<compile_context>
chip_gen: v7x
topology: tpu7x:2x2x1
jax: 0.10.0
libtpu: 0.0.40
codegen_flags: <defaults>
</compile_context>

<pallas_src>
import functools
import math

import numpy as np
import jax
import jax.numpy as jnp
from jax import lax
from jax.experimental import pallas as pl
from jax.experimental.pallas import tpu as pltpu

# ----------------------------- model config ---------------------------------
VOCAB = 50          # opt.vocab_size (small synthetic)
D_MODEL = 32        # opt.word_vec_size
N_HEADS = 4
D_HEAD = D_MODEL // N_HEADS
D_FF = 64
N_ENC_LAYERS = 2
N_DEC_LAYERS = 2
PAD_IDX = 0
POS_NUM = 3000      # pos_num when opt.plm is None
LN_EPS = 1e-6
NEG_INF = -1e9
ATTN_SCALE = 1.0 / math.sqrt(D_HEAD)
VEXT_PAD = 128      # lane-dense padded extended-vocab / attention width
MM_DTYPE = jnp.bfloat16   # MXU weight-operand dtype (f32 accumulation)

W_SLOT_R, W_SLOT_C = 64, 128   # one weight slab slot: [64, 128]


# --------------------- static slab-index layout (shared) ---------------------
def _build_indices():
    w_idx, b_idx = {}, {}

    def aw(n):
        w_idx[n] = len(w_idx)

    def ab(n):
        b_idx[n] = len(b_idx)

    for l in range(N_ENC_LAYERS):
        aw(f"e{l}_qkv"); aw(f"e{l}_o"); aw(f"e{l}_f1"); aw(f"e{l}_f2")
        for n in (f"e{l}_ln1_g", f"e{l}_ln1_b", f"e{l}_qkv_b", f"e{l}_o_b",
                  f"e{l}_ln2_g", f"e{l}_ln2_b", f"e{l}_f1_b", f"e{l}_f2_b"):
            ab(n)
    ab("e_lnf_g"); ab("e_lnf_b")
    for l in range(N_DEC_LAYERS):
        aw(f"d{l}_sqkv"); aw(f"d{l}_so"); aw(f"d{l}_cq"); aw(f"d{l}_ckv")
        aw(f"d{l}_co"); aw(f"d{l}_f1"); aw(f"d{l}_f2")
        for n in (f"d{l}_ln1_g", f"d{l}_ln1_b", f"d{l}_sqkv_b", f"d{l}_so_b",
                  f"d{l}_ln2_g", f"d{l}_ln2_b", f"d{l}_cq_b", f"d{l}_ckv_b",
                  f"d{l}_co_b", f"d{l}_ln3_g", f"d{l}_ln3_b",
                  f"d{l}_f1_b", f"d{l}_f2_b"):
            ab(n)
    ab("d_lnf_g"); ab("d_lnf_b")
    aw("emb_t")
    ab("pgen_wa"); ab("pgen_wb"); ab("pgen_b")
    return w_idx, b_idx


W_IDX, B_IDX = _build_indices()
N_W_SLOTS = len(W_IDX)
N_B_ROWS = ((len(B_IDX) + 7) // 8) * 8   # pad rows to a sublane multiple


# ----------------------------- fused kernel ----------------------------------
def _seq2seq_kernel(x_ref, y_ref, mask_ref, oov_ref, w_ref, b_ref,
                    dist_ref, attn_ref):
    """Whole Seq2Seq forward for one batch element (one grid step)."""
    Ts = x_ref.shape[1]
    Tt = y_ref.shape[1]
    D = D_MODEL

    # --- static-offset slab accessors ---------------------------------------
    def W(name, r, c):                      # bf16 [r, c]
        return w_ref[W_IDX[name], :r, :c]

    def B(name, n):                         # f32 [1, n]
        i = B_IDX[name]
        return b_ref[i:i + 1, :n]

    def ln(v, prefix):
        g = B(prefix + "_g", D)
        beta = B(prefix + "_b", D)
        mu = jnp.mean(v, axis=-1, keepdims=True)
        var = jnp.mean(jnp.square(v - mu), axis=-1, keepdims=True)
        return (v - mu) * lax.rsqrt(var + LN_EPS) * g + beta

    def mm(a16, name, r, c):                # bf16 x bf16 -> f32 acc on MXU
        return jnp.dot(a16, W(name, r, c), preferred_element_type=jnp.float32)

    def mha(q, k, v, bias, o_name, need_attn=False, exact=False):
        """Multi-head attention with the output projection folded into the
        per-head loop (no lane concat, no separate [T,D]x[D,D] matmul).
        q:[Tq,D], k/v:[Tk,D] f32; bias broadcastable to [Tq,Tk]."""
        o_w = W(o_name, D, D).astype(jnp.float32)   # cast hoisted once per call
        out = None
        attn_sum = None
        for h in range(N_HEADS):
            sl = slice(h * D_HEAD, (h + 1) * D_HEAD)
            s = lax.dot_general(q[:, sl], k[:, sl], (((1,), (1,)), ((), ())),
                                preferred_element_type=jnp.float32)
            s = s * ATTN_SCALE + bias
            s = s - jnp.max(s, axis=-1, keepdims=True)
            e = jnp.exp(s)
            den = jnp.sum(e, axis=-1, keepdims=True)
            p = e / den if exact else e * pl.reciprocal(den, approx=True)
            ctx = jnp.dot(p, v[:, sl], preferred_element_type=jnp.float32)
            proj = jnp.dot(ctx, o_w[sl, :], preferred_element_type=jnp.float32)
            out = proj if out is None else out + proj
            if need_attn:
                attn_sum = p if attn_sum is None else attn_sum + p
        attn_mean = attn_sum * (1.0 / N_HEADS) if need_attn else None
        return out, attn_mean

    # ------------------------------- encoder ---------------------------------
    src_bias = (1.0 - mask_ref[0]) * NEG_INF            # [1, Ts]
    x = x_ref[0]                                        # [Ts, D] f32
    for l in range(N_ENC_LAYERS):
        h16 = ln(x, f"e{l}_ln1").astype(MM_DTYPE)
        qkv = mm(h16, f"e{l}_qkv", D, 3 * D) + B(f"e{l}_qkv_b", 3 * D)
        a, _ = mha(qkv[:, :D], qkv[:, D:2 * D], qkv[:, 2 * D:], src_bias,
                   f"e{l}_o")
        x = x + a + B(f"e{l}_o_b", D)
        h16 = ln(x, f"e{l}_ln2").astype(MM_DTYPE)
        f = jnp.maximum(mm(h16, f"e{l}_f1", D, D_FF) + B(f"e{l}_f1_b", D_FF), 0.0)
        x = x + mm(f.astype(MM_DTYPE), f"e{l}_f2", D_FF, D) + B(f"e{l}_f2_b", D)
    mem = ln(x, "e_lnf")                                # memory bank, VMEM-only
    mem16 = mem.astype(MM_DTYPE)                        # cast hoisted

    # ------------------------------- decoder ---------------------------------
    row = lax.broadcasted_iota(jnp.int32, (Tt, Tt), 0)
    col = lax.broadcasted_iota(jnp.int32, (Tt, Tt), 1)
    causal_bias = jnp.where(col <= row, 0.0, NEG_INF)   # [Tt, Tt]

    y = y_ref[0]                                        # [Tt, D]
    attn_mean = None
    for l in range(N_DEC_LAYERS):
        # masked self-attention
        h16 = ln(y, f"d{l}_ln1").astype(MM_DTYPE)
        qkv = mm(h16, f"d{l}_sqkv", D, 3 * D) + B(f"d{l}_sqkv_b", 3 * D)
        a, _ = mha(qkv[:, :D], qkv[:, D:2 * D], qkv[:, 2 * D:], causal_bias,
                   f"d{l}_so")
        y = y + a + B(f"d{l}_so_b", D)
        # cross-attention over encoder memory (VMEM-resident)
        h16 = ln(y, f"d{l}_ln2").astype(MM_DTYPE)
        q = mm(h16, f"d{l}_cq", D, D) + B(f"d{l}_cq_b", D)
        kv = mm(mem16, f"d{l}_ckv", D, 2 * D) + B(f"d{l}_ckv_b", 2 * D)
        need = (l == N_DEC_LAYERS - 1)                  # only last layer emitted
        a, attn = mha(q, kv[:, :D], kv[:, D:], src_bias, f"d{l}_co",
                      need_attn=need, exact=need)
        if need:
            attn_mean = attn                            # [Tt, Ts] head-mean
        y = y + a + B(f"d{l}_co_b", D)
        # feed-forward
        h16 = ln(y, f"d{l}_ln3").astype(MM_DTYPE)
        f = jnp.maximum(mm(h16, f"d{l}_f1", D, D_FF) + B(f"d{l}_f1_b", D_FF), 0.0)
        y = y + mm(f.astype(MM_DTYPE), f"d{l}_f2", D_FF, D) + B(f"d{l}_f2_b", D)
    dec_out = ln(y, "d_lnf")                            # [Tt, D]

    # --- weight-tied vocab head over 128 padded lanes (exact softmax) --------
    vcol = lax.broadcasted_iota(jnp.int32, (1, VEXT_PAD), 1)
    logits = mm(dec_out.astype(MM_DTYPE), "emb_t", D, VEXT_PAD)
    logits = logits + jnp.where(vcol < VOCAB, 0.0, NEG_INF)
    logits = logits - jnp.max(logits, axis=-1, keepdims=True)
    ev = jnp.exp(logits)
    vocab_dist = ev / jnp.sum(ev, axis=-1, keepdims=True)        # [Tt, 128]

    # --- pointer-generator gate: sigmoid(wa.dec + wb.ctx + b) (VPU) ----------
    context = jnp.dot(attn_mean, mem, preferred_element_type=jnp.float32)  # [Tt,D]
    p_gen = jax.nn.sigmoid(
        jnp.sum(dec_out * B("pgen_wa", D), axis=-1, keepdims=True)
        + jnp.sum(context * B("pgen_wb", D), axis=-1, keepdims=True)
        + B("pgen_b", 1))                                          # [Tt, 1]

    # --- copy distribution: scatter attention onto src_oov ids ---------------
    onehot = (oov_ref[0] == lax.broadcasted_iota(jnp.int32, (Ts, VEXT_PAD), 1)
              ).astype(jnp.float32)                                # [Ts, 128]
    copy_dist = jnp.dot(attn_mean, onehot, preferred_element_type=jnp.float32)

    dist_ref[0] = p_gen * vocab_dist + (1.0 - p_gen) * copy_dist   # [Tt, 128]
    # lane-dense attention writeback (Ts padded to 128; sliced in the wrapper)
    attn_ref[0] = jnp.concatenate(
        [attn_mean, jnp.zeros((Tt, VEXT_PAD - Ts), jnp.float32)], axis=-1)


# ----------------------------- parameter init --------------------------------
def get_sinusoid_encoding_table(n_position, d_hid, padding_idx=None):
    pos = np.arange(n_position)[:, None].astype(np.float64)
    dim = np.arange(d_hid)[None, :]
    angle = pos / np.power(10000.0, 2.0 * (dim // 2) / d_hid)
    table = np.zeros((n_position, d_hid), dtype=np.float64)
    table[:, 0::2] = np.sin(angle[:, 0::2])
    table[:, 1::2] = np.cos(angle[:, 1::2])
    if padding_idx is not None:
        table[padding_idx] = 0.0
    return jnp.asarray(table, dtype=jnp.float32)


def _lin_init(key, fan_in, fan_out):
    lim = 1.0 / math.sqrt(fan_in)
    kw, kb = jax.random.split(key)
    w = jax.random.uniform(kw, (fan_in, fan_out), minval=-lim, maxval=lim)
    b = jax.random.uniform(kb, (fan_out,), minval=-lim, maxval=lim)
    return np.asarray(w, np.float32), np.asarray(b, np.float32)


def init_params(key):
    keys = iter(jax.random.split(key, 256))
    embed = jax.random.uniform(next(keys), (VOCAB, D_MODEL),
                               minval=-0.1, maxval=0.1)     # init_emb: U(-0.1,0.1)
    pos_table = get_sinusoid_encoding_table(POS_NUM, D_MODEL, padding_idx=PAD_IDX)

    wslab = np.zeros((N_W_SLOTS, W_SLOT_R, W_SLOT_C), np.float32)
    bslab = np.zeros((N_B_ROWS, 128), np.float32)

    def put_w(name, w):
        r, c = w.shape
        wslab[W_IDX[name], :r, :c] = w

    def put_b(name, v):
        v = np.asarray(v, np.float32).reshape(-1)
        bslab[B_IDX[name], :v.shape[0]] = v

    def put_ln(prefix):
        put_b(prefix + "_g", np.ones(D_MODEL, np.float32))  # beta rows stay 0

    for l in range(N_ENC_LAYERS):
        ws, bs = zip(*[_lin_init(next(keys), D_MODEL, D_MODEL) for _ in range(3)])
        put_w(f"e{l}_qkv", np.concatenate(ws, 1)); put_b(f"e{l}_qkv_b", np.concatenate(bs))
        w, b = _lin_init(next(keys), D_MODEL, D_MODEL); put_w(f"e{l}_o", w); put_b(f"e{l}_o_b", b)
        w, b = _lin_init(next(keys), D_MODEL, D_FF);    put_w(f"e{l}_f1", w); put_b(f"e{l}_f1_b", b)
        w, b = _lin_init(next(keys), D_FF, D_MODEL);    put_w(f"e{l}_f2", w); put_b(f"e{l}_f2_b", b)
        put_ln(f"e{l}_ln1"); put_ln(f"e{l}_ln2")
    put_ln("e_lnf")

    for l in range(N_DEC_LAYERS):
        ws, bs = zip(*[_lin_init(next(keys), D_MODEL, D_MODEL) for _ in range(3)])
        put_w(f"d{l}_sqkv", np.concatenate(ws, 1)); put_b(f"d{l}_sqkv_b", np.concatenate(bs))
        w, b = _lin_init(next(keys), D_MODEL, D_MODEL); put_w(f"d{l}_so", w); put_b(f"d{l}_so_b", b)
        w, b = _lin_init(next(keys), D_MODEL, D_MODEL); put_w(f"d{l}_cq", w); put_b(f"d{l}_cq_b", b)
        ws, bs = zip(*[_lin_init(next(keys), D_MODEL, D_MODEL) for _ in range(2)])
        put_w(f"d{l}_ckv", np.concatenate(ws, 1)); put_b(f"d{l}_ckv_b", np.concatenate(bs))
        w, b = _lin_init(next(keys), D_MODEL, D_MODEL); put_w(f"d{l}_co", w); put_b(f"d{l}_co_b", b)
        w, b = _lin_init(next(keys), D_MODEL, D_FF);    put_w(f"d{l}_f1", w); put_b(f"d{l}_f1_b", b)
        w, b = _lin_init(next(keys), D_FF, D_MODEL);    put_w(f"d{l}_f2", w); put_b(f"d{l}_f2_b", b)
        put_ln(f"d{l}_ln1"); put_ln(f"d{l}_ln2"); put_ln(f"d{l}_ln3")
    put_ln("d_lnf")

    # weight-tied, lane-padded, transposed output embedding (precomputed once)
    put_w("emb_t", np.asarray(embed, np.float32).T)

    # pointer-generator gate Linear(2D, 1) split into two [D] halves
    w, b = _lin_init(next(keys), 2 * D_MODEL, 1)
    put_b("pgen_wa", w[:D_MODEL, 0]); put_b("pgen_wb", w[D_MODEL:, 0]); put_b("pgen_b", b)

    return {"embed": embed, "pos_table": pos_table,
            "wslab": jnp.asarray(wslab, MM_DTYPE),
            "bslab": jnp.asarray(bslab, jnp.float32)}


# ----------------------------- forward pass -----------------------------------
@functools.partial(jax.jit, static_argnums=(5,))
def seq2seq_forward(params, src, src_lens, input_tgt, src_oov, max_num_oov, src_mask):
    """Mirrors Seq2SeqModel.forward -> (decoder_dist_all, attention_dist_all)."""
    del src_lens  # mask information is carried by src_mask (float [B, Ts])
    assert VOCAB + max_num_oov <= VEXT_PAD
    B, Ts = src.shape
    Tt = input_tgt.shape[1]
    scale = math.sqrt(D_MODEL)
    pos = params["pos_table"]

    # embedding gather + sinusoidal positions stay in the jitted wrapper;
    # everything downstream runs inside ONE fused Pallas kernel.
    x = jnp.take(params["embed"], src, axis=0) * scale + pos[1:Ts + 1][None]
    y = jnp.take(params["embed"], input_tgt, axis=0) * scale + pos[1:Tt + 1][None]
    mask3 = src_mask.astype(jnp.float32).reshape(B, 1, Ts)
    oov3 = src_oov.astype(jnp.int32).reshape(B, Ts, 1)
    wslab, bslab = params["wslab"], params["bslab"]

    dist_pad, attn_pad = pl.pallas_call(
        _seq2seq_kernel,
        out_shape=(jax.ShapeDtypeStruct((B, Tt, VEXT_PAD), jnp.float32),
                   jax.ShapeDtypeStruct((B, Tt, VEXT_PAD), jnp.float32)),
        grid=(B,),
        in_specs=[pl.BlockSpec((1, Ts, D_MODEL), lambda b: (b, 0, 0)),
                  pl.BlockSpec((1, Tt, D_MODEL), lambda b: (b, 0, 0)),
                  pl.BlockSpec((1, 1, Ts), lambda b: (b, 0, 0)),
                  pl.BlockSpec((1, Ts, 1), lambda b: (b, 0, 0)),
                  pl.BlockSpec(wslab.shape, lambda b: (0, 0, 0)),
                  pl.BlockSpec(bslab.shape, lambda b: (0, 0))],
        out_specs=(pl.BlockSpec((1, Tt, VEXT_PAD), lambda b: (b, 0, 0)),
                   pl.BlockSpec((1, Tt, VEXT_PAD), lambda b: (b, 0, 0))),
        compiler_params=pltpu.CompilerParams(dimension_semantics=("parallel",)),
    )(x, y, mask3, oov3, wslab, bslab)

    decoder_dist_all = dist_pad[:, :, :VOCAB + max_num_oov]
    attention_dist_all = attn_pad[:, :, :Ts]
    return decoder_dist_all, attention_dist_all


# ----------------------------- driver ------------------------------------------
if __name__ == "__main__":
    key = jax.random.PRNGKey(0)
    pkey, dkey = jax.random.split(key)
    params = init_params(pkey)

    B, Ts, Tt = 2, 8, 8
    max_num_oov = 3
    k1, k2, k3, k4 = jax.random.split(dkey, 4)

    src_lens = jnp.array([Ts, Ts - 2], dtype=jnp.int32)
    src_mask = (jnp.arange(Ts)[None, :] < src_lens[:, None]).astype(jnp.float32)
    src = jax.random.randint(k1, (B, Ts), 1, VOCAB, dtype=jnp.int32)
    src = src * src_mask.astype(jnp.int32)                     # pad positions -> PAD_IDX
    input_tgt = jax.random.randint(k2, (B, Tt), 1, VOCAB, dtype=jnp.int32)
    oov_ids = VOCAB + jax.random.randint(k3, (B, Ts), 0, max_num_oov, dtype=jnp.int32)
    is_oov = jax.random.uniform(k4, (B, Ts)) < 0.2
    src_oov = jnp.where(is_oov, oov_ids, src) * src_mask.astype(jnp.int32)

    decoder_dist_all, attention_dist_all = seq2seq_forward(
        params, src, src_lens, input_tgt, src_oov, max_num_oov, src_mask)
    jax.block_until_ready((decoder_dist_all, attention_dist_all))

    assert decoder_dist_all.shape == (B, Tt, VOCAB + max_num_oov)
    assert attention_dist_all.shape == (B, Tt, Ts)
    assert bool(jnp.all(jnp.isfinite(decoder_dist_all)))
    print("KERNEL_OK")
</pallas_src>

<mosaic_0001>
module attributes {stable_mosaic.version = 11 : i64} {
  func.func @_seq2seq_kernel(%arg0: i32, %arg1: memref<1x8x32xf32, #tpu.memory_space<vmem>>, %arg2: memref<1x8x32xf32, #tpu.memory_space<vmem>>, %arg3: memref<1x1x8xf32, #tpu.memory_space<vmem>>, %arg4: memref<1x8x1xi32, #tpu.memory_space<vmem>>, %arg5: memref<23x64x128xbf16, #tpu.memory_space<vmem>>, %arg6: memref<56x128xf32, #tpu.memory_space<vmem>>, %arg7: memref<1x8x128xf32, #tpu.memory_space<vmem>>, %arg8: memref<1x8x128xf32, #tpu.memory_space<vmem>>) attributes {dimension_semantics = [#tpu.dimension_semantics<parallel>], iteration_bounds = array<i64: 2>, scalar_prefetch = 0 : i64, scratch_operands = 0 : i64, tpu.core_type = #tpu.core_type<tc>, window_params = [{transform_indices = @transform_0, window_bounds = array<i64: 1, 8, 32>}, {transform_indices = @transform_1, window_bounds = array<i64: 1, 8, 32>}, {transform_indices = @transform_2, window_bounds = array<i64: 1, 1, 8>}, {transform_indices = @transform_3, window_bounds = array<i64: 1, 8, 1>}, {pipeline_mode = #tpu.pipeline_mode<synchronous>, transform_indices = @transform_4, window_bounds = array<i64: 23, 64, 128>}, {pipeline_mode = #tpu.pipeline_mode<synchronous>, transform_indices = @transform_5, window_bounds = array<i64: 56, 128>}, {transform_indices = @transform_6, window_bounds = array<i64: 1, 8, 128>}, {transform_indices = @transform_7, window_bounds = array<i64: 1, 8, 128>}]} {
    %c0 = arith.constant 0 : index
    %c0_0 = arith.constant 0 : index
    %c0_1 = arith.constant 0 : index
    %0 = vector.load %arg3[%c0, %c0_0, %c0_1] : memref<1x1x8xf32, #tpu.memory_space<vmem>>, vector<1x1x8xf32>
    %1 = vector.shape_cast %0 : vector<1x1x8xf32> to vector<1x8xf32>
    %cst = arith.constant 1.000000e+00 : f32
    %2 = vector.broadcast %cst : f32 to vector<1x8xf32>
    %3 = arith.subf %2, %1 : vector<1x8xf32>
    %cst_2 = arith.constant -1.000000e+09 : f32
    %4 = vector.broadcast %cst_2 : f32 to vector<1x8xf32>
    %5 = arith.mulf %3, %4 : vector<1x8xf32>
    %c0_3 = arith.constant 0 : index
    %c0_4 = arith.constant 0 : index
    %c0_5 = arith.constant 0 : index
    %6 = vector.load %arg1[%c0_3, %c0_4, %c0_5] : memref<1x8x32xf32, #tpu.memory_space<vmem>>, vector<1x8x32xf32>
    %7 = vector.shape_cast %6 : vector<1x8x32xf32> to vector<8x32xf32>
    %c0_6 = arith.constant 0 : index
    %c0_7 = arith.constant 0 : index
    %8 = vector.load %arg6[%c0_6, %c0_7] : memref<56x128xf32, #tpu.memory_space<vmem>>, vector<1x32xf32>
    %c1 = arith.constant 1 : index
    %c0_8 = arith.constant 0 : index
    %9 = vector.load %arg6[%c1, %c0_8] : memref<56x128xf32, #tpu.memory_space<vmem>>, vector<1x32xf32>
    %cst_9 = arith.constant dense<0.000000e+00> : vector<8xf32>
    %10 = vector.multi_reduction <add>, %7, %cst_9 [1] : vector<8x32xf32> to vector<8xf32>
    %11 = vector.shape_cast %10 : vector<8xf32> to vector<8x1xf32>
    %cst_10 = arith.constant 3.200000e+01 : f32
    %12 = vector.broadcast %cst_10 : f32 to vector<8x1xf32>
    %13 = arith.divf %11, %12 : vector<8x1xf32>
    %14 = vector.broadcast %13 : vector<8x1xf32> to vector<8x32xf32>
    %15 = arith.subf %7, %14 : vector<8x32xf32>
    %16 = arith.mulf %15, %15 : vector<8x32xf32>
    %cst_11 = arith.constant dense<0.000000e+00> : vector<8xf32>
    %17 = vector.multi_reduction <add>, %16, %cst_11 [1] : vector<8x32xf32> to vector<8xf32>
    %18 = vector.shape_cast %17 : vector<8xf32> to vector<8x1xf32>
    %cst_12 = arith.constant 3.200000e+01 : f32
    %19 = vector.broadcast %cst_12 : f32 to vector<8x1xf32>
    %20 = arith.divf %18, %19 : vector<8x1xf32>
    %21 = vector.broadcast %13 : vector<8x1xf32> to vector<8x32xf32>
    %22 = arith.subf %7, %21 : vector<8x32xf32>
    %cst_13 = arith.constant 9.99999997E-7 : f32
    %23 = vector.broadcast %cst_13 : f32 to vector<8x1xf32>
    %24 = arith.addf %20, %23 : vector<8x1xf32>
    %25 = math.rsqrt %24 : vector<8x1xf32>
    %26 = vector.broadcast %25 : vector<8x1xf32> to vector<8x32xf32>
    %27 = arith.mulf %22, %26 : vector<8x32xf32>
    %28 = vector.broadcast %8 : vector<1x32xf32> to vector<8x32xf32>
    %29 = arith.mulf %27, %28 : vector<8x32xf32>
    %30 = vector.broadcast %9 : vector<1x32xf32> to vector<8x32xf32>
    %31 = arith.addf %29, %30 : vector<8x32xf32>
    %32 = arith.truncf %31 : vector<8x32xf32> to vector<8x32xbf16>
    %c0_14 = arith.constant 0 : index
    %c0_15 = arith.constant 0 : index
    %c0_16 = arith.constant 0 : index
    %33 = vector.load %arg5[%c0_14, %c0_15, %c0_16] : memref<23x64x128xbf16, #tpu.memory_space<vmem>>, vector<1x32x96xbf16>
    %34 = vector.shape_cast %33 : vector<1x32x96xbf16> to vector<32x96xbf16>
    %cst_17 = arith.constant dense<0.000000e+00> : vector<8x96xf32>
    %35 = tpu.matmul %32, %34, %cst_17 {dimension_numbers = #tpu.dot_dimension_numbers<[1], [0], [0], [1], [0, 0, 1, 1], [], []>} : vector<8x32xbf16>, vector<32x96xbf16>, vector<8x96xf32> -> vector<8x96xf32>
    %c2 = arith.constant 2 : index
    %c0_18 = arith.constant 0 : index
    %36 = vector.load %arg6[%c2, %c0_18] : memref<56x128xf32, #tpu.memory_space<vmem>>, vector<1x96xf32>
    %37 = vector.broadcast %36 : vector<1x96xf32> to vector<8x96xf32>
    %38 = arith.addf %35, %37 : vector<8x96xf32>
    %39 = vector.extract_strided_slice %38 {offsets = [0, 0], sizes = [8, 32], strides = [1, 1]} : vector<8x96xf32> to vector<8x32xf32>
    %40 = vector.extract_strided_slice %38 {offsets = [0, 32], sizes = [8, 32], strides = [1, 1]} : vector<8x96xf32> to vector<8x32xf32>
    %41 = vector.extract_strided_slice %38 {offsets = [0, 64], sizes = [8, 32], strides = [1, 1]} : vector<8x96xf32> to vector<8x32xf32>
    %c1_19 = arith.constant 1 : index
    %c0_20 = arith.constant 0 : index
    %c0_21 = arith.constant 0 : index
    %42 = vector.load %arg5[%c1_19, %c0_20, %c0_21] : memref<23x64x128xbf16, #tpu.memory_space<vmem>>, vector<1x32x32xbf16>
    %43 = vector.shape_cast %42 : vector<1x32x32xbf16> to vector<32x32xbf16>
    %44 = arith.extf %43 : vector<32x32xbf16> to vector<32x32xf32>
    %45 = vector.extract_strided_slice %39 {offsets = [0, 0], sizes = [8, 8], strides = [1, 1]} : vector<8x32xf32> to vector<8x8xf32>
    %46 = vector.extract_strided_slice %40 {offsets = [0, 0], sizes = [8, 8], strides = [1, 1]} : vector<8x32xf32> to vector<8x8xf32>
    %cst_22 = arith.constant dense<0.000000e+00> : vector<8x8xf32>
    %47 = tpu.matmul %45, %46, %cst_22 {dimension_numbers = #tpu.dot_dimension_numbers<[1], [1], [0], [0], [0, 0, 1, 0], [], []>} : vector<8x8xf32>, vector<8x8xf32>, vector<8x8xf32> -> vector<8x8xf32>
    %cst_23 = arith.constant 0.353553385 : f32
    %48 = vector.broadcast %cst_23 : f32 to vector<8x8xf32>
    %49 = arith.mulf %47, %48 : vector<8x8xf32>
    %50 = vector.broadcast %5 : vector<1x8xf32> to vector<8x8xf32>
    %51 = arith.addf %49, %50 : vector<8x8xf32>
    %cst_24 = arith.constant dense<0xFF800000> : vector<8xf32>
    %52 = vector.multi_reduction <maximumf>, %51, %cst_24 [1] : vector<8x8xf32> to vector<8xf32>
    %53 = vector.shape_cast %52 : vector<8xf32> to vector<8x1xf32>
    %54 = vector.broadcast %53 : vector<8x1xf32> to vector<8x8xf32>
    %55 = arith.subf %51, %54 : vector<8x8xf32>
    %56 = math.exp %55 : vector<8x8xf32>
    %cst_25 = arith.constant dense<0.000000e+00> : vector<8xf32>
    %57 = vector.multi_reduction <add>, %56, %cst_25 [1] : vector<8x8xf32> to vector<8xf32>
    %58 = vector.shape_cast %57 : vector<8xf32> to vector<8x1xf32>
    %59 = tpu.reciprocal %58 {approx = true} : vector<8x1xf32> -> vector<8x1xf32>
    %60 = vector.broadcast %59 : vector<8x1xf32> to vector<8x8xf32>
    %61 = arith.mulf %56, %60 : vector<8x8xf32>
    %62 = vector.extract_strided_slice %41 {offsets = [0, 0], sizes = [8, 8], strides = [1, 1]} : vector<8x32xf32> to vector<8x8xf32>
    %cst_26 = arith.constant dense<0.000000e+00> : vector<8x8xf32>
    %63 = tpu.matmul %61, %62, %cst_26 {dimension_numbers = #tpu.dot_dimension_numbers<[1], [0], [0], [1], [0, 0, 1, 1], [], []>} : vector<8x8xf32>, vector<8x8xf32>, vector<8x8xf32> -> vector<8x8xf32>
    %64 = vector.extract_strided_slice %44 {offsets = [0, 0], sizes = [8, 32], strides = [1, 1]} : vector<32x32xf32> to vector<8x32xf32>
    %cst_27 = arith.constant dense<0.000000e+00> : vector<8x32xf32>
    %65 = tpu.matmul %63, %64, %cst_27 {dimension_numbers = #tpu.dot_dimension_numbers<[1], [0], [0], [1], [0, 0, 1, 1], [], []>} : vector<8x8xf32>, vector<8x32xf32>, vector<8x32xf32> -> vector<8x32xf32>
    %66 = vector.extract_strided_slice %39 {offsets = [0, 8], sizes = [8, 8], strides = [1, 1]} : vector<8x32xf32> to vector<8x8xf32>
    %67 = vector.extract_strided_slice %40 {offsets = [0, 8], sizes = [8, 8], strides = [1, 1]} : vector<8x32xf32> to vector<8x8xf32>
    %cst_28 = arith.constant dense<0.000000e+00> : vector<8x8xf32>
    %68 = tpu.matmul %66, %67, %cst_28 {dimension_numbers = #tpu.dot_dimension_numbers<[1], [1], [0], [0], [0, 0, 1, 0], [], []>} : vector<8x8xf32>, vector<8x8xf32>, vector<8x8xf32> -> vector<8x8xf32>
    %cst_29 = arith.constant 0.353553385 : f32
    %69 = vector.broadcast %cst_29 : f32 to vector<8x8xf32>
    %70 = arith.mulf %68, %69 : vector<8x8xf32>
    %71 = vector.broadcast %5 : vector<1x8xf32> to vector<8x8xf32>
    %72 = arith.addf %70, %71 : vector<8x8xf32>
    %cst_30 = arith.constant dense<0xFF800000> : vector<8xf32>
    %73 = vector.multi_reduction <maximumf>, %72, %cst_30 [1] : vector<8x8xf32> to vector<8xf32>
    %74 = vector.shape_cast %73 : vector<8xf32> to vector<8x1xf32>
    %75 = vector.broadcast %74 : vector<8x1xf32> to vector<8x8xf32>
    %76 = arith.subf %72, %75 : vector<8x8xf32>
    %77 = math.exp %76 : vector<8x8xf32>
    %cst_31 = arith.constant dense<0.000000e+00> : vector<8xf32>
    %78 = vector.multi_reduction <add>, %77, %cst_31 [1] : vector<8x8xf32> to vector<8xf32>
    %79 = vector.shape_cast %78 : vector<8xf32> to vector<8x1xf32>
    %80 = tpu.reciprocal %79 {approx = true} : vector<8x1xf32> -> vector<8x1xf32>
    %81 = vector.broadcast %80 : vector<8x1xf32> to vector<8x8xf32>
    %82 = arith.mulf %77, %81 : vector<8x8xf32>
    %83 = vector.extract_strided_slice %41 {offsets = [0, 8], sizes = [8, 8], strides = [1, 1]} : vector<8x32xf32> to vector<8x8xf32>
    %cst_32 = arith.constant dense<0.000000e+00> : vector<8x8xf32>
    %84 = tpu.matmul %82, %83, %cst_32 {dimension_numbers = #tpu.dot_dimension_numbers<[1], [0], [0], [1], [0, 0, 1, 1], [], []>} : vector<8x8xf32>, vector<8x8xf32>, vector<8x8xf32> -> vector<8x8xf32>
    %85 = vector.extract_strided_slice %44 {offsets = [8, 0], sizes = [8, 32], strides = [1, 1]} : vector<32x32xf32> to vector<8x32xf32>
    %cst_33 = arith.constant dense<0.000000e+00> : vector<8x32xf32>
    %86 = tpu.matmul %84, %85, %cst_33 {dimension_numbers = #tpu.dot_dimension_numbers<[1], [0], [0], [1], [0, 0, 1, 1], [], []>} : vector<8x8xf32>, vector<8x32xf32>, vector<8x32xf32> -> vector<8x32xf32>
    %87 = arith.addf %65, %86 : vector<8x32xf32>
    %88 = vector.extract_strided_slice %39 {offsets = [0, 16], sizes = [8, 8], strides = [1, 1]} : vector<8x32xf32> to vector<8x8xf32>
    %89 = vector.extract_strided_slice %40 {offsets = [0, 16], sizes = [8, 8], strides = [1, 1]} : vector<8x32xf32> to vector<8x8xf32>
    %cst_34 = arith.constant dense<0.000000e+00> : vector<8x8xf32>
    %90 = tpu.matmul %88, %89, %cst_34 {dimension_numbers = #tpu.dot_dimension_numbers<[1], [1], [0], [0], [0, 0, 1, 0], [], []>} : vector<8x8xf32>, vector<8x8xf32>, vector<8x8xf32> -> vector<8x8xf32>
    %cst_35 = arith.constant 0.353553385 : f32
    %91 = vector.broadcast %cst_35 : f32 to vector<8x8xf32>
    %92 = arith.mulf %90, %91 : vector<8x8xf32>
    %93 = vector.broadcast %5 : vector<1x8xf32> to vector<8x8xf32>
    %94 = arith.addf %92, %93 : vector<8x8xf32>
    %cst_36 = arith.constant dense<0xFF800000> : vector<8xf32>
    %95 = vector.multi_reduction <maximumf>, %94, %cst_36 [1] : vector<8x8xf32> to vector<8xf32>
    %96 = vector.shape_cast %95 : vector<8xf32> to vector<8x1xf32>
    %97 = vector.broadcast %96 : vector<8x1xf32> to vector<8x8xf32>
    %98 = arith.subf %94, %97 : vector<8x8xf32>
    %99 = math.exp %98 : vector<8x8xf32>
    %cst_37 = arith.constant dense<0.000000e+00> : vector<8xf32>
    %100 = vector.multi_reduction <add>, %99, %cst_37 [1] : vector<8x8xf32> to vector<8xf32>
    %101 = vector.shape_cast %100 : vector<8xf32> to vector<8x1xf32>
    %102 = tpu.reciprocal %101 {approx = true} : vector<8x1xf32> -> vector<8x1xf32>
    %103 = vector.broadcast %102 : vector<8x1xf32> to vector<8x8xf32>
    %104 = arith.mulf %99, %103 : vector<8x8xf32>
    %105 = vector.extract_strided_slice %41 {offsets = [0, 16], sizes = [8, 8], strides = [1, 1]} : vector<8x32xf32> to vector<8x8xf32>
    %cst_38 = arith.constant dense<0.000000e+00> : vector<8x8xf32>
    %106 = tpu.matmul %104, %105, %cst_38 {dimension_numbers = #tpu.dot_dimension_numbers<[1], [0], [0], [1], [0, 0, 1, 1], [], []>} : vector<8x8xf32>, vector<8x8xf32>, vector<8x8xf32> -> vector<8x8xf32>
    %107 = vector.extract_strided_slice %44 {offsets = [16, 0], sizes = [8, 32], strides = [1, 1]} : vector<32x32xf32> to vector<8x32xf32>
    %cst_39 = arith.constant dense<0.000000e+00> : vector<8x32xf32>
    %108 = tpu.matmul %106, %107, %cst_39 {dimension_numbers = #tpu.dot_dimension_numbers<[1], [0], [0], [1], [0, 0, 1, 1], [], []>} : vector<8x8xf32>, vector<8x32xf32>, vector<8x32xf32> -> vector<8x32xf32>
    %109 = arith.addf %87, %108 : vector<8x32xf32>
    %110 = vector.extract_strided_slice %39 {offsets = [0, 24], sizes = [8, 8], strides = [1, 1]} : vector<8x32xf32> to vector<8x8xf32>
    %111 = vector.extract_strided_slice %40 {offsets = [0, 24], sizes = [8, 8], strides = [1, 1]} : vector<8x32xf32> to vector<8x8xf32>
    %cst_40 = arith.constant dense<0.000000e+00> : vector<8x8xf32>
    %112 = tpu.matmul %110, %111, %cst_40 {dimension_numbers = #tpu.dot_dimension_numbers<[1], [1], [0], [0], [0, 0, 1, 0], [], []>} : vector<8x8xf32>, vector<8x8xf32>, vector<8x8xf32> -> vector<8x8xf32>
    %cst_41 = arith.constant 0.353553385 : f32
    %113 = vector.broadcast %cst_41 : f32 to vector<8x8xf32>
    %114 = arith.mulf %112, %113 : vector<8x8xf32>
    %115 = vector.broadcast %5 : vector<1x8xf32> to vector<8x8xf32>
    %116 = arith.addf %114, %115 : vector<8x8xf32>
    %cst_42 = arith.constant dense<0xFF800000> : vector<8xf32>
    %117 = vector.multi_reduction <maximumf>, %116, %cst_42 [1] : vector<8x8xf32> to vector<8xf32>
    %118 = vector.shape_cast %117 : vector<8xf32> to vector<8x1xf32>
    %119 = vector.broadcast %118 : vector<8x1xf32> to vector<8x8xf32>
    %120 = arith.subf %116, %119 : vector<8x8xf32>
    %121 = math.exp %120 : vector<8x8xf32>
    %cst_43 = arith.constant dense<0.000000e+00> : vector<8xf32>
    %122 = vector.multi_reduction <add>, %121, %cst_43 [1] : vector<8x8xf32> to vector<8xf32>
    %123 = vector.shape_cast %122 : vector<8xf32> to vector<8x1xf32>
    %124 = tpu.reciprocal %123 {approx = true} : vector<8x1xf32> -> vector<8x1xf32>
    %125 = vector.broadcast %124 : vector<8x1xf32> to vector<8x8xf32>
    %126 = arith.mulf %121, %125 : vector<8x8xf32>
    %127 = vector.extract_strided_slice %41 {offsets = [0, 24], sizes = [8, 8], strides = [1, 1]} : vector<8x32xf32> to vector<8x8xf32>
    %cst_44 = arith.constant dense<0.000000e+00> : vector<8x8xf32>
    %128 = tpu.matmul %126, %127, %cst_44 {dimension_numbers = #tpu.dot_dimension_numbers<[1], [0], [0], [1], [0, 0, 1, 1], [], []>} : vector<8x8xf32>, vector<8x8xf32>, vector<8x8xf32> -> vector<8x8xf32>
    %129 = vector.extract_strided_slice %44 {offsets = [24, 0], sizes = [8, 32], strides = [1, 1]} : vector<32x32xf32> to vector<8x32xf32>
    %cst_45 = arith.constant dense<0.000000e+00> : vector<8x32xf32>
    %130 = tpu.matmul %128, %129, %cst_45 {dimension_numbers = #tpu.dot_dimension_numbers<[1], [0], [0], [1], [0, 0, 1, 1], [], []>} : vector<8x8xf32>, vector<8x32xf32>, vector<8x32xf32> -> vector<8x32xf32>
    %131 = arith.addf %109, %130 : vector<8x32xf32>
    %132 = arith.addf %7, %131 : vector<8x32xf32>
    %c3 = arith.constant 3 : index
    %c0_46 = arith.constant 0 : index
    %133 = vector.load %arg6[%c3, %c0_46] : memref<56x128xf32, #tpu.memory_space<vmem>>, vector<1x32xf32>
    %134 = vector.broadcast %133 : vector<1x32xf32> to vector<8x32xf32>
    %135 = arith.addf %132, %134 : vector<8x32xf32>
    %c4 = arith.constant 4 : index
    %c0_47 = arith.constant 0 : index
    %136 = vector.load %arg6[%c4, %c0_47] : memref<56x128xf32, #tpu.memory_space<vmem>>, vector<1x32xf32>
    %c5 = arith.constant 5 : index
    %c0_48 = arith.constant 0 : index
    %137 = vector.load %arg6[%c5, %c0_48] : memref<56x128xf32, #tpu.memory_space<vmem>>, vector<1x32xf32>
    %cst_49 = arith.constant dense<0.000000e+00> : vector<8xf32>
    %138 = vector.multi_reduction <add>, %135, %cst_49 [1] : vector<8x32xf32> to vector<8xf32>
    %139 = vector.shape_cast %138 : vector<8xf32> to vector<8x1xf32>
    %cst_50 = arith.constant 3.200000e+01 : f32
    %140 = vector.broadcast %cst_50 : f32 to vector<8x1xf32>
    %141 = arith.divf %139, %140 : vector<8x1xf32>
    %142 = vector.broadcast %141 : vector<8x1xf32> to vector<8x32xf32>
    %143 = arith.subf %135, %142 : vector<8x32xf32>
    %144 = arith.mulf %143, %143 : vector<8x32xf32>
    %cst_51 = arith.constant dense<0.000000e+00> : vector<8xf32>
    %145 = vector.multi_reduction <add>, %144, %cst_51 [1] : vector<8x32xf32> to vector<8xf32>
    %146 = vector.shape_cast %145 : vector<8xf32> to vector<8x1xf32>
    %cst_52 = arith.constant 3.200000e+01 : f32
    %147 = vector.broadcast %cst_52 : f32 to vector<8x1xf32>
    %148 = arith.divf %146, %147 : vector<8x1xf32>
    %149 = vector.broadcast %141 : vector<8x1xf32> to vector<8x32xf32>
    %150 = arith.subf %135, %149 : vector<8x32xf32>
    %cst_53 = arith.constant 9.99999997E-7 : f32
    %151 = vector.broadcast %cst_53 : f32 to vector<8x1xf32>
    %152 = arith.addf %148, %151 : vector<8x1xf32>
    %153 = math.rsqrt %152 : vector<8x1xf32>
    %154 = vector.broadcast %153 : vector<8x1xf32> to vector<8x32xf32>
    %155 = arith.mulf %150, %154 : vector<8x32xf32>
    %156 = vector.broadcast %136 : vector<1x32xf32> to vector<8x32xf32>
    %157 = arith.mulf %155, %156 : vector<8x32xf32>
    %158 = vector.broadcast %137 : vector<1x32xf32> to vector<8x32xf32>
    %159 = arith.addf %157, %158 : vector<8x32xf32>
    %160 = arith.truncf %159 : vector<8x32xf32> to vector<8x32xbf16>
    %c2_54 = arith.constant 2 : index
    %c0_55 = arith.constant 0 : index
    %c0_56 = arith.constant 0 : index
    %161 = vector.load %arg5[%c2_54, %c0_55, %c0_56] : memref<23x64x128xbf16, #tpu.memory_space<vmem>>, vector<1x32x64xbf16>
    %162 = vector.shape_cast %161 : vector<1x32x64xbf16> to vector<32x64xbf16>
    %cst_57 = arith.constant dense<0.000000e+00> : vector<8x64xf32>
    %163 = tpu.matmul %160, %162, %cst_57 {dimension_numbers = #tpu.dot_dimension_numbers<[1], [0], [0], [1], [0, 0, 1, 1], [], []>} : vector<8x32xbf16>, vector<32x64xbf16>, vector<8x64xf32> -> vector<8x64xf32>
    %c6 = arith.constant 6 : index
    %c0_58 = arith.constant 0 : index
    %164 = vector.load %arg6[%c6, %c0_58] : memref<56x128xf32, #tpu.memory_space<vmem>>, vector<1x64xf32>
    %165 = vector.broadcast %164 : vector<1x64xf32> to vector<8x64xf32>
    %166 = arith.addf %163, %165 : vector<8x64xf32>
    %cst_59 = arith.constant 0.000000e+00 : f32
    %167 = vector.broadcast %cst_59 : f32 to vector<8x64xf32>
    %168 = arith.maximumf %166, %167 : vector<8x64xf32>
    %169 = arith.truncf %168 : vector<8x64xf32> to vector<8x64xbf16>
    %c3_60 = arith.constant 3 : index
    %c0_61 = arith.constant 0 : index
    %c0_62 = arith.constant 0 : index
    %170 = vector.load %arg5[%c3_60, %c0_61, %c0_62] : memref<23x64x128xbf16, #tpu.memory_space<vmem>>, vector<1x64x32xbf16>
    %171 = vector.shape_cast %170 : vector<1x64x32xbf16> to vector<64x32xbf16>
    %cst_63 = arith.constant dense<0.000000e+00> : vector<8x32xf32>
    %172 = tpu.matmul %169, %171, %cst_63 {dimension_numbers = #tpu.dot_dimension_numbers<[1], [0], [0], [1], [0, 0, 1, 1], [], []>} : vector<8x64xbf16>, vector<64x32xbf16>, vector<8x32xf32> -> vector<8x32xf32>
    %173 = arith.addf %135, %172 : vector<8x32xf32>
    %c7 = arith.constant 7 : index
    %c0_64 = arith.constant 0 : index
    %174 = vector.load %arg6[%c7, %c0_64] : memref<56x128xf32, #tpu.memory_space<vmem>>, vector<1x32xf32>
    %175 = vector.broadcast %174 : vector<1x32xf32> to vector<8x32xf32>
    %176 = arith.addf %173, %175 : vector<8x32xf32>
    %c8 = arith.constant 8 : index
    %c0_65 = arith.constant 0 : index
    %177 = vector.load %arg6[%c8, %c0_65] : memref<56x128xf32, #tpu.memory_space<vmem>>, vector<1x32xf32>
    %c9 = arith.constant 9 : index
    %c0_66 = arith.constant 0 : index
    %178 = vector.load %arg6[%c9, %c0_66] : memref<56x128xf32, #tpu.memory_space<vmem>>, vector<1x32xf32>
    %cst_67 = arith.constant dense<0.000000e+00> : vector<8xf32>
    %179 = vector.multi_reduction <add>, %176, %cst_67 [1] : vector<8x32xf32> to vector<8xf32>
    %180 = vector.shape_cast %179 : vector<8xf32> to vector<8x1xf32>
    %cst_68 = arith.constant 3.200000e+01 : f32
    %181 = vector.broadcast %cst_68 : f32 to vector<8x1xf32>
    %182 = arith.divf %180, %181 : vector<8x1xf32>
    %183 = vector.broadcast %182 : vector<8x1xf32> to vector<8x32xf32>
    %184 = arith.subf %176, %183 : vector<8x32xf32>
    %185 = arith.mulf %184, %184 : vector<8x32xf32>
    %cst_69 = arith.constant dense<0.000000e+00> : vector<8xf32>
    %186 = vector.multi_reduction <add>, %185, %cst_69 [1] : vector<8x32xf32> to vector<8xf32>
    %187 = vector.shape_cast %186 : vector<8xf32> to vector<8x1xf32>
    %cst_70 = arith.constant 3.200000e+01 : f32
    %188 = vector.broadcast %cst_70 : f32 to vector<8x1xf32>
    %189 = arith.divf %187, %188 : vector<8x1xf32>
    %190 = vector.broadcast %182 : vector<8x1xf32> to vector<8x32xf32>
    %191 = arith.subf %176, %190 : vector<8x32xf32>
    %cst_71 = arith.constant 9.99999997E-7 : f32
    %192 = vector.broadcast %cst_71 : f32 to vector<8x1xf32>
    %193 = arith.addf %189, %192 : vector<8x1xf32>
    %194 = math.rsqrt %193 : vector<8x1xf32>
    %195 = vector.broadcast %194 : vector<8x1xf32> to vector<8x32xf32>
    %196 = arith.mulf %191, %195 : vector<8x32xf32>
    %197 = vector.broadcast %177 : vector<1x32xf32> to vector<8x32xf32>
    %198 = arith.mulf %196, %197 : vector<8x32xf32>
    %199 = vector.broadcast %178 : vector<1x32xf32> to vector<8x32xf32>
    %200 = arith.addf %198, %199 : vector<8x32xf32>
    %201 = arith.truncf %200 : vector<8x32xf32> to vector<8x32xbf16>
    %c4_72 = arith.constant 4 : index
    %c0_73 = arith.constant 0 : index
    %c0_74 = arith.constant 0 : index
    %202 = vector.load %arg5[%c4_72, %c0_73, %c0_74] : memref<23x64x128xbf16, #tpu.memory_space<vmem>>, vector<1x32x96xbf16>
    %203 = vector.shape_cast %202 : vector<1x32x96xbf16> to vector<32x96xbf16>
    %cst_75 = arith.constant dense<0.000000e+00> : vector<8x96xf32>
    %204 = tpu.matmul %201, %203, %cst_75 {dimension_numbers = #tpu.dot_dimension_numbers<[1], [0], [0], [1], [0, 0, 1, 1], [], []>} : vector<8x32xbf16>, vector<32x96xbf16>, vector<8x96xf32> -> vector<8x96xf32>
    %c10 = arith.constant 10 : index
    %c0_76 = arith.constant 0 : index
    %205 = vector.load %arg6[%c10, %c0_76] : memref<56x128xf32, #tpu.memory_space<vmem>>, vector<1x96xf32>
    %206 = vector.broadcast %205 : vector<1x96xf32> to vector<8x96xf32>
    %207 = arith.addf %204, %206 : vector<8x96xf32>
    %208 = vector.extract_strided_slice %207 {offsets = [0, 0], sizes = [8, 32], strides = [1, 1]} : vector<8x96xf32> to vector<8x32xf32>
    %209 = vector.extract_strided_slice %207 {offsets = [0, 32], sizes = [8, 32], strides = [1, 1]} : vector<8x96xf32> to vector<8x32xf32>
    %210 = vector.extract_strided_slice %207 {offsets = [0, 64], sizes = [8, 32], strides = [1, 1]} : vector<8x96xf32> to vector<8x32xf32>
    %c5_77 = arith.constant 5 : index
    %c0_78 = arith.constant 0 : index
    %c0_79 = arith.constant 0 : index
    %211 = vector.load %arg5[%c5_77, %c0_78, %c0_79] : memref<23x64x128xbf16, #tpu.memory_space<vmem>>, vector<1x32x32xbf16>
    %212 = vector.shape_cast %211 : vector<1x32x32xbf16> to vector<32x32xbf16>
    %213 = arith.extf %212 : vector<32x32xbf16> to vector<32x32xf32>
    %214 = vector.extract_strided_slice %208 {offsets = [0, 0], sizes = [8, 8], strides = [1, 1]} : vector<8x32xf32> to vector<8x8xf32>
    %215 = vector.extract_strided_slice %209 {offsets = [0, 0], sizes = [8, 8], strides = [1, 1]} : vector<8x32xf32> to vector<8x8xf32>
    %cst_80 = arith.constant dense<0.000000e+00> : vector<8x8xf32>
    %216 = tpu.matmul %214, %215, %cst_80 {dimension_numbers = #tpu.dot_dimension_numbers<[1], [1], [0], [0], [0, 0, 1, 0], [], []>} : vector<8x8xf32>, vector<8x8xf32>, vector<8x8xf32> -> vector<8x8xf32>
    %cst_81 = arith.constant 0.353553385 : f32
    %217 = vector.broadcast %cst_81 : f32 to vector<8x8xf32>
    %218 = arith.mulf %216, %217 : vector<8x8xf32>
    %219 = vector.broadcast %5 : vector<1x8xf32> to vector<8x8xf32>
    %220 = arith.addf %218, %219 : vector<8x8xf32>
    %cst_82 = arith.constant dense<0xFF800000> : vector<8xf32>
    %221 = vector.multi_reduction <maximumf>, %220, %cst_82 [1] : vector<8x8xf32> to vector<8xf32>
    %222 = vector.shape_cast %221 : vector<8xf32> to vector<8x1xf32>
    %223 = vector.broadcast %222 : vector<8x1xf32> to vector<8x8xf32>
    %224 = arith.subf %220, %223 : vector<8x8xf32>
    %225 = math.exp %224 : vector<8x8xf32>
    %cst_83 = arith.constant dense<0.000000e+00> : vector<8xf32>
    %226 = vector.multi_reduction <add>, %225, %cst_83 [1] : vector<8x8xf32> to vector<8xf32>
    %227 = vector.shape_cast %226 : vector<8xf32> to vector<8x1xf32>
    %228 = tpu.reciprocal %227 {approx = true} : vector<8x1xf32> -> vector<8x1xf32>
    %229 = vector.broadcast %228 : vector<8x1xf32> to vector<8x8xf32>
    %230 = arith.mulf %225, %229 : vector<8x8xf32>
    %231 = vector.extract_strided_slice %210 {offsets = [0, 0], sizes = [8, 8], strides = [1, 1]} : vector<8x32xf32> to vector<8x8xf32>
    %cst_84 = arith.constant dense<0.000000e+00> : vector<8x8xf32>
    %232 = tpu.matmul %230, %231, %cst_84 {dimension_numbers = #tpu.dot_dimension_numbers<[1], [0], [0], [1], [0, 0, 1, 1], [], []>} : vector<8x8xf32>, vector<8x8xf32>, vector<8x8xf32> -> vector<8x8xf32>
    %233 = vector.extract_strided_slice %213 {offsets = [0, 0], sizes = [8, 32], strides = [1, 1]} : vector<32x32xf32> to vector<8x32xf32>
    %cst_85 = arith.constant dense<0.000000e+00> : vector<8x32xf32>
    %234 = tpu.matmul %232, %233, %cst_85 {dimension_numbers = #tpu.dot_dimension_numbers<[1], [0], [0], [1], [0, 0, 1, 1], [], []>} : vector<8x8xf32>, vector<8x32xf32>, vector<8x32xf32> -> vector<8x32xf32>
    %235 = vector.extract_strided_slice %208 {offsets = [0, 8], sizes = [8, 8], strides = [1, 1]} : vector<8x32xf32> to vector<8x8xf32>
    %236 = vector.extract_strided_slice %209 {offsets = [0, 8], sizes = [8, 8], strides = [1, 1]} : vector<8x32xf32> to vector<8x8xf32>
    %cst_86 = arith.constant dense<0.000000e+00> : vector<8x8xf32>
    %237 = tpu.matmul %235, %236, %cst_86 {dimension_numbers = #tpu.dot_dimension_numbers<[1], [1], [0], [0], [0, 0, 1, 0], [], []>} : vector<8x8xf32>, vector<8x8xf32>, vector<8x8xf32> -> vector<8x8xf32>
    %cst_87 = arith.constant 0.353553385 : f32
    %238 = vector.broadcast %cst_87 : f32 to vector<8x8xf32>
    %239 = arith.mulf %237, %238 : vector<8x8xf32>
    %240 = vector.broadcast %5 : vector<1x8xf32> to vector<8x8xf32>
    %241 = arith.addf %239, %240 : vector<8x8xf32>
    %cst_88 = arith.constant dense<0xFF800000> : vector<8xf32>
    %242 = vector.multi_reduction <maximumf>, %241, %cst_88 [1] : vector<8x8xf32> to vector<8xf32>
    %243 = vector.shape_cast %242 : vector<8xf32> to vector<8x1xf32>
    %244 = vector.broadcast %243 : vector<8x1xf32> to vector<8x8xf32>
    %245 = arith.subf %241, %244 : vector<8x8xf32>
    %246 = math.exp %245 : vector<8x8xf32>
    %cst_89 = arith.constant dense<0.000000e+00> : vector<8xf32>
    %247 = vector.multi_reduction <add>, %246, %cst_89 [1] : vector<8x8xf32> to vector<8xf32>
    %248 = vector.shape_cast %247 : vector<8xf32> to vector<8x1xf32>
    %249 = tpu.reciprocal %248 {approx = true} : vector<8x1xf32> -> vector<8x1xf32>
    %250 = vector.broadcast %249 : vector<8x1xf32> to vector<8x8xf32>
    %251 = arith.mulf %246, %250 : vector<8x8xf32>
    %252 = vector.extract_strided_slice %210 {offsets = [0, 8], sizes = [8, 8], strides = [1, 1]} : vector<8x32xf32> to vector<8x8xf32>
    %cst_90 = arith.constant dense<0.000000e+00> : vector<8x8xf32>
    %253 = tpu.matmul %251, %252, %cst_90 {dimension_numbers = #tpu.dot_dimension_numbers<[1], [0], [0], [1], [0, 0, 1, 1], [], []>} : vector<8x8xf32>, vector<8x8xf32>, vector<8x8xf32> -> vector<8x8xf32>
    %254 = vector.extract_strided_slice %213 {offsets = [8, 0], sizes = [8, 32], strides = [1, 1]} : vector<32x32xf32> to vector<8x32xf32>
    %cst_91 = arith.constant dense<0.000000e+00> : vector<8x32xf32>
    %255 = tpu.matmul %253, %254, %cst_91 {dimension_numbers = #tpu.dot_dimension_numbers<[1], [0], [0], [1], [0, 0, 1, 1], [], []>} : vector<8x8xf32>, vector<8x32xf32>, vector<8x32xf32> -> vector<8x32xf32>
    %256 = arith.addf %234, %255 : vector<8x32xf32>
    %257 = vector.extract_strided_slice %208 {offsets = [0, 16], sizes = [8, 8], strides = [1, 1]} : vector<8x32xf32> to vector<8x8xf32>
    %258 = vector.extract_strided_slice %209 {offsets = [0, 16], sizes = [8, 8], strides = [1, 1]} : vector<8x32xf32> to vector<8x8xf32>
    %cst_92 = arith.constant dense<0.000000e+00> : vector<8x8xf32>
    %259 = tpu.matmul %257, %258, %cst_92 {dimension_numbers = #tpu.dot_dimension_numbers<[1], [1], [0], [0], [0, 0, 1, 0], [], []>} : vector<8x8xf32>, vector<8x8xf32>, vector<8x8xf32> -> vector<8x8xf32>
    %cst_93 = arith.constant 0.353553385 : f32
    %260 = vector.broadcast %cst_93 : f32 to vector<8x8xf32>
    %261 = arith.mulf %259, %260 : vector<8x8xf32>
    %262 = vector.broadcast %5 : vector<1x8xf32> to vector<8x8xf32>
    %263 = arith.addf %261, %262 : vector<8x8xf32>
    %cst_94 = arith.constant dense<0xFF800000> : vector<8xf32>
    %264 = vector.multi_reduction <maximumf>, %263, %cst_94 [1] : vector<8x8xf32> to vector<8xf32>
    %265 = vector.shape_cast %264 : vector<8xf32> to vector<8x1xf32>
    %266 = vector.broadcast %265 : vector<8x1xf32> to vector<8x8xf32>
    %267 = arith.subf %263, %266 : vector<8x8xf32>
    %268 = math.exp %267 : vector<8x8xf32>
    %cst_95 = arith.constant dense<0.000000e+00> : vector<8xf32>
    %269 = vector.multi_reduction <add>, %268, %cst_95 [1] : vector<8x8xf32> to vector<8xf32>
    %270 = vector.shape_cast %269 : vector<8xf32> to vector<8x1xf32>
    %271 = tpu.reciprocal %270 {approx = true} : vector<8x1xf32> -> vector<8x1xf32>
    %272 = vector.broadcast %271 : vector<8x1xf32> to vector<8x8xf32>
    %273 = arith.mulf %268, %272 : vector<8x8xf32>
    %274 = vector.extract_strided_slice %210 {offsets = [0, 16], sizes = [8, 8], strides = [1, 1]} : vector<8x32xf32> to vector<8x8xf32>
    %cst_96 = arith.constant dense<0.000000e+00> : vector<8x8xf32>
    %275 = tpu.matmul %273, %274, %cst_96 {dimension_numbers = #tpu.dot_dimension_numbers<[1], [0], [0], [1], [0, 0, 1, 1], [], []>} : vector<8x8xf32>, vector<8x8xf32>, vector<8x8xf32> -> vector<8x8xf32>
    %276 = vector.extract_strided_slice %213 {offsets = [16, 0], sizes = [8, 32], strides = [1, 1]} : vector<32x32xf32> to vector<8x32xf32>
    %cst_97 = arith.constant dense<0.000000e+00> : vector<8x32xf32>
    %277 = tpu.matmul %275, %276, %cst_97 {dimension_numbers = #tpu.dot_dimension_numbers<[1], [0], [0], [1], [0, 0, 1, 1], [], []>} : vector<8x8xf32>, vector<8x32xf32>, vector<8x32xf32> -> vector<8x32xf32>
    %278 = arith.addf %256, %277 : vector<8x32xf32>
    %279 = vector.extract_strided_slice %208 {offsets = [0, 24], sizes = [8, 8], strides = [1, 1]} : vector<8x32xf32> to vector<8x8xf32>
    %280 = vector.extract_strided_slice %209 {offsets = [0, 24], sizes = [8, 8], strides = [1, 1]} : vector<8x32xf32> to vector<8x8xf32>
    %cst_98 = arith.constant dense<0.000000e+00> : vector<8x8xf32>
    %281 = tpu.matmul %279, %280, %cst_98 {dimension_numbers = #tpu.dot_dimension_numbers<[1], [1], [0], [0], [0, 0, 1, 0], [], []>} : vector<8x8xf32>, vector<8x8xf32>, vector<8x8xf32> -> vector<8x8xf32>
    %cst_99 = arith.constant 0.353553385 : f32
    %282 = vector.broadcast %cst_99 : f32 to vector<8x8xf32>
    %283 = arith.mulf %281, %282 : vector<8x8xf32>
    %284 = vector.broadcast %5 : vector<1x8xf32> to vector<8x8xf32>
    %285 = arith.addf %283, %284 : vector<8x8xf32>
    %cst_100 = arith.constant dense<0xFF800000> : vector<8xf32>
    %286 = vector.multi_reduction <maximumf>, %285, %cst_100 [1] : vector<8x8xf32> to vector<8xf32>
    %287 = vector.shape_cast %286 : vector<8xf32> to vector<8x1xf32>
    %288 = vector.broadcast %287 : vector<8x1xf32> to vector<8x8xf32>
    %289 = arith.subf %285, %288 : vector<8x8xf32>
    %290 = math.exp %289 : vector<8x8xf32>
    %cst_101 = arith.constant dense<0.000000e+00> : vector<8xf32>
    %291 = vector.multi_reduction <add>, %290, %cst_101 [1] : vector<8x8xf32> to vector<8xf32>
    %292 = vector.shape_cast %291 : vector<8xf32> to vector<8x1xf32>
    %293 = tpu.reciprocal %292 {approx = true} : vector<8x1xf32> -> vector<8x1xf32>
    %294 = vector.broadcast %293 : vector<8x1xf32> to vector<8x8xf32>
    %295 = arith.mulf %290, %294 : vector<8x8xf32>
    %296 = vector.extract_strided_slice %210 {offsets = [0, 24], sizes = [8, 8], strides = [1, 1]} : vector<8x32xf32> to vector<8x8xf32>
    %cst_102 = arith.constant dense<0.000000e+00> : vector<8x8xf32>
    %297 = tpu.matmul %295, %296, %cst_102 {dimension_numbers = #tpu.dot_dimension_numbers<[1], [0], [0], [1], [0, 0, 1, 1], [], []>} : vector<8x8xf32>, vector<8x8xf32>, vector<8x8xf32> -> vector<8x8xf32>
    %298 = vector.extract_strided_slice %213 {offsets = [24, 0], sizes = [8, 32], strides = [1, 1]} : vector<32x32xf32> to vector<8x32xf32>
    %cst_103 = arith.constant dense<0.000000e+00> : vector<8x32xf32>
    %299 = tpu.matmul %297, %298, %cst_103 {dimension_numbers = #tpu.dot_dimension_numbers<[1], [0], [0], [1], [0, 0, 1, 1], [], []>} : vector<8x8xf32>, vector<8x32xf32>, vector<8x32xf32> -> vector<8x32xf32>
    %300 = arith.addf %278, %299 : vector<8x32xf32>
    %301 = arith.addf %176, %300 : vector<8x32xf32>
    %c11 = arith.constant 11 : index
    %c0_104 = arith.constant 0 : index
    %302 = vector.load %arg6[%c11, %c0_104] : memref<56x128xf32, #tpu.memory_space<vmem>>, vector<1x32xf32>
    %303 = vector.broadcast %302 : vector<1x32xf32> to vector<8x32xf32>
    %304 = arith.addf %301, %303 : vector<8x32xf32>
    %c12 = arith.constant 12 : index
    %c0_105 = arith.constant 0 : index
    %305 = vector.load %arg6[%c12, %c0_105] : memref<56x128xf32, #tpu.memory_space<vmem>>, vector<1x32xf32>
    %c13 = arith.constant 13 : index
    %c0_106 = arith.constant 0 : index
    %306 = vector.load %arg6[%c13, %c0_106] : memref<56x128xf32, #tpu.memory_space<vmem>>, vector<1x32xf32>
    %cst_107 = arith.constant dense<0.000000e+00> : vector<8xf32>
    %307 = vector.multi_reduction <add>, %304, %cst_107 [1] : vector<8x32xf32> to vector<8xf32>
    %308 = vector.shape_cast %307 : vector<8xf32> to vector<8x1xf32>
    %cst_108 = arith.constant 3.200000e+01 : f32
    %309 = vector.broadcast %cst_108 : f32 to vector<8x1xf32>
    %310 = arith.divf %308, %309 : vector<8x1xf32>
    %311 = vector.broadcast %310 : vector<8x1xf32> to vector<8x32xf32>
    %312 = arith.subf %304, %311 : vector<8x32xf32>
    %313 = arith.mulf %312, %312 : vector<8x32xf32>
    %cst_109 = arith.constant dense<0.000000e+00> : vector<8xf32>
    %314 = vector.multi_reduction <add>, %313, %cst_109 [1] : vector<8x32xf32> to vector<8xf32>
    %315 = vector.shape_cast %314 : vector<8xf32> to vector<8x1xf32>
    %cst_110 = arith.constant 3.200000e+01 : f32
    %316 = vector.broadcast %cst_110 : f32 to vector<8x1xf32>
    %317 = arith.divf %315, %316 : vector<8x1xf32>
    %318 = vector.broadcast %310 : vector<8x1xf32> to vector<8x32xf32>
    %319 = arith.subf %304, %318 : vector<8x32xf32>
    %cst_111 = arith.constant 9.99999997E-7 : f32
    %320 = vector.broadcast %cst_111 : f32 to vector<8x1xf32>
    %321 = arith.addf %317, %320 : vector<8x1xf32>
    %322 = math.rsqrt %321 : vector<8x1xf32>
    %323 = vector.broadcast %322 : vector<8x1xf32> to vector<8x32xf32>
    %324 = arith.mulf %319, %323 : vector<8x32xf32>
    %325 = vector.broadcast %305 : vector<1x32xf32> to vector<8x32xf32>
    %326 = arith.mulf %324, %325 : vector<8x32xf32>
    %327 = vector.broadcast %306 : vector<1x32xf32> to vector<8x32xf32>
    %328 = arith.addf %326, %327 : vector<8x32xf32>
    %329 = arith.truncf %328 : vector<8x32xf32> to vector<8x32xbf16>
    %c6_112 = arith.constant 6 : index
    %c0_113 = arith.constant 0 : index
    %c0_114 = arith.constant 0 : index
    %330 = vector.load %arg5[%c6_112, %c0_113, %c0_114] : memref<23x64x128xbf16, #tpu.memory_space<vmem>>, vector<1x32x64xbf16>
    %331 = vector.shape_cast %330 : vector<1x32x64xbf16> to vector<32x64xbf16>
    %cst_115 = arith.constant dense<0.000000e+00> : vector<8x64xf32>
    %332 = tpu.matmul %329, %331, %cst_115 {dimension_numbers = #tpu.dot_dimension_numbers<[1], [0], [0], [1], [0, 0, 1, 1], [], []>} : vector<8x32xbf16>, vector<32x64xbf16>, vector<8x64xf32> -> vector<8x64xf32>
    %c14 = arith.constant 14 : index
    %c0_116 = arith.constant 0 : index
    %333 = vector.load %arg6[%c14, %c0_116] : memref<56x128xf32, #tpu.memory_space<vmem>>, vector<1x64xf32>
    %334 = vector.broadcast %333 : vector<1x64xf32> to vector<8x64xf32>
    %335 = arith.addf %332, %334 : vector<8x64xf32>
    %cst_117 = arith.constant 0.000000e+00 : f32
    %336 = vector.broadcast %cst_117 : f32 to vector<8x64xf32>
    %337 = arith.maximumf %335, %336 : vector<8x64xf32>
    %338 = arith.truncf %337 : vector<8x64xf32> to vector<8x64xbf16>
    %c7_118 = arith.constant 7 : index
    %c0_119 = arith.constant 0 : index
    %c0_120 = arith.constant 0 : index
    %339 = vector.load %arg5[%c7_118, %c0_119, %c0_120] : memref<23x64x128xbf16, #tpu.memory_space<vmem>>, vector<1x64x32xbf16>
    %340 = vector.shape_cast %339 : vector<1x64x32xbf16> to vector<64x32xbf16>
    %cst_121 = arith.constant dense<0.000000e+00> : vector<8x32xf32>
    %341 = tpu.matmul %338, %340, %cst_121 {dimension_numbers = #tpu.dot_dimension_numbers<[1], [0], [0], [1], [0, 0, 1, 1], [], []>} : vector<8x64xbf16>, vector<64x32xbf16>, vector<8x32xf32> -> vector<8x32xf32>
    %342 = arith.addf %304, %341 : vector<8x32xf32>
    %c15 = arith.constant 15 : index
    %c0_122 = arith.constant 0 : index
    %343 = vector.load %arg6[%c15, %c0_122] : memref<56x128xf32, #tpu.memory_space<vmem>>, vector<1x32xf32>
    %344 = vector.broadcast %343 : vector<1x32xf32> to vector<8x32xf32>
    %345 = arith.addf %342, %344 : vector<8x32xf32>
    %c16 = arith.constant 16 : index
    %c0_123 = arith.constant 0 : index
    %346 = vector.load %arg6[%c16, %c0_123] : memref<56x128xf32, #tpu.memory_space<vmem>>, vector<1x32xf32>
    %c17 = arith.constant 17 : index
    %c0_124 = arith.constant 0 : index
    %347 = vector.load %arg6[%c17, %c0_124] : memref<56x128xf32, #tpu.memory_space<vmem>>, vector<1x32xf32>
    %cst_125 = arith.constant dense<0.000000e+00> : vector<8xf32>
    %348 = vector.multi_reduction <add>, %345, %cst_125 [1] : vector<8x32xf32> to vector<8xf32>
    %349 = vector.shape_cast %348 : vector<8xf32> to vector<8x1xf32>
    %cst_126 = arith.constant 3.200000e+01 : f32
    %350 = vector.broadcast %cst_126 : f32 to vector<8x1xf32>
    %351 = arith.divf %349, %350 : vector<8x1xf32>
    %352 = vector.broadcast %351 : vector<8x1xf32> to vector<8x32xf32>
    %353 = arith.subf %345, %352 : vector<8x32xf32>
    %354 = arith.mulf %353, %353 : vector<8x32xf32>
    %cst_127 = arith.constant dense<0.000000e+00> : vector<8xf32>
    %355 = vector.multi_reduction <add>, %354, %cst_127 [1] : vector<8x32xf32> to vector<8xf32>
    %356 = vector.shape_cast %355 : vector<8xf32> to vector<8x1xf32>
    %cst_128 = arith.constant 3.200000e+01 : f32
    %357 = vector.broadcast %cst_128 : f32 to vector<8x1xf32>
    %358 = arith.divf %356, %357 : vector<8x1xf32>
    %359 = vector.broadcast %351 : vector<8x1xf32> to vector<8x32xf32>
    %360 = arith.subf %345, %359 : vector<8x32xf32>
    %cst_129 = arith.constant 9.99999997E-7 : f32
    %361 = vector.broadcast %cst_129 : f32 to vector<8x1xf32>
    %362 = arith.addf %358, %361 : vector<8x1xf32>
    %363 = math.rsqrt %362 : vector<8x1xf32>
    %364 = vector.broadcast %363 : vector<8x1xf32> to vector<8x32xf32>
    %365 = arith.mulf %360, %364 : vector<8x32xf32>
    %366 = vector.broadcast %346 : vector<1x32xf32> to vector<8x32xf32>
    %367 = arith.mulf %365, %366 : vector<8x32xf32>
    %368 = vector.broadcast %347 : vector<1x32xf32> to vector<8x32xf32>
    %369 = arith.addf %367, %368 : vector<8x32xf32>
    %370 = arith.truncf %369 : vector<8x32xf32> to vector<8x32xbf16>
    %371 = tpu.iota {dimensions = array<i32: 0>} : vector<8x8xi32>
    %372 = tpu.iota {dimensions = array<i32: 1>} : vector<8x8xi32>
    %373 = arith.cmpi sle, %372, %371 : vector<8x8xi32>
    %cst_130 = arith.constant 0.000000e+00 : f32
    %cst_131 = arith.constant -1.000000e+09 : f32
    %374 = vector.broadcast %cst_130 : f32 to vector<8x8xf32>
    %375 = vector.broadcast %cst_131 : f32 to vector<8x8xf32>
    %376 = arith.select %373, %374, %375 : vector<8x8xi1>, vector<8x8xf32>
    %c0_132 = arith.constant 0 : index
    %c0_133 = arith.constant 0 : index
    %c0_134 = arith.constant 0 : index
    %377 = vector.load %arg2[%c0_132, %c0_133, %c0_134] : memref<1x8x32xf32, #tpu.memory_space<vmem>>, vector<1x8x32xf32>
    %378 = vector.shape_cast %377 : vector<1x8x32xf32> to vector<8x32xf32>
    %c18 = arith.constant 18 : index
    %c0_135 = arith.constant 0 : index
    %379 = vector.load %arg6[%c18, %c0_135] : memref<56x128xf32, #tpu.memory_space<vmem>>, vector<1x32xf32>
    %c19 = arith.constant 19 : index
    %c0_136 = arith.constant 0 : index
    %380 = vector.load %arg6[%c19, %c0_136] : memref<56x128xf32, #tpu.memory_space<vmem>>, vector<1x32xf32>
    %cst_137 = arith.constant dense<0.000000e+00> : vector<8xf32>
    %381 = vector.multi_reduction <add>, %378, %cst_137 [1] : vector<8x32xf32> to vector<8xf32>
    %382 = vector.shape_cast %381 : vector<8xf32> to vector<8x1xf32>
    %cst_138 = arith.constant 3.200000e+01 : f32
    %383 = vector.broadcast %cst_138 : f32 to vector<8x1xf32>
    %384 = arith.divf %382, %383 : vector<8x1xf32>
    %385 = vector.broadcast %384 : vector<8x1xf32> to vector<8x32xf32>
    %386 = arith.subf %378, %385 : vector<8x32xf32>
    %387 = arith.mulf %386, %386 : vector<8x32xf32>
    %cst_139 = arith.constant dense<0.000000e+00> : vector<8xf32>
    %388 = vector.multi_reduction <add>, %387, %cst_139 [1] : vector<8x32xf32> to vector<8xf32>
    %389 = vector.shape_cast %388 : vector<8xf32> to vector<8x1xf32>
    %cst_140 = arith.constant 3.200000e+01 : f32
    %390 = vector.broadcast %cst_140 : f32 to vector<8x1xf32>
    %391 = arith.divf %389, %390 : vector<8x1xf32>
    %392 = vector.broadcast %384 : vector<8x1xf32> to vector<8x32xf32>
    %393 = arith.subf %378, %392 : vector<8x32xf32>
    %cst_141 = arith.constant 9.99999997E-7 : f32
    %394 = vector.broadcast %cst_141 : f32 to vector<8x1xf32>
    %395 = arith.addf %391, %394 : vector<8x1xf32>
    %396 = math.rsqrt %395 : vector<8x1xf32>
    %397 = vector.broadcast %396 : vector<8x1xf32> to vector<8x32xf32>
    %398 = arith.mulf %393, %397 : vector<8x32xf32>
    %399 = vector.broadcast %379 : vector<1x32xf32> to vector<8x32xf32>
    %400 = arith.mulf %398, %399 : vector<8x32xf32>
    %401 = vector.broadcast %380 : vector<1x32xf32> to vector<8x32xf32>
    %402 = arith.addf %400, %401 : vector<8x32xf32>
    %403 = arith.truncf %402 : vector<8x32xf32> to vector<8x32xbf16>
    %c8_142 = arith.constant 8 : index
    %c0_143 = arith.constant 0 : index
    %c0_144 = arith.constant 0 : index
    %404 = vector.load %arg5[%c8_142, %c0_143, %c0_144] : memref<23x64x128xbf16, #tpu.memory_space<vmem>>, vector<1x32x96xbf16>
    %405 = vector.shape_cast %404 : vector<1x32x96xbf16> to vector<32x96xbf16>
    %cst_145 = arith.constant dense<0.000000e+00> : vector<8x96xf32>
    %406 = tpu.matmul %403, %405, %cst_145 {dimension_numbers = #tpu.dot_dimension_numbers<[1], [0], [0], [1], [0, 0, 1, 1], [], []>} : vector<8x32xbf16>, vector<32x96xbf16>, vector<8x96xf32> -> vector<8x96xf32>
    %c20 = arith.constant 20 : index
    %c0_146 = arith.constant 0 : index
    %407 = vector.load %arg6[%c20, %c0_146] : memref<56x128xf32, #tpu.memory_space<vmem>>, vector<1x96xf32>
    %408 = vector.broadcast %407 : vector<1x96xf32> to vector<8x96xf32>
    %409 = arith.addf %406, %408 : vector<8x96xf32>
    %410 = vector.extract_strided_slice %409 {offsets = [0, 0], sizes = [8, 32], strides = [1, 1]} : vector<8x96xf32> to vector<8x32xf32>
    %411 = vector.extract_strided_slice %409 {offsets = [0, 32], sizes = [8, 32], strides = [1, 1]} : vector<8x96xf32> to vector<8x32xf32>
    %412 = vector.extract_strided_slice %409 {offsets = [0, 64], sizes = [8, 32], strides = [1, 1]} : vector<8x96xf32> to vector<8x32xf32>
    %c9_147 = arith.constant 9 : index
    %c0_148 = arith.constant 0 : index
    %c0_149 = arith.constant 0 : index
    %413 = vector.load %arg5[%c9_147, %c0_148, %c0_149] : memref<23x64x128xbf16, #tpu.memory_space<vmem>>, vector<1x32x32xbf16>
    %414 = vector.shape_cast %413 : vector<1x32x32xbf16> to vector<32x32xbf16>
    %415 = arith.extf %414 : vector<32x32xbf16> to vector<32x32xf32>
    %416 = vector.extract_strided_slice %410 {offsets = [0, 0], sizes = [8, 8], strides = [1, 1]} : vector<8x32xf32> to vector<8x8xf32>
    %417 = vector.extract_strided_slice %411 {offsets = [0, 0], sizes = [8, 8], strides = [1, 1]} : vector<8x32xf32> to vector<8x8xf32>
    %cst_150 = arith.constant dense<0.000000e+00> : vector<8x8xf32>
    %418 = tpu.matmul %416, %417, %cst_150 {dimension_numbers = #tpu.dot_dimension_numbers<[1], [1], [0], [0], [0, 0, 1, 0], [], []>} : vector<8x8xf32>, vector<8x8xf32>, vector<8x8xf32> -> vector<8x8xf32>
    %cst_151 = arith.constant 0.353553385 : f32
    %419 = vector.broadcast %cst_151 : f32 to vector<8x8xf32>
    %420 = arith.mulf %418, %419 : vector<8x8xf32>
    %421 = arith.addf %420, %376 : vector<8x8xf32>
    %cst_152 = arith.constant dense<0xFF800000> : vector<8xf32>
    %422 = vector.multi_reduction <maximumf>, %421, %cst_152 [1] : vector<8x8xf32> to vector<8xf32>
    %423 = vector.shape_cast %422 : vector<8xf32> to vector<8x1xf32>
    %424 = vector.broadcast %423 : vector<8x1xf32> to vector<8x8xf32>
    %425 = arith.subf %421, %424 : vector<8x8xf32>
    %426 = math.exp %425 : vector<8x8xf32>
    %cst_153 = arith.constant dense<0.000000e+00> : vector<8xf32>
    %427 = vector.multi_reduction <add>, %426, %cst_153 [1] : vector<8x8xf32> to vector<8xf32>
    %428 = vector.shape_cast %427 : vector<8xf32> to vector<8x1xf32>
    %429 = tpu.reciprocal %428 {approx = true} : vector<8x1xf32> -> vector<8x1xf32>
    %430 = vector.broadcast %429 : vector<8x1xf32> to vector<8x8xf32>
    %431 = arith.mulf %426, %430 : vector<8x8xf32>
    %432 = vector.extract_strided_slice %412 {offsets = [0, 0], sizes = [8, 8], strides = [1, 1]} : vector<8x32xf32> to vector<8x8xf32>
    %cst_154 = arith.constant dense<0.000000e+00> : vector<8x8xf32>
    %433 = tpu.matmul %431, %432, %cst_154 {dimension_numbers = #tpu.dot_dimension_numbers<[1], [0], [0], [1], [0, 0, 1, 1], [], []>} : vector<8x8xf32>, vector<8x8xf32>, vector<8x8xf32> -> vector<8x8xf32>
    %434 = vector.extract_strided_slice %415 {offsets = [0, 0], sizes = [8, 32], strides = [1, 1]} : vector<32x32xf32> to vector<8x32xf32>
    %cst_155 = arith.constant dense<0.000000e+00> : vector<8x32xf32>
    %435 = tpu.matmul %433, %434, %cst_155 {dimension_numbers = #tpu.dot_dimension_numbers<[1], [0], [0], [1], [0, 0, 1, 1], [], []>} : vector<8x8xf32>, vector<8x32xf32>, vector<8x32xf32> -> vector<8x32xf32>
    %436 = vector.extract_strided_slice %410 {offsets = [0, 8], sizes = [8, 8], strides = [1, 1]} : vector<8x32xf32> to vector<8x8xf32>
    %437 = vector.extract_strided_slice %411 {offsets = [0, 8], sizes = [8, 8], strides = [1, 1]} : vector<8x32xf32> to vector<8x8xf32>
    %cst_156 = arith.constant dense<0.000000e+00> : vector<8x8xf32>
    %438 = tpu.matmul %436, %437, %cst_156 {dimension_numbers = #tpu.dot_dimension_numbers<[1], [1], [0], [0], [0, 0, 1, 0], [], []>} : vector<8x8xf32>, vector<8x8xf32>, vector<8x8xf32> -> vector<8x8xf32>
    %cst_157 = arith.constant 0.353553385 : f32
    %439 = vector.broadcast %cst_157 : f32 to vector<8x8xf32>
    %440 = arith.mulf %438, %439 : vector<8x8xf32>
    %441 = arith.addf %440, %376 : vector<8x8xf32>
    %cst_158 = arith.constant dense<0xFF800000> : vector<8xf32>
    %442 = vector.multi_reduction <maximumf>, %441, %cst_158 [1] : vector<8x8xf32> to vector<8xf32>
    %443 = vector.shape_cast %442 : vector<8xf32> to vector<8x1xf32>
    %444 = vector.broadcast %443 : vector<8x1xf32> to vector<8x8xf32>
    %445 = arith.subf %441, %444 : vector<8x8xf32>
    %446 = math.exp %445 : vector<8x8xf32>
    %cst_159 = arith.constant dense<0.000000e+00> : vector<8xf32>
    %447 = vector.multi_reduction <add>, %446, %cst_159 [1] : vector<8x8xf32> to vector<8xf32>
    %448 = vector.shape_cast %447 : vector<8xf32> to vector<8x1xf32>
    %449 = tpu.reciprocal %448 {approx = true} : vector<8x1xf32> -> vector<8x1xf32>
    %450 = vector.broadcast %449 : vector<8x1xf32> to vector<8x8xf32>
    %451 = arith.mulf %446, %450 : vector<8x8xf32>
    %452 = vector.extract_strided_slice %412 {offsets = [0, 8], sizes = [8, 8], strides = [1, 1]} : vector<8x32xf32> to vector<8x8xf32>
    %cst_160 = arith.constant dense<0.000000e+00> : vector<8x8xf32>
    %453 = tpu.matmul %451, %452, %cst_160 {dimension_numbers = #tpu.dot_dimension_numbers<[1], [0], [0], [1], [0, 0, 1, 1], [], []>} : vector<8x8xf32>, vector<8x8xf32>, vector<8x8xf32> -> vector<8x8xf32>
    %454 = vector.extract_strided_slice %415 {offsets = [8, 0], sizes = [8, 32], strides = [1, 1]} : vector<32x32xf32> to vector<8x32xf32>
    %cst_161 = arith.constant dense<0.000000e+00> : vector<8x32xf32>
    %455 = tpu.matmul %453, %454, %cst_161 {dimension_numbers = #tpu.dot_dimension_numbers<[1], [0], [0], [1], [0, 0, 1, 1], [], []>} : vector<8x8xf32>, vector<8x32xf32>, vector<8x32xf32> -> vector<8x32xf32>
    %456 = arith.addf %435, %455 : vector<8x32xf32>
    %457 = vector.extract_strided_slice %410 {offsets = [0, 16], sizes = [8, 8], strides = [1, 1]} : vector<8x32xf32> to vector<8x8xf32>
    %458 = vector.extract_strided_slice %411 {offsets = [0, 16], sizes = [8, 8], strides = [1, 1]} : vector<8x32xf32> to vector<8x8xf32>
    %cst_162 = arith.constant dense<0.000000e+00> : vector<8x8xf32>
    %459 = tpu.matmul %457, %458, %cst_162 {dimension_numbers = #tpu.dot_dimension_numbers<[1], [1], [0], [0], [0, 0, 1, 0], [], []>} : vector<8x8xf32>, vector<8x8xf32>, vector<8x8xf32> -> vector<8x8xf32>
    %cst_163 = arith.constant 0.353553385 : f32
    %460 = vector.broadcast %cst_163 : f32 to vector<8x8xf32>
    %461 = arith.mulf %459, %460 : vector<8x8xf32>
    %462 = arith.addf %461, %376 : vector<8x8xf32>
    %cst_164 = arith.constant dense<0xFF800000> : vector<8xf32>
    %463 = vector.multi_reduction <maximumf>, %462, %cst_164 [1] : vector<8x8xf32> to vector<8xf32>
    %464 = vector.shape_cast %463 : vector<8xf32> to vector<8x1xf32>
    %465 = vector.broadcast %464 : vector<8x1xf32> to vector<8x8xf32>
    %466 = arith.subf %462, %465 : vector<8x8xf32>
    %467 = math.exp %466 : vector<8x8xf32>
    %cst_165 = arith.constant dense<0.000000e+00> : vector<8xf32>
    %468 = vector.multi_reduction <add>, %467, %cst_165 [1] : vector<8x8xf32> to vector<8xf32>
    %469 = vector.shape_cast %468 : vector<8xf32> to vector<8x1xf32>
    %470 = tpu.reciprocal %469 {approx = true} : vector<8x1xf32> -> vector<8x1xf32>
    %471 = vector.broadcast %470 : vector<8x1xf32> to vector<8x8xf32>
    %472 = arith.mulf %467, %471 : vector<8x8xf32>
    %473 = vector.extract_strided_slice %412 {offsets = [0, 16], sizes = [8, 8], strides = [1, 1]} : vector<8x32xf32> to vector<8x8xf32>
    %cst_166 = arith.constant dense<0.000000e+00> : vector<8x8xf32>
    %474 = tpu.matmul %472, %473, %cst_166 {dimension_numbers = #tpu.dot_dimension_numbers<[1], [0], [0], [1], [0, 0, 1, 1], [], []>} : vector<8x8xf32>, vector<8x8xf32>, vector<8x8xf32> -> vector<8x8xf32>
    %475 = vector.extract_strided_slice %415 {offsets = [16, 0], sizes = [8, 32], strides = [1, 1]} : vector<32x32xf32> to vector<8x32xf32>
    %cst_167 = arith.constant dense<0.000000e+00> : vector<8x32xf32>
    %476 = tpu.matmul %474, %475, %cst_167 {dimension_numbers = #tpu.dot_dimension_numbers<[1], [0], [0], [1], [0, 0, 1, 1], [], []>} : vector<8x8xf32>, vector<8x32xf32>, vector<8x32xf32> -> vector<8x32xf32>
    %477 = arith.addf %456, %476 : vector<8x32xf32>
    %478 = vector.extract_strided_slice %410 {offsets = [0, 24], sizes = [8, 8], strides = [1, 1]} : vector<8x32xf32> to vector<8x8xf32>
    %479 = vector.extract_strided_slice %411 {offsets = [0, 24], sizes = [8, 8], strides = [1, 1]} : vector<8x32xf32> to vector<8x8xf32>
    %cst_168 = arith.constant dense<0.000000e+00> : vector<8x8xf32>
    %480 = tpu.matmul %478, %479, %cst_168 {dimension_numbers = #tpu.dot_dimension_numbers<[1], [1], [0], [0], [0, 0, 1, 0], [], []>} : vector<8x8xf32>, vector<8x8xf32>, vector<8x8xf32> -> vector<8x8xf32>
    %cst_169 = arith.constant 0.353553385 : f32
    %481 = vector.broadcast %cst_169 : f32 to vector<8x8xf32>
    %482 = arith.mulf %480, %481 : vector<8x8xf32>
    %483 = arith.addf %482, %376 : vector<8x8xf32>
    %cst_170 = arith.constant dense<0xFF800000> : vector<8xf32>
    %484 = vector.multi_reduction <maximumf>, %483, %cst_170 [1] : vector<8x8xf32> to vector<8xf32>
    %485 = vector.shape_cast %484 : vector<8xf32> to vector<8x1xf32>
    %486 = vector.broadcast %485 : vector<8x1xf32> to vector<8x8xf32>
    %487 = arith.subf %483, %486 : vector<8x8xf32>
    %488 = math.exp %487 : vector<8x8xf32>
    %cst_171 = arith.constant dense<0.000000e+00> : vector<8xf32>
    %489 = vector.multi_reduction <add>, %488, %cst_171 [1] : vector<8x8xf32> to vector<8xf32>
    %490 = vector.shape_cast %489 : vector<8xf32> to vector<8x1xf32>
    %491 = tpu.reciprocal %490 {approx = true} : vector<8x1xf32> -> vector<8x1xf32>
    %492 = vector.broadcast %491 : vector<8x1xf32> to vector<8x8xf32>
    %493 = arith.mulf %488, %492 : vector<8x8xf32>
    %494 = vector.extract_strided_slice %412 {offsets = [0, 24], sizes = [8, 8], strides = [1, 1]} : vector<8x32xf32> to vector<8x8xf32>
    %cst_172 = arith.constant dense<0.000000e+00> : vector<8x8xf32>
    %495 = tpu.matmul %493, %494, %cst_172 {dimension_numbers = #tpu.dot_dimension_numbers<[1], [0], [0], [1], [0, 0, 1, 1], [], []>} : vector<8x8xf32>, vector<8x8xf32>, vector<8x8xf32> -> vector<8x8xf32>
    %496 = vector.extract_strided_slice %415 {offsets = [24, 0], sizes = [8, 32], strides = [1, 1]} : vector<32x32xf32> to vector<8x32xf32>
    %cst_173 = arith.constant dense<0.000000e+00> : vector<8x32xf32>
    %497 = tpu.matmul %495, %496, %cst_173 {dimension_numbers = #tpu.dot_dimension_numbers<[1], [0], [0], [1], [0, 0, 1, 1], [], []>} : vector<8x8xf32>, vector<8x32xf32>, vector<8x32xf32> -> vector<8x32xf32>
    %498 = arith.addf %477, %497 : vector<8x32xf32>
    %499 = arith.addf %378, %498 : vector<8x32xf32>
    %c21 = arith.constant 21 : index
    %c0_174 = arith.constant 0 : index
    %500 = vector.load %arg6[%c21, %c0_174] : memref<56x128xf32, #tpu.memory_space<vmem>>, vector<1x32xf32>
    %501 = vector.broadcast %500 : vector<1x32xf32> to vector<8x32xf32>
    %502 = arith.addf %499, %501 : vector<8x32xf32>
    %c22 = arith.constant 22 : index
    %c0_175 = arith.constant 0 : index
    %503 = vector.load %arg6[%c22, %c0_175] : memref<56x128xf32, #tpu.memory_space<vmem>>, vector<1x32xf32>
    %c23 = arith.constant 23 : index
    %c0_176 = arith.constant 0 : index
    %504 = vector.load %arg6[%c23, %c0_176] : memref<56x128xf32, #tpu.memory_space<vmem>>, vector<1x32xf32>
    %cst_177 = arith.constant dense<0.000000e+00> : vector<8xf32>
    %505 = vector.multi_reduction <add>, %502, %cst_177 [1] : vector<8x32xf32> to vector<8xf32>
    %506 = vector.shape_cast %505 : vector<8xf32> to vector<8x1xf32>
    %cst_178 = arith.constant 3.200000e+01 : f32
    %507 = vector.broadcast %cst_178 : f32 to vector<8x1xf32>
    %508 = arith.divf %506, %507 : vector<8x1xf32>
    %509 = vector.broadcast %508 : vector<8x1xf32> to vector<8x32xf32>
    %510 = arith.subf %502, %509 : vector<8x32xf32>
    %511 = arith.mulf %510, %510 : vector<8x32xf32>
    %cst_179 = arith.constant dense<0.000000e+00> : vector<8xf32>
    %512 = vector.multi_reduction <add>, %511, %cst_179 [1] : vector<8x32xf32> to vector<8xf32>
    %513 = vector.shape_cast %512 : vector<8xf32> to vector<8x1xf32>
    %cst_180 = arith.constant 3.200000e+01 : f32
    %514 = vector.broadcast %cst_180 : f32 to vector<8x1xf32>
    %515 = arith.divf %513, %514 : vector<8x1xf32>
    %516 = vector.broadcast %508 : vector<8x1xf32> to vector<8x32xf32>
    %517 = arith.subf %502, %516 : vector<8x32xf32>
    %cst_181 = arith.constant 9.99999997E-7 : f32
    %518 = vector.broadcast %cst_181 : f32 to vector<8x1xf32>
    %519 = arith.addf %515, %518 : vector<8x1xf32>
    %520 = math.rsqrt %519 : vector<8x1xf32>
    %521 = vector.broadcast %520 : vector<8x1xf32> to vector<8x32xf32>
    %522 = arith.mulf %517, %521 : vector<8x32xf32>
    %523 = vector.broadcast %503 : vector<1x32xf32> to vector<8x32xf32>
    %524 = arith.mulf %522, %523 : vector<8x32xf32>
    %525 = vector.broadcast %504 : vector<1x32xf32> to vector<8x32xf32>
    %526 = arith.addf %524, %525 : vector<8x32xf32>
    %527 = arith.truncf %526 : vector<8x32xf32> to vector<8x32xbf16>
    %c10_182 = arith.constant 10 : index
    %c0_183 = arith.constant 0 : index
    %c0_184 = arith.constant 0 : index
    %528 = vector.load %arg5[%c10_182, %c0_183, %c0_184] : memref<23x64x128xbf16, #tpu.memory_space<vmem>>, vector<1x32x32xbf16>
    %529 = vector.shape_cast %528 : vector<1x32x32xbf16> to vector<32x32xbf16>
    %cst_185 = arith.constant dense<0.000000e+00> : vector<8x32xf32>
    %530 = tpu.matmul %527, %529, %cst_185 {dimension_numbers = #tpu.dot_dimension_numbers<[1], [0], [0], [1], [0, 0, 1, 1], [], []>} : vector<8x32xbf16>, vector<32x32xbf16>, vector<8x32xf32> -> vector<8x32xf32>
    %c24 = arith.constant 24 : index
    %c0_186 = arith.constant 0 : index
    %531 = vector.load %arg6[%c24, %c0_186] : memref<56x128xf32, #tpu.memory_space<vmem>>, vector<1x32xf32>
    %532 = vector.broadcast %531 : vector<1x32xf32> to vector<8x32xf32>
    %533 = arith.addf %530, %532 : vector<8x32xf32>
    %c11_187 = arith.constant 11 : index
    %c0_188 = arith.constant 0 : index
    %c0_189 = arith.constant 0 : index
    %534 = vector.load %arg5[%c11_187, %c0_188, %c0_189] : memref<23x64x128xbf16, #tpu.memory_space<vmem>>, vector<1x32x64xbf16>
    %535 = vector.shape_cast %534 : vector<1x32x64xbf16> to vector<32x64xbf16>
    %cst_190 = arith.constant dense<0.000000e+00> : vector<8x64xf32>
    %536 = tpu.matmul %370, %535, %cst_190 {dimension_numbers = #tpu.dot_dimension_numbers<[1], [0], [0], [1], [0, 0, 1, 1], [], []>} : vector<8x32xbf16>, vector<32x64xbf16>, vector<8x64xf32> -> vector<8x64xf32>
    %c25 = arith.constant 25 : index
    %c0_191 = arith.constant 0 : index
    %537 = vector.load %arg6[%c25, %c0_191] : memref<56x128xf32, #tpu.memory_space<vmem>>, vector<1x64xf32>
    %538 = vector.broadcast %537 : vector<1x64xf32> to vector<8x64xf32>
    %539 = arith.addf %536, %538 : vector<8x64xf32>
    %540 = vector.extract_strided_slice %539 {offsets = [0, 0], sizes = [8, 32], strides = [1, 1]} : vector<8x64xf32> to vector<8x32xf32>
    %541 = vector.extract_strided_slice %539 {offsets = [0, 32], sizes = [8, 32], strides = [1, 1]} : vector<8x64xf32> to vector<8x32xf32>
    %c12_192 = arith.constant 12 : index
    %c0_193 = arith.constant 0 : index
    %c0_194 = arith.constant 0 : index
    %542 = vector.load %arg5[%c12_192, %c0_193, %c0_194] : memref<23x64x128xbf16, #tpu.memory_space<vmem>>, vector<1x32x32xbf16>
    %543 = vector.shape_cast %542 : vector<1x32x32xbf16> to vector<32x32xbf16>
    %544 = arith.extf %543 : vector<32x32xbf16> to vector<32x32xf32>
    %545 = vector.extract_strided_slice %533 {offsets = [0, 0], sizes = [8, 8], strides = [1, 1]} : vector<8x32xf32> to vector<8x8xf32>
    %546 = vector.extract_strided_slice %540 {offsets = [0, 0], sizes = [8, 8], strides = [1, 1]} : vector<8x32xf32> to vector<8x8xf32>
    %cst_195 = arith.constant dense<0.000000e+00> : vector<8x8xf32>
    %547 = tpu.matmul %545, %546, %cst_195 {dimension_numbers = #tpu.dot_dimension_numbers<[1], [1], [0], [0], [0, 0, 1, 0], [], []>} : vector<8x8xf32>, vector<8x8xf32>, vector<8x8xf32> -> vector<8x8xf32>
    %cst_196 = arith.constant 0.353553385 : f32
    %548 = vector.broadcast %cst_196 : f32 to vector<8x8xf32>
    %549 = arith.mulf %547, %548 : vector<8x8xf32>
    %550 = vector.broadcast %5 : vector<1x8xf32> to vector<8x8xf32>
    %551 = arith.addf %549, %550 : vector<8x8xf32>
    %cst_197 = arith.constant dense<0xFF800000> : vector<8xf32>
    %552 = vector.multi_reduction <maximumf>, %551, %cst_197 [1] : vector<8x8xf32> to vector<8xf32>
    %553 = vector.shape_cast %552 : vector<8xf32> to vector<8x1xf32>
    %554 = vector.broadcast %553 : vector<8x1xf32> to vector<8x8xf32>
    %555 = arith.subf %551, %554 : vector<8x8xf32>
    %556 = math.exp %555 : vector<8x8xf32>
    %cst_198 = arith.constant dense<0.000000e+00> : vector<8xf32>
    %557 = vector.multi_reduction <add>, %556, %cst_198 [1] : vector<8x8xf32> to vector<8xf32>
    %558 = vector.shape_cast %557 : vector<8xf32> to vector<8x1xf32>
    %559 = tpu.reciprocal %558 {approx = true} : vector<8x1xf32> -> vector<8x1xf32>
    %560 = vector.broadcast %559 : vector<8x1xf32> to vector<8x8xf32>
    %561 = arith.mulf %556, %560 : vector<8x8xf32>
    %562 = vector.extract_strided_slice %541 {offsets = [0, 0], sizes = [8, 8], strides = [1, 1]} : vector<8x32xf32> to vector<8x8xf32>
    %cst_199 = arith.constant dense<0.000000e+00> : vector<8x8xf32>
    %563 = tpu.matmul %561, %562, %cst_199 {dimension_numbers = #tpu.dot_dimension_numbers<[1], [0], [0], [1], [0, 0, 1, 1], [], []>} : vector<8x8xf32>, vector<8x8xf32>, vector<8x8xf32> -> vector<8x8xf32>
    %564 = vector.extract_strided_slice %544 {offsets = [0, 0], sizes = [8, 32], strides = [1, 1]} : vector<32x32xf32> to vector<8x32xf32>
    %cst_200 = arith.constant dense<0.000000e+00> : vector<8x32xf32>
    %565 = tpu.matmul %563, %564, %cst_200 {dimension_numbers = #tpu.dot_dimension_numbers<[1], [0], [0], [1], [0, 0, 1, 1], [], []>} : vector<8x8xf32>, vector<8x32xf32>, vector<8x32xf32> -> vector<8x32xf32>
    %566 = vector.extract_strided_slice %533 {offsets = [0, 8], sizes = [8, 8], strides = [1, 1]} : vector<8x32xf32> to vector<8x8xf32>
    %567 = vector.extract_strided_slice %540 {offsets = [0, 8], sizes = [8, 8], strides = [1, 1]} : vector<8x32xf32> to vector<8x8xf32>
    %cst_201 = arith.constant dense<0.000000e+00> : vector<8x8xf32>
    %568 = tpu.matmul %566, %567, %cst_201 {dimension_numbers = #tpu.dot_dimension_numbers<[1], [1], [0], [0], [0, 0, 1, 0], [], []>} : vector<8x8xf32>, vector<8x8xf32>, vector<8x8xf32> -> vector<8x8xf32>
    %cst_202 = arith.constant 0.353553385 : f32
    %569 = vector.broadcast %cst_202 : f32 to vector<8x8xf32>
    %570 = arith.mulf %568, %569 : vector<8x8xf32>
    %571 = vector.broadcast %5 : vector<1x8xf32> to vector<8x8xf32>
    %572 = arith.addf %570, %571 : vector<8x8xf32>
    %cst_203 = arith.constant dense<0xFF800000> : vector<8xf32>
    %573 = vector.multi_reduction <maximumf>, %572, %cst_203 [1] : vector<8x8xf32> to vector<8xf32>
    %574 = vector.shape_cast %573 : vector<8xf32> to vector<8x1xf32>
    %575 = vector.broadcast %574 : vector<8x1xf32> to vector<8x8xf32>
    %576 = arith.subf %572, %575 : vector<8x8xf32>
    %577 = math.exp %576 : vector<8x8xf32>
    %cst_204 = arith.constant dense<0.000000e+00> : vector<8xf32>
    %578 = vector.multi_reduction <add>, %577, %cst_204 [1] : vector<8x8xf32> to vector<8xf32>
    %579 = vector.shape_cast %578 : vector<8xf32> to vector<8x1xf32>
    %580 = tpu.reciprocal %579 {approx = true} : vector<8x1xf32> -> vector<8x1xf32>
    %581 = vector.broadcast %580 : vector<8x1xf32> to vector<8x8xf32>
    %582 = arith.mulf %577, %581 : vector<8x8xf32>
    %583 = vector.extract_strided_slice %541 {offsets = [0, 8], sizes = [8, 8], strides = [1, 1]} : vector<8x32xf32> to vector<8x8xf32>
    %cst_205 = arith.constant dense<0.000000e+00> : vector<8x8xf32>
    %584 = tpu.matmul %582, %583, %cst_205 {dimension_numbers = #tpu.dot_dimension_numbers<[1], [0], [0], [1], [0, 0, 1, 1], [], []>} : vector<8x8xf32>, vector<8x8xf32>, vector<8x8xf32> -> vector<8x8xf32>
    %585 = vector.extract_strided_slice %544 {offsets = [8, 0], sizes = [8, 32], strides = [1, 1]} : vector<32x32xf32> to vector<8x32xf32>
    %cst_206 = arith.constant dense<0.000000e+00> : vector<8x32xf32>
    %586 = tpu.matmul %584, %585, %cst_206 {dimension_numbers = #tpu.dot_dimension_numbers<[1], [0], [0], [1], [0, 0, 1, 1], [], []>} : vector<8x8xf32>, vector<8x32xf32>, vector<8x32xf32> -> vector<8x32xf32>
    %587 = arith.addf %565, %586 : vector<8x32xf32>
    %588 = vector.extract_strided_slice %533 {offsets = [0, 16], sizes = [8, 8], strides = [1, 1]} : vector<8x32xf32> to vector<8x8xf32>
    %589 = vector.extract_strided_slice %540 {offsets = [0, 16], sizes = [8, 8], strides = [1, 1]} : vector<8x32xf32> to vector<8x8xf32>
    %cst_207 = arith.constant dense<0.000000e+00> : vector<8x8xf32>
    %590 = tpu.matmul %588, %589, %cst_207 {dimension_numbers = #tpu.dot_dimension_numbers<[1], [1], [0], [0], [0, 0, 1, 0], [], []>} : vector<8x8xf32>, vector<8x8xf32>, vector<8x8xf32> -> vector<8x8xf32>
    %cst_208 = arith.constant 0.353553385 : f32
    %591 = vector.broadcast %cst_208 : f32 to vector<8x8xf32>
    %592 = arith.mulf %590, %591 : vector<8x8xf32>
    %593 = vector.broadcast %5 : vector<1x8xf32> to vector<8x8xf32>
    %594 = arith.addf %592, %593 : vector<8x8xf32>
    %cst_209 = arith.constant dense<0xFF800000> : vector<8xf32>
    %595 = vector.multi_reduction <maximumf>, %594, %cst_209 [1] : vector<8x8xf32> to vector<8xf32>
    %596 = vector.shape_cast %595 : vector<8xf32> to vector<8x1xf32>
    %597 = vector.broadcast %596 : vector<8x1xf32> to vector<8x8xf32>
    %598 = arith.subf %594, %597 : vector<8x8xf32>
    %599 = math.exp %598 : vector<8x8xf32>
    %cst_210 = arith.constant dense<0.000000e+00> : vector<8xf32>
    %600 = vector.multi_reduction <add>, %599, %cst_210 [1] : vector<8x8xf32> to vector<8xf32>
    %601 = vector.shape_cast %600 : vector<8xf32> to vector<8x1xf32>
    %602 = tpu.reciprocal %601 {approx = true} : vector<8x1xf32> -> vector<8x1xf32>
    %603 = vector.broadcast %602 : vector<8x1xf32> to vector<8x8xf32>
    %604 = arith.mulf %599, %603 : vector<8x8xf32>
    %605 = vector.extract_strided_slice %541 {offsets = [0, 16], sizes = [8, 8], strides = [1, 1]} : vector<8x32xf32> to vector<8x8xf32>
    %cst_211 = arith.constant dense<0.000000e+00> : vector<8x8xf32>
    %606 = tpu.matmul %604, %605, %cst_211 {dimension_numbers = #tpu.dot_dimension_numbers<[1], [0], [0], [1], [0, 0, 1, 1], [], []>} : vector<8x8xf32>, vector<8x8xf32>, vector<8x8xf32> -> vector<8x8xf32>
    %607 = vector.extract_strided_slice %544 {offsets = [16, 0], sizes = [8, 32], strides = [1, 1]} : vector<32x32xf32> to vector<8x32xf32>
    %cst_212 = arith.constant dense<0.000000e+00> : vector<8x32xf32>
    %608 = tpu.matmul %606, %607, %cst_212 {dimension_numbers = #tpu.dot_dimension_numbers<[1], [0], [0], [1], [0, 0, 1, 1], [], []>} : vector<8x8xf32>, vector<8x32xf32>, vector<8x32xf32> -> vector<8x32xf32>
    %609 = arith.addf %587, %608 : vector<8x32xf32>
    %610 = vector.extract_strided_slice %533 {offsets = [0, 24], sizes = [8, 8], strides = [1, 1]} : vector<8x32xf32> to vector<8x8xf32>
    %611 = vector.extract_strided_slice %540 {offsets = [0, 24], sizes = [8, 8], strides = [1, 1]} : vector<8x32xf32> to vector<8x8xf32>
    %cst_213 = arith.constant dense<0.000000e+00> : vector<8x8xf32>
    %612 = tpu.matmul %610, %611, %cst_213 {dimension_numbers = #tpu.dot_dimension_numbers<[1], [1], [0], [0], [0, 0, 1, 0], [], []>} : vector<8x8xf32>, vector<8x8xf32>, vector<8x8xf32> -> vector<8x8xf32>
    %cst_214 = arith.constant 0.353553385 : f32
    %613 = vector.broadcast %cst_214 : f32 to vector<8x8xf32>
    %614 = arith.mulf %612, %613 : vector<8x8xf32>
    %615 = vector.broadcast %5 : vector<1x8xf32> to vector<8x8xf32>
    %616 = arith.addf %614, %615 : vector<8x8xf32>
    %cst_215 = arith.constant dense<0xFF800000> : vector<8xf32>
    %617 = vector.multi_reduction <maximumf>, %616, %cst_215 [1] : vector<8x8xf32> to vector<8xf32>
    %618 = vector.shape_cast %617 : vector<8xf32> to vector<8x1xf32>
    %619 = vector.broadcast %618 : vector<8x1xf32> to vector<8x8xf32>
    %620 = arith.subf %616, %619 : vector<8x8xf32>
    %621 = math.exp %620 : vector<8x8xf32>
    %cst_216 = arith.constant dense<0.000000e+00> : vector<8xf32>
    %622 = vector.multi_reduction <add>, %621, %cst_216 [1] : vector<8x8xf32> to vector<8xf32>
    %623 = vector.shape_cast %622 : vector<8xf32> to vector<8x1xf32>
    %624 = tpu.reciprocal %623 {approx = true} : vector<8x1xf32> -> vector<8x1xf32>
    %625 = vector.broadcast %624 : vector<8x1xf32> to vector<8x8xf32>
    %626 = arith.mulf %621, %625 : vector<8x8xf32>
    %627 = vector.extract_strided_slice %541 {offsets = [0, 24], sizes = [8, 8], strides = [1, 1]} : vector<8x32xf32> to vector<8x8xf32>
    %cst_217 = arith.constant dense<0.000000e+00> : vector<8x8xf32>
    %628 = tpu.matmul %626, %627, %cst_217 {dimension_numbers = #tpu.dot_dimension_numbers<[1], [0], [0], [1], [0, 0, 1, 1], [], []>} : vector<8x8xf32>, vector<8x8xf32>, vector<8x8xf32> -> vector<8x8xf32>
    %629 = vector.extract_strided_slice %544 {offsets = [24, 0], sizes = [8, 32], strides = [1, 1]} : vector<32x32xf32> to vector<8x32xf32>
    %cst_218 = arith.constant dense<0.000000e+00> : vector<8x32xf32>
    %630 = tpu.matmul %628, %629, %cst_218 {dimension_numbers = #tpu.dot_dimension_numbers<[1], [0], [0], [1], [0, 0, 1, 1], [], []>} : vector<8x8xf32>, vector<8x32xf32>, vector<8x32xf32> -> vector<8x32xf32>
    %631 = arith.addf %609, %630 : vector<8x32xf32>
    %632 = arith.addf %502, %631 : vector<8x32xf32>
    %c26 = arith.constant 26 : index
    %c0_219 = arith.constant 0 : index
    %633 = vector.load %arg6[%c26, %c0_219] : memref<56x128xf32, #tpu.memory_space<vmem>>, vector<1x32xf32>
    %634 = vector.broadcast %633 : vector<1x32xf32> to vector<8x32xf32>
    %635 = arith.addf %632, %634 : vector<8x32xf32>
    %c27 = arith.constant 27 : index
    %c0_220 = arith.constant 0 : index
    %636 = vector.load %arg6[%c27, %c0_220] : memref<56x128xf32, #tpu.memory_space<vmem>>, vector<1x32xf32>
    %c28 = arith.constant 28 : index
    %c0_221 = arith.constant 0 : index
    %637 = vector.load %arg6[%c28, %c0_221] : memref<56x128xf32, #tpu.memory_space<vmem>>, vector<1x32xf32>
    %cst_222 = arith.constant dense<0.000000e+00> : vector<8xf32>
    %638 = vector.multi_reduction <add>, %635, %cst_222 [1] : vector<8x32xf32> to vector<8xf32>
    %639 = vector.shape_cast %638 : vector<8xf32> to vector<8x1xf32>
    %cst_223 = arith.constant 3.200000e+01 : f32
    %640 = vector.broadcast %cst_223 : f32 to vector<8x1xf32>
    %641 = arith.divf %639, %640 : vector<8x1xf32>
    %642 = vector.broadcast %641 : vector<8x1xf32> to vector<8x32xf32>
    %643 = arith.subf %635, %642 : vector<8x32xf32>
    %644 = arith.mulf %643, %643 : vector<8x32xf32>
    %cst_224 = arith.constant dense<0.000000e+00> : vector<8xf32>
    %645 = vector.multi_reduction <add>, %644, %cst_224 [1] : vector<8x32xf32> to vector<8xf32>
    %646 = vector.shape_cast %645 : vector<8xf32> to vector<8x1xf32>
    %cst_225 = arith.constant 3.200000e+01 : f32
    %647 = vector.broadcast %cst_225 : f32 to vector<8x1xf32>
    %648 = arith.divf %646, %647 : vector<8x1xf32>
    %649 = vector.broadcast %641 : vector<8x1xf32> to vector<8x32xf32>
    %650 = arith.subf %635, %649 : vector<8x32xf32>
    %cst_226 = arith.constant 9.99999997E-7 : f32
    %651 = vector.broadcast %cst_226 : f32 to vector<8x1xf32>
    %652 = arith.addf %648, %651 : vector<8x1xf32>
    %653 = math.rsqrt %652 : vector<8x1xf32>
    %654 = vector.broadcast %653 : vector<8x1xf32> to vector<8x32xf32>
    %655 = arith.mulf %650, %654 : vector<8x32xf32>
    %656 = vector.broadcast %636 : vector<1x32xf32> to vector<8x32xf32>
    %657 = arith.mulf %655, %656 : vector<8x32xf32>
    %658 = vector.broadcast %637 : vector<1x32xf32> to vector<8x32xf32>
    %659 = arith.addf %657, %658 : vector<8x32xf32>
    %660 = arith.truncf %659 : vector<8x32xf32> to vector<8x32xbf16>
    %c13_227 = arith.constant 13 : index
    %c0_228 = arith.constant 0 : index
    %c0_229 = arith.constant 0 : index
    %661 = vector.load %arg5[%c13_227, %c0_228, %c0_229] : memref<23x64x128xbf16, #tpu.memory_space<vmem>>, vector<1x32x64xbf16>
    %662 = vector.shape_cast %661 : vector<1x32x64xbf16> to vector<32x64xbf16>
    %cst_230 = arith.constant dense<0.000000e+00> : vector<8x64xf32>
    %663 = tpu.matmul %660, %662, %cst_230 {dimension_numbers = #tpu.dot_dimension_numbers<[1], [0], [0], [1], [0, 0, 1, 1], [], []>} : vector<8x32xbf16>, vector<32x64xbf16>, vector<8x64xf32> -> vector<8x64xf32>
    %c29 = arith.constant 29 : index
    %c0_231 = arith.constant 0 : index
    %664 = vector.load %arg6[%c29, %c0_231] : memref<56x128xf32, #tpu.memory_space<vmem>>, vector<1x64xf32>
    %665 = vector.broadcast %664 : vector<1x64xf32> to vector<8x64xf32>
    %666 = arith.addf %663, %665 : vector<8x64xf32>
    %cst_232 = arith.constant 0.000000e+00 : f32
    %667 = vector.broadcast %cst_232 : f32 to vector<8x64xf32>
    %668 = arith.maximumf %666, %667 : vector<8x64xf32>
    %669 = arith.truncf %668 : vector<8x64xf32> to vector<8x64xbf16>
    %c14_233 = arith.constant 14 : index
    %c0_234 = arith.constant 0 : index
    %c0_235 = arith.constant 0 : index
    %670 = vector.load %arg5[%c14_233, %c0_234, %c0_235] : memref<23x64x128xbf16, #tpu.memory_space<vmem>>, vector<1x64x32xbf16>
    %671 = vector.shape_cast %670 : vector<1x64x32xbf16> to vector<64x32xbf16>
    %cst_236 = arith.constant dense<0.000000e+00> : vector<8x32xf32>
    %672 = tpu.matmul %669, %671, %cst_236 {dimension_numbers = #tpu.dot_dimension_numbers<[1], [0], [0], [1], [0, 0, 1, 1], [], []>} : vector<8x64xbf16>, vector<64x32xbf16>, vector<8x32xf32> -> vector<8x32xf32>
    %673 = arith.addf %635, %672 : vector<8x32xf32>
    %c30 = arith.constant 30 : index
    %c0_237 = arith.constant 0 : index
    %674 = vector.load %arg6[%c30, %c0_237] : memref<56x128xf32, #tpu.memory_space<vmem>>, vector<1x32xf32>
    %675 = vector.broadcast %674 : vector<1x32xf32> to vector<8x32xf32>
    %676 = arith.addf %673, %675 : vector<8x32xf32>
    %c31 = arith.constant 31 : index
    %c0_238 = arith.constant 0 : index
    %677 = vector.load %arg6[%c31, %c0_238] : memref<56x128xf32, #tpu.memory_space<vmem>>, vector<1x32xf32>
    %c32 = arith.constant 32 : index
    %c0_239 = arith.constant 0 : index
    %678 = vector.load %arg6[%c32, %c0_239] : memref<56x128xf32, #tpu.memory_space<vmem>>, vector<1x32xf32>
    %cst_240 = arith.constant dense<0.000000e+00> : vector<8xf32>
    %679 = vector.multi_reduction <add>, %676, %cst_240 [1] : vector<8x32xf32> to vector<8xf32>
    %680 = vector.shape_cast %679 : vector<8xf32> to vector<8x1xf32>
    %cst_241 = arith.constant 3.200000e+01 : f32
    %681 = vector.broadcast %cst_241 : f32 to vector<8x1xf32>
    %682 = arith.divf %680, %681 : vector<8x1xf32>
    %683 = vector.broadcast %682 : vector<8x1xf32> to vector<8x32xf32>
    %684 = arith.subf %676, %683 : vector<8x32xf32>
    %685 = arith.mulf %684, %684 : vector<8x32xf32>
    %cst_242 = arith.constant dense<0.000000e+00> : vector<8xf32>
    %686 = vector.multi_reduction <add>, %685, %cst_242 [1] : vector<8x32xf32> to vector<8xf32>
    %687 = vector.shape_cast %686 : vector<8xf32> to vector<8x1xf32>
    %cst_243 = arith.constant 3.200000e+01 : f32
    %688 = vector.broadcast %cst_243 : f32 to vector<8x1xf32>
    %689 = arith.divf %687, %688 : vector<8x1xf32>
    %690 = vector.broadcast %682 : vector<8x1xf32> to vector<8x32xf32>
    %691 = arith.subf %676, %690 : vector<8x32xf32>
    %cst_244 = arith.constant 9.99999997E-7 : f32
    %692 = vector.broadcast %cst_244 : f32 to vector<8x1xf32>
    %693 = arith.addf %689, %692 : vector<8x1xf32>
    %694 = math.rsqrt %693 : vector<8x1xf32>
    %695 = vector.broadcast %694 : vector<8x1xf32> to vector<8x32xf32>
    %696 = arith.mulf %691, %695 : vector<8x32xf32>
    %697 = vector.broadcast %677 : vector<1x32xf32> to vector<8x32xf32>
    %698 = arith.mulf %696, %697 : vector<8x32xf32>
    %699 = vector.broadcast %678 : vector<1x32xf32> to vector<8x32xf32>
    %700 = arith.addf %698, %699 : vector<8x32xf32>
    %701 = arith.truncf %700 : vector<8x32xf32> to vector<8x32xbf16>
    %c15_245 = arith.constant 15 : index
    %c0_246 = arith.constant 0 : index
    %c0_247 = arith.constant 0 : index
    %702 = vector.load %arg5[%c15_245, %c0_246, %c0_247] : memref<23x64x128xbf16, #tpu.memory_space<vmem>>, vector<1x32x96xbf16>
    %703 = vector.shape_cast %702 : vector<1x32x96xbf16> to vector<32x96xbf16>
    %cst_248 = arith.constant dense<0.000000e+00> : vector<8x96xf32>
    %704 = tpu.matmul %701, %703, %cst_248 {dimension_numbers = #tpu.dot_dimension_numbers<[1], [0], [0], [1], [0, 0, 1, 1], [], []>} : vector<8x32xbf16>, vector<32x96xbf16>, vector<8x96xf32> -> vector<8x96xf32>
    %c33 = arith.constant 33 : index
    %c0_249 = arith.constant 0 : index
    %705 = vector.load %arg6[%c33, %c0_249] : memref<56x128xf32, #tpu.memory_space<vmem>>, vector<1x96xf32>
    %706 = vector.broadcast %705 : vector<1x96xf32> to vector<8x96xf32>
    %707 = arith.addf %704, %706 : vector<8x96xf32>
    %708 = vector.extract_strided_slice %707 {offsets = [0, 0], sizes = [8, 32], strides = [1, 1]} : vector<8x96xf32> to vector<8x32xf32>
    %709 = vector.extract_strided_slice %707 {offsets = [0, 32], sizes = [8, 32], strides = [1, 1]} : vector<8x96xf32> to vector<8x32xf32>
    %710 = vector.extract_strided_slice %707 {offsets = [0, 64], sizes = [8, 32], strides = [1, 1]} : vector<8x96xf32> to vector<8x32xf32>
    %c16_250 = arith.constant 16 : index
    %c0_251 = arith.constant 0 : index
    %c0_252 = arith.constant 0 : index
    %711 = vector.load %arg5[%c16_250, %c0_251, %c0_252] : memref<23x64x128xbf16, #tpu.memory_space<vmem>>, vector<1x32x32xbf16>
    %712 = vector.shape_cast %711 : vector<1x32x32xbf16> to vector<32x32xbf16>
    %713 = arith.extf %712 : vector<32x32xbf16> to vector<32x32xf32>
    %714 = vector.extract_strided_slice %708 {offsets = [0, 0], sizes = [8, 8], strides = [1, 1]} : vector<8x32xf32> to vector<8x8xf32>
    %715 = vector.extract_strided_slice %709 {offsets = [0, 0], sizes = [8, 8], strides = [1, 1]} : vector<8x32xf32> to vector<8x8xf32>
    %cst_253 = arith.constant dense<0.000000e+00> : vector<8x8xf32>
    %716 = tpu.matmul %714, %715, %cst_253 {dimension_numbers = #tpu.dot_dimension_numbers<[1], [1], [0], [0], [0, 0, 1, 0], [], []>} : vector<8x8xf32>, vector<8x8xf32>, vector<8x8xf32> -> vector<8x8xf32>
    %cst_254 = arith.constant 0.353553385 : f32
    %717 = vector.broadcast %cst_254 : f32 to vector<8x8xf32>
    %718 = arith.mulf %716, %717 : vector<8x8xf32>
    %719 = arith.addf %718, %376 : vector<8x8xf32>
    %cst_255 = arith.constant dense<0xFF800000> : vector<8xf32>
    %720 = vector.multi_reduction <maximumf>, %719, %cst_255 [1] : vector<8x8xf32> to vector<8xf32>
    %721 = vector.shape_cast %720 : vector<8xf32> to vector<8x1xf32>
    %722 = vector.broadcast %721 : vector<8x1xf32> to vector<8x8xf32>
    %723 = arith.subf %719, %722 : vector<8x8xf32>
    %724 = math.exp %723 : vector<8x8xf32>
    %cst_256 = arith.constant dense<0.000000e+00> : vector<8xf32>
    %725 = vector.multi_reduction <add>, %724, %cst_256 [1] : vector<8x8xf32> to vector<8xf32>
    %726 = vector.shape_cast %725 : vector<8xf32> to vector<8x1xf32>
    %727 = tpu.reciprocal %726 {approx = true} : vector<8x1xf32> -> vector<8x1xf32>
    %728 = vector.broadcast %727 : vector<8x1xf32> to vector<8x8xf32>
    %729 = arith.mulf %724, %728 : vector<8x8xf32>
    %730 = vector.extract_strided_slice %710 {offsets = [0, 0], sizes = [8, 8], strides = [1, 1]} : vector<8x32xf32> to vector<8x8xf32>
    %cst_257 = arith.constant dense<0.000000e+00> : vector<8x8xf32>
    %731 = tpu.matmul %729, %730, %cst_257 {dimension_numbers = #tpu.dot_dimension_numbers<[1], [0], [0], [1], [0, 0, 1, 1], [], []>} : vector<8x8xf32>, vector<8x8xf32>, vector<8x8xf32> -> vector<8x8xf32>
    %732 = vector.extract_strided_slice %713 {offsets = [0, 0], sizes = [8, 32], strides = [1, 1]} : vector<32x32xf32> to vector<8x32xf32>
    %cst_258 = arith.constant dense<0.000000e+00> : vector<8x32xf32>
    %733 = tpu.matmul %731, %732, %cst_258 {dimension_numbers = #tpu.dot_dimension_numbers<[1], [0], [0], [1], [0, 0, 1, 1], [], []>} : vector<8x8xf32>, vector<8x32xf32>, vector<8x32xf32> -> vector<8x32xf32>
    %734 = vector.extract_strided_slice %708 {offsets = [0, 8], sizes = [8, 8], strides = [1, 1]} : vector<8x32xf32> to vector<8x8xf32>
    %735 = vector.extract_strided_slice %709 {offsets = [0, 8], sizes = [8, 8], strides = [1, 1]} : vector<8x32xf32> to vector<8x8xf32>
    %cst_259 = arith.constant dense<0.000000e+00> : vector<8x8xf32>
    %736 = tpu.matmul %734, %735, %cst_259 {dimension_numbers = #tpu.dot_dimension_numbers<[1], [1], [0], [0], [0, 0, 1, 0], [], []>} : vector<8x8xf32>, vector<8x8xf32>, vector<8x8xf32> -> vector<8x8xf32>
    %cst_260 = arith.constant 0.353553385 : f32
    %737 = vector.broadcast %cst_260 : f32 to vector<8x8xf32>
    %738 = arith.mulf %736, %737 : vector<8x8xf32>
    %739 = arith.addf %738, %376 : vector<8x8xf32>
    %cst_261 = arith.constant dense<0xFF800000> : vector<8xf32>
    %740 = vector.multi_reduction <maximumf>, %739, %cst_261 [1] : vector<8x8xf32> to vector<8xf32>
    %741 = vector.shape_cast %740 : vector<8xf32> to vector<8x1xf32>
    %742 = vector.broadcast %741 : vector<8x1xf32> to vector<8x8xf32>
    %743 = arith.subf %739, %742 : vector<8x8xf32>
    %744 = math.exp %743 : vector<8x8xf32>
    %cst_262 = arith.constant dense<0.000000e+00> : vector<8xf32>
    %745 = vector.multi_reduction <add>, %744, %cst_262 [1] : vector<8x8xf32> to vector<8xf32>
    %746 = vector.shape_cast %745 : vector<8xf32> to vector<8x1xf32>
    %747 = tpu.reciprocal %746 {approx = true} : vector<8x1xf32> -> vector<8x1xf32>
    %748 = vector.broadcast %747 : vector<8x1xf32> to vector<8x8xf32>
    %749 = arith.mulf %744, %748 : vector<8x8xf32>
    %750 = vector.extract_strided_slice %710 {offsets = [0, 8], sizes = [8, 8], strides = [1, 1]} : vector<8x32xf32> to vector<8x8xf32>
    %cst_263 = arith.constant dense<0.000000e+00> : vector<8x8xf32>
    %751 = tpu.matmul %749, %750, %cst_263 {dimension_numbers = #tpu.dot_dimension_numbers<[1], [0], [0], [1], [0, 0, 1, 1], [], []>} : vector<8x8xf32>, vector<8x8xf32>, vector<8x8xf32> -> vector<8x8xf32>
    %752 = vector.extract_strided_slice %713 {offsets = [8, 0], sizes = [8, 32], strides = [1, 1]} : vector<32x32xf32> to vector<8x32xf32>
    %cst_264 = arith.constant dense<0.000000e+00> : vector<8x32xf32>
    %753 = tpu.matmul %751, %752, %cst_264 {dimension_numbers = #tpu.dot_dimension_numbers<[1], [0], [0], [1], [0, 0, 1, 1], [], []>} : vector<8x8xf32>, vector<8x32xf32>, vector<8x32xf32> -> vector<8x32xf32>
    %754 = arith.addf %733, %753 : vector<8x32xf32>
    %755 = vector.extract_strided_slice %708 {offsets = [0, 16], sizes = [8, 8], strides = [1, 1]} : vector<8x32xf32> to vector<8x8xf32>
    %756 = vector.extract_strided_slice %709 {offsets = [0, 16], sizes = [8, 8], strides = [1, 1]} : vector<8x32xf32> to vector<8x8xf32>
    %cst_265 = arith.constant dense<0.000000e+00> : vector<8x8xf32>
    %757 = tpu.matmul %755, %756, %cst_265 {dimension_numbers = #tpu.dot_dimension_numbers<[1], [1], [0], [0], [0, 0, 1, 0], [], []>} : vector<8x8xf32>, vector<8x8xf32>, vector<8x8xf32> -> vector<8x8xf32>
    %cst_266 = arith.constant 0.353553385 : f32
    %758 = vector.broadcast %cst_266 : f32 to vector<8x8xf32>
    %759 = arith.mulf %757, %758 : vector<8x8xf32>
    %760 = arith.addf %759, %376 : vector<8x8xf32>
    %cst_267 = arith.constant dense<0xFF800000> : vector<8xf32>
    %761 = vector.multi_reduction <maximumf>, %760, %cst_267 [1] : vector<8x8xf32> to vector<8xf32>
    %762 = vector.shape_cast %761 : vector<8xf32> to vector<8x1xf32>
    %763 = vector.broadcast %762 : vector<8x1xf32> to vector<8x8xf32>
    %764 = arith.subf %760, %763 : vector<8x8xf32>
    %765 = math.exp %764 : vector<8x8xf32>
    %cst_268 = arith.constant dense<0.000000e+00> : vector<8xf32>
    %766 = vector.multi_reduction <add>, %765, %cst_268 [1] : vector<8x8xf32> to vector<8xf32>
    %767 = vector.shape_cast %766 : vector<8xf32> to vector<8x1xf32>
    %768 = tpu.reciprocal %767 {approx = true} : vector<8x1xf32> -> vector<8x1xf32>
    %769 = vector.broadcast %768 : vector<8x1xf32> to vector<8x8xf32>
    %770 = arith.mulf %765, %769 : vector<8x8xf32>
    %771 = vector.extract_strided_slice %710 {offsets = [0, 16], sizes = [8, 8], strides = [1, 1]} : vector<8x32xf32> to vector<8x8xf32>
    %cst_269 = arith.constant dense<0.000000e+00> : vector<8x8xf32>
    %772 = tpu.matmul %770, %771, %cst_269 {dimension_numbers = #tpu.dot_dimension_numbers<[1], [0], [0], [1], [0, 0, 1, 1], [], []>} : vector<8x8xf32>, vector<8x8xf32>, vector<8x8xf32> -> vector<8x8xf32>
    %773 = vector.extract_strided_slice %713 {offsets = [16, 0], sizes = [8, 32], strides = [1, 1]} : vector<32x32xf32> to vector<8x32xf32>
    %cst_270 = arith.constant dense<0.000000e+00> : vector<8x32xf32>
    %774 = tpu.matmul %772, %773, %cst_270 {dimension_numbers = #tpu.dot_dimension_numbers<[1], [0], [0], [1], [0, 0, 1, 1], [], []>} : vector<8x8xf32>, vector<8x32xf32>, vector<8x32xf32> -> vector<8x32xf32>
    %775 = arith.addf %754, %774 : vector<8x32xf32>
    %776 = vector.extract_strided_slice %708 {offsets = [0, 24], sizes = [8, 8], strides = [1, 1]} : vector<8x32xf32> to vector<8x8xf32>
    %777 = vector.extract_strided_slice %709 {offsets = [0, 24], sizes = [8, 8], strides = [1, 1]} : vector<8x32xf32> to vector<8x8xf32>
    %cst_271 = arith.constant dense<0.000000e+00> : vector<8x8xf32>
    %778 = tpu.matmul %776, %777, %cst_271 {dimension_numbers = #tpu.dot_dimension_numbers<[1], [1], [0], [0], [0, 0, 1, 0], [], []>} : vector<8x8xf32>, vector<8x8xf32>, vector<8x8xf32> -> vector<8x8xf32>
    %cst_272 = arith.constant 0.353553385 : f32
    %779 = vector.broadcast %cst_272 : f32 to vector<8x8xf32>
    %780 = arith.mulf %778, %779 : vector<8x8xf32>
    %781 = arith.addf %780, %376 : vector<8x8xf32>
    %cst_273 = arith.constant dense<0xFF800000> : vector<8xf32>
    %782 = vector.multi_reduction <maximumf>, %781, %cst_273 [1] : vector<8x8xf32> to vector<8xf32>
    %783 = vector.shape_cast %782 : vector<8xf32> to vector<8x1xf32>
    %784 = vector.broadcast %783 : vector<8x1xf32> to vector<8x8xf32>
    %785 = arith.subf %781, %784 : vector<8x8xf32>
    %786 = math.exp %785 : vector<8x8xf32>
    %cst_274 = arith.constant dense<0.000000e+00> : vector<8xf32>
    %787 = vector.multi_reduction <add>, %786, %cst_274 [1] : vector<8x8xf32> to vector<8xf32>
    %788 = vector.shape_cast %787 : vector<8xf32> to vector<8x1xf32>
    %789 = tpu.reciprocal %788 {approx = true} : vector<8x1xf32> -> vector<8x1xf32>
    %790 = vector.broadcast %789 : vector<8x1xf32> to vector<8x8xf32>
    %791 = arith.mulf %786, %790 : vector<8x8xf32>
    %792 = vector.extract_strided_slice %710 {offsets = [0, 24], sizes = [8, 8], strides = [1, 1]} : vector<8x32xf32> to vector<8x8xf32>
    %cst_275 = arith.constant dense<0.000000e+00> : vector<8x8xf32>
    %793 = tpu.matmul %791, %792, %cst_275 {dimension_numbers = #tpu.dot_dimension_numbers<[1], [0], [0], [1], [0, 0, 1, 1], [], []>} : vector<8x8xf32>, vector<8x8xf32>, vector<8x8xf32> -> vector<8x8xf32>
    %794 = vector.extract_strided_slice %713 {offsets = [24, 0], sizes = [8, 32], strides = [1, 1]} : vector<32x32xf32> to vector<8x32xf32>
    %cst_276 = arith.constant dense<0.000000e+00> : vector<8x32xf32>
    %795 = tpu.matmul %793, %794, %cst_276 {dimension_numbers = #tpu.dot_dimension_numbers<[1], [0], [0], [1], [0, 0, 1, 1], [], []>} : vector<8x8xf32>, vector<8x32xf32>, vector<8x32xf32> -> vector<8x32xf32>
    %796 = arith.addf %775, %795 : vector<8x32xf32>
    %797 = arith.addf %676, %796 : vector<8x32xf32>
    %c34 = arith.constant 34 : index
    %c0_277 = arith.constant 0 : index
    %798 = vector.load %arg6[%c34, %c0_277] : memref<56x128xf32, #tpu.memory_space<vmem>>, vector<1x32xf32>
    %799 = vector.broadcast %798 : vector<1x32xf32> to vector<8x32xf32>
    %800 = arith.addf %797, %799 : vector<8x32xf32>
    %c35 = arith.constant 35 : index
    %c0_278 = arith.constant 0 : index
    %801 = vector.load %arg6[%c35, %c0_278] : memref<56x128xf32, #tpu.memory_space<vmem>>, vector<1x32xf32>
    %c36 = arith.constant 36 : index
    %c0_279 = arith.constant 0 : index
    %802 = vector.load %arg6[%c36, %c0_279] : memref<56x128xf32, #tpu.memory_space<vmem>>, vector<1x32xf32>
    %cst_280 = arith.constant dense<0.000000e+00> : vector<8xf32>
    %803 = vector.multi_reduction <add>, %800, %cst_280 [1] : vector<8x32xf32> to vector<8xf32>
    %804 = vector.shape_cast %803 : vector<8xf32> to vector<8x1xf32>
    %cst_281 = arith.constant 3.200000e+01 : f32
    %805 = vector.broadcast %cst_281 : f32 to vector<8x1xf32>
    %806 = arith.divf %804, %805 : vector<8x1xf32>
    %807 = vector.broadcast %806 : vector<8x1xf32> to vector<8x32xf32>
    %808 = arith.subf %800, %807 : vector<8x32xf32>
    %809 = arith.mulf %808, %808 : vector<8x32xf32>
    %cst_282 = arith.constant dense<0.000000e+00> : vector<8xf32>
    %810 = vector.multi_reduction <add>, %809, %cst_282 [1] : vector<8x32xf32> to vector<8xf32>
    %811 = vector.shape_cast %810 : vector<8xf32> to vector<8x1xf32>
    %cst_283 = arith.constant 3.200000e+01 : f32
    %812 = vector.broadcast %cst_283 : f32 to vector<8x1xf32>
    %813 = arith.divf %811, %812 : vector<8x1xf32>
    %814 = vector.broadcast %806 : vector<8x1xf32> to vector<8x32xf32>
    %815 = arith.subf %800, %814 : vector<8x32xf32>
    %cst_284 = arith.constant 9.99999997E-7 : f32
    %816 = vector.broadcast %cst_284 : f32 to vector<8x1xf32>
    %817 = arith.addf %813, %816 : vector<8x1xf32>
    %818 = math.rsqrt %817 : vector<8x1xf32>
    %819 = vector.broadcast %818 : vector<8x1xf32> to vector<8x32xf32>
    %820 = arith.mulf %815, %819 : vector<8x32xf32>
    %821 = vector.broadcast %801 : vector<1x32xf32> to vector<8x32xf32>
    %822 = arith.mulf %820, %821 : vector<8x32xf32>
    %823 = vector.broadcast %802 : vector<1x32xf32> to vector<8x32xf32>
    %824 = arith.addf %822, %823 : vector<8x32xf32>
    %825 = arith.truncf %824 : vector<8x32xf32> to vector<8x32xbf16>
    %c17_285 = arith.constant 17 : index
    %c0_286 = arith.constant 0 : index
    %c0_287 = arith.constant 0 : index
    %826 = vector.load %arg5[%c17_285, %c0_286, %c0_287] : memref<23x64x128xbf16, #tpu.memory_space<vmem>>, vector<1x32x32xbf16>
    %827 = vector.shape_cast %826 : vector<1x32x32xbf16> to vector<32x32xbf16>
    %cst_288 = arith.constant dense<0.000000e+00> : vector<8x32xf32>
    %828 = tpu.matmul %825, %827, %cst_288 {dimension_numbers = #tpu.dot_dimension_numbers<[1], [0], [0], [1], [0, 0, 1, 1], [], []>} : vector<8x32xbf16>, vector<32x32xbf16>, vector<8x32xf32> -> vector<8x32xf32>
    %c37 = arith.constant 37 : index
    %c0_289 = arith.constant 0 : index
    %829 = vector.load %arg6[%c37, %c0_289] : memref<56x128xf32, #tpu.memory_space<vmem>>, vector<1x32xf32>
    %830 = vector.broadcast %829 : vector<1x32xf32> to vector<8x32xf32>
    %831 = arith.addf %828, %830 : vector<8x32xf32>
    %c18_290 = arith.constant 18 : index
    %c0_291 = arith.constant 0 : index
    %c0_292 = arith.constant 0 : index
    %832 = vector.load %arg5[%c18_290, %c0_291, %c0_292] : memref<23x64x128xbf16, #tpu.memory_space<vmem>>, vector<1x32x64xbf16>
    %833 = vector.shape_cast %832 : vector<1x32x64xbf16> to vector<32x64xbf16>
    %cst_293 = arith.constant dense<0.000000e+00> : vector<8x64xf32>
    %834 = tpu.matmul %370, %833, %cst_293 {dimension_numbers = #tpu.dot_dimension_numbers<[1], [0], [0], [1], [0, 0, 1, 1], [], []>} : vector<8x32xbf16>, vector<32x64xbf16>, vector<8x64xf32> -> vector<8x64xf32>
    %c38 = arith.constant 38 : index
    %c0_294 = arith.constant 0 : index
    %835 = vector.load %arg6[%c38, %c0_294] : memref<56x128xf32, #tpu.memory_space<vmem>>, vector<1x64xf32>
    %836 = vector.broadcast %835 : vector<1x64xf32> to vector<8x64xf32>
    %837 = arith.addf %834, %836 : vector<8x64xf32>
    %838 = vector.extract_strided_slice %837 {offsets = [0, 0], sizes = [8, 32], strides = [1, 1]} : vector<8x64xf32> to vector<8x32xf32>
    %839 = vector.extract_strided_slice %837 {offsets = [0, 32], sizes = [8, 32], strides = [1, 1]} : vector<8x64xf32> to vector<8x32xf32>
    %c19_295 = arith.constant 19 : index
    %c0_296 = arith.constant 0 : index
    %c0_297 = arith.constant 0 : index
    %840 = vector.load %arg5[%c19_295, %c0_296, %c0_297] : memref<23x64x128xbf16, #tpu.memory_space<vmem>>, vector<1x32x32xbf16>
    %841 = vector.shape_cast %840 : vector<1x32x32xbf16> to vector<32x32xbf16>
    %842 = arith.extf %841 : vector<32x32xbf16> to vector<32x32xf32>
    %843 = vector.extract_strided_slice %831 {offsets = [0, 0], sizes = [8, 8], strides = [1, 1]} : vector<8x32xf32> to vector<8x8xf32>
    %844 = vector.extract_strided_slice %838 {offsets = [0, 0], sizes = [8, 8], strides = [1, 1]} : vector<8x32xf32> to vector<8x8xf32>
    %cst_298 = arith.constant dense<0.000000e+00> : vector<8x8xf32>
    %845 = tpu.matmul %843, %844, %cst_298 {dimension_numbers = #tpu.dot_dimension_numbers<[1], [1], [0], [0], [0, 0, 1, 0], [], []>} : vector<8x8xf32>, vector<8x8xf32>, vector<8x8xf32> -> vector<8x8xf32>
    %cst_299 = arith.constant 0.353553385 : f32
    %846 = vector.broadcast %cst_299 : f32 to vector<8x8xf32>
    %847 = arith.mulf %845, %846 : vector<8x8xf32>
    %848 = vector.broadcast %5 : vector<1x8xf32> to vector<8x8xf32>
    %849 = arith.addf %847, %848 : vector<8x8xf32>
    %cst_300 = arith.constant dense<0xFF800000> : vector<8xf32>
    %850 = vector.multi_reduction <maximumf>, %849, %cst_300 [1] : vector<8x8xf32> to vector<8xf32>
    %851 = vector.shape_cast %850 : vector<8xf32> to vector<8x1xf32>
    %852 = vector.broadcast %851 : vector<8x1xf32> to vector<8x8xf32>
    %853 = arith.subf %849, %852 : vector<8x8xf32>
    %854 = math.exp %853 : vector<8x8xf32>
    %cst_301 = arith.constant dense<0.000000e+00> : vector<8xf32>
    %855 = vector.multi_reduction <add>, %854, %cst_301 [1] : vector<8x8xf32> to vector<8xf32>
    %856 = vector.shape_cast %855 : vector<8xf32> to vector<8x1xf32>
    %857 = vector.broadcast %856 : vector<8x1xf32> to vector<8x8xf32>
    %858 = arith.divf %854, %857 : vector<8x8xf32>
    %859 = vector.extract_strided_slice %839 {offsets = [0, 0], sizes = [8, 8], strides = [1, 1]} : vector<8x32xf32> to vector<8x8xf32>
    %cst_302 = arith.constant dense<0.000000e+00> : vector<8x8xf32>
    %860 = tpu.matmul %858, %859, %cst_302 {dimension_numbers = #tpu.dot_dimension_numbers<[1], [0], [0], [1], [0, 0, 1, 1], [], []>} : vector<8x8xf32>, vector<8x8xf32>, vector<8x8xf32> -> vector<8x8xf32>
    %861 = vector.extract_strided_slice %842 {offsets = [0, 0], sizes = [8, 32], strides = [1, 1]} : vector<32x32xf32> to vector<8x32xf32>
    %cst_303 = arith.constant dense<0.000000e+00> : vector<8x32xf32>
    %862 = tpu.matmul %860, %861, %cst_303 {dimension_numbers = #tpu.dot_dimension_numbers<[1], [0], [0], [1], [0, 0, 1, 1], [], []>} : vector<8x8xf32>, vector<8x32xf32>, vector<8x32xf32> -> vector<8x32xf32>
    %863 = vector.extract_strided_slice %831 {offsets = [0, 8], sizes = [8, 8], strides = [1, 1]} : vector<8x32xf32> to vector<8x8xf32>
    %864 = vector.extract_strided_slice %838 {offsets = [0, 8], sizes = [8, 8], strides = [1, 1]} : vector<8x32xf32> to vector<8x8xf32>
    %cst_304 = arith.constant dense<0.000000e+00> : vector<8x8xf32>
    %865 = tpu.matmul %863, %864, %cst_304 {dimension_numbers = #tpu.dot_dimension_numbers<[1], [1], [0], [0], [0, 0, 1, 0], [], []>} : vector<8x8xf32>, vector<8x8xf32>, vector<8x8xf32> -> vector<8x8xf32>
    %cst_305 = arith.constant 0.353553385 : f32
    %866 = vector.broadcast %cst_305 : f32 to vector<8x8xf32>
    %867 = arith.mulf %865, %866 : vector<8x8xf32>
    %868 = vector.broadcast %5 : vector<1x8xf32> to vector<8x8xf32>
    %869 = arith.addf %867, %868 : vector<8x8xf32>
    %cst_306 = arith.constant dense<0xFF800000> : vector<8xf32>
    %870 = vector.multi_reduction <maximumf>, %869, %cst_306 [1] : vector<8x8xf32> to vector<8xf32>
    %871 = vector.shape_cast %870 : vector<8xf32> to vector<8x1xf32>
    %872 = vector.broadcast %871 : vector<8x1xf32> to vector<8x8xf32>
    %873 = arith.subf %869, %872 : vector<8x8xf32>
    %874 = math.exp %873 : vector<8x8xf32>
    %cst_307 = arith.constant dense<0.000000e+00> : vector<8xf32>
    %875 = vector.multi_reduction <add>, %874, %cst_307 [1] : vector<8x8xf32> to vector<8xf32>
    %876 = vector.shape_cast %875 : vector<8xf32> to vector<8x1xf32>
    %877 = vector.broadcast %876 : vector<8x1xf32> to vector<8x8xf32>
    %878 = arith.divf %874, %877 : vector<8x8xf32>
    %879 = vector.extract_strided_slice %839 {offsets = [0, 8], sizes = [8, 8], strides = [1, 1]} : vector<8x32xf32> to vector<8x8xf32>
    %cst_308 = arith.constant dense<0.000000e+00> : vector<8x8xf32>
    %880 = tpu.matmul %878, %879, %cst_308 {dimension_numbers = #tpu.dot_dimension_numbers<[1], [0], [0], [1], [0, 0, 1, 1], [], []>} : vector<8x8xf32>, vector<8x8xf32>, vector<8x8xf32> -> vector<8x8xf32>
    %881 = vector.extract_strided_slice %842 {offsets = [8, 0], sizes = [8, 32], strides = [1, 1]} : vector<32x32xf32> to vector<8x32xf32>
    %cst_309 = arith.constant dense<0.000000e+00> : vector<8x32xf32>
    %882 = tpu.matmul %880, %881, %cst_309 {dimension_numbers = #tpu.dot_dimension_numbers<[1], [0], [0], [1], [0, 0, 1, 1], [], []>} : vector<8x8xf32>, vector<8x32xf32>, vector<8x32xf32> -> vector<8x32xf32>
    %883 = arith.addf %862, %882 : vector<8x32xf32>
    %884 = arith.addf %858, %878 : vector<8x8xf32>
    %885 = vector.extract_strided_slice %831 {offsets = [0, 16], sizes = [8, 8], strides = [1, 1]} : vector<8x32xf32> to vector<8x8xf32>
    %886 = vector.extract_strided_slice %838 {offsets = [0, 16], sizes = [8, 8], strides = [1, 1]} : vector<8x32xf32> to vector<8x8xf32>
    %cst_310 = arith.constant dense<0.000000e+00> : vector<8x8xf32>
    %887 = tpu.matmul %885, %886, %cst_310 {dimension_numbers = #tpu.dot_dimension_numbers<[1], [1], [0], [0], [0, 0, 1, 0], [], []>} : vector<8x8xf32>, vector<8x8xf32>, vector<8x8xf32> -> vector<8x8xf32>
    %cst_311 = arith.constant 0.353553385 : f32
    %888 = vector.broadcast %cst_311 : f32 to vector<8x8xf32>
    %889 = arith.mulf %887, %888 : vector<8x8xf32>
    %890 = vector.broadcast %5 : vector<1x8xf32> to vector<8x8xf32>
    %891 = arith.addf %889, %890 : vector<8x8xf32>
    %cst_312 = arith.constant dense<0xFF800000> : vector<8xf32>
    %892 = vector.multi_reduction <maximumf>, %891, %cst_312 [1] : vector<8x8xf32> to vector<8xf32>
    %893 = vector.shape_cast %892 : vector<8xf32> to vector<8x1xf32>
    %894 = vector.broadcast %893 : vector<8x1xf32> to vector<8x8xf32>
    %895 = arith.subf %891, %894 : vector<8x8xf32>
    %896 = math.exp %895 : vector<8x8xf32>
    %cst_313 = arith.constant dense<0.000000e+00> : vector<8xf32>
    %897 = vector.multi_reduction <add>, %896, %cst_313 [1] : vector<8x8xf32> to vector<8xf32>
    %898 = vector.shape_cast %897 : vector<8xf32> to vector<8x1xf32>
    %899 = vector.broadcast %898 : vector<8x1xf32> to vector<8x8xf32>
    %900 = arith.divf %896, %899 : vector<8x8xf32>
    %901 = vector.extract_strided_slice %839 {offsets = [0, 16], sizes = [8, 8], strides = [1, 1]} : vector<8x32xf32> to vector<8x8xf32>
    %cst_314 = arith.constant dense<0.000000e+00> : vector<8x8xf32>
    %902 = tpu.matmul %900, %901, %cst_314 {dimension_numbers = #tpu.dot_dimension_numbers<[1], [0], [0], [1], [0, 0, 1, 1], [], []>} : vector<8x8xf32>, vector<8x8xf32>, vector<8x8xf32> -> vector<8x8xf32>
    %903 = vector.extract_strided_slice %842 {offsets = [16, 0], sizes = [8, 32], strides = [1, 1]} : vector<32x32xf32> to vector<8x32xf32>
    %cst_315 = arith.constant dense<0.000000e+00> : vector<8x32xf32>
    %904 = tpu.matmul %902, %903, %cst_315 {dimension_numbers = #tpu.dot_dimension_numbers<[1], [0], [0], [1], [0, 0, 1, 1], [], []>} : vector<8x8xf32>, vector<8x32xf32>, vector<8x32xf32> -> vector<8x32xf32>
    %905 = arith.addf %883, %904 : vector<8x32xf32>
    %906 = arith.addf %884, %900 : vector<8x8xf32>
    %907 = vector.extract_strided_slice %831 {offsets = [0, 24], sizes = [8, 8], strides = [1, 1]} : vector<8x32xf32> to vector<8x8xf32>
    %908 = vector.extract_strided_slice %838 {offsets = [0, 24], sizes = [8, 8], strides = [1, 1]} : vector<8x32xf32> to vector<8x8xf32>
    %cst_316 = arith.constant dense<0.000000e+00> : vector<8x8xf32>
    %909 = tpu.matmul %907, %908, %cst_316 {dimension_numbers = #tpu.dot_dimension_numbers<[1], [1], [0], [0], [0, 0, 1, 0], [], []>} : vector<8x8xf32>, vector<8x8xf32>, vector<8x8xf32> -> vector<8x8xf32>
    %cst_317 = arith.constant 0.353553385 : f32
    %910 = vector.broadcast %cst_317 : f32 to vector<8x8xf32>
    %911 = arith.mulf %909, %910 : vector<8x8xf32>
    %912 = vector.broadcast %5 : vector<1x8xf32> to vector<8x8xf32>
    %913 = arith.addf %911, %912 : vector<8x8xf32>
    %cst_318 = arith.constant dense<0xFF800000> : vector<8xf32>
    %914 = vector.multi_reduction <maximumf>, %913, %cst_318 [1] : vector<8x8xf32> to vector<8xf32>
    %915 = vector.shape_cast %914 : vector<8xf32> to vector<8x1xf32>
    %916 = vector.broadcast %915 : vector<8x1xf32> to vector<8x8xf32>
    %917 = arith.subf %913, %916 : vector<8x8xf32>
    %918 = math.exp %917 : vector<8x8xf32>
    %cst_319 = arith.constant dense<0.000000e+00> : vector<8xf32>
    %919 = vector.multi_reduction <add>, %918, %cst_319 [1] : vector<8x8xf32> to vector<8xf32>
    %920 = vector.shape_cast %919 : vector<8xf32> to vector<8x1xf32>
    %921 = vector.broadcast %920 : vector<8x1xf32> to vector<8x8xf32>
    %922 = arith.divf %918, %921 : vector<8x8xf32>
    %923 = vector.extract_strided_slice %839 {offsets = [0, 24], sizes = [8, 8], strides = [1, 1]} : vector<8x32xf32> to vector<8x8xf32>
    %cst_320 = arith.constant dense<0.000000e+00> : vector<8x8xf32>
    %924 = tpu.matmul %922, %923, %cst_320 {dimension_numbers = #tpu.dot_dimension_numbers<[1], [0], [0], [1], [0, 0, 1, 1], [], []>} : vector<8x8xf32>, vector<8x8xf32>, vector<8x8xf32> -> vector<8x8xf32>
    %925 = vector.extract_strided_slice %842 {offsets = [24, 0], sizes = [8, 32], strides = [1, 1]} : vector<32x32xf32> to vector<8x32xf32>
    %cst_321 = arith.constant dense<0.000000e+00> : vector<8x32xf32>
    %926 = tpu.matmul %924, %925, %cst_321 {dimension_numbers = #tpu.dot_dimension_numbers<[1], [0], [0], [1], [0, 0, 1, 1], [], []>} : vector<8x8xf32>, vector<8x32xf32>, vector<8x32xf32> -> vector<8x32xf32>
    %927 = arith.addf %905, %926 : vector<8x32xf32>
    %928 = arith.addf %906, %922 : vector<8x8xf32>
    %cst_322 = arith.constant 2.500000e-01 : f32
    %929 = vector.broadcast %cst_322 : f32 to vector<8x8xf32>
    %930 = arith.mulf %928, %929 : vector<8x8xf32>
    %931 = arith.addf %800, %927 : vector<8x32xf32>
    %c39 = arith.constant 39 : index
    %c0_323 = arith.constant 0 : index
    %932 = vector.load %arg6[%c39, %c0_323] : memref<56x128xf32, #tpu.memory_space<vmem>>, vector<1x32xf32>
    %933 = vector.broadcast %932 : vector<1x32xf32> to vector<8x32xf32>
    %934 = arith.addf %931, %933 : vector<8x32xf32>
    %c40 = arith.constant 40 : index
    %c0_324 = arith.constant 0 : index
    %935 = vector.load %arg6[%c40, %c0_324] : memref<56x128xf32, #tpu.memory_space<vmem>>, vector<1x32xf32>
    %c41 = arith.constant 41 : index
    %c0_325 = arith.constant 0 : index
    %936 = vector.load %arg6[%c41, %c0_325] : memref<56x128xf32, #tpu.memory_space<vmem>>, vector<1x32xf32>
    %cst_326 = arith.constant dense<0.000000e+00> : vector<8xf32>
    %937 = vector.multi_reduction <add>, %934, %cst_326 [1] : vector<8x32xf32> to vector<8xf32>
    %938 = vector.shape_cast %937 : vector<8xf32> to vector<8x1xf32>
    %cst_327 = arith.constant 3.200000e+01 : f32
    %939 = vector.broadcast %cst_327 : f32 to vector<8x1xf32>
    %940 = arith.divf %938, %939 : vector<8x1xf32>
    %941 = vector.broadcast %940 : vector<8x1xf32> to vector<8x32xf32>
    %942 = arith.subf %934, %941 : vector<8x32xf32>
    %943 = arith.mulf %942, %942 : vector<8x32xf32>
    %cst_328 = arith.constant dense<0.000000e+00> : vector<8xf32>
    %944 = vector.multi_reduction <add>, %943, %cst_328 [1] : vector<8x32xf32> to vector<8xf32>
    %945 = vector.shape_cast %944 : vector<8xf32> to vector<8x1xf32>
    %cst_329 = arith.constant 3.200000e+01 : f32
    %946 = vector.broadcast %cst_329 : f32 to vector<8x1xf32>
    %947 = arith.divf %945, %946 : vector<8x1xf32>
    %948 = vector.broadcast %940 : vector<8x1xf32> to vector<8x32xf32>
    %949 = arith.subf %934, %948 : vector<8x32xf32>
    %cst_330 = arith.constant 9.99999997E-7 : f32
    %950 = vector.broadcast %cst_330 : f32 to vector<8x1xf32>
    %951 = arith.addf %947, %950 : vector<8x1xf32>
    %952 = math.rsqrt %951 : vector<8x1xf32>
    %953 = vector.broadcast %952 : vector<8x1xf32> to vector<8x32xf32>
    %954 = arith.mulf %949, %953 : vector<8x32xf32>
    %955 = vector.broadcast %935 : vector<1x32xf32> to vector<8x32xf32>
    %956 = arith.mulf %954, %955 : vector<8x32xf32>
    %957 = vector.broadcast %936 : vector<1x32xf32> to vector<8x32xf32>
    %958 = arith.addf %956, %957 : vector<8x32xf32>
    %959 = arith.truncf %958 : vector<8x32xf32> to vector<8x32xbf16>
    %c20_331 = arith.constant 20 : index
    %c0_332 = arith.constant 0 : index
    %c0_333 = arith.constant 0 : index
    %960 = vector.load %arg5[%c20_331, %c0_332, %c0_333] : memref<23x64x128xbf16, #tpu.memory_space<vmem>>, vector<1x32x64xbf16>
    %961 = vector.shape_cast %960 : vector<1x32x64xbf16> to vector<32x64xbf16>
    %cst_334 = arith.constant dense<0.000000e+00> : vector<8x64xf32>
    %962 = tpu.matmul %959, %961, %cst_334 {dimension_numbers = #tpu.dot_dimension_numbers<[1], [0], [0], [1], [0, 0, 1, 1], [], []>} : vector<8x32xbf16>, vector<32x64xbf16>, vector<8x64xf32> -> vector<8x64xf32>
    %c42 = arith.constant 42 : index
    %c0_335 = arith.constant 0 : index
    %963 = vector.load %arg6[%c42, %c0_335] : memref<56x128xf32, #tpu.memory_space<vmem>>, vector<1x64xf32>
    %964 = vector.broadcast %963 : vector<1x64xf32> to vector<8x64xf32>
    %965 = arith.addf %962, %964 : vector<8x64xf32>
    %cst_336 = arith.constant 0.000000e+00 : f32
    %966 = vector.broadcast %cst_336 : f32 to vector<8x64xf32>
    %967 = arith.maximumf %965, %966 : vector<8x64xf32>
    %968 = arith.truncf %967 : vector<8x64xf32> to vector<8x64xbf16>
    %c21_337 = arith.constant 21 : index
    %c0_338 = arith.constant 0 : index
    %c0_339 = arith.constant 0 : index
    %969 = vector.load %arg5[%c21_337, %c0_338, %c0_339] : memref<23x64x128xbf16, #tpu.memory_space<vmem>>, vector<1x64x32xbf16>
    %970 = vector.shape_cast %969 : vector<1x64x32xbf16> to vector<64x32xbf16>
    %cst_340 = arith.constant dense<0.000000e+00> : vector<8x32xf32>
    %971 = tpu.matmul %968, %970, %cst_340 {dimension_numbers = #tpu.dot_dimension_numbers<[1], [0], [0], [1], [0, 0, 1, 1], [], []>} : vector<8x64xbf16>, vector<64x32xbf16>, vector<8x32xf32> -> vector<8x32xf32>
    %972 = arith.addf %934, %971 : vector<8x32xf32>
    %c43 = arith.constant 43 : index
    %c0_341 = arith.constant 0 : index
    %973 = vector.load %arg6[%c43, %c0_341] : memref<56x128xf32, #tpu.memory_space<vmem>>, vector<1x32xf32>
    %974 = vector.broadcast %973 : vector<1x32xf32> to vector<8x32xf32>
    %975 = arith.addf %972, %974 : vector<8x32xf32>
    %c44 = arith.constant 44 : index
    %c0_342 = arith.constant 0 : index
    %976 = vector.load %arg6[%c44, %c0_342] : memref<56x128xf32, #tpu.memory_space<vmem>>, vector<1x32xf32>
    %c45 = arith.constant 45 : index
    %c0_343 = arith.constant 0 : index
    %977 = vector.load %arg6[%c45, %c0_343] : memref<56x128xf32, #tpu.memory_space<vmem>>, vector<1x32xf32>
    %cst_344 = arith.constant dense<0.000000e+00> : vector<8xf32>
    %978 = vector.multi_reduction <add>, %975, %cst_344 [1] : vector<8x32xf32> to vector<8xf32>
    %979 = vector.shape_cast %978 : vector<8xf32> to vector<8x1xf32>
    %cst_345 = arith.constant 3.200000e+01 : f32
    %980 = vector.broadcast %cst_345 : f32 to vector<8x1xf32>
    %981 = arith.divf %979, %980 : vector<8x1xf32>
    %982 = vector.broadcast %981 : vector<8x1xf32> to vector<8x32xf32>
    %983 = arith.subf %975, %982 : vector<8x32xf32>
    %984 = arith.mulf %983, %983 : vector<8x32xf32>
    %cst_346 = arith.constant dense<0.000000e+00> : vector<8xf32>
    %985 = vector.multi_reduction <add>, %984, %cst_346 [1] : vector<8x32xf32> to vector<8xf32>
    %986 = vector.shape_cast %985 : vector<8xf32> to vector<8x1xf32>
    %cst_347 = arith.constant 3.200000e+01 : f32
    %987 = vector.broadcast %cst_347 : f32 to vector<8x1xf32>
    %988 = arith.divf %986, %987 : vector<8x1xf32>
    %989 = vector.broadcast %981 : vector<8x1xf32> to vector<8x32xf32>
    %990 = arith.subf %975, %989 : vector<8x32xf32>
    %cst_348 = arith.constant 9.99999997E-7 : f32
    %991 = vector.broadcast %cst_348 : f32 to vector<8x1xf32>
    %992 = arith.addf %988, %991 : vector<8x1xf32>
    %993 = math.rsqrt %992 : vector<8x1xf32>
    %994 = vector.broadcast %993 : vector<8x1xf32> to vector<8x32xf32>
    %995 = arith.mulf %990, %994 : vector<8x32xf32>
    %996 = vector.broadcast %976 : vector<1x32xf32> to vector<8x32xf32>
    %997 = arith.mulf %995, %996 : vector<8x32xf32>
    %998 = vector.broadcast %977 : vector<1x32xf32> to vector<8x32xf32>
    %999 = arith.addf %997, %998 : vector<8x32xf32>
    %1000 = tpu.iota {dimensions = array<i32: 1>} : vector<1x128xi32>
    %1001 = arith.truncf %999 : vector<8x32xf32> to vector<8x32xbf16>
    %c22_349 = arith.constant 22 : index
    %c0_350 = arith.constant 0 : index
    %c0_351 = arith.constant 0 : index
    %1002 = vector.load %arg5[%c22_349, %c0_350, %c0_351] : memref<23x64x128xbf16, #tpu.memory_space<vmem>>, vector<1x32x128xbf16>
    %1003 = vector.shape_cast %1002 : vector<1x32x128xbf16> to vector<32x128xbf16>
    %cst_352 = arith.constant dense<0.000000e+00> : vector<8x128xf32>
    %1004 = tpu.matmul %1001, %1003, %cst_352 {dimension_numbers = #tpu.dot_dimension_numbers<[1], [0], [0], [1], [0, 0, 1, 1], [], []>} : vector<8x32xbf16>, vector<32x128xbf16>, vector<8x128xf32> -> vector<8x128xf32>
    %c50_i32 = arith.constant 50 : i32
    %1005 = vector.broadcast %c50_i32 : i32 to vector<1x128xi32>
    %1006 = arith.cmpi slt, %1000, %1005 : vector<1x128xi32>
    %cst_353 = arith.constant 0.000000e+00 : f32
    %cst_354 = arith.constant -1.000000e+09 : f32
    %1007 = vector.broadcast %cst_353 : f32 to vector<1x128xf32>
    %1008 = vector.broadcast %cst_354 : f32 to vector<1x128xf32>
    %1009 = arith.select %1006, %1007, %1008 : vector<1x128xi1>, vector<1x128xf32>
    %1010 = vector.broadcast %1009 : vector<1x128xf32> to vector<8x128xf32>
    %1011 = arith.addf %1004, %1010 : vector<8x128xf32>
    %cst_355 = arith.constant dense<0xFF800000> : vector<8xf32>
    %1012 = vector.multi_reduction <maximumf>, %1011, %cst_355 [1] : vector<8x128xf32> to vector<8xf32>
    %1013 = vector.shape_cast %1012 : vector<8xf32> to vector<8x1xf32>
    %1014 = vector.broadcast %1013 : vector<8x1xf32> to vector<8x128xf32>
    %1015 = arith.subf %1011, %1014 : vector<8x128xf32>
    %1016 = math.exp %1015 : vector<8x128xf32>
    %cst_356 = arith.constant dense<0.000000e+00> : vector<8xf32>
    %1017 = vector.multi_reduction <add>, %1016, %cst_356 [1] : vector<8x128xf32> to vector<8xf32>
    %1018 = vector.shape_cast %1017 : vector<8xf32> to vector<8x1xf32>
    %1019 = vector.broadcast %1018 : vector<8x1xf32> to vector<8x128xf32>
    %1020 = arith.divf %1016, %1019 : vector<8x128xf32>
    %cst_357 = arith.constant dense<0.000000e+00> : vector<8x32xf32>
    %1021 = tpu.matmul %930, %369, %cst_357 {dimension_numbers = #tpu.dot_dimension_numbers<[1], [0], [0], [1], [0, 0, 1, 1], [], []>} : vector<8x8xf32>, vector<8x32xf32>, vector<8x32xf32> -> vector<8x32xf32>
    %c46 = arith.constant 46 : index
    %c0_358 = arith.constant 0 : index
    %1022 = vector.load %arg6[%c46, %c0_358] : memref<56x128xf32, #tpu.memory_space<vmem>>, vector<1x32xf32>
    %1023 = vector.broadcast %1022 : vector<1x32xf32> to vector<8x32xf32>
    %1024 = arith.mulf %999, %1023 : vector<8x32xf32>
    %cst_359 = arith.constant dense<0.000000e+00> : vector<8xf32>
    %1025 = vector.multi_reduction <add>, %1024, %cst_359 [1] : vector<8x32xf32> to vector<8xf32>
    %1026 = vector.shape_cast %1025 : vector<8xf32> to vector<8x1xf32>
    %c47 = arith.constant 47 : index
    %c0_360 = arith.constant 0 : index
    %1027 = vector.load %arg6[%c47, %c0_360] : memref<56x128xf32, #tpu.memory_space<vmem>>, vector<1x32xf32>
    %1028 = vector.broadcast %1027 : vector<1x32xf32> to vector<8x32xf32>
    %1029 = arith.mulf %1021, %1028 : vector<8x32xf32>
    %cst_361 = arith.constant dense<0.000000e+00> : vector<8xf32>
    %1030 = vector.multi_reduction <add>, %1029, %cst_361 [1] : vector<8x32xf32> to vector<8xf32>
    %1031 = vector.shape_cast %1030 : vector<8xf32> to vector<8x1xf32>
    %1032 = arith.addf %1026, %1031 : vector<8x1xf32>
    %c48 = arith.constant 48 : index
    %c0_362 = arith.constant 0 : index
    %1033 = vector.load %arg6[%c48, %c0_362] : memref<56x128xf32, #tpu.memory_space<vmem>>, vector<1x1xf32>
    %1034 = vector.broadcast %1033 : vector<1x1xf32> to vector<8x1xf32>
    %1035 = arith.addf %1032, %1034 : vector<8x1xf32>
    %1036 = arith.negf %1035 : vector<8x1xf32>
    %1037 = math.exp %1036 : vector<8x1xf32>
    %cst_363 = arith.constant 1.000000e+00 : f32
    %1038 = vector.broadcast %cst_363 : f32 to vector<8x1xf32>
    %1039 = arith.addf %1038, %1037 : vector<8x1xf32>
    %1040 = arith.divf %1038, %1039 : vector<8x1xf32>
    %c0_364 = arith.constant 0 : index
    %c0_365 = arith.constant 0 : index
    %c0_366 = arith.constant 0 : index
    %1041 = vector.load %arg4[%c0_364, %c0_365, %c0_366] : memref<1x8x1xi32, #tpu.memory_space<vmem>>, vector<1x8x1xi32>
    %1042 = vector.shape_cast %1041 : vector<1x8x1xi32> to vector<8x1xi32>
    %1043 = tpu.iota {dimensions = array<i32: 1>} : vector<8x128xi32>
    %1044 = vector.broadcast %1042 : vector<8x1xi32> to vector<8x128xi32>
    %1045 = arith.cmpi eq, %1044, %1043 : vector<8x128xi32>
    %1046 = arith.extui %1045 : vector<8x128xi1> to vector<8x128xi32>
    %1047 = arith.sitofp %1046 : vector<8x128xi32> to vector<8x128xf32>
    %cst_367 = arith.constant dense<0.000000e+00> : vector<8x128xf32>
    %1048 = tpu.matmul %930, %1047, %cst_367 {dimension_numbers = #tpu.dot_dimension_numbers<[1], [0], [0], [1], [0, 0, 1, 1], [], []>} : vector<8x8xf32>, vector<8x128xf32>, vector<8x128xf32> -> vector<8x128xf32>
    %1049 = vector.broadcast %1040 : vector<8x1xf32> to vector<8x128xf32>
    %1050 = arith.mulf %1049, %1020 : vector<8x128xf32>
    %cst_368 = arith.constant 1.000000e+00 : f32
    %1051 = vector.broadcast %cst_368 : f32 to vector<8x1xf32>
    %1052 = arith.subf %1051, %1040 : vector<8x1xf32>
    %1053 = vector.broadcast %1052 : vector<8x1xf32> to vector<8x128xf32>
    %1054 = arith.mulf %1053, %1048 : vector<8x128xf32>
    %1055 = arith.addf %1050, %1054 : vector<8x128xf32>
    %c0_369 = arith.constant 0 : index
    %c0_370 = arith.constant 0 : index
    %c0_371 = arith.constant 0 : index
    %1056 = vector.load %arg7[%c0_369, %c0_370, %c0_371] : memref<1x8x128xf32, #tpu.memory_space<vmem>>, vector<1x8x128xf32>
    %1057 = vector.shape_cast %1056 : vector<1x8x128xf32> to vector<8x128xf32>
    %1058 = vector.shape_cast %1055 : vector<8x128xf32> to vector<1x8x128xf32>
    tpu.vector_store %arg7[%c0_369, %c0_370, %c0_371], %1058 {strides = array<i32>} : memref<1x8x128xf32, #tpu.memory_space<vmem>>, vector<1x8x128xf32>,
    %cst_372 = arith.constant 0.000000e+00 : f32
    %1059 = vector.broadcast %cst_372 : f32 to vector<8x120xf32>
    %1060 = tpu.concatenate %930, %1059 in 1 : vector<8x8xf32>, vector<8x120xf32> -> vector<8x128xf32>
    %c0_373 = arith.constant 0 : index
    %c0_374 = arith.constant 0 : index
    %c0_375 = arith.constant 0 : index
    %1061 = vector.load %arg8[%c0_373, %c0_374, %c0_375] : memref<1x8x128xf32, #tpu.memory_space<vmem>>, vector<1x8x128xf32>
    %1062 = vector.shape_cast %1061 : vector<1x8x128xf32> to vector<8x128xf32>
    %1063 = vector.shape_cast %1060 : vector<8x128xf32> to vector<1x8x128xf32>
    tpu.vector_store %arg8[%c0_373, %c0_374, %c0_375], %1063 {strides = array<i32>} : memref<1x8x128xf32, #tpu.memory_space<vmem>>, vector<1x8x128xf32>,
    return
  }
  func.func @transform_0(%arg0: i32) -> (i32, i32, i32) {
    %c0_i32 = arith.constant 0 : i32
    %c0_i32_0 = arith.constant 0 : i32
    %c0_i32_1 = arith.constant 0 : i32
    return %arg0, %c0_i32, %c0_i32_0 : i32, i32, i32
  }
  func.func @transform_1(%arg0: i32) -> (i32, i32, i32) {
    %c0_i32 = arith.constant 0 : i32
    %c0_i32_0 = arith.constant 0 : i32
    %c0_i32_1 = arith.constant 0 : i32
    return %arg0, %c0_i32, %c0_i32_0 : i32, i32, i32
  }
  func.func @transform_2(%arg0: i32) -> (i32, i32, i32) {
    %c0_i32 = arith.constant 0 : i32
    %c0_i32_0 = arith.constant 0 : i32
    %c0_i32_1 = arith.constant 0 : i32
    return %arg0, %c0_i32, %c0_i32_0 : i32, i32, i32
  }
  func.func @transform_3(%arg0: i32) -> (i32, i32, i32) {
    %c0_i32 = arith.constant 0 : i32
    %c0_i32_0 = arith.constant 0 : i32
    %c0_i32_1 = arith.constant 0 : i32
    return %arg0, %c0_i32, %c0_i32_0 : i32, i32, i32
  }
  func.func @transform_4(%arg0: i32) -> (i32, i32, i32) {
    %c0_i32 = arith.constant 0 : i32
    %c0_i32_0 = arith.constant 0 : i32
    %c0_i32_1 = arith.constant 0 : i32
    %c0_i32_2 = arith.constant 0 : i32
    return %c0_i32, %c0_i32_0, %c0_i32_1 : i32, i32, i32
  }
  func.func @transform_5(%arg0: i32) -> (i32, i32) {
    %c0_i32 = arith.constant 0 : i32
    %c0_i32_0 = arith.constant 0 : i32
    %c0_i32_1 = arith.constant 0 : i32
    return %c0_i32, %c0_i32_0 : i32, i32
  }
  func.func @transform_6(%arg0: i32) -> (i32, i32, i32) {
    %c0_i32 = arith.constant 0 : i32
    %c0_i32_0 = arith.constant 0 : i32
    %c0_i32_1 = arith.constant 0 : i32
    return %arg0, %c0_i32, %c0_i32_0 : i32, i32, i32
  }
  func.func @transform_7(%arg0: i32) -> (i32, i32, i32) {
    %c0_i32 = arith.constant 0 : i32
    %c0_i32_0 = arith.constant 0 : i32
    %c0_i32_1 = arith.constant 0 : i32
    return %arg0, %c0_i32, %c0_i32_0 : i32, i32, i32
  }
}

</mosaic_0001>

<llo_original>
// kernel: seq2seq_forward.1
$region0: #{seq2seq_forward.1}
  #allocation0 [shape = 'u32[]', space=smem, size = 0x4, offset = 0x4, fixed_abs, tag = 'smem constant byte address 0x4 - core index']
  #allocation1 [shape = 'u32[144,128]{1,0:T(1,128)}', space=vmem, size = 0x12000, scoped, tag = 'internal scratch']
  %s0 = inlined_call_operand.vmem [shape: f32[2,8,32], index: 0, kind: input, shape index: {}]
  %s1 = inlined_call_operand.vmem [shape: f32[2,8,32], index: 1, kind: input, shape index: {}]
  %s2 = inlined_call_operand.vmem [shape: f32[2,1,8], index: 2, kind: input, shape index: {}]
  %s3 = inlined_call_operand.vmem [shape: s32[2,8,1], index: 3, kind: input, shape index: {}]
  %s4 = inlined_call_operand.hbm [shape: bf16[23,64,128], index: 4, kind: input, shape index: {}]
  %s5 = inlined_call_operand.vmem [shape: f32[56,128], index: 5, kind: input, shape index: {}]
  %s6 = inlined_call_operand.hbm [shape: f32[2,8,128], index: 6, kind: output, shape index: {0}]
  %s7 = inlined_call_operand.hbm [shape: f32[2,8,128], index: 7, kind: output, shape index: {1}]
  %8 = xla_tuple %s6, %s7
  %s9 = sld [smem:[#allocation0]]
  $region69: #{seq2seq_forward.1} parent=0
    _
  %s11 = ssub.s32 1, %s9
  %s12 = scalar_select 0, %s11, %s9
  $region1: #{seq2seq_forward.1} parent=0
    #allocation2 [shape = 'u8[376832]{0}', space=vmem, size = 0x5c000, scoped, tag = 'input window, operand 4, single buffered']
    #allocation3 [shape = 's32[2]{0}', space=sflag, size = 0x8, scoped, tag = 'scoped memory for seq2seq_forward.1']
    #allocation4 [shape = 's32[2]{0}', space=sflag, size = 0x8, scoped, tag = 'scoped memory for seq2seq_forward.1']
    #allocation5 [shape = 'u8[8192]{0}', space=vmem, size = 0x2000, scoped, tag = 'output window, operand 0']
    #allocation6 [shape = 'u8[8192]{0}', space=vmem, size = 0x2000, scoped, tag = 'output window, operand 1']
    #allocation7 [shape = 's32[2]{0}', space=sflag, size = 0x8, scoped, tag = 'scoped memory for seq2seq_forward.1']
    %13 = vsyncpa [#allocation3], 0
    %14 = vsyncpa [#allocation4], 0
    %s15 = scalar_lea.sflag [#allocation4], 1
    %16 = vsyncpa %s15, 0
    %17 = vsyncpa [#allocation7], 0
    %s18 = scalar_lea.sflag [#allocation7], 1
    %19 = vsyncpa %s18, 0
    loop: start=0, step=1, limit=4
    $region2: #{seq2seq_forward.1} parent=1 // loop_pre_header
      _
    $region3: #{seq2seq_forward.1} parent=1 // loop_header
      %s21 = sphi 0, %s25
      %p22 = scmp.ge.s32.totalorder %s21, 4
      %s31 = sphi 0, %s33
      %s34 = sphi 0, %s31
      %s35 = sphi 0, %s34
      %s51 = sphi 0, %s35
      %s57 = sphi 0, %s59
      %s60 = sphi 0, %s57
      %s61 = sphi 0, %s60
      %s77 = sphi 0, %s61
      %s83 = sphi 0, %s85
      %s86 = sphi 0, %s83
      %s87 = sphi 0, %s86
      %s103 = sphi 0, %s87
      %s109 = sphi 0, %s111
      %s112 = sphi 0, %s109
      %s113 = sphi 0, %s112
      %s129 = sphi 0, %s113
      %s133 = sphi 0, %s133
      %s135 = sphi 0, %s133
      %s136 = sphi 0, %s135
      %s150 = sphi 0, %s136
      %s154 = sphi 0, %s154
      %s156 = sphi 0, %s154
      %s157 = sphi 0, %s156
      %s171 = sphi 0, %s157
      %s177 = sphi 0, %s179
      %s180 = sphi 0, %s177
      %s181 = sphi 0, %s180
      %s197 = sphi 0, %s181
      %s203 = sphi 0, %s205
      %s206 = sphi 0, %s203
      %s207 = sphi 0, %s206
      %s223 = sphi 0, %s207
    $region4: #{seq2seq_forward.1} parent=1 // loop_header_branch
      %24 = sbr.rel (%p22) target = $region8
    $region5: #{seq2seq_forward.1} parent=1 // loop_body
      %s26 = ssub.s32 %s21, 1
      %s27 = ssub.s32 %s21, 2
      %s28 = sadd.s32 %s21, 1
      %s29 = ssub.s32 %s21, %s28
      %p30 = scmp.eq.s32.totalorder %s29, 0
      %s32 = sadd.s32 %s31, 1
      %s33 = scalar_select %p30, %s31, %s32
      %p36 = pneg %p30
      %p37 = scmp.eq.s32.totalorder %s21, 1
      %p38 = por %p36, %p37
      %p39 = scmp.ne.s32.totalorder %s31, %s34
      %p40 = scmp.eq.s32.totalorder %s21, 0
      %p41 = por %p39, %p40
      %p42 = scmp.ne.s32.totalorder %s31, %s34
      %p43 = scmp.eq.s32.totalorder %s26, 1
      %p44 = por %p42, %p43
      %p45 = scmp.ne.s32.totalorder %s34, %s35
      %p46 = scmp.eq.s32.totalorder %s26, 0
      %p47 = por %p45, %p46
      %p48 = scmp.ne.s32.totalorder %s34, %s35
      %p49 = scmp.eq.s32.totalorder %s27, 1
      %p50 = por %p48, %p49
      %p52 = scmp.ne.s32.totalorder %s35, %s51
      %p53 = scmp.eq.s32.totalorder %s27, 0
      %p54 = por %p52, %p53
      %s55 = ssub.s32 %s21, %s28
      %p56 = scmp.eq.s32.totalorder %s55, 0
      %s58 = sadd.s32 %s57, 1
      %s59 = scalar_select %p56, %s57, %s58
      %p62 = pneg %p56
      %p63 = scmp.eq.s32.totalorder %s21, 1
      %p64 = por %p62, %p63
      %p65 = scmp.ne.s32.totalorder %s57, %s60
      %p66 = scmp.eq.s32.totalorder %s21, 0
      %p67 = por %p65, %p66
      %p68 = scmp.ne.s32.totalorder %s57, %s60
      %p69 = scmp.eq.s32.totalorder %s26, 1
      %p70 = por %p68, %p69
      %p71 = scmp.ne.s32.totalorder %s60, %s61
      %p72 = scmp.eq.s32.totalorder %s26, 0
      %p73 = por %p71, %p72
      %p74 = scmp.ne.s32.totalorder %s60, %s61
      %p75 = scmp.eq.s32.totalorder %s27, 1
      %p76 = por %p74, %p75
      %p78 = scmp.ne.s32.totalorder %s61, %s77
      %p79 = scmp.eq.s32.totalorder %s27, 0
      %p80 = por %p78, %p79
      %s81 = ssub.s32 %s21, %s28
      %p82 = scmp.eq.s32.totalorder %s81, 0
      %s84 = sadd.s32 %s83, 1
      %s85 = scalar_select %p82, %s83, %s84
      %p88 = pneg %p82
      %p89 = scmp.eq.s32.totalorder %s21, 1
      %p90 = por %p88, %p89
      %p91 = scmp.ne.s32.totalorder %s83, %s86
      %p92 = scmp.eq.s32.totalorder %s21, 0
      %p93 = por %p91, %p92
      %p94 = scmp.ne.s32.totalorder %s83, %s86
      %p95 = scmp.eq.s32.totalorder %s26, 1
      %p96 = por %p94, %p95
      %p97 = scmp.ne.s32.totalorder %s86, %s87
      %p98 = scmp.eq.s32.totalorder %s26, 0
      %p99 = por %p97, %p98
      %p100 = scmp.ne.s32.totalorder %s86, %s87
      %p101 = scmp.eq.s32.totalorder %s27, 1
      %p102 = por %p100, %p101
      %p104 = scmp.ne.s32.totalorder %s87, %s103
      %p105 = scmp.eq.s32.totalorder %s27, 0
      %p106 = por %p104, %p105
      %s107 = ssub.s32 %s21, %s28
      %p108 = scmp.eq.s32.totalorder %s107, 0
      %s110 = sadd.s32 %s109, 1
      %s111 = scalar_select %p108, %s109, %s110
      %p114 = pneg %p108
      %p115 = scmp.eq.s32.totalorder %s21, 1
      %p116 = por %p114, %p115
      %p117 = scmp.ne.s32.totalorder %s109, %s112
      %p118 = scmp.eq.s32.totalorder %s21, 0
      %p119 = por %p117, %p118
      %p120 = scmp.ne.s32.totalorder %s109, %s112
      %p121 = scmp.eq.s32.totalorder %s26, 1
      %p122 = por %p120, %p121
      %p123 = scmp.ne.s32.totalorder %s112, %s113
      %p124 = scmp.eq.s32.totalorder %s26, 0
      %p125 = por %p123, %p124
      %p126 = scmp.ne.s32.totalorder %s112, %s113
      %p127 = scmp.eq.s32.totalorder %s27, 1
      %p128 = por %p126, %p127
      %p130 = scmp.ne.s32.totalorder %s113, %s129
      %p131 = scmp.eq.s32.totalorder %s27, 0
      %p132 = por %p130, %p131
      %s134 = sadd.s32 %s133, 1
      %p137 = scmp.eq.s32.totalorder %s21, 1
      %p138 = scmp.ne.s32.totalorder %s133, %s135
      %p139 = scmp.eq.s32.totalorder %s21, 0
      %p140 = por %p138, %p139
      %p141 = scmp.ne.s32.totalorder %s133, %s135
      %p142 = scmp.eq.s32.totalorder %s26, 1
      %p143 = por %p141, %p142
      %p144 = scmp.ne.s32.totalorder %s135, %s136
      %p145 = scmp.eq.s32.totalorder %s26, 0
      %p146 = por %p144, %p145
      %p147 = scmp.ne.s32.totalorder %s135, %s136
      %p148 = scmp.eq.s32.totalorder %s27, 1
      %p149 = por %p147, %p148
      %p151 = scmp.ne.s32.totalorder %s136, %s150
      %p152 = scmp.eq.s32.totalorder %s27, 0
      %p153 = por %p151, %p152
      %s155 = sadd.s32 %s154, 1
      %p158 = scmp.eq.s32.totalorder %s21, 1
      %p159 = scmp.ne.s32.totalorder %s154, %s156
      %p160 = scmp.eq.s32.totalorder %s21, 0
      %p161 = por %p159, %p160
      %p162 = scmp.ne.s32.totalorder %s154, %s156
      %p163 = scmp.eq.s32.totalorder %s26, 1
      %p164 = por %p162, %p163
      %p165 = scmp.ne.s32.totalorder %s156, %s157
      %p166 = scmp.eq.s32.totalorder %s26, 0
      %p167 = por %p165, %p166
      %p168 = scmp.ne.s32.totalorder %s156, %s157
      %p169 = scmp.eq.s32.totalorder %s27, 1
      %p170 = por %p168, %p169
      %p172 = scmp.ne.s32.totalorder %s157, %s171
      %p173 = scmp.eq.s32.totalorder %s27, 0
      %p174 = por %p172, %p173
      %s175 = ssub.s32 %s21, %s28
      %p176 = scmp.eq.s32.totalorder %s175, 0
      %s178 = sadd.s32 %s177, 1
      %s179 = scalar_select %p176, %s177, %s178
      %p182 = pneg %p176
      %p183 = scmp.eq.s32.totalorder %s21, 1
      %p184 = por %p182, %p183
      %p185 = scmp.ne.s32.totalorder %s177, %s180
      %p186 = scmp.eq.s32.totalorder %s21, 0
      %p187 = por %p185, %p186
      %p188 = scmp.ne.s32.totalorder %s177, %s180
      %p189 = scmp.eq.s32.totalorder %s26, 1
      %p190 = por %p188, %p189
      %p191 = scmp.ne.s32.totalorder %s180, %s181
      %p192 = scmp.eq.s32.totalorder %s26, 0
      %p193 = por %p191, %p192
      %p194 = scmp.ne.s32.totalorder %s180, %s181
      %p195 = scmp.eq.s32.totalorder %s27, 1
      %p196 = por %p194, %p195
      %p198 = scmp.ne.s32.totalorder %s181, %s197
      %p199 = scmp.eq.s32.totalorder %s27, 0
      %p200 = por %p198, %p199
      %s201 = ssub.s32 %s21, %s28
      %p202 = scmp.eq.s32.totalorder %s201, 0
      %s204 = sadd.s32 %s203, 1
      %s205 = scalar_select %p202, %s203, %s204
      %p208 = pneg %p202
      %p209 = scmp.eq.s32.totalorder %s21, 1
      %p210 = por %p208, %p209
      %p211 = scmp.ne.s32.totalorder %s203, %s206
      %p212 = scmp.eq.s32.totalorder %s21, 0
      %p213 = por %p211, %p212
      %p214 = scmp.ne.s32.totalorder %s203, %s206
      %p215 = scmp.eq.s32.totalorder %s26, 1
      %p216 = por %p214, %p215
      %p217 = scmp.ne.s32.totalorder %s206, %s207
      %p218 = scmp.eq.s32.totalorder %s26, 0
      %p219 = por %p217, %p218
      %p220 = scmp.ne.s32.totalorder %s206, %s207
      %p221 = scmp.eq.s32.totalorder %s27, 1
      %p222 = por %p220, %p221
      %p224 = scmp.ne.s32.totalorder %s207, %s223
      %p225 = scmp.eq.s32.totalorder %s27, 0
      %p226 = por %p224, %p225
      %p227 = scmp.le.s32.totalorder 1, %s21
      %p228 = scmp.lt.s32.totalorder %s21, 3
      %p229 = pnand %p227, %p228
      %p230 = pneg %p229
      // Predicated region
      $region9: #{seq2seq_forward.1} parent=5 // pred_check
        _
      $region10: #{seq2seq_forward.1} parent=5 // pred_check_branch
        %232 = sbr.rel (%p229) target = $region12
      $region11: #{seq2seq_forward.1} parent=5 // pred_region
        %s233 = ssub.s32 %s21, 1
        // Predicated region
        $region13: #{seq2seq_forward.1} parent=11 // pred_check
          %p234 = pneg %p146
        $region14: #{seq2seq_forward.1} parent=11 // pred_check_branch
          %236 = sbr.rel (%p234) target = $region16
        $region15: #{seq2seq_forward.1} parent=11 // pred_region
          %s238 = ssub.s32 11776, 11776
          %239 = vsyncadd [#allocation3], %s238
          %s240 = sshll.u32 [#allocation2], 4
          %s241 = int_to_ptr.vmem [resolvable:$true] %s240
          %246 = dma.hbm_to_vmem [thread:$0]  %s4, 11776, %s241, [#allocation3], 64, 64, 4
        $region16: #{seq2seq_forward.1} parent=11 // pred_fallthru
          _
        // Predicated region
        $region17: #{seq2seq_forward.1} parent=11 // pred_check
          %p247 = pneg %p167
        $region18: #{seq2seq_forward.1} parent=11 // pred_check_branch
          %249 = sbr.rel (%p247) target = $region20
        $region19: #{seq2seq_forward.1} parent=11 // pred_region
          _
        $region20: #{seq2seq_forward.1} parent=11 // pred_fallthru
          _
      $region12: #{seq2seq_forward.1} parent=5 // pred_fallthru
        _
      %p250 = scmp.lt.s32.totalorder %s21, 2
      // Predicated region
      $region21: #{seq2seq_forward.1} parent=5 // pred_check
        %p251 = pneg %p250
      $region22: #{seq2seq_forward.1} parent=5 // pred_check_branch
        %253 = sbr.rel (%p251) target = $region24
      $region23: #{seq2seq_forward.1} parent=5 // pred_region
        // Predicated region
        $region25: #{seq2seq_forward.1} parent=23 // pred_check
          %p254 = pneg %p41
        $region26: #{seq2seq_forward.1} parent=23 // pred_check_branch
          %256 = sbr.rel (%p254) target = $region28
        $region27: #{seq2seq_forward.1} parent=23 // pred_region
          %p257 = scmp.lt.s32.totalorder %s21, 1
          %s258 = scalar_select %p257, %s21, 1
          %s259 = smul.addr %s258, 8
          %s260 = scalar_lea.vmem %s0, %s259
        $region28: #{seq2seq_forward.1} parent=23 // pred_fallthru
          _
        // Predicated region
        $region29: #{seq2seq_forward.1} parent=23 // pred_check
          %p261 = pneg %p67
        $region30: #{seq2seq_forward.1} parent=23 // pred_check_branch
          %263 = sbr.rel (%p261) target = $region32
        $region31: #{seq2seq_forward.1} parent=23 // pred_region
          %p264 = scmp.lt.s32.totalorder %s21, 1
          %s265 = scalar_select %p264, %s21, 1
          %s266 = smul.addr %s265, 8
          %s267 = scalar_lea.vmem %s1, %s266
        $region32: #{seq2seq_forward.1} parent=23 // pred_fallthru
          _
        // Predicated region
        $region33: #{seq2seq_forward.1} parent=23 // pred_check
          %p268 = pneg %p93
        $region34: #{seq2seq_forward.1} parent=23 // pred_check_branch
          %270 = sbr.rel (%p268) target = $region36
        $region35: #{seq2seq_forward.1} parent=23 // pred_region
          %p271 = scmp.lt.s32.totalorder %s21, 1
          %s272 = scalar_select %p271, %s21, 1
          %s273 = scalar_lea.vmem %s2, %s272
        $region36: #{seq2seq_forward.1} parent=23 // pred_fallthru
          _
        // Predicated region
        $region37: #{seq2seq_forward.1} parent=23 // pred_check
          %p274 = pneg %p119
        $region38: #{seq2seq_forward.1} parent=23 // pred_check_branch
          %276 = sbr.rel (%p274) target = $region40
        $region39: #{seq2seq_forward.1} parent=23 // pred_region
          %p277 = scmp.lt.s32.totalorder %s21, 1
          %s278 = scalar_select %p277, %s21, 1
          %s279 = smul.addr %s278, 8
          %s280 = scalar_lea.vmem %s3, %s279
        $region40: #{seq2seq_forward.1} parent=23 // pred_fallthru
          _
      $region24: #{seq2seq_forward.1} parent=5 // pred_fallthru
        _
      %p281 = scmp.le.s32.totalorder 1, %s21
      %p282 = scmp.lt.s32.totalorder %s21, 3
      %p283 = pnand %p281, %p282
      %p284 = pneg %p283
      // Predicated region
      $region41: #{seq2seq_forward.1} parent=5 // pred_check
        _
      $region42: #{seq2seq_forward.1} parent=5 // pred_check_branch
        %286 = sbr.rel (%p283) target = $region44
      $region43: #{seq2seq_forward.1} parent=5 // pred_region
        %s287 = ssub.s32 %s21, 1
        // Predicated region
        $region45: #{seq2seq_forward.1} parent=43 // pred_check
          %p288 = pneg %p146
        $region46: #{seq2seq_forward.1} parent=43 // pred_check_branch
          %290 = sbr.rel (%p288) target = $region48
        $region47: #{seq2seq_forward.1} parent=43 // pred_region
          %291 = dma.done [#allocation3], 11776
        $region48: #{seq2seq_forward.1} parent=43 // pred_fallthru
          _
        %p292 = scmp.lt.s32.totalorder %s26, 1
        %s293 = scalar_select %p292, %s26, 1
        %s294 = smul.addr %s293, 8
        %s295 = scalar_lea.vmem %s0, %s294
        %p296 = pneg %p47
        %p297 = pneg %p44
        %p298 = scmp.lt.s32.totalorder %s26, 1
        %s299 = scalar_select %p298, %s26, 1
        %s300 = smul.addr %s299, 8
        %s301 = scalar_lea.vmem %s1, %s300
        %p302 = pneg %p73
        %p303 = pneg %p70
        %p304 = scmp.lt.s32.totalorder %s26, 1
        %s305 = scalar_select %p304, %s26, 1
        %s306 = scalar_lea.vmem %s2, %s305
        %p307 = pneg %p99
        %p308 = pneg %p96
        %p309 = scmp.lt.s32.totalorder %s26, 1
        %s310 = scalar_select %p309, %s26, 1
        %s311 = smul.addr %s310, 8
        %s312 = scalar_lea.vmem %s3, %s311
        %p313 = pneg %p125
        %p314 = pneg %p122
        %p315 = pneg %p146
        %p316 = pneg %p143
        %p317 = pneg %p167
        %p318 = pneg %p164
        %p319 = pneg %p193
        %p320 = pneg %p190
        %s321 = sand.u32 %s180, 1
        %s322 = scalar_lea.sflag [#allocation4], %s321
        %s323 = sand.u32 %s180, 1
        %s324 = smul.addr %s323, 8
        %s325 = scalar_lea.vmem [#allocation5], %s324
        %p326 = pneg %p219
        %p327 = pneg %p216
        %s328 = sand.u32 %s206, 1
        %s329 = scalar_lea.sflag [#allocation7], %s328
        %s330 = sand.u32 %s206, 1
        %s331 = smul.addr %s330, 8
        %s332 = scalar_lea.vmem [#allocation6], %s331
        %p333 = scmp.lt.s32.totalorder %s26, 1
        %s334 = scalar_select %p333, %s26, 1
        %s335 = smul.addr %s334, 8
        %s336 = scalar_lea.vmem %s0, %s335
        %p337 = scmp.lt.s32.totalorder %s26, 1
        %s338 = scalar_select %p337, %s26, 1
        %s339 = smul.addr %s338, 8
        %s340 = scalar_lea.vmem %s1, %s339
        %p341 = scmp.lt.s32.totalorder %s26, 1
        %s342 = scalar_select %p341, %s26, 1
        %s343 = scalar_lea.vmem %s2, %s342
        %p344 = scmp.lt.s32.totalorder %s26, 1
        %s345 = scalar_select %p344, %s26, 1
        %s346 = smul.addr %s345, 8
        %s347 = scalar_lea.vmem %s3, %s346
        %v349 = vld [vmem:[%s343] sm:$0x1]
        %v350 = vsub.f32 1.0, %v349
        %v351 = vmul.f32 %v350, -1e+09
        %v352 = vld [vmem:[%s336] sm:$0xff]
        %v353 = vld [vmem:[%s5] sm:$0x1]
        %v354 = vld [vmem:[%s5 + $0x1] sm:$0x1]
        %vm355 = vcmask 261120
        %v356 = vsel %vm355, %v352, 0.0
        %357 = vadd.xlane.f32.xlu0 %v356
        %v358 = vpop.xlane.xlu0 %357
        %v359 = vrcp.pop 32.0
        %v360 = vmul.f32 %v358, %v359
        %v361 = vsub.f32 %v352, %v360
        %v362 = vmul.f32 %v361, %v361
        %v363 = vsel %vm355, %v362, 0.0
        %364 = vadd.xlane.f32.xlu0 %v363
        %v365 = vpop.xlane.xlu0 %364
        %v366 = vmul.f32 %v365, %v359
        %v367 = vadd.f32 %v366, 1e-06
        %v368 = vrsqrt.pop %v367
        %v369 = vmul.f32 %v361, %v368
        %v370 = vlaneseq
        %v371 = vshrl.u32 %v370, 7
        %v372 = vsub.s32 0, %v371
        %v373 = vrot.slane %v353, %v372
        %v374 = vmul.f32 %v369, %v373
        %v375 = vlaneseq
        %v376 = vshrl.u32 %v375, 7
        %v377 = vsub.s32 0, %v376
        %v378 = vrot.slane %v354, %v377
        %v379 = vadd.f32 %v374, %v378
        %v380 = vpack.c.bf16 %v379, %v379
        %v381 = vld [vmem:[#allocation2] sm:$0xf]
        %v382 = vld [vmem:[#allocation2 + $0x4] sm:$0xf]
        %v383 = vld [vmem:[#allocation2 + $0x8] sm:$0xf]
        %v384 = vld [vmem:[#allocation2 + $0xc] sm:$0xf]
        %v385 = vld [vmem:[%s5 + $0x2] sm:$0x1]
        %v386 = vlaneseq
        %v387 = vshrl.u32 %v386, 7
        %v388 = vsub.s32 0, %v387
        %v389 = vrot.slane %v385, %v388
        %v394 = vunpack.c.l.b16 %v381
        %v395 = vunpack.c.l.b16 %v382
        %v396 = vunpack.c.l.b16 %v383
        %v397 = vunpack.c.l.b16 %v384
        %v398 = vpack.c.b16 %v395, %v394
        %v399 = vpack.c.b16 %v397, %v396
        %v403 = vsel %vm355, %v380, 0
        %405 = vmatprep.subr.bf16.mxu0 0
        %406 = vmatpush1.bf16.msra.mxu0 %v398
        %407 = vmatprep.subr.bf16.mxu0 0
        %408 = vmatpush1.bf16.msra.mxu0 %v399
        %409 = vmatprep.subr.bf16.mxu0 0
        %410 = vmatpush1.bf16.msra.mxu0 0
        %411 = vmatprep.subr.bf16.mxu0 0
        %412 = vmatpush1.bf16.msra.mxu0 0
        %413 = vmatprep.subr.bf16.mxu0 0
        %414 = vmatpush1.bf16.msra.mxu0 0
        %415 = vmatprep.subr.bf16.mxu0 0
        %416 = vmatpush1.bf16.msra.mxu0 0
        %417 = vmatprep.subr.bf16.mxu0 0
        %418 = vmatpush1.bf16.msra.mxu0 0
        %419 = vmatprep.subr.bf16.mxu0 0
        %420 = vmatpush1.bf16.msra.mxu0 0
        %421 = vmatprep.subr.bf16.mxu0 0
        %422 = vmatpush1.bf16.msra.mxu0 0
        %423 = vmatprep.subr.bf16.mxu0 0
        %424 = vmatpush1.bf16.msra.mxu0 0
        %425 = vmatprep.subr.bf16.mxu0 0
        %426 = vmatpush1.bf16.msra.mxu0 0
        %427 = vmatprep.subr.bf16.mxu0 0
        %428 = vmatpush1.bf16.msra.mxu0 0
        %429 = vmatprep.subr.bf16.mxu0 0
        %430 = vmatpush1.bf16.msra.mxu0 0
        %431 = vmatprep.subr.bf16.mxu0 0
        %432 = vmatpush1.bf16.msra.mxu0 0
        %433 = vmatprep.subr.bf16.mxu0 0
        %434 = vmatpush1.bf16.msra.mxu0 0
        %435 = vmatprep.subr.bf16.mxu0 0
        %436 = vmatpush1.bf16.msra.mxu0 0
        %437 = vmatprep.mubr.bf16.mxu0 0
        %438 = vmatmul.mubr.bf16.gmra.mrb[0].mxu0 %v403
        %v439 = vpop.f32.mrb[0].mxu0
        %v440 = vadd.f32 %v389, %v439
        %v441 = vpop.f32.mrb[0].mxu0
        %v442 = vpop.f32.mrb[0].mxu0
        %v443 = vpop.f32.mrb[0].mxu0
        %444 = vdwg.mxu0
        %s445 = scalar_lea.vmem [#allocation2], 32
        %v446 = vld [vmem:[%s445] sm:$0xf]
        %v447 = vld [vmem:[%s445 + $0x4] sm:$0xf]
        %v448 = vld [vmem:[%s445 + $0x8] sm:$0xf]
        %v449 = vld [vmem:[%s445 + $0xc] sm:$0xf]
        %v450 = vunpack.c.l.bf16 %v446
        %v451 = vunpack.c.l.bf16 %v447
        %v452 = vunpack.c.l.bf16 %v448
        %v453 = vunpack.c.l.bf16 %v449
        %455 = vrot.lane.b32.xlu0 %v440, 96
        %v456 = vpop.permute.xlu0 %455
        %vm457 = vcmask 64512
        %v458 = vsel %vm457, %v440, 0
        %v460 = vsel %vm457, %v456, 0
        %462 = vmatprep.subr.mxu0 0.0
        %463 = vmatpush1.xpose.msra.mxu0 %v460
        %464 = vmatprep.subr.mxu0 0.0
        %465 = vmatpush1.xpose.msra.mxu0 0.0
        %466 = vmatprep.subr.mxu0 0.0
        %467 = vmatpush1.xpose.msra.mxu0 0.0
        %468 = vmatprep.subr.mxu0 0.0
        %469 = vmatpush1.xpose.msra.mxu0 0.0
        %470 = vmatprep.subr.mxu0 0.0
        %471 = vmatpush1.xpose.msra.mxu0 0.0
        %472 = vmatprep.subr.mxu0 0.0
        %473 = vmatpush1.xpose.msra.mxu0 0.0
        %474 = vmatprep.subr.mxu0 0.0
        %475 = vmatpush1.xpose.msra.mxu0 0.0
        %476 = vmatprep.subr.mxu0 0.0
        %477 = vmatpush1.xpose.msra.mxu0 0.0
        %478 = vmatprep.subr.mxu0 0.0
        %479 = vmatpush1.xpose.msra.mxu0 0.0
        %480 = vmatprep.subr.mxu0 0.0
        %481 = vmatpush1.xpose.msra.mxu0 0.0
        %482 = vmatprep.subr.mxu0 0.0
        %483 = vmatpush1.xpose.msra.mxu0 0.0
        %484 = vmatprep.subr.mxu0 0.0
        %485 = vmatpush1.xpose.msra.mxu0 0.0
        %486 = vmatprep.subr.mxu0 0.0
        %487 = vmatpush1.xpose.msra.mxu0 0.0
        %488 = vmatprep.subr.mxu0 0.0
        %489 = vmatpush1.xpose.msra.mxu0 0.0
        %490 = vmatprep.subr.mxu0 0.0
        %491 = vmatpush1.xpose.msra.mxu0 0.0
        %492 = vmatprep.subr.mxu0 0.0
        %493 = vmatpush1.xpose.msra.mxu0 0.0
        %494 = vmatprep.subr.mxu0 0.0
        %495 = vmatpush1.xpose.msra.mxu0 0.0
        %496 = vmatprep.subr.mxu0 0.0
        %497 = vmatpush1.xpose.msra.mxu0 0.0
        %498 = vmatprep.subr.mxu0 0.0
        %499 = vmatpush1.xpose.msra.mxu0 0.0
        %500 = vmatprep.subr.mxu0 0.0
        %501 = vmatpush1.xpose.msra.mxu0 0.0
        %502 = vmatprep.subr.mxu0 0.0
        %503 = vmatpush1.xpose.msra.mxu0 0.0
        %504 = vmatprep.subr.mxu0 0.0
        %505 = vmatpush1.xpose.msra.mxu0 0.0
        %506 = vmatprep.subr.mxu0 0.0
        %507 = vmatpush1.xpose.msra.mxu0 0.0
        %508 = vmatprep.subr.mxu0 0.0
        %509 = vmatpush1.xpose.msra.mxu0 0.0
        %510 = vmatprep.subr.mxu0 0.0
        %511 = vmatpush1.xpose.msra.mxu0 0.0
        %512 = vmatprep.subr.mxu0 0.0
        %513 = vmatpush1.xpose.msra.mxu0 0.0
        %514 = vmatprep.subr.mxu0 0.0
        %515 = vmatpush1.xpose.msra.mxu0 0.0
        %516 = vmatprep.subr.mxu0 0.0
        %517 = vmatpush1.xpose.msra.mxu0 0.0
        %518 = vmatprep.subr.mxu0 0.0
        %519 = vmatpush1.xpose.msra.mxu0 0.0
        %520 = vmatprep.subr.mxu0 0.0
        %521 = vmatpush1.xpose.msra.mxu0 0.0
        %522 = vmatprep.subr.mxu0 0.0
        %523 = vmatpush1.xpose.msra.mxu0 0.0
        %524 = vmatprep.subr.mxu0 0.0
        %525 = vmatpush1.xpose.msra.mxu0 0.0
        %526 = vmatprep.mubr.f32.mxu0 0.0
        %527 = vmatmul.mubr.f32.gmra.mrb[0].mxu0 %v458
        %v528 = vpop.f32.mrb[0].mxu0
        %v529 = vadd.f32 0.0, %v528
        %v530 = vpop.f32.mrb[0].mxu0
        %531 = vdwg.mxu0
        %v532 = vmul.f32 %v529, 0.35355338
        %v534 = vlaneseq
        %v535 = vshrl.u32 %v534, 7
        %v536 = vsub.s32 0, %v535
        %v537 = vrot.slane %v351, %v536
        %v539 = vadd.f32 %v532, %v537
        %v540 = vsel %vm457, %v539, -inf
        %541 = vmax.xlane.f32.xlu0 %v540
        %v542 = vpop.xlane.xlu0 %541
        %v543 = vsub.f32 %v539, %v542
        %v544 = vmul.f32 %v543, 1.442695
        %v545 = vpow.pop %v544
        %v546 = vsel %vm457, %v545, 0.0
        %547 = vadd.xlane.f32.xlu0 %v546
        %v548 = vpop.xlane.xlu0 %547
        %v549 = vrcp.pop %v548
        %v550 = vmul.f32 %v545, %v549
        %551 = vrot.lane.b32.xlu0 %v440, 64
        %v552 = vpop.permute.xlu0 %551
        %v555 = vsel %vm457, %v550, 0
        %557 = vmatprep.subr.mxu0 0.0
        %558 = vmatpush1.msra.mxu0 %v552
        %559 = vmatprep.subr.mxu0 0.0
        %560 = vmatpush1.msra.mxu0 0.0
        %561 = vmatprep.subr.mxu0 0.0
        %562 = vmatpush1.msra.mxu0 0.0
        %563 = vmatprep.subr.mxu0 0.0
        %564 = vmatpush1.msra.mxu0 0.0
        %565 = vmatprep.subr.mxu0 0.0
        %566 = vmatpush1.msra.mxu0 0.0
        %567 = vmatprep.subr.mxu0 0.0
        %568 = vmatpush1.msra.mxu0 0.0
        %569 = vmatprep.subr.mxu0 0.0
        %570 = vmatpush1.msra.mxu0 0.0
        %571 = vmatprep.subr.mxu0 0.0
        %572 = vmatpush1.msra.mxu0 0.0
        %573 = vmatprep.subr.mxu0 0.0
        %574 = vmatpush1.msra.mxu0 0.0
        %575 = vmatprep.subr.mxu0 0.0
        %576 = vmatpush1.msra.mxu0 0.0
        %577 = vmatprep.subr.mxu0 0.0
        %578 = vmatpush1.msra.mxu0 0.0
        %579 = vmatprep.subr.mxu0 0.0
        %580 = vmatpush1.msra.mxu0 0.0
        %581 = vmatprep.subr.mxu0 0.0
        %582 = vmatpush1.msra.mxu0 0.0
        %583 = vmatprep.subr.mxu0 0.0
        %584 = vmatpush1.msra.mxu0 0.0
        %585 = vmatprep.subr.mxu0 0.0
        %586 = vmatpush1.msra.mxu0 0.0
        %587 = vmatprep.subr.mxu0 0.0
        %588 = vmatpush1.msra.mxu0 0.0
        %589 = vmatprep.subr.mxu0 0.0
        %590 = vmatpush1.msra.mxu0 0.0
        %591 = vmatprep.subr.mxu0 0.0
        %592 = vmatpush1.msra.mxu0 0.0
        %593 = vmatprep.subr.mxu0 0.0
        %594 = vmatpush1.msra.mxu0 0.0
        %595 = vmatprep.subr.mxu0 0.0
        %596 = vmatpush1.msra.mxu0 0.0
        %597 = vmatprep.subr.mxu0 0.0
        %598 = vmatpush1.msra.mxu0 0.0
        %599 = vmatprep.subr.mxu0 0.0
        %600 = vmatpush1.msra.mxu0 0.0
        %601 = vmatprep.subr.mxu0 0.0
        %602 = vmatpush1.msra.mxu0 0.0
        %603 = vmatprep.subr.mxu0 0.0
        %604 = vmatpush1.msra.mxu0 0.0
        %605 = vmatprep.subr.mxu0 0.0
        %606 = vmatpush1.msra.mxu0 0.0
        %607 = vmatprep.subr.mxu0 0.0
        %608 = vmatpush1.msra.mxu0 0.0
        %609 = vmatprep.subr.mxu0 0.0
        %610 = vmatpush1.msra.mxu0 0.0
        %611 = vmatprep.subr.mxu0 0.0
        %612 = vmatpush1.msra.mxu0 0.0
        %613 = vmatprep.subr.mxu0 0.0
        %614 = vmatpush1.msra.mxu0 0.0
        %615 = vmatprep.subr.mxu0 0.0
        %616 = vmatpush1.msra.mxu0 0.0
        %617 = vmatprep.subr.mxu0 0.0
        %618 = vmatpush1.msra.mxu0 0.0
        %619 = vmatprep.subr.mxu0 0.0
        %620 = vmatpush1.msra.mxu0 0.0
        %621 = vmatprep.mubr.f32.mxu0 0.0
        %622 = vmatmul.mubr.f32.gmra.mrb[0].mxu0 %v555
        %v623 = vpop.f32.mrb[0].mxu0
        %v624 = vadd.f32 0.0, %v623
        %v625 = vpop.f32.mrb[0].mxu0
        %626 = vdwg.mxu0
        %627 = vrot.lane.b32.xlu0 %v440, 120
        %v628 = vpop.permute.xlu0 %627
        %629 = vrot.lane.b32.xlu0 %v440, 88
        %v630 = vpop.permute.xlu0 %629
        %v631 = vsel %vm457, %v628, 0
        %v633 = vsel %vm457, %v630, 0
        %635 = vmatprep.subr.mxu0 0.0
        %636 = vmatpush1.xpose.msra.mxu0 %v633
        %637 = vmatprep.subr.mxu0 0.0
        %638 = vmatpush1.xpose.msra.mxu0 0.0
        %639 = vmatprep.subr.mxu0 0.0
        %640 = vmatpush1.xpose.msra.mxu0 0.0
        %641 = vmatprep.subr.mxu0 0.0
        %642 = vmatpush1.xpose.msra.mxu0 0.0
        %643 = vmatprep.subr.mxu0 0.0
        %644 = vmatpush1.xpose.msra.mxu0 0.0
        %645 = vmatprep.subr.mxu0 0.0
        %646 = vmatpush1.xpose.msra.mxu0 0.0
        %647 = vmatprep.subr.mxu0 0.0
        %648 = vmatpush1.xpose.msra.mxu0 0.0
        %649 = vmatprep.subr.mxu0 0.0
        %650 = vmatpush1.xpose.msra.mxu0 0.0
        %651 = vmatprep.subr.mxu0 0.0
        %652 = vmatpush1.xpose.msra.mxu0 0.0
        %653 = vmatprep.subr.mxu0 0.0
        %654 = vmatpush1.xpose.msra.mxu0 0.0
        %655 = vmatprep.subr.mxu0 0.0
        %656 = vmatpush1.xpose.msra.mxu0 0.0
        %657 = vmatprep.subr.mxu0 0.0
        %658 = vmatpush1.xpose.msra.mxu0 0.0
        %659 = vmatprep.subr.mxu0 0.0
        %660 = vmatpush1.xpose.msra.mxu0 0.0
        %661 = vmatprep.subr.mxu0 0.0
        %662 = vmatpush1.xpose.msra.mxu0 0.0
        %663 = vmatprep.subr.mxu0 0.0
        %664 = vmatpush1.xpose.msra.mxu0 0.0
        %665 = vmatprep.subr.mxu0 0.0
        %666 = vmatpush1.xpose.msra.mxu0 0.0
        %667 = vmatprep.subr.mxu0 0.0
        %668 = vmatpush1.xpose.msra.mxu0 0.0
        %669 = vmatprep.subr.mxu0 0.0
        %670 = vmatpush1.xpose.msra.mxu0 0.0
        %671 = vmatprep.subr.mxu0 0.0
        %672 = vmatpush1.xpose.msra.mxu0 0.0
        %673 = vmatprep.subr.mxu0 0.0
        %674 = vmatpush1.xpose.msra.mxu0 0.0
        %675 = vmatprep.subr.mxu0 0.0
        %676 = vmatpush1.xpose.msra.mxu0 0.0
        %677 = vmatprep.subr.mxu0 0.0
        %678 = vmatpush1.xpose.msra.mxu0 0.0
        %679 = vmatprep.subr.mxu0 0.0
        %680 = vmatpush1.xpose.msra.mxu0 0.0
        %681 = vmatprep.subr.mxu0 0.0
        %682 = vmatpush1.xpose.msra.mxu0 0.0
        %683 = vmatprep.subr.mxu0 0.0
        %684 = vmatpush1.xpose.msra.mxu0 0.0
        %685 = vmatprep.subr.mxu0 0.0
        %686 = vmatpush1.xpose.msra.mxu0 0.0
        %687 = vmatprep.subr.mxu0 0.0
        %688 = vmatpush1.xpose.msra.mxu0 0.0
        %689 = vmatprep.subr.mxu0 0.0
        %690 = vmatpush1.xpose.msra.mxu0 0.0
        %691 = vmatprep.subr.mxu0 0.0
        %692 = vmatpush1.xpose.msra.mxu0 0.0
        %693 = vmatprep.subr.mxu0 0.0
        %694 = vmatpush1.xpose.msra.mxu0 0.0
        %695 = vmatprep.subr.mxu0 0.0
        %696 = vmatpush1.xpose.msra.mxu0 0.0
        %697 = vmatprep.subr.mxu0 0.0
        %698 = vmatpush1.xpose.msra.mxu0 0.0
        %699 = vmatprep.mubr.f32.mxu0 0.0
        %700 = vmatmul.mubr.f32.gmra.mrb[0].mxu0 %v631
        %v701 = vpop.f32.mrb[0].mxu0
        %v702 = vadd.f32 0.0, %v701
        %v703 = vpop.f32.mrb[0].mxu0
        %704 = vdwg.mxu0
        %v705 = vmul.f32 %v702, 0.35355338
        %v706 = vadd.f32 %v705, %v537
        %v707 = vsel %vm457, %v706, -inf
        %708 = vmax.xlane.f32.xlu0 %v707
        %v709 = vpop.xlane.xlu0 %708
        %v710 = vsub.f32 %v706, %v709
        %v711 = vmul.f32 %v710, 1.442695
        %v712 = vpow.pop %v711
        %v713 = vsel %vm457, %v712, 0.0
        %714 = vadd.xlane.f32.xlu0 %v713
        %v715 = vpop.xlane.xlu0 %714
        %v716 = vrcp.pop %v715
        %v717 = vmul.f32 %v712, %v716
        %718 = vrot.lane.b32.xlu0 %v440, 56
        %v719 = vpop.permute.xlu0 %718
        %v722 = vsel %vm457, %v717, 0
        %724 = vmatprep.subr.mxu0 0.0
        %725 = vmatpush1.msra.mxu0 %v719
        %726 = vmatprep.subr.mxu0 0.0
        %727 = vmatpush1.msra.mxu0 0.0
        %728 = vmatprep.subr.mxu0 0.0
        %729 = vmatpush1.msra.mxu0 0.0
        %730 = vmatprep.subr.mxu0 0.0
        %731 = vmatpush1.msra.mxu0 0.0
        %732 = vmatprep.subr.mxu0 0.0
        %733 = vmatpush1.msra.mxu0 0.0
        %734 = vmatprep.subr.mxu0 0.0
        %735 = vmatpush1.msra.mxu0 0.0
        %736 = vmatprep.subr.mxu0 0.0
        %737 = vmatpush1.msra.mxu0 0.0
        %738 = vmatprep.subr.mxu0 0.0
        %739 = vmatpush1.msra.mxu0 0.0
        %740 = vmatprep.subr.mxu0 0.0
        %741 = vmatpush1.msra.mxu0 0.0
        %742 = vmatprep.subr.mxu0 0.0
        %743 = vmatpush1.msra.mxu0 0.0
        %744 = vmatprep.subr.mxu0 0.0
        %745 = vmatpush1.msra.mxu0 0.0
        %746 = vmatprep.subr.mxu0 0.0
        %747 = vmatpush1.msra.mxu0 0.0
        %748 = vmatprep.subr.mxu0 0.0
        %749 = vmatpush1.msra.mxu0 0.0
        %750 = vmatprep.subr.mxu0 0.0
        %751 = vmatpush1.msra.mxu0 0.0
        %752 = vmatprep.subr.mxu0 0.0
        %753 = vmatpush1.msra.mxu0 0.0
        %754 = vmatprep.subr.mxu0 0.0
        %755 = vmatpush1.msra.mxu0 0.0
        %756 = vmatprep.subr.mxu0 0.0
        %757 = vmatpush1.msra.mxu0 0.0
        %758 = vmatprep.subr.mxu0 0.0
        %759 = vmatpush1.msra.mxu0 0.0
        %760 = vmatprep.subr.mxu0 0.0
        %761 = vmatpush1.msra.mxu0 0.0
        %762 = vmatprep.subr.mxu0 0.0
        %763 = vmatpush1.msra.mxu0 0.0
        %764 = vmatprep.subr.mxu0 0.0
        %765 = vmatpush1.msra.mxu0 0.0
        %766 = vmatprep.subr.mxu0 0.0
        %767 = vmatpush1.msra.mxu0 0.0
        %768 = vmatprep.subr.mxu0 0.0
        %769 = vmatpush1.msra.mxu0 0.0
        %770 = vmatprep.subr.mxu0 0.0
        %771 = vmatpush1.msra.mxu0 0.0
        %772 = vmatprep.subr.mxu0 0.0
        %773 = vmatpush1.msra.mxu0 0.0
        %774 = vmatprep.subr.mxu0 0.0
        %775 = vmatpush1.msra.mxu0 0.0
        %776 = vmatprep.subr.mxu0 0.0
        %777 = vmatpush1.msra.mxu0 0.0
        %778 = vmatprep.subr.mxu0 0.0
        %779 = vmatpush1.msra.mxu0 0.0
        %780 = vmatprep.subr.mxu0 0.0
        %781 = vmatpush1.msra.mxu0 0.0
        %782 = vmatprep.subr.mxu0 0.0
        %783 = vmatpush1.msra.mxu0 0.0
        %784 = vmatprep.subr.mxu0 0.0
        %785 = vmatpush1.msra.mxu0 0.0
        %786 = vmatprep.subr.mxu0 0.0
        %787 = vmatpush1.msra.mxu0 0.0
        %788 = vmatprep.mubr.f32.mxu0 0.0
        %789 = vmatmul.mubr.f32.gmra.mrb[0].mxu0 %v722
        %v790 = vpop.f32.mrb[0].mxu0
        %v791 = vadd.f32 0.0, %v790
        %v792 = vpop.f32.mrb[0].mxu0
        %793 = vdwg.mxu0
        %v795 = vsel %vm457, %v791, 0
        %797 = vmatprep.subr.mxu0 0.0
        %798 = vmatpush1.msra.mxu0 %v451
        %799 = vmatprep.subr.mxu0 0.0
        %800 = vmatpush1.msra.mxu0 0.0
        %801 = vmatprep.subr.mxu0 0.0
        %802 = vmatpush1.msra.mxu0 0.0
        %803 = vmatprep.subr.mxu0 0.0
        %804 = vmatpush1.msra.mxu0 0.0
        %805 = vmatprep.subr.mxu0 0.0
        %806 = vmatpush1.msra.mxu0 0.0
        %807 = vmatprep.subr.mxu0 0.0
        %808 = vmatpush1.msra.mxu0 0.0
        %809 = vmatprep.subr.mxu0 0.0
        %810 = vmatpush1.msra.mxu0 0.0
        %811 = vmatprep.subr.mxu0 0.0
        %812 = vmatpush1.msra.mxu0 0.0
        %813 = vmatprep.subr.mxu0 0.0
        %814 = vmatpush1.msra.mxu0 0.0
        %815 = vmatprep.subr.mxu0 0.0
        %816 = vmatpush1.msra.mxu0 0.0
        %817 = vmatprep.subr.mxu0 0.0
        %818 = vmatpush1.msra.mxu0 0.0
        %819 = vmatprep.subr.mxu0 0.0
        %820 = vmatpush1.msra.mxu0 0.0
        %821 = vmatprep.subr.mxu0 0.0
        %822 = vmatpush1.msra.mxu0 0.0
        %823 = vmatprep.subr.mxu0 0.0
        %824 = vmatpush1.msra.mxu0 0.0
        %825 = vmatprep.subr.mxu0 0.0
        %826 = vmatpush1.msra.mxu0 0.0
        %827 = vmatprep.subr.mxu0 0.0
        %828 = vmatpush1.msra.mxu0 0.0
        %829 = vmatprep.subr.mxu0 0.0
        %830 = vmatpush1.msra.mxu0 0.0
        %831 = vmatprep.subr.mxu0 0.0
        %832 = vmatpush1.msra.mxu0 0.0
        %833 = vmatprep.subr.mxu0 0.0
        %834 = vmatpush1.msra.mxu0 0.0
        %835 = vmatprep.subr.mxu0 0.0
        %836 = vmatpush1.msra.mxu0 0.0
        %837 = vmatprep.subr.mxu0 0.0
        %838 = vmatpush1.msra.mxu0 0.0
        %839 = vmatprep.subr.mxu0 0.0
        %840 = vmatpush1.msra.mxu0 0.0
        %841 = vmatprep.subr.mxu0 0.0
        %842 = vmatpush1.msra.mxu0 0.0
        %843 = vmatprep.subr.mxu0 0.0
        %844 = vmatpush1.msra.mxu0 0.0
        %845 = vmatprep.subr.mxu0 0.0
        %846 = vmatpush1.msra.mxu0 0.0
        %847 = vmatprep.subr.mxu0 0.0
        %848 = vmatpush1.msra.mxu0 0.0
        %849 = vmatprep.subr.mxu0 0.0
        %850 = vmatpush1.msra.mxu0 0.0
        %851 = vmatprep.subr.mxu0 0.0
        %852 = vmatpush1.msra.mxu0 0.0
        %853 = vmatprep.subr.mxu0 0.0
        %854 = vmatpush1.msra.mxu0 0.0
        %855 = vmatprep.subr.mxu0 0.0
        %856 = vmatpush1.msra.mxu0 0.0
        %857 = vmatprep.subr.mxu0 0.0
        %858 = vmatpush1.msra.mxu0 0.0
        %859 = vmatprep.subr.mxu0 0.0
        %860 = vmatpush1.msra.mxu0 0.0
        %861 = vmatprep.mubr.f32.mxu0 0.0
        %862 = vmatmul.mubr.f32.gmra.mrb[0].mxu0 %v795
        %v863 = vpop.f32.mrb[0].mxu0
        %v864 = vadd.f32 0.0, %v863
        %v865 = vpop.f32.mrb[0].mxu0
        %866 = vdwg.mxu0
        %v868 = vsel %vm457, %v624, 0
        %870 = vmatprep.subr.mxu0 0.0
        %871 = vmatpush1.msra.mxu0 %v450
        %872 = vmatprep.subr.mxu0 0.0
        %873 = vmatpush1.msra.mxu0 0.0
        %874 = vmatprep.subr.mxu0 0.0
        %875 = vmatpush1.msra.mxu0 0.0
        %876 = vmatprep.subr.mxu0 0.0
        %877 = vmatpush1.msra.mxu0 0.0
        %878 = vmatprep.subr.mxu0 0.0
        %879 = vmatpush1.msra.mxu0 0.0
        %880 = vmatprep.subr.mxu0 0.0
        %881 = vmatpush1.msra.mxu0 0.0
        %882 = vmatprep.subr.mxu0 0.0
        %883 = vmatpush1.msra.mxu0 0.0
        %884 = vmatprep.subr.mxu0 0.0
        %885 = vmatpush1.msra.mxu0 0.0
        %886 = vmatprep.subr.mxu0 0.0
        %887 = vmatpush1.msra.mxu0 0.0
        %888 = vmatprep.subr.mxu0 0.0
        %889 = vmatpush1.msra.mxu0 0.0
        %890 = vmatprep.subr.mxu0 0.0
        %891 = vmatpush1.msra.mxu0 0.0
        %892 = vmatprep.subr.mxu0 0.0
        %893 = vmatpush1.msra.mxu0 0.0
        %894 = vmatprep.subr.mxu0 0.0
        %895 = vmatpush1.msra.mxu0 0.0
        %896 = vmatprep.subr.mxu0 0.0
        %897 = vmatpush1.msra.mxu0 0.0
        %898 = vmatprep.subr.mxu0 0.0
        %899 = vmatpush1.msra.mxu0 0.0
        %900 = vmatprep.subr.mxu0 0.0
        %901 = vmatpush1.msra.mxu0 0.0
        %902 = vmatprep.subr.mxu0 0.0
        %903 = vmatpush1.msra.mxu0 0.0
        %904 = vmatprep.subr.mxu0 0.0
        %905 = vmatpush1.msra.mxu0 0.0
        %906 = vmatprep.subr.mxu0 0.0
        %907 = vmatpush1.msra.mxu0 0.0
        %908 = vmatprep.subr.mxu0 0.0
        %909 = vmatpush1.msra.mxu0 0.0
        %910 = vmatprep.subr.mxu0 0.0
        %911 = vmatpush1.msra.mxu0 0.0
        %912 = vmatprep.subr.mxu0 0.0
        %913 = vmatpush1.msra.mxu0 0.0
        %914 = vmatprep.subr.mxu0 0.0
        %915 = vmatpush1.msra.mxu0 0.0
        %916 = vmatprep.subr.mxu0 0.0
        %917 = vmatpush1.msra.mxu0 0.0
        %918 = vmatprep.subr.mxu0 0.0
        %919 = vmatpush1.msra.mxu0 0.0
        %920 = vmatprep.subr.mxu0 0.0
        %921 = vmatpush1.msra.mxu0 0.0
        %922 = vmatprep.subr.mxu0 0.0
        %923 = vmatpush1.msra.mxu0 0.0
        %924 = vmatprep.subr.mxu0 0.0
        %925 = vmatpush1.msra.mxu0 0.0
        %926 = vmatprep.subr.mxu0 0.0
        %927 = vmatpush1.msra.mxu0 0.0
        %928 = vmatprep.subr.mxu0 0.0
        %929 = vmatpush1.msra.mxu0 0.0
        %930 = vmatprep.subr.mxu0 0.0
        %931 = vmatpush1.msra.mxu0 0.0
        %932 = vmatprep.subr.mxu0 0.0
        %933 = vmatpush1.msra.mxu0 0.0
        %934 = vmatprep.mubr.f32.mxu0 0.0
        %935 = vmatmul.mubr.f32.gmra.mrb[0].mxu0 %v868
        %v936 = vpop.f32.mrb[0].mxu0
        %v937 = vadd.f32 %v864, %v936
        %v938 = vpop.f32.mrb[0].mxu0
        %939 = vdwg.mxu0
        %940 = vrot.lane.b32.xlu0 %v440, 112
        %v941 = vpop.permute.xlu0 %940
        %942 = vrot.lane.b32.xlu0 %v440, 80
        %v943 = vpop.permute.xlu0 %942
        %v944 = vsel %vm457, %v941, 0
        %v946 = vsel %vm457, %v943, 0
        %948 = vmatprep.subr.mxu0 0.0
        %949 = vmatpush1.xpose.msra.mxu0 %v946
        %950 = vmatprep.subr.mxu0 0.0
        %951 = vmatpush1.xpose.msra.mxu0 0.0
        %952 = vmatprep.subr.mxu0 0.0
        %953 = vmatpush1.xpose.msra.mxu0 0.0
        %954 = vmatprep.subr.mxu0 0.0
        %955 = vmatpush1.xpose.msra.mxu0 0.0
        %956 = vmatprep.subr.mxu0 0.0
        %957 = vmatpush1.xpose.msra.mxu0 0.0
        %958 = vmatprep.subr.mxu0 0.0
        %959 = vmatpush1.xpose.msra.mxu0 0.0
        %960 = vmatprep.subr.mxu0 0.0
        %961 = vmatpush1.xpose.msra.mxu0 0.0
        %962 = vmatprep.subr.mxu0 0.0
        %963 = vmatpush1.xpose.msra.mxu0 0.0
        %964 = vmatprep.subr.mxu0 0.0
        %965 = vmatpush1.xpose.msra.mxu0 0.0
        %966 = vmatprep.subr.mxu0 0.0
        %967 = vmatpush1.xpose.msra.mxu0 0.0
        %968 = vmatprep.subr.mxu0 0.0
        %969 = vmatpush1.xpose.msra.mxu0 0.0
        %970 = vmatprep.subr.mxu0 0.0
        %971 = vmatpush1.xpose.msra.mxu0 0.0
        %972 = vmatprep.subr.mxu0 0.0
        %973 = vmatpush1.xpose.msra.mxu0 0.0
        %974 = vmatprep.subr.mxu0 0.0
        %975 = vmatpush1.xpose.msra.mxu0 0.0
        %976 = vmatprep.subr.mxu0 0.0
        %977 = vmatpush1.xpose.msra.mxu0 0.0
        %978 = vmatprep.subr.mxu0 0.0
        %979 = vmatpush1.xpose.msra.mxu0 0.0
        %980 = vmatprep.subr.mxu0 0.0
        %981 = vmatpush1.xpose.msra.mxu0 0.0
        %982 = vmatprep.subr.mxu0 0.0
        %983 = vmatpush1.xpose.msra.mxu0 0.0
        %984 = vmatprep.subr.mxu0 0.0
        %985 = vmatpush1.xpose.msra.mxu0 0.0
        %986 = vmatprep.subr.mxu0 0.0
        %987 = vmatpush1.xpose.msra.mxu0 0.0
        %988 = vmatprep.subr.mxu0 0.0
        %989 = vmatpush1.xpose.msra.mxu0 0.0
        %990 = vmatprep.subr.mxu0 0.0
        %991 = vmatpush1.xpose.msra.mxu0 0.0
        %992 = vmatprep.subr.mxu0 0.0
        %993 = vmatpush1.xpose.msra.mxu0 0.0
        %994 = vmatprep.subr.mxu0 0.0
        %995 = vmatpush1.xpose.msra.mxu0 0.0
        %996 = vmatprep.subr.mxu0 0.0
        %997 = vmatpush1.xpose.msra.mxu0 0.0
        %998 = vmatprep.subr.mxu0 0.0
        %999 = vmatpush1.xpose.msra.mxu0 0.0
        %1000 = vmatprep.subr.mxu0 0.0
        %1001 = vmatpush1.xpose.msra.mxu0 0.0
        %1002 = vmatprep.subr.mxu0 0.0
        %1003 = vmatpush1.xpose.msra.mxu0 0.0
        %1004 = vmatprep.subr.mxu0 0.0
        %1005 = vmatpush1.xpose.msra.mxu0 0.0
        %1006 = vmatprep.subr.mxu0 0.0
        %1007 = vmatpush1.xpose.msra.mxu0 0.0
        %1008 = vmatprep.subr.mxu0 0.0
        %1009 = vmatpush1.xpose.msra.mxu0 0.0
        %1010 = vmatprep.subr.mxu0 0.0
        %1011 = vmatpush1.xpose.msra.mxu0 0.0
        %1012 = vmatprep.mubr.f32.mxu0 0.0
        %1013 = vmatmul.mubr.f32.gmra.mrb[0].mxu0 %v944
        %v1014 = vpop.f32.mrb[0].mxu0
        %v1015 = vadd.f32 0.0, %v1014
        %v1016 = vpop.f32.mrb[0].mxu0
        %1017 = vdwg.mxu0
        %v1018 = vmul.f32 %v1015, 0.35355338
        %v1019 = vadd.f32 %v1018, %v537
        %v1020 = vsel %vm457, %v1019, -inf
        %1021 = vmax.xlane.f32.xlu0 %v1020
        %v1022 = vpop.xlane.xlu0 %1021
        %v1023 = vsub.f32 %v1019, %v1022
        %v1024 = vmul.f32 %v1023, 1.442695
        %v1025 = vpow.pop %v1024
        %v1026 = vsel %vm457, %v1025, 0.0
        %1027 = vadd.xlane.f32.xlu0 %v1026
        %v1028 = vpop.xlane.xlu0 %1027
        %v1029 = vrcp.pop %v1028
        %v1030 = vmul.f32 %v1025, %v1029
        %1031 = vrot.lane.b32.xlu0 %v440, 48
        %v1032 = vpop.permute.xlu0 %1031
        %v1035 = vsel %vm457, %v1030, 0
        %1037 = vmatprep.subr.mxu0 0.0
        %1038 = vmatpush1.msra.mxu0 %v1032
        %1039 = vmatprep.subr.mxu0 0.0
        %1040 = vmatpush1.msra.mxu0 0.0
        %1041 = vmatprep.subr.mxu0 0.0
        %1042 = vmatpush1.msra.mxu0 0.0
        %1043 = vmatprep.subr.mxu0 0.0
        %1044 = vmatpush1.msra.mxu0 0.0
        %1045 = vmatprep.subr.mxu0 0.0
        %1046 = vmatpush1.msra.mxu0 0.0
        %1047 = vmatprep.subr.mxu0 0.0
        %1048 = vmatpush1.msra.mxu0 0.0
        %1049 = vmatprep.subr.mxu0 0.0
        %1050 = vmatpush1.msra.mxu0 0.0
        %1051 = vmatprep.subr.mxu0 0.0
        %1052 = vmatpush1.msra.mxu0 0.0
        %1053 = vmatprep.subr.mxu0 0.0
        %1054 = vmatpush1.msra.mxu0 0.0
        %1055 = vmatprep.subr.mxu0 0.0
        %1056 = vmatpush1.msra.mxu0 0.0
        %1057 = vmatprep.subr.mxu0 0.0
        %1058 = vmatpush1.msra.mxu0 0.0
        %1059 = vmatprep.subr.mxu0 0.0
        %1060 = vmatpush1.msra.mxu0 0.0
        %1061 = vmatprep.subr.mxu0 0.0
        %1062 = vmatpush1.msra.mxu0 0.0
        %1063 = vmatprep.subr.mxu0 0.0
        %1064 = vmatpush1.msra.mxu0 0.0
        %1065 = vmatprep.subr.mxu0 0.0
        %1066 = vmatpush1.msra.mxu0 0.0
        %1067 = vmatprep.subr.mxu0 0.0
        %1068 = vmatpush1.msra.mxu0 0.0
        %1069 = vmatprep.subr.mxu0 0.0
        %1070 = vmatpush1.msra.mxu0 0.0
        %1071 = vmatprep.subr.mxu0 0.0
        %1072 = vmatpush1.msra.mxu0 0.0
        %1073 = vmatprep.subr.mxu0 0.0
        %1074 = vmatpush1.msra.mxu0 0.0
        %1075 = vmatprep.subr.mxu0 0.0
        %1076 = vmatpush1.msra.mxu0 0.0
        %1077 = vmatprep.subr.mxu0 0.0
        %1078 = vmatpush1.msra.mxu0 0.0
        %1079 = vmatprep.subr.mxu0 0.0
        %1080 = vmatpush1.msra.mxu0 0.0
        %1081 = vmatprep.subr.mxu0 0.0
        %1082 = vmatpush1.msra.mxu0 0.0
        %1083 = vmatprep.subr.mxu0 0.0
        %1084 = vmatpush1.msra.mxu0 0.0
        %1085 = vmatprep.subr.mxu0 0.0
        %1086 = vmatpush1.msra.mxu0 0.0
        %1087 = vmatprep.subr.mxu0 0.0
        %1088 = vmatpush1.msra.mxu0 0.0
        %1089 = vmatprep.subr.mxu0 0.0
        %1090 = vmatpush1.msra.mxu0 0.0
        %1091 = vmatprep.subr.mxu0 0.0
        %1092 = vmatpush1.msra.mxu0 0.0
        %1093 = vmatprep.subr.mxu0 0.0
        %1094 = vmatpush1.msra.mxu0 0.0
        %1095 = vmatprep.subr.mxu0 0.0
        %1096 = vmatpush1.msra.mxu0 0.0
        %1097 = vmatprep.subr.mxu0 0.0
        %1098 = vmatpush1.msra.mxu0 0.0
        %1099 = vmatprep.subr.mxu0 0.0
        %1100 = vmatpush1.msra.mxu0 0.0
        %1101 = vmatprep.mubr.f32.mxu0 0.0
        %1102 = vmatmul.mubr.f32.gmra.mrb[0].mxu0 %v1035
        %v1103 = vpop.f32.mrb[0].mxu0
        %v1104 = vadd.f32 0.0, %v1103
        %v1105 = vpop.f32.mrb[0].mxu0
        %1106 = vdwg.mxu0
        %v1108 = vsel %vm457, %v1104, 0
        %1110 = vmatprep.subr.mxu0 0.0
        %1111 = vmatpush1.msra.mxu0 %v452
        %1112 = vmatprep.subr.mxu0 0.0
        %1113 = vmatpush1.msra.mxu0 0.0
        %1114 = vmatprep.subr.mxu0 0.0
        %1115 = vmatpush1.msra.mxu0 0.0
        %1116 = vmatprep.subr.mxu0 0.0
        %1117 = vmatpush1.msra.mxu0 0.0
        %1118 = vmatprep.subr.mxu0 0.0
        %1119 = vmatpush1.msra.mxu0 0.0
        %1120 = vmatprep.subr.mxu0 0.0
        %1121 = vmatpush1.msra.mxu0 0.0
        %1122 = vmatprep.subr.mxu0 0.0
        %1123 = vmatpush1.msra.mxu0 0.0
        %1124 = vmatprep.subr.mxu0 0.0
        %1125 = vmatpush1.msra.mxu0 0.0
        %1126 = vmatprep.subr.mxu0 0.0
        %1127 = vmatpush1.msra.mxu0 0.0
        %1128 = vmatprep.subr.mxu0 0.0
        %1129 = vmatpush1.msra.mxu0 0.0
        %1130 = vmatprep.subr.mxu0 0.0
        %1131 = vmatpush1.msra.mxu0 0.0
        %1132 = vmatprep.subr.mxu0 0.0
        %1133 = vmatpush1.msra.mxu0 0.0
        %1134 = vmatprep.subr.mxu0 0.0
        %1135 = vmatpush1.msra.mxu0 0.0
        %1136 = vmatprep.subr.mxu0 0.0
        %1137 = vmatpush1.msra.mxu0 0.0
        %1138 = vmatprep.subr.mxu0 0.0
        %1139 = vmatpush1.msra.mxu0 0.0
        %1140 = vmatprep.subr.mxu0 0.0
        %1141 = vmatpush1.msra.mxu0 0.0
        %1142 = vmatprep.subr.mxu0 0.0
        %1143 = vmatpush1.msra.mxu0 0.0
        %1144 = vmatprep.subr.mxu0 0.0
        %1145 = vmatpush1.msra.mxu0 0.0
        %1146 = vmatprep.subr.mxu0 0.0
        %1147 = vmatpush1.msra.mxu0 0.0
        %1148 = vmatprep.subr.mxu0 0.0
        %1149 = vmatpush1.msra.mxu0 0.0
        %1150 = vmatprep.subr.mxu0 0.0
        %1151 = vmatpush1.msra.mxu0 0.0
        %1152 = vmatprep.subr.mxu0 0.0
        %1153 = vmatpush1.msra.mxu0 0.0
        %1154 = vmatprep.subr.mxu0 0.0
        %1155 = vmatpush1.msra.mxu0 0.0
        %1156 = vmatprep.subr.mxu0 0.0
        %1157 = vmatpush1.msra.mxu0 0.0
        %1158 = vmatprep.subr.mxu0 0.0
        %1159 = vmatpush1.msra.mxu0 0.0
        %1160 = vmatprep.subr.mxu0 0.0
        %1161 = vmatpush1.msra.mxu0 0.0
        %1162 = vmatprep.subr.mxu0 0.0
        %1163 = vmatpush1.msra.mxu0 0.0
        %1164 = vmatprep.subr.mxu0 0.0
        %1165 = vmatpush1.msra.mxu0 0.0
        %1166 = vmatprep.subr.mxu0 0.0
        %1167 = vmatpush1.msra.mxu0 0.0
        %1168 = vmatprep.subr.mxu0 0.0
        %1169 = vmatpush1.msra.mxu0 0.0
        %1170 = vmatprep.subr.mxu0 0.0
        %1171 = vmatpush1.msra.mxu0 0.0
        %1172 = vmatprep.subr.mxu0 0.0
        %1173 = vmatpush1.msra.mxu0 0.0
        %1174 = vmatprep.mubr.f32.mxu0 0.0
        %1175 = vmatmul.mubr.f32.gmra.mrb[0].mxu0 %v1108
        %v1176 = vpop.f32.mrb[0].mxu0
        %v1177 = vadd.f32 0.0, %v1176
        %v1178 = vpop.f32.mrb[0].mxu0
        %1179 = vdwg.mxu0
        %v1180 = vadd.f32 %v937, %v1177
        %1181 = vrot.lane.b32.xlu0 %v440, 104
        %v1182 = vpop.permute.xlu0 %1181
        %1183 = vrot.lane.b32.xlu0 %v440, 72
        %v1184 = vpop.permute.xlu0 %1183
        %v1185 = vsel %vm457, %v1182, 0
        %v1187 = vsel %vm457, %v1184, 0
        %1189 = vmatprep.subr.mxu0 0.0
        %1190 = vmatpush1.xpose.msra.mxu0 %v1187
        %1191 = vmatprep.subr.mxu0 0.0
        %1192 = vmatpush1.xpose.msra.mxu0 0.0
        %1193 = vmatprep.subr.mxu0 0.0
        %1194 = vmatpush1.xpose.msra.mxu0 0.0
        %1195 = vmatprep.subr.mxu0 0.0
        %1196 = vmatpush1.xpose.msra.mxu0 0.0
        %1197 = vmatprep.subr.mxu0 0.0
        %1198 = vmatpush1.xpose.msra.mxu0 0.0
        %1199 = vmatprep.subr.mxu0 0.0
        %1200 = vmatpush1.xpose.msra.mxu0 0.0
        %1201 = vmatprep.subr.mxu0 0.0
        %1202 = vmatpush1.xpose.msra.mxu0 0.0
        %1203 = vmatprep.subr.mxu0 0.0
        %1204 = vmatpush1.xpose.msra.mxu0 0.0
        %1205 = vmatprep.subr.mxu0 0.0
        %1206 = vmatpush1.xpose.msra.mxu0 0.0
        %1207 = vmatprep.subr.mxu0 0.0
        %1208 = vmatpush1.xpose.msra.mxu0 0.0
        %1209 = vmatprep.subr.mxu0 0.0
        %1210 = vmatpush1.xpose.msra.mxu0 0.0
        %1211 = vmatprep.subr.mxu0 0.0
        %1212 = vmatpush1.xpose.msra.mxu0 0.0
        %1213 = vmatprep.subr.mxu0 0.0
        %1214 = vmatpush1.xpose.msra.mxu0 0.0
        %1215 = vmatprep.subr.mxu0 0.0
        %1216 = vmatpush1.xpose.msra.mxu0 0.0
        %1217 = vmatprep.subr.mxu0 0.0
        %1218 = vmatpush1.xpose.msra.mxu0 0.0
        %1219 = vmatprep.subr.mxu0 0.0
        %1220 = vmatpush1.xpose.msra.mxu0 0.0
        %1221 = vmatprep.subr.mxu0 0.0
        %1222 = vmatpush1.xpose.msra.mxu0 0.0
        %1223 = vmatprep.subr.mxu0 0.0
        %1224 = vmatpush1.xpose.msra.mxu0 0.0
        %1225 = vmatprep.subr.mxu0 0.0
        %1226 = vmatpush1.xpose.msra.mxu0 0.0
        %1227 = vmatprep.subr.mxu0 0.0
        %1228 = vmatpush1.xpose.msra.mxu0 0.0
        %1229 = vmatprep.subr.mxu0 0.0
        %1230 = vmatpush1.xpose.msra.mxu0 0.0
        %1231 = vmatprep.subr.mxu0 0.0
        %1232 = vmatpush1.xpose.msra.mxu0 0.0
        %1233 = vmatprep.subr.mxu0 0.0
        %1234 = vmatpush1.xpose.msra.mxu0 0.0
        %1235 = vmatprep.subr.mxu0 0.0
        %1236 = vmatpush1.xpose.msra.mxu0 0.0
        %1237 = vmatprep.subr.mxu0 0.0
        %1238 = vmatpush1.xpose.msra.mxu0 0.0
        %1239 = vmatprep.subr.mxu0 0.0
        %1240 = vmatpush1.xpose.msra.mxu0 0.0
        %1241 = vmatprep.subr.mxu0 0.0
        %1242 = vmatpush1.xpose.msra.mxu0 0.0
        %1243 = vmatprep.subr.mxu0 0.0
        %1244 = vmatpush1.xpose.msra.mxu0 0.0
        %1245 = vmatprep.subr.mxu0 0.0
        %1246 = vmatpush1.xpose.msra.mxu0 0.0
        %1247 = vmatprep.subr.mxu0 0.0
        %1248 = vmatpush1.xpose.msra.mxu0 0.0
        %1249 = vmatprep.subr.mxu0 0.0
        %1250 = vmatpush1.xpose.msra.mxu0 0.0
        %1251 = vmatprep.subr.mxu0 0.0
        %1252 = vmatpush1.xpose.msra.mxu0 0.0
        %1253 = vmatprep.mubr.f32.mxu0 0.0
        %1254 = vmatmul.mubr.f32.gmra.mrb[0].mxu0 %v1185
        %v1255 = vpop.f32.mrb[0].mxu0
        %v1256 = vadd.f32 0.0, %v1255
        %v1257 = vpop.f32.mrb[0].mxu0
        %1258 = vdwg.mxu0
        %v1259 = vmul.f32 %v1256, 0.35355338
        %v1260 = vadd.f32 %v1259, %v537
        %v1261 = vsel %vm457, %v1260, -inf
        %1262 = vmax.xlane.f32.xlu0 %v1261
        %v1263 = vpop.xlane.xlu0 %1262
        %v1264 = vsub.f32 %v1260, %v1263
        %v1265 = vmul.f32 %v1264, 1.442695
        %v1266 = vpow.pop %v1265
        %v1267 = vsel %vm457, %v1266, 0.0
        %1268 = vadd.xlane.f32.xlu0 %v1267
        %v1269 = vpop.xlane.xlu0 %1268
        %v1270 = vrcp.pop %v1269
        %v1271 = vmul.f32 %v1266, %v1270
        %1272 = vrot.lane.b32.xlu0 %v440, 40
        %v1273 = vpop.permute.xlu0 %1272
        %v1276 = vsel %vm457, %v1271, 0
        %1278 = vmatprep.subr.mxu0 0.0
        %1279 = vmatpush1.msra.mxu0 %v1273
        %1280 = vmatprep.subr.mxu0 0.0
        %1281 = vmatpush1.msra.mxu0 0.0
        %1282 = vmatprep.subr.mxu0 0.0
        %1283 = vmatpush1.msra.mxu0 0.0
        %1284 = vmatprep.subr.mxu0 0.0
        %1285 = vmatpush1.msra.mxu0 0.0
        %1286 = vmatprep.subr.mxu0 0.0
        %1287 = vmatpush1.msra.mxu0 0.0
        %1288 = vmatprep.subr.mxu0 0.0
        %1289 = vmatpush1.msra.mxu0 0.0
        %1290 = vmatprep.subr.mxu0 0.0
        %1291 = vmatpush1.msra.mxu0 0.0
        %1292 = vmatprep.subr.mxu0 0.0
        %1293 = vmatpush1.msra.mxu0 0.0
        %1294 = vmatprep.subr.mxu0 0.0
        %1295 = vmatpush1.msra.mxu0 0.0
        %1296 = vmatprep.subr.mxu0 0.0
        %1297 = vmatpush1.msra.mxu0 0.0
        %1298 = vmatprep.subr.mxu0 0.0
        %1299 = vmatpush1.msra.mxu0 0.0
        %1300 = vmatprep.subr.mxu0 0.0
        %1301 = vmatpush1.msra.mxu0 0.0
        %1302 = vmatprep.subr.mxu0 0.0
        %1303 = vmatpush1.msra.mxu0 0.0
        %1304 = vmatprep.subr.mxu0 0.0
        %1305 = vmatpush1.msra.mxu0 0.0
        %1306 = vmatprep.subr.mxu0 0.0
        %1307 = vmatpush1.msra.mxu0 0.0
        %1308 = vmatprep.subr.mxu0 0.0
        %1309 = vmatpush1.msra.mxu0 0.0
        %1310 = vmatprep.subr.mxu0 0.0
        %1311 = vmatpush1.msra.mxu0 0.0
        %1312 = vmatprep.subr.mxu0 0.0
        %1313 = vmatpush1.msra.mxu0 0.0
        %1314 = vmatprep.subr.mxu0 0.0
        %1315 = vmatpush1.msra.mxu0 0.0
        %1316 = vmatprep.subr.mxu0 0.0
        %1317 = vmatpush1.msra.mxu0 0.0
        %1318 = vmatprep.subr.mxu0 0.0
        %1319 = vmatpush1.msra.mxu0 0.0
        %1320 = vmatprep.subr.mxu0 0.0
        %1321 = vmatpush1.msra.mxu0 0.0
        %1322 = vmatprep.subr.mxu0 0.0
        %1323 = vmatpush1.msra.mxu0 0.0
        %1324 = vmatprep.subr.mxu0 0.0
        %1325 = vmatpush1.msra.mxu0 0.0
        %1326 = vmatprep.subr.mxu0 0.0
        %1327 = vmatpush1.msra.mxu0 0.0
        %1328 = vmatprep.subr.mxu0 0.0
        %1329 = vmatpush1.msra.mxu0 0.0
        %1330 = vmatprep.subr.mxu0 0.0
        %1331 = vmatpush1.msra.mxu0 0.0
        %1332 = vmatprep.subr.mxu0 0.0
        %1333 = vmatpush1.msra.mxu0 0.0
        %1334 = vmatprep.subr.mxu0 0.0
        %1335 = vmatpush1.msra.mxu0 0.0
        %1336 = vmatprep.subr.mxu0 0.0
        %1337 = vmatpush1.msra.mxu0 0.0
        %1338 = vmatprep.subr.mxu0 0.0
        %1339 = vmatpush1.msra.mxu0 0.0
        %1340 = vmatprep.subr.mxu0 0.0
        %1341 = vmatpush1.msra.mxu0 0.0
        %1342 = vmatprep.mubr.f32.mxu0 0.0
        %1343 = vmatmul.mubr.f32.gmra.mrb[0].mxu0 %v1276
        %v1344 = vpop.f32.mrb[0].mxu0
        %v1345 = vadd.f32 0.0, %v1344
        %v1346 = vpop.f32.mrb[0].mxu0
        %1347 = vdwg.mxu0
        %v1349 = vsel %vm457, %v1345, 0
        %1351 = vmatprep.subr.mxu0 0.0
        %1352 = vmatpush1.msra.mxu0 %v453
        %1353 = vmatprep.subr.mxu0 0.0
        %1354 = vmatpush1.msra.mxu0 0.0
        %1355 = vmatprep.subr.mxu0 0.0
        %1356 = vmatpush1.msra.mxu0 0.0
        %1357 = vmatprep.subr.mxu0 0.0
        %1358 = vmatpush1.msra.mxu0 0.0
        %1359 = vmatprep.subr.mxu0 0.0
        %1360 = vmatpush1.msra.mxu0 0.0
        %1361 = vmatprep.subr.mxu0 0.0
        %1362 = vmatpush1.msra.mxu0 0.0
        %1363 = vmatprep.subr.mxu0 0.0
        %1364 = vmatpush1.msra.mxu0 0.0
        %1365 = vmatprep.subr.mxu0 0.0
        %1366 = vmatpush1.msra.mxu0 0.0
        %1367 = vmatprep.subr.mxu0 0.0
        %1368 = vmatpush1.msra.mxu0 0.0
        %1369 = vmatprep.subr.mxu0 0.0
        %1370 = vmatpush1.msra.mxu0 0.0
        %1371 = vmatprep.subr.mxu0 0.0
        %1372 = vmatpush1.msra.mxu0 0.0
        %1373 = vmatprep.subr.mxu0 0.0
        %1374 = vmatpush1.msra.mxu0 0.0
        %1375 = vmatprep.subr.mxu0 0.0
        %1376 = vmatpush1.msra.mxu0 0.0
        %1377 = vmatprep.subr.mxu0 0.0
        %1378 = vmatpush1.msra.mxu0 0.0
        %1379 = vmatprep.subr.mxu0 0.0
        %1380 = vmatpush1.msra.mxu0 0.0
        %1381 = vmatprep.subr.mxu0 0.0
        %1382 = vmatpush1.msra.mxu0 0.0
        %1383 = vmatprep.subr.mxu0 0.0
        %1384 = vmatpush1.msra.mxu0 0.0
        %1385 = vmatprep.subr.mxu0 0.0
        %1386 = vmatpush1.msra.mxu0 0.0
        %1387 = vmatprep.subr.mxu0 0.0
        %1388 = vmatpush1.msra.mxu0 0.0
        %1389 = vmatprep.subr.mxu0 0.0
        %1390 = vmatpush1.msra.mxu0 0.0
        %1391 = vmatprep.subr.mxu0 0.0
        %1392 = vmatpush1.msra.mxu0 0.0
        %1393 = vmatprep.subr.mxu0 0.0
        %1394 = vmatpush1.msra.mxu0 0.0
        %1395 = vmatprep.subr.mxu0 0.0
        %1396 = vmatpush1.msra.mxu0 0.0
        %1397 = vmatprep.subr.mxu0 0.0
        %1398 = vmatpush1.msra.mxu0 0.0
        %1399 = vmatprep.subr.mxu0 0.0
        %1400 = vmatpush1.msra.mxu0 0.0
        %1401 = vmatprep.subr.mxu0 0.0
        %1402 = vmatpush1.msra.mxu0 0.0
        %1403 = vmatprep.subr.mxu0 0.0
        %1404 = vmatpush1.msra.mxu0 0.0
        %1405 = vmatprep.subr.mxu0 0.0
        %1406 = vmatpush1.msra.mxu0 0.0
        %1407 = vmatprep.subr.mxu0 0.0
        %1408 = vmatpush1.msra.mxu0 0.0
        %1409 = vmatprep.subr.mxu0 0.0
        %1410 = vmatpush1.msra.mxu0 0.0
        %1411 = vmatprep.subr.mxu0 0.0
        %1412 = vmatpush1.msra.mxu0 0.0
        %1413 = vmatprep.subr.mxu0 0.0
        %1414 = vmatpush1.msra.mxu0 0.0
        %1415 = vmatprep.mubr.f32.mxu0 0.0
        %1416 = vmatmul.mubr.f32.gmra.mrb[0].mxu0 %v1349
        %v1417 = vpop.f32.mrb[0].mxu0
        %v1418 = vadd.f32 0.0, %v1417
        %v1419 = vpop.f32.mrb[0].mxu0
        %1420 = vdwg.mxu0
        %v1421 = vadd.f32 %v1180, %v1418
        %v1422 = vadd.f32 %v352, %v1421
        %v1423 = vld [vmem:[%s5 + $0x3] sm:$0x1]
        %v1424 = vlaneseq
        %v1425 = vshrl.u32 %v1424, 7
        %v1426 = vsub.s32 0, %v1425
        %v1427 = vrot.slane %v1423, %v1426
        %v1428 = vadd.f32 %v1422, %v1427
        %v1429 = vld [vmem:[%s5 + $0x4] sm:$0x1]
        %v1430 = vld [vmem:[%s5 + $0x5] sm:$0x1]
        %v1431 = vsel %vm355, %v1428, 0.0
        %1432 = vadd.xlane.f32.xlu0 %v1431
        %v1433 = vpop.xlane.xlu0 %1432
        %v1434 = vmul.f32 %v1433, %v359
        %v1435 = vsub.f32 %v1428, %v1434
        %v1436 = vmul.f32 %v1435, %v1435
        %v1437 = vsel %vm355, %v1436, 0.0
        %1438 = vadd.xlane.f32.xlu0 %v1437
        %v1439 = vpop.xlane.xlu0 %1438
        %v1440 = vmul.f32 %v1439, %v359
        %v1441 = vadd.f32 %v1440, 1e-06
        %v1442 = vrsqrt.pop %v1441
        %v1443 = vmul.f32 %v1435, %v1442
        %v1444 = vlaneseq
        %v1445 = vshrl.u32 %v1444, 7
        %v1446 = vsub.s32 0, %v1445
        %v1447 = vrot.slane %v1429, %v1446
        %v1448 = vmul.f32 %v1443, %v1447
        %v1449 = vlaneseq
        %v1450 = vshrl.u32 %v1449, 7
        %v1451 = vsub.s32 0, %v1450
        %v1452 = vrot.slane %v1430, %v1451
        %v1453 = vadd.f32 %v1448, %v1452
        %v1454 = vpack.c.bf16 %v1453, %v1453
        %s1455 = scalar_lea.vmem [#allocation2], 64
        %v1456 = vld [vmem:[%s1455] sm:$0xf]
        %v1457 = vld [vmem:[%s1455 + $0x4] sm:$0xf]
        %v1458 = vld [vmem:[%s1455 + $0x8] sm:$0xf]
        %v1459 = vld [vmem:[%s1455 + $0xc] sm:$0xf]
        %v1460 = vld [vmem:[%s5 + $0x6] sm:$0x1]
        %v1461 = vlaneseq
        %v1462 = vshrl.u32 %v1461, 7
        %v1463 = vsub.s32 0, %v1462
        %v1464 = vrot.slane %v1460, %v1463
        %v1469 = vunpack.c.l.b16 %v1456
        %v1470 = vunpack.c.l.b16 %v1457
        %v1471 = vunpack.c.l.b16 %v1458
        %v1472 = vunpack.c.l.b16 %v1459
        %v1473 = vpack.c.b16 %v1470, %v1469
        %v1474 = vpack.c.b16 %v1472, %v1471
        %v1478 = vsel %vm355, %v1454, 0
        %1480 = vmatprep.subr.bf16.mxu0 0
        %1481 = vmatpush1.bf16.msra.mxu0 %v1473
        %1482 = vmatprep.subr.bf16.mxu0 0
        %1483 = vmatpush1.bf16.msra.mxu0 %v1474
        %1484 = vmatprep.subr.bf16.mxu0 0
        %1485 = vmatpush1.bf16.msra.mxu0 0
        %1486 = vmatprep.subr.bf16.mxu0 0
        %1487 = vmatpush1.bf16.msra.mxu0 0
        %1488 = vmatprep.subr.bf16.mxu0 0
        %1489 = vmatpush1.bf16.msra.mxu0 0
        %1490 = vmatprep.subr.bf16.mxu0 0
        %1491 = vmatpush1.bf16.msra.mxu0 0
        %1492 = vmatprep.subr.bf16.mxu0 0
        %1493 = vmatpush1.bf16.msra.mxu0 0
        %1494 = vmatprep.subr.bf16.mxu0 0
        %1495 = vmatpush1.bf16.msra.mxu0 0
        %1496 = vmatprep.subr.bf16.mxu0 0
        %1497 = vmatpush1.bf16.msra.mxu0 0
        %1498 = vmatprep.subr.bf16.mxu0 0
        %1499 = vmatpush1.bf16.msra.mxu0 0
        %1500 = vmatprep.subr.bf16.mxu0 0
        %1501 = vmatpush1.bf16.msra.mxu0 0
        %1502 = vmatprep.subr.bf16.mxu0 0
        %1503 = vmatpush1.bf16.msra.mxu0 0
        %1504 = vmatprep.subr.bf16.mxu0 0
        %1505 = vmatpush1.bf16.msra.mxu0 0
        %1506 = vmatprep.subr.bf16.mxu0 0
        %1507 = vmatpush1.bf16.msra.mxu0 0
        %1508 = vmatprep.subr.bf16.mxu0 0
        %1509 = vmatpush1.bf16.msra.mxu0 0
        %1510 = vmatprep.subr.bf16.mxu0 0
        %1511 = vmatpush1.bf16.msra.mxu0 0
        %1512 = vmatprep.mubr.bf16.mxu0 0
        %1513 = vmatmul.mubr.bf16.gmra.mrb[0].mxu0 %v1478
        %v1514 = vpop.f32.mrb[0].mxu0
        %v1515 = vadd.f32 %v1464, %v1514
        %v1516 = vpop.f32.mrb[0].mxu0
        %v1517 = vpop.f32.mrb[0].mxu0
        %v1518 = vpop.f32.mrb[0].mxu0
        %1519 = vdwg.mxu0
        %v1520 = vmax.f32 %v1515, 0.0
        %v1521 = vpack.c.bf16 %v1520, %v1520
        %s1522 = scalar_lea.vmem [#allocation2], 96
        %v1523 = vld [vmem:[%s1522] sm:$0xf]
        %v1524 = vld [vmem:[%s1522 + $0x4] sm:$0xf]
        %v1525 = vld [vmem:[%s1522 + $0x8] sm:$0xf]
        %v1526 = vld [vmem:[%s1522 + $0xc] sm:$0xf]
        %v1527 = vld [vmem:[%s1522 + $0x10] sm:$0xf]
        %v1528 = vld [vmem:[%s1522 + $0x14] sm:$0xf]
        %v1529 = vld [vmem:[%s1522 + $0x18] sm:$0xf]
        %v1530 = vld [vmem:[%s1522 + $0x1c] sm:$0xf]
        %v1539 = vunpack.c.l.b16 %v1523
        %v1540 = vunpack.c.l.b16 %v1524
        %v1541 = vunpack.c.l.b16 %v1525
        %v1542 = vunpack.c.l.b16 %v1526
        %v1543 = vunpack.c.l.b16 %v1527
        %v1544 = vunpack.c.l.b16 %v1528
        %v1545 = vunpack.c.l.b16 %v1529
        %v1546 = vunpack.c.l.b16 %v1530
        %v1547 = vpack.c.b16 %v1540, %v1539
        %v1548 = vpack.c.b16 %v1542, %v1541
        %v1549 = vpack.c.b16 %v1544, %v1543
        %v1550 = vpack.c.b16 %v1546, %v1545
        %vm1555 = vcmask 523264
        %v1557 = vsel %vm1555, %v1521, 0
        %1559 = vmatprep.subr.bf16.mxu0 0
        %1560 = vmatpush1.bf16.msra.mxu0 %v1547
        %1561 = vmatprep.subr.bf16.mxu0 0
        %1562 = vmatpush1.bf16.msra.mxu0 %v1548
        %1563 = vmatprep.subr.bf16.mxu0 0
        %1564 = vmatpush1.bf16.msra.mxu0 %v1549
        %1565 = vmatprep.subr.bf16.mxu0 0
        %1566 = vmatpush1.bf16.msra.mxu0 %v1550
        %1567 = vmatprep.subr.bf16.mxu0 0
        %1568 = vmatpush1.bf16.msra.mxu0 0
        %1569 = vmatprep.subr.bf16.mxu0 0
        %1570 = vmatpush1.bf16.msra.mxu0 0
        %1571 = vmatprep.subr.bf16.mxu0 0
        %1572 = vmatpush1.bf16.msra.mxu0 0
        %1573 = vmatprep.subr.bf16.mxu0 0
        %1574 = vmatpush1.bf16.msra.mxu0 0
        %1575 = vmatprep.subr.bf16.mxu0 0
        %1576 = vmatpush1.bf16.msra.mxu0 0
        %1577 = vmatprep.subr.bf16.mxu0 0
        %1578 = vmatpush1.bf16.msra.mxu0 0
        %1579 = vmatprep.subr.bf16.mxu0 0
        %1580 = vmatpush1.bf16.msra.mxu0 0
        %1581 = vmatprep.subr.bf16.mxu0 0
        %1582 = vmatpush1.bf16.msra.mxu0 0
        %1583 = vmatprep.subr.bf16.mxu0 0
        %1584 = vmatpush1.bf16.msra.mxu0 0
        %1585 = vmatprep.subr.bf16.mxu0 0
        %1586 = vmatpush1.bf16.msra.mxu0 0
        %1587 = vmatprep.subr.bf16.mxu0 0
        %1588 = vmatpush1.bf16.msra.mxu0 0
        %1589 = vmatprep.subr.bf16.mxu0 0
        %1590 = vmatpush1.bf16.msra.mxu0 0
        %1591 = vmatprep.mubr.bf16.mxu0 0
        %1592 = vmatmul.mubr.bf16.gmra.mrb[0].mxu0 %v1557
        %v1593 = vpop.f32.mrb[0].mxu0
        %v1594 = vadd.f32 0.0, %v1593
        %v1595 = vpop.f32.mrb[0].mxu0
        %v1596 = vpop.f32.mrb[0].mxu0
        %v1597 = vpop.f32.mrb[0].mxu0
        %1598 = vdwg.mxu0
        %v1599 = vadd.f32 %v1428, %v1594
        %v1600 = vld [vmem:[%s5 + $0x7] sm:$0x1]
        %v1601 = vlaneseq
        %v1602 = vshrl.u32 %v1601, 7
        %v1603 = vsub.s32 0, %v1602
        %v1604 = vrot.slane %v1600, %v1603
        %v1605 = vadd.f32 %v1599, %v1604
        %v1606 = vld [vmem:[%s5 + $0x8] sm:$0x1]
        %v1607 = vld [vmem:[%s5 + $0x9] sm:$0x1]
        %v1608 = vsel %vm355, %v1605, 0.0
        %1609 = vadd.xlane.f32.xlu0 %v1608
        %v1610 = vpop.xlane.xlu0 %1609
        %v1611 = vmul.f32 %v1610, %v359
        %v1612 = vsub.f32 %v1605, %v1611
        %v1613 = vmul.f32 %v1612, %v1612
        %v1614 = vsel %vm355, %v1613, 0.0
        %1615 = vadd.xlane.f32.xlu0 %v1614
        %v1616 = vpop.xlane.xlu0 %1615
        %v1617 = vmul.f32 %v1616, %v359
        %v1618 = vadd.f32 %v1617, 1e-06
        %v1619 = vrsqrt.pop %v1618
        %v1620 = vmul.f32 %v1612, %v1619
        %v1621 = vlaneseq
        %v1622 = vshrl.u32 %v1621, 7
        %v1623 = vsub.s32 0, %v1622
        %v1624 = vrot.slane %v1606, %v1623
        %v1625 = vmul.f32 %v1620, %v1624
        %v1626 = vlaneseq
        %v1627 = vshrl.u32 %v1626, 7
        %v1628 = vsub.s32 0, %v1627
        %v1629 = vrot.slane %v1607, %v1628
        %v1630 = vadd.f32 %v1625, %v1629
        %v1631 = vpack.c.bf16 %v1630, %v1630
        %s1632 = scalar_lea.vmem [#allocation2], 128
        %v1633 = vld [vmem:[%s1632] sm:$0xf]
        %v1634 = vld [vmem:[%s1632 + $0x4] sm:$0xf]
        %v1635 = vld [vmem:[%s1632 + $0x8] sm:$0xf]
        %v1636 = vld [vmem:[%s1632 + $0xc] sm:$0xf]
        %v1637 = vld [vmem:[%s5 + $0xa] sm:$0x1]
        %v1638 = vlaneseq
        %v1639 = vshrl.u32 %v1638, 7
        %v1640 = vsub.s32 0, %v1639
        %v1641 = vrot.slane %v1637, %v1640
        %v1646 = vunpack.c.l.b16 %v1633
        %v1647 = vunpack.c.l.b16 %v1634
        %v1648 = vunpack.c.l.b16 %v1635
        %v1649 = vunpack.c.l.b16 %v1636
        %v1650 = vpack.c.b16 %v1647, %v1646
        %v1651 = vpack.c.b16 %v1649, %v1648
        %v1655 = vsel %vm355, %v1631, 0
        %1657 = vmatprep.subr.bf16.mxu0 0
        %1658 = vmatpush1.bf16.msra.mxu0 %v1650
        %1659 = vmatprep.subr.bf16.mxu0 0
        %1660 = vmatpush1.bf16.msra.mxu0 %v1651
        %1661 = vmatprep.subr.bf16.mxu0 0
        %1662 = vmatpush1.bf16.msra.mxu0 0
        %1663 = vmatprep.subr.bf16.mxu0 0
        %1664 = vmatpush1.bf16.msra.mxu0 0
        %1665 = vmatprep.subr.bf16.mxu0 0
        %1666 = vmatpush1.bf16.msra.mxu0 0
        %1667 = vmatprep.subr.bf16.mxu0 0
        %1668 = vmatpush1.bf16.msra.mxu0 0
        %1669 = vmatprep.subr.bf16.mxu0 0
        %1670 = vmatpush1.bf16.msra.mxu0 0
        %1671 = vmatprep.subr.bf16.mxu0 0
        %1672 = vmatpush1.bf16.msra.mxu0 0
        %1673 = vmatprep.subr.bf16.mxu0 0
        %1674 = vmatpush1.bf16.msra.mxu0 0
        %1675 = vmatprep.subr.bf16.mxu0 0
        %1676 = vmatpush1.bf16.msra.mxu0 0
        %1677 = vmatprep.subr.bf16.mxu0 0
        %1678 = vmatpush1.bf16.msra.mxu0 0
        %1679 = vmatprep.subr.bf16.mxu0 0
        %1680 = vmatpush1.bf16.msra.mxu0 0
        %1681 = vmatprep.subr.bf16.mxu0 0
        %1682 = vmatpush1.bf16.msra.mxu0 0
        %1683 = vmatprep.subr.bf16.mxu0 0
        %1684 = vmatpush1.bf16.msra.mxu0 0
        %1685 = vmatprep.subr.bf16.mxu0 0
        %1686 = vmatpush1.bf16.msra.mxu0 0
        %1687 = vmatprep.subr.bf16.mxu0 0
        %1688 = vmatpush1.bf16.msra.mxu0 0
        %1689 = vmatprep.mubr.bf16.mxu0 0
        %1690 = vmatmul.mubr.bf16.gmra.mrb[0].mxu0 %v1655
        %v1691 = vpop.f32.mrb[0].mxu0
        %v1692 = vadd.f32 %v1641, %v1691
        %v1693 = vpop.f32.mrb[0].mxu0
        %v1694 = vpop.f32.mrb[0].mxu0
        %v1695 = vpop.f32.mrb[0].mxu0
        %1696 = vdwg.mxu0
        %s1697 = scalar_lea.vmem [#allocation2], 160
        %v1698 = vld [vmem:[%s1697] sm:$0xf]
        %v1699 = vld [vmem:[%s1697 + $0x4] sm:$0xf]
        %v1700 = vld [vmem:[%s1697 + $0x8] sm:$0xf]
        %v1701 = vld [vmem:[%s1697 + $0xc] sm:$0xf]
        %v1702 = vunpack.c.l.bf16 %v1698
        %v1703 = vunpack.c.l.bf16 %v1699
        %v1704 = vunpack.c.l.bf16 %v1700
        %v1705 = vunpack.c.l.bf16 %v1701
        %1707 = vrot.lane.b32.xlu0 %v1692, 96
        %v1708 = vpop.permute.xlu0 %1707
        %v1709 = vsel %vm457, %v1692, 0
        %v1711 = vsel %vm457, %v1708, 0
        %1713 = vmatprep.subr.mxu0 0.0
        %1714 = vmatpush1.xpose.msra.mxu0 %v1711
        %1715 = vmatprep.subr.mxu0 0.0
        %1716 = vmatpush1.xpose.msra.mxu0 0.0
        %1717 = vmatprep.subr.mxu0 0.0
        %1718 = vmatpush1.xpose.msra.mxu0 0.0
        %1719 = vmatprep.subr.mxu0 0.0
        %1720 = vmatpush1.xpose.msra.mxu0 0.0
        %1721 = vmatprep.subr.mxu0 0.0
        %1722 = vmatpush1.xpose.msra.mxu0 0.0
        %1723 = vmatprep.subr.mxu0 0.0
        %1724 = vmatpush1.xpose.msra.mxu0 0.0
        %1725 = vmatprep.subr.mxu0 0.0
        %1726 = vmatpush1.xpose.msra.mxu0 0.0
        %1727 = vmatprep.subr.mxu0 0.0
        %1728 = vmatpush1.xpose.msra.mxu0 0.0
        %1729 = vmatprep.subr.mxu0 0.0
        %1730 = vmatpush1.xpose.msra.mxu0 0.0
        %1731 = vmatprep.subr.mxu0 0.0
        %1732 = vmatpush1.xpose.msra.mxu0 0.0
        %1733 = vmatprep.subr.mxu0 0.0
        %1734 = vmatpush1.xpose.msra.mxu0 0.0
        %1735 = vmatprep.subr.mxu0 0.0
        %1736 = vmatpush1.xpose.msra.mxu0 0.0
        %1737 = vmatprep.subr.mxu0 0.0
        %1738 = vmatpush1.xpose.msra.mxu0 0.0
        %1739 = vmatprep.subr.mxu0 0.0
        %1740 = vmatpush1.xpose.msra.mxu0 0.0
        %1741 = vmatprep.subr.mxu0 0.0
        %1742 = vmatpush1.xpose.msra.mxu0 0.0
        %1743 = vmatprep.subr.mxu0 0.0
        %1744 = vmatpush1.xpose.msra.mxu0 0.0
        %1745 = vmatprep.subr.mxu0 0.0
        %1746 = vmatpush1.xpose.msra.mxu0 0.0
        %1747 = vmatprep.subr.mxu0 0.0
        %1748 = vmatpush1.xpose.msra.mxu0 0.0
        %1749 = vmatprep.subr.mxu0 0.0
        %1750 = vmatpush1.xpose.msra.mxu0 0.0
        %1751 = vmatprep.subr.mxu0 0.0
        %1752 = vmatpush1.xpose.msra.mxu0 0.0
        %1753 = vmatprep.subr.mxu0 0.0
        %1754 = vmatpush1.xpose.msra.mxu0 0.0
        %1755 = vmatprep.subr.mxu0 0.0
        %1756 = vmatpush1.xpose.msra.mxu0 0.0
        %1757 = vmatprep.subr.mxu0 0.0
        %1758 = vmatpush1.xpose.msra.mxu0 0.0
        %1759 = vmatprep.subr.mxu0 0.0
        %1760 = vmatpush1.xpose.msra.mxu0 0.0
        %1761 = vmatprep.subr.mxu0 0.0
        %1762 = vmatpush1.xpose.msra.mxu0 0.0
        %1763 = vmatprep.subr.mxu0 0.0
        %1764 = vmatpush1.xpose.msra.mxu0 0.0
        %1765 = vmatprep.subr.mxu0 0.0
        %1766 = vmatpush1.xpose.msra.mxu0 0.0
        %1767 = vmatprep.subr.mxu0 0.0
        %1768 = vmatpush1.xpose.msra.mxu0 0.0
        %1769 = vmatprep.subr.mxu0 0.0
        %1770 = vmatpush1.xpose.msra.mxu0 0.0
        %1771 = vmatprep.subr.mxu0 0.0
        %1772 = vmatpush1.xpose.msra.mxu0 0.0
        %1773 = vmatprep.subr.mxu0 0.0
        %1774 = vmatpush1.xpose.msra.mxu0 0.0
        %1775 = vmatprep.subr.mxu0 0.0
        %1776 = vmatpush1.xpose.msra.mxu0 0.0
        %1777 = vmatprep.mubr.f32.mxu0 0.0
        %1778 = vmatmul.mubr.f32.gmra.mrb[0].mxu0 %v1709
        %v1779 = vpop.f32.mrb[0].mxu0
        %v1780 = vadd.f32 0.0, %v1779
        %v1781 = vpop.f32.mrb[0].mxu0
        %1782 = vdwg.mxu0
        %v1783 = vmul.f32 %v1780, 0.35355338
        %v1784 = vadd.f32 %v1783, %v537
        %v1785 = vsel %vm457, %v1784, -inf
        %1786 = vmax.xlane.f32.xlu0 %v1785
        %v1787 = vpop.xlane.xlu0 %1786
        %v1788 = vsub.f32 %v1784, %v1787
        %v1789 = vmul.f32 %v1788, 1.442695
        %v1790 = vpow.pop %v1789
        %v1791 = vsel %vm457, %v1790, 0.0
        %1792 = vadd.xlane.f32.xlu0 %v1791
        %v1793 = vpop.xlane.xlu0 %1792
        %v1794 = vrcp.pop %v1793
        %v1795 = vmul.f32 %v1790, %v1794
        %1796 = vrot.lane.b32.xlu0 %v1692, 64
        %v1797 = vpop.permute.xlu0 %1796
        %v1800 = vsel %vm457, %v1795, 0
        %1802 = vmatprep.subr.mxu0 0.0
        %1803 = vmatpush1.msra.mxu0 %v1797
        %1804 = vmatprep.subr.mxu0 0.0
        %1805 = vmatpush1.msra.mxu0 0.0
        %1806 = vmatprep.subr.mxu0 0.0
        %1807 = vmatpush1.msra.mxu0 0.0
        %1808 = vmatprep.subr.mxu0 0.0
        %1809 = vmatpush1.msra.mxu0 0.0
        %1810 = vmatprep.subr.mxu0 0.0
        %1811 = vmatpush1.msra.mxu0 0.0
        %1812 = vmatprep.subr.mxu0 0.0
        %1813 = vmatpush1.msra.mxu0 0.0
        %1814 = vmatprep.subr.mxu0 0.0
        %1815 = vmatpush1.msra.mxu0 0.0
        %1816 = vmatprep.subr.mxu0 0.0
        %1817 = vmatpush1.msra.mxu0 0.0
        %1818 = vmatprep.subr.mxu0 0.0
        %1819 = vmatpush1.msra.mxu0 0.0
        %1820 = vmatprep.subr.mxu0 0.0
        %1821 = vmatpush1.msra.mxu0 0.0
        %1822 = vmatprep.subr.mxu0 0.0
        %1823 = vmatpush1.msra.mxu0 0.0
        %1824 = vmatprep.subr.mxu0 0.0
        %1825 = vmatpush1.msra.mxu0 0.0
        %1826 = vmatprep.subr.mxu0 0.0
        %1827 = vmatpush1.msra.mxu0 0.0
        %1828 = vmatprep.subr.mxu0 0.0
        %1829 = vmatpush1.msra.mxu0 0.0
        %1830 = vmatprep.subr.mxu0 0.0
        %1831 = vmatpush1.msra.mxu0 0.0
        %1832 = vmatprep.subr.mxu0 0.0
        %1833 = vmatpush1.msra.mxu0 0.0
        %1834 = vmatprep.subr.mxu0 0.0
        %1835 = vmatpush1.msra.mxu0 0.0
        %1836 = vmatprep.subr.mxu0 0.0
        %1837 = vmatpush1.msra.mxu0 0.0
        %1838 = vmatprep.subr.mxu0 0.0
        %1839 = vmatpush1.msra.mxu0 0.0
        %1840 = vmatprep.subr.mxu0 0.0
        %1841 = vmatpush1.msra.mxu0 0.0
        %1842 = vmatprep.subr.mxu0 0.0
        %1843 = vmatpush1.msra.mxu0 0.0
        %1844 = vmatprep.subr.mxu0 0.0
        %1845 = vmatpush1.msra.mxu0 0.0
        %1846 = vmatprep.subr.mxu0 0.0
        %1847 = vmatpush1.msra.mxu0 0.0
        %1848 = vmatprep.subr.mxu0 0.0
        %1849 = vmatpush1.msra.mxu0 0.0
        %1850 = vmatprep.subr.mxu0 0.0
        %1851 = vmatpush1.msra.mxu0 0.0
        %1852 = vmatprep.subr.mxu0 0.0
        %1853 = vmatpush1.msra.mxu0 0.0
        %1854 = vmatprep.subr.mxu0 0.0
        %1855 = vmatpush1.msra.mxu0 0.0
        %1856 = vmatprep.subr.mxu0 0.0
        %1857 = vmatpush1.msra.mxu0 0.0
        %1858 = vmatprep.subr.mxu0 0.0
        %1859 = vmatpush1.msra.mxu0 0.0
        %1860 = vmatprep.subr.mxu0 0.0
        %1861 = vmatpush1.msra.mxu0 0.0
        %1862 = vmatprep.subr.mxu0 0.0
        %1863 = vmatpush1.msra.mxu0 0.0
        %1864 = vmatprep.subr.mxu0 0.0
        %1865 = vmatpush1.msra.mxu0 0.0
        %1866 = vmatprep.mubr.f32.mxu0 0.0
        %1867 = vmatmul.mubr.f32.gmra.mrb[0].mxu0 %v1800
        %v1868 = vpop.f32.mrb[0].mxu0
        %v1869 = vadd.f32 0.0, %v1868
        %v1870 = vpop.f32.mrb[0].mxu0
        %1871 = vdwg.mxu0
        %1872 = vrot.lane.b32.xlu0 %v1692, 120
        %v1873 = vpop.permute.xlu0 %1872
        %1874 = vrot.lane.b32.xlu0 %v1692, 88
        %v1875 = vpop.permute.xlu0 %1874
        %v1876 = vsel %vm457, %v1873, 0
        %v1878 = vsel %vm457, %v1875, 0
        %1880 = vmatprep.subr.mxu0 0.0
        %1881 = vmatpush1.xpose.msra.mxu0 %v1878
        %1882 = vmatprep.subr.mxu0 0.0
        %1883 = vmatpush1.xpose.msra.mxu0 0.0
        %1884 = vmatprep.subr.mxu0 0.0
        %1885 = vmatpush1.xpose.msra.mxu0 0.0
        %1886 = vmatprep.subr.mxu0 0.0
        %1887 = vmatpush1.xpose.msra.mxu0 0.0
        %1888 = vmatprep.subr.mxu0 0.0
        %1889 = vmatpush1.xpose.msra.mxu0 0.0
        %1890 = vmatprep.subr.mxu0 0.0
        %1891 = vmatpush1.xpose.msra.mxu0 0.0
        %1892 = vmatprep.subr.mxu0 0.0
        %1893 = vmatpush1.xpose.msra.mxu0 0.0
        %1894 = vmatprep.subr.mxu0 0.0
        %1895 = vmatpush1.xpose.msra.mxu0 0.0
        %1896 = vmatprep.subr.mxu0 0.0
        %1897 = vmatpush1.xpose.msra.mxu0 0.0
        %1898 = vmatprep.subr.mxu0 0.0
        %1899 = vmatpush1.xpose.msra.mxu0 0.0
        %1900 = vmatprep.subr.mxu0 0.0
        %1901 = vmatpush1.xpose.msra.mxu0 0.0
        %1902 = vmatprep.subr.mxu0 0.0
        %1903 = vmatpush1.xpose.msra.mxu0 0.0
        %1904 = vmatprep.subr.mxu0 0.0
        %1905 = vmatpush1.xpose.msra.mxu0 0.0
        %1906 = vmatprep.subr.mxu0 0.0
        %1907 = vmatpush1.xpose.msra.mxu0 0.0
        %1908 = vmatprep.subr.mxu0 0.0
        %1909 = vmatpush1.xpose.msra.mxu0 0.0
        %1910 = vmatprep.subr.mxu0 0.0
        %1911 = vmatpush1.xpose.msra.mxu0 0.0
        %1912 = vmatprep.subr.mxu0 0.0
        %1913 = vmatpush1.xpose.msra.mxu0 0.0
        %1914 = vmatprep.subr.mxu0 0.0
        %1915 = vmatpush1.xpose.msra.mxu0 0.0
        %1916 = vmatprep.subr.mxu0 0.0
        %1917 = vmatpush1.xpose.msra.mxu0 0.0
        %1918 = vmatprep.subr.mxu0 0.0
        %1919 = vmatpush1.xpose.msra.mxu0 0.0
        %1920 = vmatprep.subr.mxu0 0.0
        %1921 = vmatpush1.xpose.msra.mxu0 0.0
        %1922 = vmatprep.subr.mxu0 0.0
        %1923 = vmatpush1.xpose.msra.mxu0 0.0
        %1924 = vmatprep.subr.mxu0 0.0
        %1925 = vmatpush1.xpose.msra.mxu0 0.0
        %1926 = vmatprep.subr.mxu0 0.0
        %1927 = vmatpush1.xpose.msra.mxu0 0.0
        %1928 = vmatprep.subr.mxu0 0.0
        %1929 = vmatpush1.xpose.msra.mxu0 0.0
        %1930 = vmatprep.subr.mxu0 0.0
        %1931 = vmatpush1.xpose.msra.mxu0 0.0
        %1932 = vmatprep.subr.mxu0 0.0
        %1933 = vmatpush1.xpose.msra.mxu0 0.0
        %1934 = vmatprep.subr.mxu0 0.0
        %1935 = vmatpush1.xpose.msra.mxu0 0.0
        %1936 = vmatprep.subr.mxu0 0.0
        %1937 = vmatpush1.xpose.msra.mxu0 0.0
        %1938 = vmatprep.subr.mxu0 0.0
        %1939 = vmatpush1.xpose.msra.mxu0 0.0
        %1940 = vmatprep.subr.mxu0 0.0
        %1941 = vmatpush1.xpose.msra.mxu0 0.0
        %1942 = vmatprep.subr.mxu0 0.0
        %1943 = vmatpush1.xpose.msra.mxu0 0.0
        %1944 = vmatprep.mubr.f32.mxu0 0.0
        %1945 = vmatmul.mubr.f32.gmra.mrb[0].mxu0 %v1876
        %v1946 = vpop.f32.mrb[0].mxu0
        %v1947 = vadd.f32 0.0, %v1946
        %v1948 = vpop.f32.mrb[0].mxu0
        %1949 = vdwg.mxu0
        %v1950 = vmul.f32 %v1947, 0.35355338
        %v1951 = vadd.f32 %v1950, %v537
        %v1952 = vsel %vm457, %v1951, -inf
        %1953 = vmax.xlane.f32.xlu0 %v1952
        %v1954 = vpop.xlane.xlu0 %1953
        %v1955 = vsub.f32 %v1951, %v1954
        %v1956 = vmul.f32 %v1955, 1.442695
        %v1957 = vpow.pop %v1956
        %v1958 = vsel %vm457, %v1957, 0.0
        %1959 = vadd.xlane.f32.xlu0 %v1958
        %v1960 = vpop.xlane.xlu0 %1959
        %v1961 = vrcp.pop %v1960
        %v1962 = vmul.f32 %v1957, %v1961
        %1963 = vrot.lane.b32.xlu0 %v1692, 56
        %v1964 = vpop.permute.xlu0 %1963
        %v1967 = vsel %vm457, %v1962, 0
        %1969 = vmatprep.subr.mxu0 0.0
        %1970 = vmatpush1.msra.mxu0 %v1964
        %1971 = vmatprep.subr.mxu0 0.0
        %1972 = vmatpush1.msra.mxu0 0.0
        %1973 = vmatprep.subr.mxu0 0.0
        %1974 = vmatpush1.msra.mxu0 0.0
        %1975 = vmatprep.subr.mxu0 0.0
        %1976 = vmatpush1.msra.mxu0 0.0
        %1977 = vmatprep.subr.mxu0 0.0
        %1978 = vmatpush1.msra.mxu0 0.0
        %1979 = vmatprep.subr.mxu0 0.0
        %1980 = vmatpush1.msra.mxu0 0.0
        %1981 = vmatprep.subr.mxu0 0.0
        %1982 = vmatpush1.msra.mxu0 0.0
        %1983 = vmatprep.subr.mxu0 0.0
        %1984 = vmatpush1.msra.mxu0 0.0
        %1985 = vmatprep.subr.mxu0 0.0
        %1986 = vmatpush1.msra.mxu0 0.0
        %1987 = vmatprep.subr.mxu0 0.0
        %1988 = vmatpush1.msra.mxu0 0.0
        %1989 = vmatprep.subr.mxu0 0.0
        %1990 = vmatpush1.msra.mxu0 0.0
        %1991 = vmatprep.subr.mxu0 0.0
        %1992 = vmatpush1.msra.mxu0 0.0
        %1993 = vmatprep.subr.mxu0 0.0
        %1994 = vmatpush1.msra.mxu0 0.0
        %1995 = vmatprep.subr.mxu0 0.0
        %1996 = vmatpush1.msra.mxu0 0.0
        %1997 = vmatprep.subr.mxu0 0.0
        %1998 = vmatpush1.msra.mxu0 0.0
        %1999 = vmatprep.subr.mxu0 0.0
        %2000 = vmatpush1.msra.mxu0 0.0
        %2001 = vmatprep.subr.mxu0 0.0
        %2002 = vmatpush1.msra.mxu0 0.0
        %2003 = vmatprep.subr.mxu0 0.0
        %2004 = vmatpush1.msra.mxu0 0.0
        %2005 = vmatprep.subr.mxu0 0.0
        %2006 = vmatpush1.msra.mxu0 0.0
        %2007 = vmatprep.subr.mxu0 0.0
        %2008 = vmatpush1.msra.mxu0 0.0
        %2009 = vmatprep.subr.mxu0 0.0
        %2010 = vmatpush1.msra.mxu0 0.0
        %2011 = vmatprep.subr.mxu0 0.0
        %2012 = vmatpush1.msra.mxu0 0.0
        %2013 = vmatprep.subr.mxu0 0.0
        %2014 = vmatpush1.msra.mxu0 0.0
        %2015 = vmatprep.subr.mxu0 0.0
        %2016 = vmatpush1.msra.mxu0 0.0
        %2017 = vmatprep.subr.mxu0 0.0
        %2018 = vmatpush1.msra.mxu0 0.0
        %2019 = vmatprep.subr.mxu0 0.0
        %2020 = vmatpush1.msra.mxu0 0.0
        %2021 = vmatprep.subr.mxu0 0.0
        %2022 = vmatpush1.msra.mxu0 0.0
        %2023 = vmatprep.subr.mxu0 0.0
        %2024 = vmatpush1.msra.mxu0 0.0
        %2025 = vmatprep.subr.mxu0 0.0
        %2026 = vmatpush1.msra.mxu0 0.0
        %2027 = vmatprep.subr.mxu0 0.0
        %2028 = vmatpush1.msra.mxu0 0.0
        %2029 = vmatprep.subr.mxu0 0.0
        %2030 = vmatpush1.msra.mxu0 0.0
        %2031 = vmatprep.subr.mxu0 0.0
        %2032 = vmatpush1.msra.mxu0 0.0
        %2033 = vmatprep.mubr.f32.mxu0 0.0
        %2034 = vmatmul.mubr.f32.gmra.mrb[0].mxu0 %v1967
        %v2035 = vpop.f32.mrb[0].mxu0
        %v2036 = vadd.f32 0.0, %v2035
        %v2037 = vpop.f32.mrb[0].mxu0
        %2038 = vdwg.mxu0
        %v2040 = vsel %vm457, %v2036, 0
        %2042 = vmatprep.subr.mxu0 0.0
        %2043 = vmatpush1.msra.mxu0 %v1703
        %2044 = vmatprep.subr.mxu0 0.0
        %2045 = vmatpush1.msra.mxu0 0.0
        %2046 = vmatprep.subr.mxu0 0.0
        %2047 = vmatpush1.msra.mxu0 0.0
        %2048 = vmatprep.subr.mxu0 0.0
        %2049 = vmatpush1.msra.mxu0 0.0
        %2050 = vmatprep.subr.mxu0 0.0
        %2051 = vmatpush1.msra.mxu0 0.0
        %2052 = vmatprep.subr.mxu0 0.0
        %2053 = vmatpush1.msra.mxu0 0.0
        %2054 = vmatprep.subr.mxu0 0.0
        %2055 = vmatpush1.msra.mxu0 0.0
        %2056 = vmatprep.subr.mxu0 0.0
        %2057 = vmatpush1.msra.mxu0 0.0
        %2058 = vmatprep.subr.mxu0 0.0
        %2059 = vmatpush1.msra.mxu0 0.0
        %2060 = vmatprep.subr.mxu0 0.0
        %2061 = vmatpush1.msra.mxu0 0.0
        %2062 = vmatprep.subr.mxu0 0.0
        %2063 = vmatpush1.msra.mxu0 0.0
        %2064 = vmatprep.subr.mxu0 0.0
        %2065 = vmatpush1.msra.mxu0 0.0
        %2066 = vmatprep.subr.mxu0 0.0
        %2067 = vmatpush1.msra.mxu0 0.0
        %2068 = vmatprep.subr.mxu0 0.0
        %2069 = vmatpush1.msra.mxu0 0.0
        %2070 = vmatprep.subr.mxu0 0.0
        %2071 = vmatpush1.msra.mxu0 0.0
        %2072 = vmatprep.subr.mxu0 0.0
        %2073 = vmatpush1.msra.mxu0 0.0
        %2074 = vmatprep.subr.mxu0 0.0
        %2075 = vmatpush1.msra.mxu0 0.0
        %2076 = vmatprep.subr.mxu0 0.0
        %2077 = vmatpush1.msra.mxu0 0.0
        %2078 = vmatprep.subr.mxu0 0.0
        %2079 = vmatpush1.msra.mxu0 0.0
        %2080 = vmatprep.subr.mxu0 0.0
        %2081 = vmatpush1.msra.mxu0 0.0
        %2082 = vmatprep.subr.mxu0 0.0
        %2083 = vmatpush1.msra.mxu0 0.0
        %2084 = vmatprep.subr.mxu0 0.0
        %2085 = vmatpush1.msra.mxu0 0.0
        %2086 = vmatprep.subr.mxu0 0.0
        %2087 = vmatpush1.msra.mxu0 0.0
        %2088 = vmatprep.subr.mxu0 0.0
        %2089 = vmatpush1.msra.mxu0 0.0
        %2090 = vmatprep.subr.mxu0 0.0
        %2091 = vmatpush1.msra.mxu0 0.0
        %2092 = vmatprep.subr.mxu0 0.0
        %2093 = vmatpush1.msra.mxu0 0.0
        %2094 = vmatprep.subr.mxu0 0.0
        %2095 = vmatpush1.msra.mxu0 0.0
        %2096 = vmatprep.subr.mxu0 0.0
        %2097 = vmatpush1.msra.mxu0 0.0
        %2098 = vmatprep.subr.mxu0 0.0
        %2099 = vmatpush1.msra.mxu0 0.0
        %2100 = vmatprep.subr.mxu0 0.0
        %2101 = vmatpush1.msra.mxu0 0.0
        %2102 = vmatprep.subr.mxu0 0.0
        %2103 = vmatpush1.msra.mxu0 0.0
        %2104 = vmatprep.subr.mxu0 0.0
        %2105 = vmatpush1.msra.mxu0 0.0
        %2106 = vmatprep.mubr.f32.mxu0 0.0
        %2107 = vmatmul.mubr.f32.gmra.mrb[0].mxu0 %v2040
        %v2108 = vpop.f32.mrb[0].mxu0
        %v2109 = vadd.f32 0.0, %v2108
        %v2110 = vpop.f32.mrb[0].mxu0
        %2111 = vdwg.mxu0
        %v2113 = vsel %vm457, %v1869, 0
        %2115 = vmatprep.subr.mxu0 0.0
        %2116 = vmatpush1.msra.mxu0 %v1702
        %2117 = vmatprep.subr.mxu0 0.0
        %2118 = vmatpush1.msra.mxu0 0.0
        %2119 = vmatprep.subr.mxu0 0.0
        %2120 = vmatpush1.msra.mxu0 0.0
        %2121 = vmatprep.subr.mxu0 0.0
        %2122 = vmatpush1.msra.mxu0 0.0
        %2123 = vmatprep.subr.mxu0 0.0
        %2124 = vmatpush1.msra.mxu0 0.0
        %2125 = vmatprep.subr.mxu0 0.0
        %2126 = vmatpush1.msra.mxu0 0.0
        %2127 = vmatprep.subr.mxu0 0.0
        %2128 = vmatpush1.msra.mxu0 0.0
        %2129 = vmatprep.subr.mxu0 0.0
        %2130 = vmatpush1.msra.mxu0 0.0
        %2131 = vmatprep.subr.mxu0 0.0
        %2132 = vmatpush1.msra.mxu0 0.0
        %2133 = vmatprep.subr.mxu0 0.0
        %2134 = vmatpush1.msra.mxu0 0.0
        %2135 = vmatprep.subr.mxu0 0.0
        %2136 = vmatpush1.msra.mxu0 0.0
        %2137 = vmatprep.subr.mxu0 0.0
        %2138 = vmatpush1.msra.mxu0 0.0
        %2139 = vmatprep.subr.mxu0 0.0
        %2140 = vmatpush1.msra.mxu0 0.0
        %2141 = vmatprep.subr.mxu0 0.0
        %2142 = vmatpush1.msra.mxu0 0.0
        %2143 = vmatprep.subr.mxu0 0.0
        %2144 = vmatpush1.msra.mxu0 0.0
        %2145 = vmatprep.subr.mxu0 0.0
        %2146 = vmatpush1.msra.mxu0 0.0
        %2147 = vmatprep.subr.mxu0 0.0
        %2148 = vmatpush1.msra.mxu0 0.0
        %2149 = vmatprep.subr.mxu0 0.0
        %2150 = vmatpush1.msra.mxu0 0.0
        %2151 = vmatprep.subr.mxu0 0.0
        %2152 = vmatpush1.msra.mxu0 0.0
        %2153 = vmatprep.subr.mxu0 0.0
        %2154 = vmatpush1.msra.mxu0 0.0
        %2155 = vmatprep.subr.mxu0 0.0
        %2156 = vmatpush1.msra.mxu0 0.0
        %2157 = vmatprep.subr.mxu0 0.0
        %2158 = vmatpush1.msra.mxu0 0.0
        %2159 = vmatprep.subr.mxu0 0.0
        %2160 = vmatpush1.msra.mxu0 0.0
        %2161 = vmatprep.subr.mxu0 0.0
        %2162 = vmatpush1.msra.mxu0 0.0
        %2163 = vmatprep.subr.mxu0 0.0
        %2164 = vmatpush1.msra.mxu0 0.0
        %2165 = vmatprep.subr.mxu0 0.0
        %2166 = vmatpush1.msra.mxu0 0.0
        %2167 = vmatprep.subr.mxu0 0.0
        %2168 = vmatpush1.msra.mxu0 0.0
        %2169 = vmatprep.subr.mxu0 0.0
        %2170 = vmatpush1.msra.mxu0 0.0
        %2171 = vmatprep.subr.mxu0 0.0
        %2172 = vmatpush1.msra.mxu0 0.0
        %2173 = vmatprep.subr.mxu0 0.0
        %2174 = vmatpush1.msra.mxu0 0.0
        %2175 = vmatprep.subr.mxu0 0.0
        %2176 = vmatpush1.msra.mxu0 0.0
        %2177 = vmatprep.subr.mxu0 0.0
        %2178 = vmatpush1.msra.mxu0 0.0
        %2179 = vmatprep.mubr.f32.mxu0 0.0
        %2180 = vmatmul.mubr.f32.gmra.mrb[0].mxu0 %v2113
        %v2181 = vpop.f32.mrb[0].mxu0
        %v2182 = vadd.f32 %v2109, %v2181
        %v2183 = vpop.f32.mrb[0].mxu0
        %2184 = vdwg.mxu0
        %2185 = vrot.lane.b32.xlu0 %v1692, 112
        %v2186 = vpop.permute.xlu0 %2185
        %2187 = vrot.lane.b32.xlu0 %v1692, 80
        %v2188 = vpop.permute.xlu0 %2187
        %v2189 = vsel %vm457, %v2186, 0
        %v2191 = vsel %vm457, %v2188, 0
        %2193 = vmatprep.subr.mxu0 0.0
        %2194 = vmatpush1.xpose.msra.mxu0 %v2191
        %2195 = vmatprep.subr.mxu0 0.0
        %2196 = vmatpush1.xpose.msra.mxu0 0.0
        %2197 = vmatprep.subr.mxu0 0.0
        %2198 = vmatpush1.xpose.msra.mxu0 0.0
        %2199 = vmatprep.subr.mxu0 0.0
        %2200 = vmatpush1.xpose.msra.mxu0 0.0
        %2201 = vmatprep.subr.mxu0 0.0
        %2202 = vmatpush1.xpose.msra.mxu0 0.0
        %2203 = vmatprep.subr.mxu0 0.0
        %2204 = vmatpush1.xpose.msra.mxu0 0.0
        %2205 = vmatprep.subr.mxu0 0.0
        %2206 = vmatpush1.xpose.msra.mxu0 0.0
        %2207 = vmatprep.subr.mxu0 0.0
        %2208 = vmatpush1.xpose.msra.mxu0 0.0
        %2209 = vmatprep.subr.mxu0 0.0
        %2210 = vmatpush1.xpose.msra.mxu0 0.0
        %2211 = vmatprep.subr.mxu0 0.0
        %2212 = vmatpush1.xpose.msra.mxu0 0.0
        %2213 = vmatprep.subr.mxu0 0.0
        %2214 = vmatpush1.xpose.msra.mxu0 0.0
        %2215 = vmatprep.subr.mxu0 0.0
        %2216 = vmatpush1.xpose.msra.mxu0 0.0
        %2217 = vmatprep.subr.mxu0 0.0
        %2218 = vmatpush1.xpose.msra.mxu0 0.0
        %2219 = vmatprep.subr.mxu0 0.0
        %2220 = vmatpush1.xpose.msra.mxu0 0.0
        %2221 = vmatprep.subr.mxu0 0.0
        %2222 = vmatpush1.xpose.msra.mxu0 0.0
        %2223 = vmatprep.subr.mxu0 0.0
        %2224 = vmatpush1.xpose.msra.mxu0 0.0
        %2225 = vmatprep.subr.mxu0 0.0
        %2226 = vmatpush1.xpose.msra.mxu0 0.0
        %2227 = vmatprep.subr.mxu0 0.0
        %2228 = vmatpush1.xpose.msra.mxu0 0.0
        %2229 = vmatprep.subr.mxu0 0.0
        %2230 = vmatpush1.xpose.msra.mxu0 0.0
        %2231 = vmatprep.subr.mxu0 0.0
        %2232 = vmatpush1.xpose.msra.mxu0 0.0
        %2233 = vmatprep.subr.mxu0 0.0
        %2234 = vmatpush1.xpose.msra.mxu0 0.0
        %2235 = vmatprep.subr.mxu0 0.0
        %2236 = vmatpush1.xpose.msra.mxu0 0.0
        %2237 = vmatprep.subr.mxu0 0.0
        %2238 = vmatpush1.xpose.msra.mxu0 0.0
        %2239 = vmatprep.subr.mxu0 0.0
        %2240 = vmatpush1.xpose.msra.mxu0 0.0
        %2241 = vmatprep.subr.mxu0 0.0
        %2242 = vmatpush1.xpose.msra.mxu0 0.0
        %2243 = vmatprep.subr.mxu0 0.0
        %2244 = vmatpush1.xpose.msra.mxu0 0.0
        %2245 = vmatprep.subr.mxu0 0.0
        %2246 = vmatpush1.xpose.msra.mxu0 0.0
        %2247 = vmatprep.subr.mxu0 0.0
        %2248 = vmatpush1.xpose.msra.mxu0 0.0
        %2249 = vmatprep.subr.mxu0 0.0
        %2250 = vmatpush1.xpose.msra.mxu0 0.0
        %2251 = vmatprep.subr.mxu0 0.0
        %2252 = vmatpush1.xpose.msra.mxu0 0.0
        %2253 = vmatprep.subr.mxu0 0.0
        %2254 = vmatpush1.xpose.msra.mxu0 0.0
        %2255 = vmatprep.subr.mxu0 0.0
        %2256 = vmatpush1.xpose.msra.mxu0 0.0
        %2257 = vmatprep.mubr.f32.mxu0 0.0
        %2258 = vmatmul.mubr.f32.gmra.mrb[0].mxu0 %v2189
        %v2259 = vpop.f32.mrb[0].mxu0
        %v2260 = vadd.f32 0.0, %v2259
        %v2261 = vpop.f32.mrb[0].mxu0
        %2262 = vdwg.mxu0
        %v2263 = vmul.f32 %v2260, 0.35355338
        %v2264 = vadd.f32 %v2263, %v537
        %v2265 = vsel %vm457, %v2264, -inf
        %2266 = vmax.xlane.f32.xlu0 %v2265
        %v2267 = vpop.xlane.xlu0 %2266
        %v2268 = vsub.f32 %v2264, %v2267
        %v2269 = vmul.f32 %v2268, 1.442695
        %v2270 = vpow.pop %v2269
        %v2271 = vsel %vm457, %v2270, 0.0
        %2272 = vadd.xlane.f32.xlu0 %v2271
        %v2273 = vpop.xlane.xlu0 %2272
        %v2274 = vrcp.pop %v2273
        %v2275 = vmul.f32 %v2270, %v2274
        %2276 = vrot.lane.b32.xlu0 %v1692, 48
        %v2277 = vpop.permute.xlu0 %2276
        %v2280 = vsel %vm457, %v2275, 0
        %2282 = vmatprep.subr.mxu0 0.0
        %2283 = vmatpush1.msra.mxu0 %v2277
        %2284 = vmatprep.subr.mxu0 0.0
        %2285 = vmatpush1.msra.mxu0 0.0
        %2286 = vmatprep.subr.mxu0 0.0
        %2287 = vmatpush1.msra.mxu0 0.0
        %2288 = vmatprep.subr.mxu0 0.0
        %2289 = vmatpush1.msra.mxu0 0.0
        %2290 = vmatprep.subr.mxu0 0.0
        %2291 = vmatpush1.msra.mxu0 0.0
        %2292 = vmatprep.subr.mxu0 0.0
        %2293 = vmatpush1.msra.mxu0 0.0
        %2294 = vmatprep.subr.mxu0 0.0
        %2295 = vmatpush1.msra.mxu0 0.0
        %2296 = vmatprep.subr.mxu0 0.0
        %2297 = vmatpush1.msra.mxu0 0.0
        %2298 = vmatprep.subr.mxu0 0.0
        %2299 = vmatpush1.msra.mxu0 0.0
        %2300 = vmatprep.subr.mxu0 0.0
        %2301 = vmatpush1.msra.mxu0 0.0
        %2302 = vmatprep.subr.mxu0 0.0
        %2303 = vmatpush1.msra.mxu0 0.0
        %2304 = vmatprep.subr.mxu0 0.0
        %2305 = vmatpush1.msra.mxu0 0.0
        %2306 = vmatprep.subr.mxu0 0.0
        %2307 = vmatpush1.msra.mxu0 0.0
        %2308 = vmatprep.subr.mxu0 0.0
        %2309 = vmatpush1.msra.mxu0 0.0
        %2310 = vmatprep.subr.mxu0 0.0
        %2311 = vmatpush1.msra.mxu0 0.0
        %2312 = vmatprep.subr.mxu0 0.0
        %2313 = vmatpush1.msra.mxu0 0.0
        %2314 = vmatprep.subr.mxu0 0.0
        %2315 = vmatpush1.msra.mxu0 0.0
        %2316 = vmatprep.subr.mxu0 0.0
        %2317 = vmatpush1.msra.mxu0 0.0
        %2318 = vmatprep.subr.mxu0 0.0
        %2319 = vmatpush1.msra.mxu0 0.0
        %2320 = vmatprep.subr.mxu0 0.0
        %2321 = vmatpush1.msra.mxu0 0.0
        %2322 = vmatprep.subr.mxu0 0.0
        %2323 = vmatpush1.msra.mxu0 0.0
        %2324 = vmatprep.subr.mxu0 0.0
        %2325 = vmatpush1.msra.mxu0 0.0
        %2326 = vmatprep.subr.mxu0 0.0
        %2327 = vmatpush1.msra.mxu0 0.0
        %2328 = vmatprep.subr.mxu0 0.0
        %2329 = vmatpush1.msra.mxu0 0.0
        %2330 = vmatprep.subr.mxu0 0.0
        %2331 = vmatpush1.msra.mxu0 0.0
        %2332 = vmatprep.subr.mxu0 0.0
        %2333 = vmatpush1.msra.mxu0 0.0
        %2334 = vmatprep.subr.mxu0 0.0
        %2335 = vmatpush1.msra.mxu0 0.0
        %2336 = vmatprep.subr.mxu0 0.0
        %2337 = vmatpush1.msra.mxu0 0.0
        %2338 = vmatprep.subr.mxu0 0.0
        %2339 = vmatpush1.msra.mxu0 0.0
        %2340 = vmatprep.subr.mxu0 0.0
        %2341 = vmatpush1.msra.mxu0 0.0
        %2342 = vmatprep.subr.mxu0 0.0
        %2343 = vmatpush1.msra.mxu0 0.0
        %2344 = vmatprep.subr.mxu0 0.0
        %2345 = vmatpush1.msra.mxu0 0.0
        %2346 = vmatprep.mubr.f32.mxu0 0.0
        %2347 = vmatmul.mubr.f32.gmra.mrb[0].mxu0 %v2280
        %v2348 = vpop.f32.mrb[0].mxu0
        %v2349 = vadd.f32 0.0, %v2348
        %v2350 = vpop.f32.mrb[0].mxu0
        %2351 = vdwg.mxu0
        %v2353 = vsel %vm457, %v2349, 0
        %2355 = vmatprep.subr.mxu0 0.0
        %2356 = vmatpush1.msra.mxu0 %v1704
        %2357 = vmatprep.subr.mxu0 0.0
        %2358 = vmatpush1.msra.mxu0 0.0
        %2359 = vmatprep.subr.mxu0 0.0
        %2360 = vmatpush1.msra.mxu0 0.0
        %2361 = vmatprep.subr.mxu0 0.0
        %2362 = vmatpush1.msra.mxu0 0.0
        %2363 = vmatprep.subr.mxu0 0.0
        %2364 = vmatpush1.msra.mxu0 0.0
        %2365 = vmatprep.subr.mxu0 0.0
        %2366 = vmatpush1.msra.mxu0 0.0
        %2367 = vmatprep.subr.mxu0 0.0
        %2368 = vmatpush1.msra.mxu0 0.0
        %2369 = vmatprep.subr.mxu0 0.0
        %2370 = vmatpush1.msra.mxu0 0.0
        %2371 = vmatprep.subr.mxu0 0.0
        %2372 = vmatpush1.msra.mxu0 0.0
        %2373 = vmatprep.subr.mxu0 0.0
        %2374 = vmatpush1.msra.mxu0 0.0
        %2375 = vmatprep.subr.mxu0 0.0
        %2376 = vmatpush1.msra.mxu0 0.0
        %2377 = vmatprep.subr.mxu0 0.0
        %2378 = vmatpush1.msra.mxu0 0.0
        %2379 = vmatprep.subr.mxu0 0.0
        %2380 = vmatpush1.msra.mxu0 0.0
        %2381 = vmatprep.subr.mxu0 0.0
        %2382 = vmatpush1.msra.mxu0 0.0
        %2383 = vmatprep.subr.mxu0 0.0
        %2384 = vmatpush1.msra.mxu0 0.0
        %2385 = vmatprep.subr.mxu0 0.0
        %2386 = vmatpush1.msra.mxu0 0.0
        %2387 = vmatprep.subr.mxu0 0.0
        %2388 = vmatpush1.msra.mxu0 0.0
        %2389 = vmatprep.subr.mxu0 0.0
        %2390 = vmatpush1.msra.mxu0 0.0
        %2391 = vmatprep.subr.mxu0 0.0
        %2392 = vmatpush1.msra.mxu0 0.0
        %2393 = vmatprep.subr.mxu0 0.0
        %2394 = vmatpush1.msra.mxu0 0.0
        %2395 = vmatprep.subr.mxu0 0.0
        %2396 = vmatpush1.msra.mxu0 0.0
        %2397 = vmatprep.subr.mxu0 0.0
        %2398 = vmatpush1.msra.mxu0 0.0
        %2399 = vmatprep.subr.mxu0 0.0
        %2400 = vmatpush1.msra.mxu0 0.0
        %2401 = vmatprep.subr.mxu0 0.0
        %2402 = vmatpush1.msra.mxu0 0.0
        %2403 = vmatprep.subr.mxu0 0.0
        %2404 = vmatpush1.msra.mxu0 0.0
        %2405 = vmatprep.subr.mxu0 0.0
        %2406 = vmatpush1.msra.mxu0 0.0
        %2407 = vmatprep.subr.mxu0 0.0
        %2408 = vmatpush1.msra.mxu0 0.0
        %2409 = vmatprep.subr.mxu0 0.0
        %2410 = vmatpush1.msra.mxu0 0.0
        %2411 = vmatprep.subr.mxu0 0.0
        %2412 = vmatpush1.msra.mxu0 0.0
        %2413 = vmatprep.subr.mxu0 0.0
        %2414 = vmatpush1.msra.mxu0 0.0
        %2415 = vmatprep.subr.mxu0 0.0
        %2416 = vmatpush1.msra.mxu0 0.0
        %2417 = vmatprep.subr.mxu0 0.0
        %2418 = vmatpush1.msra.mxu0 0.0
        %2419 = vmatprep.mubr.f32.mxu0 0.0
        %2420 = vmatmul.mubr.f32.gmra.mrb[0].mxu0 %v2353
        %v2421 = vpop.f32.mrb[0].mxu0
        %v2422 = vadd.f32 0.0, %v2421
        %v2423 = vpop.f32.mrb[0].mxu0
        %2424 = vdwg.mxu0
        %v2425 = vadd.f32 %v2182, %v2422
        %2426 = vrot.lane.b32.xlu0 %v1692, 104
        %v2427 = vpop.permute.xlu0 %2426
        %2428 = vrot.lane.b32.xlu0 %v1692, 72
        %v2429 = vpop.permute.xlu0 %2428
        %v2430 = vsel %vm457, %v2427, 0
        %v2432 = vsel %vm457, %v2429, 0
        %2434 = vmatprep.subr.mxu0 0.0
        %2435 = vmatpush1.xpose.msra.mxu0 %v2432
        %2436 = vmatprep.subr.mxu0 0.0
        %2437 = vmatpush1.xpose.msra.mxu0 0.0
        %2438 = vmatprep.subr.mxu0 0.0
        %2439 = vmatpush1.xpose.msra.mxu0 0.0
        %2440 = vmatprep.subr.mxu0 0.0
        %2441 = vmatpush1.xpose.msra.mxu0 0.0
        %2442 = vmatprep.subr.mxu0 0.0
        %2443 = vmatpush1.xpose.msra.mxu0 0.0
        %2444 = vmatprep.subr.mxu0 0.0
        %2445 = vmatpush1.xpose.msra.mxu0 0.0
        %2446 = vmatprep.subr.mxu0 0.0
        %2447 = vmatpush1.xpose.msra.mxu0 0.0
        %2448 = vmatprep.subr.mxu0 0.0
        %2449 = vmatpush1.xpose.msra.mxu0 0.0
        %2450 = vmatprep.subr.mxu0 0.0
        %2451 = vmatpush1.xpose.msra.mxu0 0.0
        %2452 = vmatprep.subr.mxu0 0.0
        %2453 = vmatpush1.xpose.msra.mxu0 0.0
        %2454 = vmatprep.subr.mxu0 0.0
        %2455 = vmatpush1.xpose.msra.mxu0 0.0
        %2456 = vmatprep.subr.mxu0 0.0
        %2457 = vmatpush1.xpose.msra.mxu0 0.0
        %2458 = vmatprep.subr.mxu0 0.0
        %2459 = vmatpush1.xpose.msra.mxu0 0.0
        %2460 = vmatprep.subr.mxu0 0.0
        %2461 = vmatpush1.xpose.msra.mxu0 0.0
        %2462 = vmatprep.subr.mxu0 0.0
        %2463 = vmatpush1.xpose.msra.mxu0 0.0
        %2464 = vmatprep.subr.mxu0 0.0
        %2465 = vmatpush1.xpose.msra.mxu0 0.0
        %2466 = vmatprep.subr.mxu0 0.0
        %2467 = vmatpush1.xpose.msra.mxu0 0.0
        %2468 = vmatprep.subr.mxu0 0.0
        %2469 = vmatpush1.xpose.msra.mxu0 0.0
        %2470 = vmatprep.subr.mxu0 0.0
        %2471 = vmatpush1.xpose.msra.mxu0 0.0
        %2472 = vmatprep.subr.mxu0 0.0
        %2473 = vmatpush1.xpose.msra.mxu0 0.0
        %2474 = vmatprep.subr.mxu0 0.0
        %2475 = vmatpush1.xpose.msra.mxu0 0.0
        %2476 = vmatprep.subr.mxu0 0.0
        %2477 = vmatpush1.xpose.msra.mxu0 0.0
        %2478 = vmatprep.subr.mxu0 0.0
        %2479 = vmatpush1.xpose.msra.mxu0 0.0
        %2480 = vmatprep.subr.mxu0 0.0
        %2481 = vmatpush1.xpose.msra.mxu0 0.0
        %2482 = vmatprep.subr.mxu0 0.0
        %2483 = vmatpush1.xpose.msra.mxu0 0.0
        %2484 = vmatprep.subr.mxu0 0.0
        %2485 = vmatpush1.xpose.msra.mxu0 0.0
        %2486 = vmatprep.subr.mxu0 0.0
        %2487 = vmatpush1.xpose.msra.mxu0 0.0
        %2488 = vmatprep.subr.mxu0 0.0
        %2489 = vmatpush1.xpose.msra.mxu0 0.0
        %2490 = vmatprep.subr.mxu0 0.0
        %2491 = vmatpush1.xpose.msra.mxu0 0.0
        %2492 = vmatprep.subr.mxu0 0.0
        %2493 = vmatpush1.xpose.msra.mxu0 0.0
        %2494 = vmatprep.subr.mxu0 0.0
        %2495 = vmatpush1.xpose.msra.mxu0 0.0
        %2496 = vmatprep.subr.mxu0 0.0
        %2497 = vmatpush1.xpose.msra.mxu0 0.0
        %2498 = vmatprep.mubr.f32.mxu0 0.0
        %2499 = vmatmul.mubr.f32.gmra.mrb[0].mxu0 %v2430
        %v2500 = vpop.f32.mrb[0].mxu0
        %v2501 = vadd.f32 0.0, %v2500
        %v2502 = vpop.f32.mrb[0].mxu0
        %2503 = vdwg.mxu0
        %v2504 = vmul.f32 %v2501, 0.35355338
        %v2505 = vadd.f32 %v2504, %v537
        %v2506 = vsel %vm457, %v2505, -inf
        %2507 = vmax.xlane.f32.xlu0 %v2506
        %v2508 = vpop.xlane.xlu0 %2507
        %v2509 = vsub.f32 %v2505, %v2508
        %v2510 = vmul.f32 %v2509, 1.442695
        %v2511 = vpow.pop %v2510
        %v2512 = vsel %vm457, %v2511, 0.0
        %2513 = vadd.xlane.f32.xlu0 %v2512
        %v2514 = vpop.xlane.xlu0 %2513
        %v2515 = vrcp.pop %v2514
        %v2516 = vmul.f32 %v2511, %v2515
        %2517 = vrot.lane.b32.xlu0 %v1692, 40
        %v2518 = vpop.permute.xlu0 %2517
        %v2521 = vsel %vm457, %v2516, 0
        %2523 = vmatprep.subr.mxu0 0.0
        %2524 = vmatpush1.msra.mxu0 %v2518
        %2525 = vmatprep.subr.mxu0 0.0
        %2526 = vmatpush1.msra.mxu0 0.0
        %2527 = vmatprep.subr.mxu0 0.0
        %2528 = vmatpush1.msra.mxu0 0.0
        %2529 = vmatprep.subr.mxu0 0.0
        %2530 = vmatpush1.msra.mxu0 0.0
        %2531 = vmatprep.subr.mxu0 0.0
        %2532 = vmatpush1.msra.mxu0 0.0
        %2533 = vmatprep.subr.mxu0 0.0
        %2534 = vmatpush1.msra.mxu0 0.0
        %2535 = vmatprep.subr.mxu0 0.0
        %2536 = vmatpush1.msra.mxu0 0.0
        %2537 = vmatprep.subr.mxu0 0.0
        %2538 = vmatpush1.msra.mxu0 0.0
        %2539 = vmatprep.subr.mxu0 0.0
        %2540 = vmatpush1.msra.mxu0 0.0
        %2541 = vmatprep.subr.mxu0 0.0
        %2542 = vmatpush1.msra.mxu0 0.0
        %2543 = vmatprep.subr.mxu0 0.0
        %2544 = vmatpush1.msra.mxu0 0.0
        %2545 = vmatprep.subr.mxu0 0.0
        %2546 = vmatpush1.msra.mxu0 0.0
        %2547 = vmatprep.subr.mxu0 0.0
        %2548 = vmatpush1.msra.mxu0 0.0
        %2549 = vmatprep.subr.mxu0 0.0
        %2550 = vmatpush1.msra.mxu0 0.0
        %2551 = vmatprep.subr.mxu0 0.0
        %2552 = vmatpush1.msra.mxu0 0.0
        %2553 = vmatprep.subr.mxu0 0.0
        %2554 = vmatpush1.msra.mxu0 0.0
        %2555 = vmatprep.subr.mxu0 0.0
        %2556 = vmatpush1.msra.mxu0 0.0
        %2557 = vmatprep.subr.mxu0 0.0
        %2558 = vmatpush1.msra.mxu0 0.0
        %2559 = vmatprep.subr.mxu0 0.0
        %2560 = vmatpush1.msra.mxu0 0.0
        %2561 = vmatprep.subr.mxu0 0.0
        %2562 = vmatpush1.msra.mxu0 0.0
        %2563 = vmatprep.subr.mxu0 0.0
        %2564 = vmatpush1.msra.mxu0 0.0
        %2565 = vmatprep.subr.mxu0 0.0
        %2566 = vmatpush1.msra.mxu0 0.0
        %2567 = vmatprep.subr.mxu0 0.0
        %2568 = vmatpush1.msra.mxu0 0.0
        %2569 = vmatprep.subr.mxu0 0.0
        %2570 = vmatpush1.msra.mxu0 0.0
        %2571 = vmatprep.subr.mxu0 0.0
        %2572 = vmatpush1.msra.mxu0 0.0
        %2573 = vmatprep.subr.mxu0 0.0
        %2574 = vmatpush1.msra.mxu0 0.0
        %2575 = vmatprep.subr.mxu0 0.0
        %2576 = vmatpush1.msra.mxu0 0.0
        %2577 = vmatprep.subr.mxu0 0.0
        %2578 = vmatpush1.msra.mxu0 0.0
        %2579 = vmatprep.subr.mxu0 0.0
        %2580 = vmatpush1.msra.mxu0 0.0
        %2581 = vmatprep.subr.mxu0 0.0
        %2582 = vmatpush1.msra.mxu0 0.0
        %2583 = vmatprep.subr.mxu0 0.0
        %2584 = vmatpush1.msra.mxu0 0.0
        %2585 = vmatprep.subr.mxu0 0.0
        %2586 = vmatpush1.msra.mxu0 0.0
        %2587 = vmatprep.mubr.f32.mxu0 0.0
        %2588 = vmatmul.mubr.f32.gmra.mrb[0].mxu0 %v2521
        %v2589 = vpop.f32.mrb[0].mxu0
        %v2590 = vadd.f32 0.0, %v2589
        %v2591 = vpop.f32.mrb[0].mxu0
        %2592 = vdwg.mxu0
        %v2594 = vsel %vm457, %v2590, 0
        %2596 = vmatprep.subr.mxu0 0.0
        %2597 = vmatpush1.msra.mxu0 %v1705
        %2598 = vmatprep.subr.mxu0 0.0
        %2599 = vmatpush1.msra.mxu0 0.0
        %2600 = vmatprep.subr.mxu0 0.0
        %2601 = vmatpush1.msra.mxu0 0.0
        %2602 = vmatprep.subr.mxu0 0.0
        %2603 = vmatpush1.msra.mxu0 0.0
        %2604 = vmatprep.subr.mxu0 0.0
        %2605 = vmatpush1.msra.mxu0 0.0
        %2606 = vmatprep.subr.mxu0 0.0
        %2607 = vmatpush1.msra.mxu0 0.0
        %2608 = vmatprep.subr.mxu0 0.0
        %2609 = vmatpush1.msra.mxu0 0.0
        %2610 = vmatprep.subr.mxu0 0.0
        %2611 = vmatpush1.msra.mxu0 0.0
        %2612 = vmatprep.subr.mxu0 0.0
        %2613 = vmatpush1.msra.mxu0 0.0
        %2614 = vmatprep.subr.mxu0 0.0
        %2615 = vmatpush1.msra.mxu0 0.0
        %2616 = vmatprep.subr.mxu0 0.0
        %2617 = vmatpush1.msra.mxu0 0.0
        %2618 = vmatprep.subr.mxu0 0.0
        %2619 = vmatpush1.msra.mxu0 0.0
        %2620 = vmatprep.subr.mxu0 0.0
        %2621 = vmatpush1.msra.mxu0 0.0
        %2622 = vmatprep.subr.mxu0 0.0
        %2623 = vmatpush1.msra.mxu0 0.0
        %2624 = vmatprep.subr.mxu0 0.0
        %2625 = vmatpush1.msra.mxu0 0.0
        %2626 = vmatprep.subr.mxu0 0.0
        %2627 = vmatpush1.msra.mxu0 0.0
        %2628 = vmatprep.subr.mxu0 0.0
        %2629 = vmatpush1.msra.mxu0 0.0
        %2630 = vmatprep.subr.mxu0 0.0
        %2631 = vmatpush1.msra.mxu0 0.0
        %2632 = vmatprep.subr.mxu0 0.0
        %2633 = vmatpush1.msra.mxu0 0.0
        %2634 = vmatprep.subr.mxu0 0.0
        %2635 = vmatpush1.msra.mxu0 0.0
        %2636 = vmatprep.subr.mxu0 0.0
        %2637 = vmatpush1.msra.mxu0 0.0
        %2638 = vmatprep.subr.mxu0 0.0
        %2639 = vmatpush1.msra.mxu0 0.0
        %2640 = vmatprep.subr.mxu0 0.0
        %2641 = vmatpush1.msra.mxu0 0.0
        %2642 = vmatprep.subr.mxu0 0.0
        %2643 = vmatpush1.msra.mxu0 0.0
        %2644 = vmatprep.subr.mxu0 0.0
        %2645 = vmatpush1.msra.mxu0 0.0
        %2646 = vmatprep.subr.mxu0 0.0
        %2647 = vmatpush1.msra.mxu0 0.0
        %2648 = vmatprep.subr.mxu0 0.0
        %2649 = vmatpush1.msra.mxu0 0.0
        %2650 = vmatprep.subr.mxu0 0.0
        %2651 = vmatpush1.msra.mxu0 0.0
        %2652 = vmatprep.subr.mxu0 0.0
        %2653 = vmatpush1.msra.mxu0 0.0
        %2654 = vmatprep.subr.mxu0 0.0
        %2655 = vmatpush1.msra.mxu0 0.0
        %2656 = vmatprep.subr.mxu0 0.0
        %2657 = vmatpush1.msra.mxu0 0.0
        %2658 = vmatprep.subr.mxu0 0.0
        %2659 = vmatpush1.msra.mxu0 0.0
        %2660 = vmatprep.mubr.f32.mxu0 0.0
        %2661 = vmatmul.mubr.f32.gmra.mrb[0].mxu0 %v2594
        %v2662 = vpop.f32.mrb[0].mxu0
        %v2663 = vadd.f32 0.0, %v2662
        %v2664 = vpop.f32.mrb[0].mxu0
        %2665 = vdwg.mxu0
        %v2666 = vadd.f32 %v2425, %v2663
        %v2667 = vadd.f32 %v1605, %v2666
        %v2668 = vld [vmem:[%s5 + $0xb] sm:$0x1]
        %v2669 = vlaneseq
        %v2670 = vshrl.u32 %v2669, 7
        %v2671 = vsub.s32 0, %v2670
        %v2672 = vrot.slane %v2668, %v2671
        %v2673 = vadd.f32 %v2667, %v2672
        %v2674 = vld [vmem:[%s5 + $0xc] sm:$0x1]
        %v2675 = vld [vmem:[%s5 + $0xd] sm:$0x1]
        %v2676 = vsel %vm355, %v2673, 0.0
        %2677 = vadd.xlane.f32.xlu0 %v2676
        %v2678 = vpop.xlane.xlu0 %2677
        %v2679 = vmul.f32 %v2678, %v359
        %v2680 = vsub.f32 %v2673, %v2679
        %v2681 = vmul.f32 %v2680, %v2680
        %v2682 = vsel %vm355, %v2681, 0.0
        %2683 = vadd.xlane.f32.xlu0 %v2682
        %v2684 = vpop.xlane.xlu0 %2683
        %v2685 = vmul.f32 %v2684, %v359
        %v2686 = vadd.f32 %v2685, 1e-06
        %v2687 = vrsqrt.pop %v2686
        %v2688 = vmul.f32 %v2680, %v2687
        %v2689 = vlaneseq
        %v2690 = vshrl.u32 %v2689, 7
        %v2691 = vsub.s32 0, %v2690
        %v2692 = vrot.slane %v2674, %v2691
        %v2693 = vmul.f32 %v2688, %v2692
        %v2694 = vlaneseq
        %v2695 = vshrl.u32 %v2694, 7
        %v2696 = vsub.s32 0, %v2695
        %v2697 = vrot.slane %v2675, %v2696
        %v2698 = vadd.f32 %v2693, %v2697
        %v2699 = vpack.c.bf16 %v2698, %v2698
        %s2700 = scalar_lea.vmem [#allocation2], 192
        %v2701 = vld [vmem:[%s2700] sm:$0xf]
        %v2702 = vld [vmem:[%s2700 + $0x4] sm:$0xf]
        %v2703 = vld [vmem:[%s2700 + $0x8] sm:$0xf]
        %v2704 = vld [vmem:[%s2700 + $0xc] sm:$0xf]
        %v2705 = vld [vmem:[%s5 + $0xe] sm:$0x1]
        %v2706 = vlaneseq
        %v2707 = vshrl.u32 %v2706, 7
        %v2708 = vsub.s32 0, %v2707
        %v2709 = vrot.slane %v2705, %v2708
        %v2714 = vunpack.c.l.b16 %v2701
        %v2715 = vunpack.c.l.b16 %v2702
        %v2716 = vunpack.c.l.b16 %v2703
        %v2717 = vunpack.c.l.b16 %v2704
        %v2718 = vpack.c.b16 %v2715, %v2714
        %v2719 = vpack.c.b16 %v2717, %v2716
        %v2723 = vsel %vm355, %v2699, 0
        %2725 = vmatprep.subr.bf16.mxu0 0
        %2726 = vmatpush1.bf16.msra.mxu0 %v2718
        %2727 = vmatprep.subr.bf16.mxu0 0
        %2728 = vmatpush1.bf16.msra.mxu0 %v2719
        %2729 = vmatprep.subr.bf16.mxu0 0
        %2730 = vmatpush1.bf16.msra.mxu0 0
        %2731 = vmatprep.subr.bf16.mxu0 0
        %2732 = vmatpush1.bf16.msra.mxu0 0
        %2733 = vmatprep.subr.bf16.mxu0 0
        %2734 = vmatpush1.bf16.msra.mxu0 0
        %2735 = vmatprep.subr.bf16.mxu0 0
        %2736 = vmatpush1.bf16.msra.mxu0 0
        %2737 = vmatprep.subr.bf16.mxu0 0
        %2738 = vmatpush1.bf16.msra.mxu0 0
        %2739 = vmatprep.subr.bf16.mxu0 0
        %2740 = vmatpush1.bf16.msra.mxu0 0
        %2741 = vmatprep.subr.bf16.mxu0 0
        %2742 = vmatpush1.bf16.msra.mxu0 0
        %2743 = vmatprep.subr.bf16.mxu0 0
        %2744 = vmatpush1.bf16.msra.mxu0 0
        %2745 = vmatprep.subr.bf16.mxu0 0
        %2746 = vmatpush1.bf16.msra.mxu0 0
        %2747 = vmatprep.subr.bf16.mxu0 0
        %2748 = vmatpush1.bf16.msra.mxu0 0
        %2749 = vmatprep.subr.bf16.mxu0 0
        %2750 = vmatpush1.bf16.msra.mxu0 0
        %2751 = vmatprep.subr.bf16.mxu0 0
        %2752 = vmatpush1.bf16.msra.mxu0 0
        %2753 = vmatprep.subr.bf16.mxu0 0
        %2754 = vmatpush1.bf16.msra.mxu0 0
        %2755 = vmatprep.subr.bf16.mxu0 0
        %2756 = vmatpush1.bf16.msra.mxu0 0
        %2757 = vmatprep.mubr.bf16.mxu0 0
        %2758 = vmatmul.mubr.bf16.gmra.mrb[0].mxu0 %v2723
        %v2759 = vpop.f32.mrb[0].mxu0
        %v2760 = vadd.f32 %v2709, %v2759
        %v2761 = vpop.f32.mrb[0].mxu0
        %v2762 = vpop.f32.mrb[0].mxu0
        %v2763 = vpop.f32.mrb[0].mxu0
        %2764 = vdwg.mxu0
        %v2765 = vmax.f32 %v2760, 0.0
        %v2766 = vpack.c.bf16 %v2765, %v2765
        %s2767 = scalar_lea.vmem [#allocation2], 224
        %v2768 = vld [vmem:[%s2767] sm:$0xf]
        %v2769 = vld [vmem:[%s2767 + $0x4] sm:$0xf]
        %v2770 = vld [vmem:[%s2767 + $0x8] sm:$0xf]
        %v2771 = vld [vmem:[%s2767 + $0xc] sm:$0xf]
        %v2772 = vld [vmem:[%s2767 + $0x10] sm:$0xf]
        %v2773 = vld [vmem:[%s2767 + $0x14] sm:$0xf]
        %v2774 = vld [vmem:[%s2767 + $0x18] sm:$0xf]
        %v2775 = vld [vmem:[%s2767 + $0x1c] sm:$0xf]
        %v2784 = vunpack.c.l.b16 %v2768
        %v2785 = vunpack.c.l.b16 %v2769
        %v2786 = vunpack.c.l.b16 %v2770
        %v2787 = vunpack.c.l.b16 %v2771
        %v2788 = vunpack.c.l.b16 %v2772
        %v2789 = vunpack.c.l.b16 %v2773
        %v2790 = vunpack.c.l.b16 %v2774
        %v2791 = vunpack.c.l.b16 %v2775
        %v2792 = vpack.c.b16 %v2785, %v2784
        %v2793 = vpack.c.b16 %v2787, %v2786
        %v2794 = vpack.c.b16 %v2789, %v2788
        %v2795 = vpack.c.b16 %v2791, %v2790
        %v2801 = vsel %vm1555, %v2766, 0
        %2803 = vmatprep.subr.bf16.mxu0 0
        %2804 = vmatpush1.bf16.msra.mxu0 %v2792
        %2805 = vmatprep.subr.bf16.mxu0 0
        %2806 = vmatpush1.bf16.msra.mxu0 %v2793
        %2807 = vmatprep.subr.bf16.mxu0 0
        %2808 = vmatpush1.bf16.msra.mxu0 %v2794
        %2809 = vmatprep.subr.bf16.mxu0 0
        %2810 = vmatpush1.bf16.msra.mxu0 %v2795
        %2811 = vmatprep.subr.bf16.mxu0 0
        %2812 = vmatpush1.bf16.msra.mxu0 0
        %2813 = vmatprep.subr.bf16.mxu0 0
        %2814 = vmatpush1.bf16.msra.mxu0 0
        %2815 = vmatprep.subr.bf16.mxu0 0
        %2816 = vmatpush1.bf16.msra.mxu0 0
        %2817 = vmatprep.subr.bf16.mxu0 0
        %2818 = vmatpush1.bf16.msra.mxu0 0
        %2819 = vmatprep.subr.bf16.mxu0 0
        %2820 = vmatpush1.bf16.msra.mxu0 0
        %2821 = vmatprep.subr.bf16.mxu0 0
        %2822 = vmatpush1.bf16.msra.mxu0 0
        %2823 = vmatprep.subr.bf16.mxu0 0
        %2824 = vmatpush1.bf16.msra.mxu0 0
        %2825 = vmatprep.subr.bf16.mxu0 0
        %2826 = vmatpush1.bf16.msra.mxu0 0
        %2827 = vmatprep.subr.bf16.mxu0 0
        %2828 = vmatpush1.bf16.msra.mxu0 0
        %2829 = vmatprep.subr.bf16.mxu0 0
        %2830 = vmatpush1.bf16.msra.mxu0 0
        %2831 = vmatprep.subr.bf16.mxu0 0
        %2832 = vmatpush1.bf16.msra.mxu0 0
        %2833 = vmatprep.subr.bf16.mxu0 0
        %2834 = vmatpush1.bf16.msra.mxu0 0
        %2835 = vmatprep.mubr.bf16.mxu0 0
        %2836 = vmatmul.mubr.bf16.gmra.mrb[0].mxu0 %v2801
        %v2837 = vpop.f32.mrb[0].mxu0
        %v2838 = vadd.f32 0.0, %v2837
        %v2839 = vpop.f32.mrb[0].mxu0
        %v2840 = vpop.f32.mrb[0].mxu0
        %v2841 = vpop.f32.mrb[0].mxu0
        %2842 = vdwg.mxu0
        %v2843 = vadd.f32 %v2673, %v2838
        %v2844 = vld [vmem:[%s5 + $0xf] sm:$0x1]
        %v2845 = vlaneseq
        %v2846 = vshrl.u32 %v2845, 7
        %v2847 = vsub.s32 0, %v2846
        %v2848 = vrot.slane %v2844, %v2847
        %v2849 = vadd.f32 %v2843, %v2848
        %v2850 = vld [vmem:[%s5 + $0x10] sm:$0x1]
        %v2851 = vld [vmem:[%s5 + $0x11] sm:$0x1]
        %v2852 = vsel %vm355, %v2849, 0.0
        %2853 = vadd.xlane.f32.xlu0 %v2852
        %v2854 = vpop.xlane.xlu0 %2853
        %v2855 = vmul.f32 %v2854, %v359
        %v2856 = vsub.f32 %v2849, %v2855
        %v2857 = vmul.f32 %v2856, %v2856
        %v2858 = vsel %vm355, %v2857, 0.0
        %2859 = vadd.xlane.f32.xlu0 %v2858
        %v2860 = vpop.xlane.xlu0 %2859
        %v2861 = vmul.f32 %v2860, %v359
        %v2862 = vadd.f32 %v2861, 1e-06
        %v2863 = vrsqrt.pop %v2862
        %v2864 = vmul.f32 %v2856, %v2863
        %v2865 = vlaneseq
        %v2866 = vshrl.u32 %v2865, 7
        %v2867 = vsub.s32 0, %v2866
        %v2868 = vrot.slane %v2850, %v2867
        %v2869 = vmul.f32 %v2864, %v2868
        %v2870 = vlaneseq
        %v2871 = vshrl.u32 %v2870, 7
        %v2872 = vsub.s32 0, %v2871
        %v2873 = vrot.slane %v2851, %v2872
        %v2874 = vadd.f32 %v2869, %v2873
        %v2875 = vpack.c.bf16 %v2874, %v2874
        %v2876 = vlaneseq
        %v2877 = vshrl.u32 %v2876, 7
        %v2878 = vlaneseq
        %v2879 = vand.u32 %v2878, 127
        %vm2880 = vcmp.le.s32.totalorder %v2879, %v2877
        %v2881 = vsel %vm2880, 0.0, -1e+09
        %v2882 = vld [vmem:[%s340] sm:$0xff]
        %v2883 = vld [vmem:[%s5 + $0x12] sm:$0x1]
        %v2884 = vld [vmem:[%s5 + $0x13] sm:$0x1]
        %v2885 = vsel %vm355, %v2882, 0.0
        %2886 = vadd.xlane.f32.xlu0 %v2885
        %v2887 = vpop.xlane.xlu0 %2886
        %v2888 = vmul.f32 %v2887, %v359
        %v2889 = vsub.f32 %v2882, %v2888
        %v2890 = vmul.f32 %v2889, %v2889
        %v2891 = vsel %vm355, %v2890, 0.0
        %2892 = vadd.xlane.f32.xlu0 %v2891
        %v2893 = vpop.xlane.xlu0 %2892
        %v2894 = vmul.f32 %v2893, %v359
        %v2895 = vadd.f32 %v2894, 1e-06
        %v2896 = vrsqrt.pop %v2895
        %v2897 = vmul.f32 %v2889, %v2896
        %v2898 = vlaneseq
        %v2899 = vshrl.u32 %v2898, 7
        %v2900 = vsub.s32 0, %v2899
        %v2901 = vrot.slane %v2883, %v2900
        %v2902 = vmul.f32 %v2897, %v2901
        %v2903 = vlaneseq
        %v2904 = vshrl.u32 %v2903, 7
        %v2905 = vsub.s32 0, %v2904
        %v2906 = vrot.slane %v2884, %v2905
        %v2907 = vadd.f32 %v2902, %v2906
        %v2908 = vpack.c.bf16 %v2907, %v2907
        %s2909 = scalar_lea.vmem [#allocation2], 256
        %v2910 = vld [vmem:[%s2909] sm:$0xf]
        %v2911 = vld [vmem:[%s2909 + $0x4] sm:$0xf]
        %v2912 = vld [vmem:[%s2909 + $0x8] sm:$0xf]
        %v2913 = vld [vmem:[%s2909 + $0xc] sm:$0xf]
        %v2914 = vld [vmem:[%s5 + $0x14] sm:$0x1]
        %v2915 = vlaneseq
        %v2916 = vshrl.u32 %v2915, 7
        %v2917 = vsub.s32 0, %v2916
        %v2918 = vrot.slane %v2914, %v2917
        %v2923 = vunpack.c.l.b16 %v2910
        %v2924 = vunpack.c.l.b16 %v2911
        %v2925 = vunpack.c.l.b16 %v2912
        %v2926 = vunpack.c.l.b16 %v2913
        %v2927 = vpack.c.b16 %v2924, %v2923
        %v2928 = vpack.c.b16 %v2926, %v2925
        %v2932 = vsel %vm355, %v2908, 0
        %2934 = vmatprep.subr.bf16.mxu0 0
        %2935 = vmatpush1.bf16.msra.mxu0 %v2927
        %2936 = vmatprep.subr.bf16.mxu0 0
        %2937 = vmatpush1.bf16.msra.mxu0 %v2928
        %2938 = vmatprep.subr.bf16.mxu0 0
        %2939 = vmatpush1.bf16.msra.mxu0 0
        %2940 = vmatprep.subr.bf16.mxu0 0
        %2941 = vmatpush1.bf16.msra.mxu0 0
        %2942 = vmatprep.subr.bf16.mxu0 0
        %2943 = vmatpush1.bf16.msra.mxu0 0
        %2944 = vmatprep.subr.bf16.mxu0 0
        %2945 = vmatpush1.bf16.msra.mxu0 0
        %2946 = vmatprep.subr.bf16.mxu0 0
        %2947 = vmatpush1.bf16.msra.mxu0 0
        %2948 = vmatprep.subr.bf16.mxu0 0
        %2949 = vmatpush1.bf16.msra.mxu0 0
        %2950 = vmatprep.subr.bf16.mxu0 0
        %2951 = vmatpush1.bf16.msra.mxu0 0
        %2952 = vmatprep.subr.bf16.mxu0 0
        %2953 = vmatpush1.bf16.msra.mxu0 0
        %2954 = vmatprep.subr.bf16.mxu0 0
        %2955 = vmatpush1.bf16.msra.mxu0 0
        %2956 = vmatprep.subr.bf16.mxu0 0
        %2957 = vmatpush1.bf16.msra.mxu0 0
        %2958 = vmatprep.subr.bf16.mxu0 0
        %2959 = vmatpush1.bf16.msra.mxu0 0
        %2960 = vmatprep.subr.bf16.mxu0 0
        %2961 = vmatpush1.bf16.msra.mxu0 0
        %2962 = vmatprep.subr.bf16.mxu0 0
        %2963 = vmatpush1.bf16.msra.mxu0 0
        %2964 = vmatprep.subr.bf16.mxu0 0
        %2965 = vmatpush1.bf16.msra.mxu0 0
        %2966 = vmatprep.mubr.bf16.mxu0 0
        %2967 = vmatmul.mubr.bf16.gmra.mrb[0].mxu0 %v2932
        %v2968 = vpop.f32.mrb[0].mxu0
        %v2969 = vadd.f32 %v2918, %v2968
        %v2970 = vpop.f32.mrb[0].mxu0
        %v2971 = vpop.f32.mrb[0].mxu0
        %v2972 = vpop.f32.mrb[0].mxu0
        %2973 = vdwg.mxu0
        %s2974 = scalar_lea.vmem [#allocation2], 288
        %v2975 = vld [vmem:[%s2974] sm:$0xf]
        %v2976 = vld [vmem:[%s2974 + $0x4] sm:$0xf]
        %v2977 = vld [vmem:[%s2974 + $0x8] sm:$0xf]
        %v2978 = vld [vmem:[%s2974 + $0xc] sm:$0xf]
        %v2979 = vunpack.c.l.bf16 %v2975
        %v2980 = vunpack.c.l.bf16 %v2976
        %v2981 = vunpack.c.l.bf16 %v2977
        %v2982 = vunpack.c.l.bf16 %v2978
        %2984 = vrot.lane.b32.xlu0 %v2969, 96
        %v2985 = vpop.permute.xlu0 %2984
        %v2986 = vsel %vm457, %v2969, 0
        %v2988 = vsel %vm457, %v2985, 0
        %2990 = vmatprep.subr.mxu0 0.0
        %2991 = vmatpush1.xpose.msra.mxu0 %v2988
        %2992 = vmatprep.subr.mxu0 0.0
        %2993 = vmatpush1.xpose.msra.mxu0 0.0
        %2994 = vmatprep.subr.mxu0 0.0
        %2995 = vmatpush1.xpose.msra.mxu0 0.0
        %2996 = vmatprep.subr.mxu0 0.0
        %2997 = vmatpush1.xpose.msra.mxu0 0.0
        %2998 = vmatprep.subr.mxu0 0.0
        %2999 = vmatpush1.xpose.msra.mxu0 0.0
        %3000 = vmatprep.subr.mxu0 0.0
        %3001 = vmatpush1.xpose.msra.mxu0 0.0
        %3002 = vmatprep.subr.mxu0 0.0
        %3003 = vmatpush1.xpose.msra.mxu0 0.0
        %3004 = vmatprep.subr.mxu0 0.0
        %3005 = vmatpush1.xpose.msra.mxu0 0.0
        %3006 = vmatprep.subr.mxu0 0.0
        %3007 = vmatpush1.xpose.msra.mxu0 0.0
        %3008 = vmatprep.subr.mxu0 0.0
        %3009 = vmatpush1.xpose.msra.mxu0 0.0
        %3010 = vmatprep.subr.mxu0 0.0
        %3011 = vmatpush1.xpose.msra.mxu0 0.0
        %3012 = vmatprep.subr.mxu0 0.0
        %3013 = vmatpush1.xpose.msra.mxu0 0.0
        %3014 = vmatprep.subr.mxu0 0.0
        %3015 = vmatpush1.xpose.msra.mxu0 0.0
        %3016 = vmatprep.subr.mxu0 0.0
        %3017 = vmatpush1.xpose.msra.mxu0 0.0
        %3018 = vmatprep.subr.mxu0 0.0
        %3019 = vmatpush1.xpose.msra.mxu0 0.0
        %3020 = vmatprep.subr.mxu0 0.0
        %3021 = vmatpush1.xpose.msra.mxu0 0.0
        %3022 = vmatprep.subr.mxu0 0.0
        %3023 = vmatpush1.xpose.msra.mxu0 0.0
        %3024 = vmatprep.subr.mxu0 0.0
        %3025 = vmatpush1.xpose.msra.mxu0 0.0
        %3026 = vmatprep.subr.mxu0 0.0
        %3027 = vmatpush1.xpose.msra.mxu0 0.0
        %3028 = vmatprep.subr.mxu0 0.0
        %3029 = vmatpush1.xpose.msra.mxu0 0.0
        %3030 = vmatprep.subr.mxu0 0.0
        %3031 = vmatpush1.xpose.msra.mxu0 0.0
        %3032 = vmatprep.subr.mxu0 0.0
        %3033 = vmatpush1.xpose.msra.mxu0 0.0
        %3034 = vmatprep.subr.mxu0 0.0
        %3035 = vmatpush1.xpose.msra.mxu0 0.0
        %3036 = vmatprep.subr.mxu0 0.0
        %3037 = vmatpush1.xpose.msra.mxu0 0.0
        %3038 = vmatprep.subr.mxu0 0.0
        %3039 = vmatpush1.xpose.msra.mxu0 0.0
        %3040 = vmatprep.subr.mxu0 0.0
        %3041 = vmatpush1.xpose.msra.mxu0 0.0
        %3042 = vmatprep.subr.mxu0 0.0
        %3043 = vmatpush1.xpose.msra.mxu0 0.0
        %3044 = vmatprep.subr.mxu0 0.0
        %3045 = vmatpush1.xpose.msra.mxu0 0.0
        %3046 = vmatprep.subr.mxu0 0.0
        %3047 = vmatpush1.xpose.msra.mxu0 0.0
        %3048 = vmatprep.subr.mxu0 0.0
        %3049 = vmatpush1.xpose.msra.mxu0 0.0
        %3050 = vmatprep.subr.mxu0 0.0
        %3051 = vmatpush1.xpose.msra.mxu0 0.0
        %3052 = vmatprep.subr.mxu0 0.0
        %3053 = vmatpush1.xpose.msra.mxu0 0.0
        %3054 = vmatprep.mubr.f32.mxu0 0.0
        %3055 = vmatmul.mubr.f32.gmra.mrb[0].mxu0 %v2986
        %v3056 = vpop.f32.mrb[0].mxu0
        %v3057 = vadd.f32 0.0, %v3056
        %v3058 = vpop.f32.mrb[0].mxu0
        %3059 = vdwg.mxu0
        %v3060 = vmul.f32 %v3057, 0.35355338
        %v3061 = vadd.f32 %v3060, %v2881
        %v3062 = vsel %vm457, %v3061, -inf
        %3063 = vmax.xlane.f32.xlu0 %v3062
        %v3064 = vpop.xlane.xlu0 %3063
        %v3065 = vsub.f32 %v3061, %v3064
        %v3066 = vmul.f32 %v3065, 1.442695
        %v3067 = vpow.pop %v3066
        %v3068 = vsel %vm457, %v3067, 0.0
        %3069 = vadd.xlane.f32.xlu0 %v3068
        %v3070 = vpop.xlane.xlu0 %3069
        %v3071 = vrcp.pop %v3070
        %v3072 = vmul.f32 %v3067, %v3071
        %3073 = vrot.lane.b32.xlu0 %v2969, 64
        %v3074 = vpop.permute.xlu0 %3073
        %v3077 = vsel %vm457, %v3072, 0
        %3079 = vmatprep.subr.mxu0 0.0
        %3080 = vmatpush1.msra.mxu0 %v3074
        %3081 = vmatprep.subr.mxu0 0.0
        %3082 = vmatpush1.msra.mxu0 0.0
        %3083 = vmatprep.subr.mxu0 0.0
        %3084 = vmatpush1.msra.mxu0 0.0
        %3085 = vmatprep.subr.mxu0 0.0
        %3086 = vmatpush1.msra.mxu0 0.0
        %3087 = vmatprep.subr.mxu0 0.0
        %3088 = vmatpush1.msra.mxu0 0.0
        %3089 = vmatprep.subr.mxu0 0.0
        %3090 = vmatpush1.msra.mxu0 0.0
        %3091 = vmatprep.subr.mxu0 0.0
        %3092 = vmatpush1.msra.mxu0 0.0
        %3093 = vmatprep.subr.mxu0 0.0
        %3094 = vmatpush1.msra.mxu0 0.0
        %3095 = vmatprep.subr.mxu0 0.0
        %3096 = vmatpush1.msra.mxu0 0.0
        %3097 = vmatprep.subr.mxu0 0.0
        %3098 = vmatpush1.msra.mxu0 0.0
        %3099 = vmatprep.subr.mxu0 0.0
        %3100 = vmatpush1.msra.mxu0 0.0
        %3101 = vmatprep.subr.mxu0 0.0
        %3102 = vmatpush1.msra.mxu0 0.0
        %3103 = vmatprep.subr.mxu0 0.0
        %3104 = vmatpush1.msra.mxu0 0.0
        %3105 = vmatprep.subr.mxu0 0.0
        %3106 = vmatpush1.msra.mxu0 0.0
        %3107 = vmatprep.subr.mxu0 0.0
        %3108 = vmatpush1.msra.mxu0 0.0
        %3109 = vmatprep.subr.mxu0 0.0
        %3110 = vmatpush1.msra.mxu0 0.0
        %3111 = vmatprep.subr.mxu0 0.0
        %3112 = vmatpush1.msra.mxu0 0.0
        %3113 = vmatprep.subr.mxu0 0.0
        %3114 = vmatpush1.msra.mxu0 0.0
        %3115 = vmatprep.subr.mxu0 0.0
        %3116 = vmatpush1.msra.mxu0 0.0
        %3117 = vmatprep.subr.mxu0 0.0
        %3118 = vmatpush1.msra.mxu0 0.0
        %3119 = vmatprep.subr.mxu0 0.0
        %3120 = vmatpush1.msra.mxu0 0.0
        %3121 = vmatprep.subr.mxu0 0.0
        %3122 = vmatpush1.msra.mxu0 0.0
        %3123 = vmatprep.subr.mxu0 0.0
        %3124 = vmatpush1.msra.mxu0 0.0
        %3125 = vmatprep.subr.mxu0 0.0
        %3126 = vmatpush1.msra.mxu0 0.0
        %3127 = vmatprep.subr.mxu0 0.0
        %3128 = vmatpush1.msra.mxu0 0.0
        %3129 = vmatprep.subr.mxu0 0.0
        %3130 = vmatpush1.msra.mxu0 0.0
        %3131 = vmatprep.subr.mxu0 0.0
        %3132 = vmatpush1.msra.mxu0 0.0
        %3133 = vmatprep.subr.mxu0 0.0
        %3134 = vmatpush1.msra.mxu0 0.0
        %3135 = vmatprep.subr.mxu0 0.0
        %3136 = vmatpush1.msra.mxu0 0.0
        %3137 = vmatprep.subr.mxu0 0.0
        %3138 = vmatpush1.msra.mxu0 0.0
        %3139 = vmatprep.subr.mxu0 0.0
        %3140 = vmatpush1.msra.mxu0 0.0
        %3141 = vmatprep.subr.mxu0 0.0
        %3142 = vmatpush1.msra.mxu0 0.0
        %3143 = vmatprep.mubr.f32.mxu0 0.0
        %3144 = vmatmul.mubr.f32.gmra.mrb[0].mxu0 %v3077
        %v3145 = vpop.f32.mrb[0].mxu0
        %v3146 = vadd.f32 0.0, %v3145
        %v3147 = vpop.f32.mrb[0].mxu0
        %3148 = vdwg.mxu0
        %3149 = vrot.lane.b32.xlu0 %v2969, 120
        %v3150 = vpop.permute.xlu0 %3149
        %3151 = vrot.lane.b32.xlu0 %v2969, 88
        %v3152 = vpop.permute.xlu0 %3151
        %v3153 = vsel %vm457, %v3150, 0
        %v3155 = vsel %vm457, %v3152, 0
        %3157 = vmatprep.subr.mxu0 0.0
        %3158 = vmatpush1.xpose.msra.mxu0 %v3155
        %3159 = vmatprep.subr.mxu0 0.0
        %3160 = vmatpush1.xpose.msra.mxu0 0.0
        %3161 = vmatprep.subr.mxu0 0.0
        %3162 = vmatpush1.xpose.msra.mxu0 0.0
        %3163 = vmatprep.subr.mxu0 0.0
        %3164 = vmatpush1.xpose.msra.mxu0 0.0
        %3165 = vmatprep.subr.mxu0 0.0
        %3166 = vmatpush1.xpose.msra.mxu0 0.0
        %3167 = vmatprep.subr.mxu0 0.0
        %3168 = vmatpush1.xpose.msra.mxu0 0.0
        %3169 = vmatprep.subr.mxu0 0.0
        %3170 = vmatpush1.xpose.msra.mxu0 0.0
        %3171 = vmatprep.subr.mxu0 0.0
        %3172 = vmatpush1.xpose.msra.mxu0 0.0
        %3173 = vmatprep.subr.mxu0 0.0
        %3174 = vmatpush1.xpose.msra.mxu0 0.0
        %3175 = vmatprep.subr.mxu0 0.0
        %3176 = vmatpush1.xpose.msra.mxu0 0.0
        %3177 = vmatprep.subr.mxu0 0.0
        %3178 = vmatpush1.xpose.msra.mxu0 0.0
        %3179 = vmatprep.subr.mxu0 0.0
        %3180 = vmatpush1.xpose.msra.mxu0 0.0
        %3181 = vmatprep.subr.mxu0 0.0
        %3182 = vmatpush1.xpose.msra.mxu0 0.0
        %3183 = vmatprep.subr.mxu0 0.0
        %3184 = vmatpush1.xpose.msra.mxu0 0.0
        %3185 = vmatprep.subr.mxu0 0.0
        %3186 = vmatpush1.xpose.msra.mxu0 0.0
        %3187 = vmatprep.subr.mxu0 0.0
        %3188 = vmatpush1.xpose.msra.mxu0 0.0
        %3189 = vmatprep.subr.mxu0 0.0
        %3190 = vmatpush1.xpose.msra.mxu0 0.0
        %3191 = vmatprep.subr.mxu0 0.0
        %3192 = vmatpush1.xpose.msra.mxu0 0.0
        %3193 = vmatprep.subr.mxu0 0.0
        %3194 = vmatpush1.xpose.msra.mxu0 0.0
        %3195 = vmatprep.subr.mxu0 0.0
        %3196 = vmatpush1.xpose.msra.mxu0 0.0
        %3197 = vmatprep.subr.mxu0 0.0
        %3198 = vmatpush1.xpose.msra.mxu0 0.0
        %3199 = vmatprep.subr.mxu0 0.0
        %3200 = vmatpush1.xpose.msra.mxu0 0.0
        %3201 = vmatprep.subr.mxu0 0.0
        %3202 = vmatpush1.xpose.msra.mxu0 0.0
        %3203 = vmatprep.subr.mxu0 0.0
        %3204 = vmatpush1.xpose.msra.mxu0 0.0
        %3205 = vmatprep.subr.mxu0 0.0
        %3206 = vmatpush1.xpose.msra.mxu0 0.0
        %3207 = vmatprep.subr.mxu0 0.0
        %3208 = vmatpush1.xpose.msra.mxu0 0.0
        %3209 = vmatprep.subr.mxu0 0.0
        %3210 = vmatpush1.xpose.msra.mxu0 0.0
        %3211 = vmatprep.subr.mxu0 0.0
        %3212 = vmatpush1.xpose.msra.mxu0 0.0
        %3213 = vmatprep.subr.mxu0 0.0
        %3214 = vmatpush1.xpose.msra.mxu0 0.0
        %3215 = vmatprep.subr.mxu0 0.0
        %3216 = vmatpush1.xpose.msra.mxu0 0.0
        %3217 = vmatprep.subr.mxu0 0.0
        %3218 = vmatpush1.xpose.msra.mxu0 0.0
        %3219 = vmatprep.subr.mxu0 0.0
        %3220 = vmatpush1.xpose.msra.mxu0 0.0
        %3221 = vmatprep.mubr.f32.mxu0 0.0
        %3222 = vmatmul.mubr.f32.gmra.mrb[0].mxu0 %v3153
        %v3223 = vpop.f32.mrb[0].mxu0
        %v3224 = vadd.f32 0.0, %v3223
        %v3225 = vpop.f32.mrb[0].mxu0
        %3226 = vdwg.mxu0
        %v3227 = vmul.f32 %v3224, 0.35355338
        %v3228 = vadd.f32 %v3227, %v2881
        %v3229 = vsel %vm457, %v3228, -inf
        %3230 = vmax.xlane.f32.xlu0 %v3229
        %v3231 = vpop.xlane.xlu0 %3230
        %v3232 = vsub.f32 %v3228, %v3231
        %v3233 = vmul.f32 %v3232, 1.442695
        %v3234 = vpow.pop %v3233
        %v3235 = vsel %vm457, %v3234, 0.0
        %3236 = vadd.xlane.f32.xlu0 %v3235
        %v3237 = vpop.xlane.xlu0 %3236
        %v3238 = vrcp.pop %v3237
        %v3239 = vmul.f32 %v3234, %v3238
        %3240 = vrot.lane.b32.xlu0 %v2969, 56
        %v3241 = vpop.permute.xlu0 %3240
        %v3244 = vsel %vm457, %v3239, 0
        %3246 = vmatprep.subr.mxu0 0.0
        %3247 = vmatpush1.msra.mxu0 %v3241
        %3248 = vmatprep.subr.mxu0 0.0
        %3249 = vmatpush1.msra.mxu0 0.0
        %3250 = vmatprep.subr.mxu0 0.0
        %3251 = vmatpush1.msra.mxu0 0.0
        %3252 = vmatprep.subr.mxu0 0.0
        %3253 = vmatpush1.msra.mxu0 0.0
        %3254 = vmatprep.subr.mxu0 0.0
        %3255 = vmatpush1.msra.mxu0 0.0
        %3256 = vmatprep.subr.mxu0 0.0
        %3257 = vmatpush1.msra.mxu0 0.0
        %3258 = vmatprep.subr.mxu0 0.0
        %3259 = vmatpush1.msra.mxu0 0.0
        %3260 = vmatprep.subr.mxu0 0.0
        %3261 = vmatpush1.msra.mxu0 0.0
        %3262 = vmatprep.subr.mxu0 0.0
        %3263 = vmatpush1.msra.mxu0 0.0
        %3264 = vmatprep.subr.mxu0 0.0
        %3265 = vmatpush1.msra.mxu0 0.0
        %3266 = vmatprep.subr.mxu0 0.0
        %3267 = vmatpush1.msra.mxu0 0.0
        %3268 = vmatprep.subr.mxu0 0.0
        %3269 = vmatpush1.msra.mxu0 0.0
        %3270 = vmatprep.subr.mxu0 0.0
        %3271 = vmatpush1.msra.mxu0 0.0
        %3272 = vmatprep.subr.mxu0 0.0
        %3273 = vmatpush1.msra.mxu0 0.0
        %3274 = vmatprep.subr.mxu0 0.0
        %3275 = vmatpush1.msra.mxu0 0.0
        %3276 = vmatprep.subr.mxu0 0.0
        %3277 = vmatpush1.msra.mxu0 0.0
        %3278 = vmatprep.subr.mxu0 0.0
        %3279 = vmatpush1.msra.mxu0 0.0
        %3280 = vmatprep.subr.mxu0 0.0
        %3281 = vmatpush1.msra.mxu0 0.0
        %3282 = vmatprep.subr.mxu0 0.0
        %3283 = vmatpush1.msra.mxu0 0.0
        %3284 = vmatprep.subr.mxu0 0.0
        %3285 = vmatpush1.msra.mxu0 0.0
        %3286 = vmatprep.subr.mxu0 0.0
        %3287 = vmatpush1.msra.mxu0 0.0
        %3288 = vmatprep.subr.mxu0 0.0
        %3289 = vmatpush1.msra.mxu0 0.0
        %3290 = vmatprep.subr.mxu0 0.0
        %3291 = vmatpush1.msra.mxu0 0.0
        %3292 = vmatprep.subr.mxu0 0.0
        %3293 = vmatpush1.msra.mxu0 0.0
        %3294 = vmatprep.subr.mxu0 0.0
        %3295 = vmatpush1.msra.mxu0 0.0
        %3296 = vmatprep.subr.mxu0 0.0
        %3297 = vmatpush1.msra.mxu0 0.0
        %3298 = vmatprep.subr.mxu0 0.0
        %3299 = vmatpush1.msra.mxu0 0.0
        %3300 = vmatprep.subr.mxu0 0.0
        %3301 = vmatpush1.msra.mxu0 0.0
        %3302 = vmatprep.subr.mxu0 0.0
        %3303 = vmatpush1.msra.mxu0 0.0
        %3304 = vmatprep.subr.mxu0 0.0
        %3305 = vmatpush1.msra.mxu0 0.0
        %3306 = vmatprep.subr.mxu0 0.0
        %3307 = vmatpush1.msra.mxu0 0.0
        %3308 = vmatprep.subr.mxu0 0.0
        %3309 = vmatpush1.msra.mxu0 0.0
        %3310 = vmatprep.mubr.f32.mxu0 0.0
        %3311 = vmatmul.mubr.f32.gmra.mrb[0].mxu0 %v3244
        %v3312 = vpop.f32.mrb[0].mxu0
        %v3313 = vadd.f32 0.0, %v3312
        %v3314 = vpop.f32.mrb[0].mxu0
        %3315 = vdwg.mxu0
        %v3317 = vsel %vm457, %v3313, 0
        %3319 = vmatprep.subr.mxu0 0.0
        %3320 = vmatpush1.msra.mxu0 %v2980
        %3321 = vmatprep.subr.mxu0 0.0
        %3322 = vmatpush1.msra.mxu0 0.0
        %3323 = vmatprep.subr.mxu0 0.0
        %3324 = vmatpush1.msra.mxu0 0.0
        %3325 = vmatprep.subr.mxu0 0.0
        %3326 = vmatpush1.msra.mxu0 0.0
        %3327 = vmatprep.subr.mxu0 0.0
        %3328 = vmatpush1.msra.mxu0 0.0
        %3329 = vmatprep.subr.mxu0 0.0
        %3330 = vmatpush1.msra.mxu0 0.0
        %3331 = vmatprep.subr.mxu0 0.0
        %3332 = vmatpush1.msra.mxu0 0.0
        %3333 = vmatprep.subr.mxu0 0.0
        %3334 = vmatpush1.msra.mxu0 0.0
        %3335 = vmatprep.subr.mxu0 0.0
        %3336 = vmatpush1.msra.mxu0 0.0
        %3337 = vmatprep.subr.mxu0 0.0
        %3338 = vmatpush1.msra.mxu0 0.0
        %3339 = vmatprep.subr.mxu0 0.0
        %3340 = vmatpush1.msra.mxu0 0.0
        %3341 = vmatprep.subr.mxu0 0.0
        %3342 = vmatpush1.msra.mxu0 0.0
        %3343 = vmatprep.subr.mxu0 0.0
        %3344 = vmatpush1.msra.mxu0 0.0
        %3345 = vmatprep.subr.mxu0 0.0
        %3346 = vmatpush1.msra.mxu0 0.0
        %3347 = vmatprep.subr.mxu0 0.0
        %3348 = vmatpush1.msra.mxu0 0.0
        %3349 = vmatprep.subr.mxu0 0.0
        %3350 = vmatpush1.msra.mxu0 0.0
        %3351 = vmatprep.subr.mxu0 0.0
        %3352 = vmatpush1.msra.mxu0 0.0
        %3353 = vmatprep.subr.mxu0 0.0
        %3354 = vmatpush1.msra.mxu0 0.0
        %3355 = vmatprep.subr.mxu0 0.0
        %3356 = vmatpush1.msra.mxu0 0.0
        %3357 = vmatprep.subr.mxu0 0.0
        %3358 = vmatpush1.msra.mxu0 0.0
        %3359 = vmatprep.subr.mxu0 0.0
        %3360 = vmatpush1.msra.mxu0 0.0
        %3361 = vmatprep.subr.mxu0 0.0
        %3362 = vmatpush1.msra.mxu0 0.0
        %3363 = vmatprep.subr.mxu0 0.0
        %3364 = vmatpush1.msra.mxu0 0.0
        %3365 = vmatprep.subr.mxu0 0.0
        %3366 = vmatpush1.msra.mxu0 0.0
        %3367 = vmatprep.subr.mxu0 0.0
        %3368 = vmatpush1.msra.mxu0 0.0
        %3369 = vmatprep.subr.mxu0 0.0
        %3370 = vmatpush1.msra.mxu0 0.0
        %3371 = vmatprep.subr.mxu0 0.0
        %3372 = vmatpush1.msra.mxu0 0.0
        %3373 = vmatprep.subr.mxu0 0.0
        %3374 = vmatpush1.msra.mxu0 0.0
        %3375 = vmatprep.subr.mxu0 0.0
        %3376 = vmatpush1.msra.mxu0 0.0
        %3377 = vmatprep.subr.mxu0 0.0
        %3378 = vmatpush1.msra.mxu0 0.0
        %3379 = vmatprep.subr.mxu0 0.0
        %3380 = vmatpush1.msra.mxu0 0.0
        %3381 = vmatprep.subr.mxu0 0.0
        %3382 = vmatpush1.msra.mxu0 0.0
        %3383 = vmatprep.mubr.f32.mxu0 0.0
        %3384 = vmatmul.mubr.f32.gmra.mrb[0].mxu0 %v3317
        %v3385 = vpop.f32.mrb[0].mxu0
        %v3386 = vadd.f32 0.0, %v3385
        %v3387 = vpop.f32.mrb[0].mxu0
        %3388 = vdwg.mxu0
        %v3390 = vsel %vm457, %v3146, 0
        %3392 = vmatprep.subr.mxu0 0.0
        %3393 = vmatpush1.msra.mxu0 %v2979
        %3394 = vmatprep.subr.mxu0 0.0
        %3395 = vmatpush1.msra.mxu0 0.0
        %3396 = vmatprep.subr.mxu0 0.0
        %3397 = vmatpush1.msra.mxu0 0.0
        %3398 = vmatprep.subr.mxu0 0.0
        %3399 = vmatpush1.msra.mxu0 0.0
        %3400 = vmatprep.subr.mxu0 0.0
        %3401 = vmatpush1.msra.mxu0 0.0
        %3402 = vmatprep.subr.mxu0 0.0
        %3403 = vmatpush1.msra.mxu0 0.0
        %3404 = vmatprep.subr.mxu0 0.0
        %3405 = vmatpush1.msra.mxu0 0.0
        %3406 = vmatprep.subr.mxu0 0.0
        %3407 = vmatpush1.msra.mxu0 0.0
        %3408 = vmatprep.subr.mxu0 0.0
        %3409 = vmatpush1.msra.mxu0 0.0
        %3410 = vmatprep.subr.mxu0 0.0
        %3411 = vmatpush1.msra.mxu0 0.0
        %3412 = vmatprep.subr.mxu0 0.0
        %3413 = vmatpush1.msra.mxu0 0.0
        %3414 = vmatprep.subr.mxu0 0.0
        %3415 = vmatpush1.msra.mxu0 0.0
        %3416 = vmatprep.subr.mxu0 0.0
        %3417 = vmatpush1.msra.mxu0 0.0
        %3418 = vmatprep.subr.mxu0 0.0
        %3419 = vmatpush1.msra.mxu0 0.0
        %3420 = vmatprep.subr.mxu0 0.0
        %3421 = vmatpush1.msra.mxu0 0.0
        %3422 = vmatprep.subr.mxu0 0.0
        %3423 = vmatpush1.msra.mxu0 0.0
        %3424 = vmatprep.subr.mxu0 0.0
        %3425 = vmatpush1.msra.mxu0 0.0
        %3426 = vmatprep.subr.mxu0 0.0
        %3427 = vmatpush1.msra.mxu0 0.0
        %3428 = vmatprep.subr.mxu0 0.0
        %3429 = vmatpush1.msra.mxu0 0.0
        %3430 = vmatprep.subr.mxu0 0.0
        %3431 = vmatpush1.msra.mxu0 0.0
        %3432 = vmatprep.subr.mxu0 0.0
        %3433 = vmatpush1.msra.mxu0 0.0
        %3434 = vmatprep.subr.mxu0 0.0
        %3435 = vmatpush1.msra.mxu0 0.0
        %3436 = vmatprep.subr.mxu0 0.0
        %3437 = vmatpush1.msra.mxu0 0.0
        %3438 = vmatprep.subr.mxu0 0.0
        %3439 = vmatpush1.msra.mxu0 0.0
        %3440 = vmatprep.subr.mxu0 0.0
        %3441 = vmatpush1.msra.mxu0 0.0
        %3442 = vmatprep.subr.mxu0 0.0
        %3443 = vmatpush1.msra.mxu0 0.0
        %3444 = vmatprep.subr.mxu0 0.0
        %3445 = vmatpush1.msra.mxu0 0.0
        %3446 = vmatprep.subr.mxu0 0.0
        %3447 = vmatpush1.msra.mxu0 0.0
        %3448 = vmatprep.subr.mxu0 0.0
        %3449 = vmatpush1.msra.mxu0 0.0
        %3450 = vmatprep.subr.mxu0 0.0
        %3451 = vmatpush1.msra.mxu0 0.0
        %3452 = vmatprep.subr.mxu0 0.0
        %3453 = vmatpush1.msra.mxu0 0.0
        %3454 = vmatprep.subr.mxu0 0.0
        %3455 = vmatpush1.msra.mxu0 0.0
        %3456 = vmatprep.mubr.f32.mxu0 0.0
        %3457 = vmatmul.mubr.f32.gmra.mrb[0].mxu0 %v3390
        %v3458 = vpop.f32.mrb[0].mxu0
        %v3459 = vadd.f32 %v3386, %v3458
        %v3460 = vpop.f32.mrb[0].mxu0
        %3461 = vdwg.mxu0
        %3462 = vrot.lane.b32.xlu0 %v2969, 112
        %v3463 = vpop.permute.xlu0 %3462
        %3464 = vrot.lane.b32.xlu0 %v2969, 80
        %v3465 = vpop.permute.xlu0 %3464
        %v3466 = vsel %vm457, %v3463, 0
        %v3468 = vsel %vm457, %v3465, 0
        %3470 = vmatprep.subr.mxu0 0.0
        %3471 = vmatpush1.xpose.msra.mxu0 %v3468
        %3472 = vmatprep.subr.mxu0 0.0
        %3473 = vmatpush1.xpose.msra.mxu0 0.0
        %3474 = vmatprep.subr.mxu0 0.0
        %3475 = vmatpush1.xpose.msra.mxu0 0.0
        %3476 = vmatprep.subr.mxu0 0.0
        %3477 = vmatpush1.xpose.msra.mxu0 0.0
        %3478 = vmatprep.subr.mxu0 0.0
        %3479 = vmatpush1.xpose.msra.mxu0 0.0
        %3480 = vmatprep.subr.mxu0 0.0
        %3481 = vmatpush1.xpose.msra.mxu0 0.0
        %3482 = vmatprep.subr.mxu0 0.0
        %3483 = vmatpush1.xpose.msra.mxu0 0.0
        %3484 = vmatprep.subr.mxu0 0.0
        %3485 = vmatpush1.xpose.msra.mxu0 0.0
        %3486 = vmatprep.subr.mxu0 0.0
        %3487 = vmatpush1.xpose.msra.mxu0 0.0
        %3488 = vmatprep.subr.mxu0 0.0
        %3489 = vmatpush1.xpose.msra.mxu0 0.0
        %3490 = vmatprep.subr.mxu0 0.0
        %3491 = vmatpush1.xpose.msra.mxu0 0.0
        %3492 = vmatprep.subr.mxu0 0.0
        %3493 = vmatpush1.xpose.msra.mxu0 0.0
        %3494 = vmatprep.subr.mxu0 0.0
        %3495 = vmatpush1.xpose.msra.mxu0 0.0
        %3496 = vmatprep.subr.mxu0 0.0
        %3497 = vmatpush1.xpose.msra.mxu0 0.0
        %3498 = vmatprep.subr.mxu0 0.0
        %3499 = vmatpush1.xpose.msra.mxu0 0.0
        %3500 = vmatprep.subr.mxu0 0.0
        %3501 = vmatpush1.xpose.msra.mxu0 0.0
        %3502 = vmatprep.subr.mxu0 0.0
        %3503 = vmatpush1.xpose.msra.mxu0 0.0
        %3504 = vmatprep.subr.mxu0 0.0
        %3505 = vmatpush1.xpose.msra.mxu0 0.0
        %3506 = vmatprep.subr.mxu0 0.0
        %3507 = vmatpush1.xpose.msra.mxu0 0.0
        %3508 = vmatprep.subr.mxu0 0.0
        %3509 = vmatpush1.xpose.msra.mxu0 0.0
        %3510 = vmatprep.subr.mxu0 0.0
        %3511 = vmatpush1.xpose.msra.mxu0 0.0
        %3512 = vmatprep.subr.mxu0 0.0
        %3513 = vmatpush1.xpose.msra.mxu0 0.0
        %3514 = vmatprep.subr.mxu0 0.0
        %3515 = vmatpush1.xpose.msra.mxu0 0.0
        %3516 = vmatprep.subr.mxu0 0.0
        %3517 = vmatpush1.xpose.msra.mxu0 0.0
        %3518 = vmatprep.subr.mxu0 0.0
        %3519 = vmatpush1.xpose.msra.mxu0 0.0
        %3520 = vmatprep.subr.mxu0 0.0
        %3521 = vmatpush1.xpose.msra.mxu0 0.0
        %3522 = vmatprep.subr.mxu0 0.0
        %3523 = vmatpush1.xpose.msra.mxu0 0.0
        %3524 = vmatprep.subr.mxu0 0.0
        %3525 = vmatpush1.xpose.msra.mxu0 0.0
        %3526 = vmatprep.subr.mxu0 0.0
        %3527 = vmatpush1.xpose.msra.mxu0 0.0
        %3528 = vmatprep.subr.mxu0 0.0
        %3529 = vmatpush1.xpose.msra.mxu0 0.0
        %3530 = vmatprep.subr.mxu0 0.0
        %3531 = vmatpush1.xpose.msra.mxu0 0.0
        %3532 = vmatprep.subr.mxu0 0.0
        %3533 = vmatpush1.xpose.msra.mxu0 0.0
        %3534 = vmatprep.mubr.f32.mxu0 0.0
        %3535 = vmatmul.mubr.f32.gmra.mrb[0].mxu0 %v3466
        %v3536 = vpop.f32.mrb[0].mxu0
        %v3537 = vadd.f32 0.0, %v3536
        %v3538 = vpop.f32.mrb[0].mxu0
        %3539 = vdwg.mxu0
        %v3540 = vmul.f32 %v3537, 0.35355338
        %v3541 = vadd.f32 %v3540, %v2881
        %v3542 = vsel %vm457, %v3541, -inf
        %3543 = vmax.xlane.f32.xlu0 %v3542
        %v3544 = vpop.xlane.xlu0 %3543
        %v3545 = vsub.f32 %v3541, %v3544
        %v3546 = vmul.f32 %v3545, 1.442695
        %v3547 = vpow.pop %v3546
        %v3548 = vsel %vm457, %v3547, 0.0
        %3549 = vadd.xlane.f32.xlu0 %v3548
        %v3550 = vpop.xlane.xlu0 %3549
        %v3551 = vrcp.pop %v3550
        %v3552 = vmul.f32 %v3547, %v3551
        %3553 = vrot.lane.b32.xlu0 %v2969, 48
        %v3554 = vpop.permute.xlu0 %3553
        %v3557 = vsel %vm457, %v3552, 0
        %3559 = vmatprep.subr.mxu0 0.0
        %3560 = vmatpush1.msra.mxu0 %v3554
        %3561 = vmatprep.subr.mxu0 0.0
        %3562 = vmatpush1.msra.mxu0 0.0
        %3563 = vmatprep.subr.mxu0 0.0
        %3564 = vmatpush1.msra.mxu0 0.0
        %3565 = vmatprep.subr.mxu0 0.0
        %3566 = vmatpush1.msra.mxu0 0.0
        %3567 = vmatprep.subr.mxu0 0.0
        %3568 = vmatpush1.msra.mxu0 0.0
        %3569 = vmatprep.subr.mxu0 0.0
        %3570 = vmatpush1.msra.mxu0 0.0
        %3571 = vmatprep.subr.mxu0 0.0
        %3572 = vmatpush1.msra.mxu0 0.0
        %3573 = vmatprep.subr.mxu0 0.0
        %3574 = vmatpush1.msra.mxu0 0.0
        %3575 = vmatprep.subr.mxu0 0.0
        %3576 = vmatpush1.msra.mxu0 0.0
        %3577 = vmatprep.subr.mxu0 0.0
        %3578 = vmatpush1.msra.mxu0 0.0
        %3579 = vmatprep.subr.mxu0 0.0
        %3580 = vmatpush1.msra.mxu0 0.0
        %3581 = vmatprep.subr.mxu0 0.0
        %3582 = vmatpush1.msra.mxu0 0.0
        %3583 = vmatprep.subr.mxu0 0.0
        %3584 = vmatpush1.msra.mxu0 0.0
        %3585 = vmatprep.subr.mxu0 0.0
        %3586 = vmatpush1.msra.mxu0 0.0
        %3587 = vmatprep.subr.mxu0 0.0
        %3588 = vmatpush1.msra.mxu0 0.0
        %3589 = vmatprep.subr.mxu0 0.0
        %3590 = vmatpush1.msra.mxu0 0.0
        %3591 = vmatprep.subr.mxu0 0.0
        %3592 = vmatpush1.msra.mxu0 0.0
        %3593 = vmatprep.subr.mxu0 0.0
        %3594 = vmatpush1.msra.mxu0 0.0
        %3595 = vmatprep.subr.mxu0 0.0
        %3596 = vmatpush1.msra.mxu0 0.0
        %3597 = vmatprep.subr.mxu0 0.0
        %3598 = vmatpush1.msra.mxu0 0.0
        %3599 = vmatprep.subr.mxu0 0.0
        %3600 = vmatpush1.msra.mxu0 0.0
        %3601 = vmatprep.subr.mxu0 0.0
        %3602 = vmatpush1.msra.mxu0 0.0
        %3603 = vmatprep.subr.mxu0 0.0
        %3604 = vmatpush1.msra.mxu0 0.0
        %3605 = vmatprep.subr.mxu0 0.0
        %3606 = vmatpush1.msra.mxu0 0.0
        %3607 = vmatprep.subr.mxu0 0.0
        %3608 = vmatpush1.msra.mxu0 0.0
        %3609 = vmatprep.subr.mxu0 0.0
        %3610 = vmatpush1.msra.mxu0 0.0
        %3611 = vmatprep.subr.mxu0 0.0
        %3612 = vmatpush1.msra.mxu0 0.0
        %3613 = vmatprep.subr.mxu0 0.0
        %3614 = vmatpush1.msra.mxu0 0.0
        %3615 = vmatprep.subr.mxu0 0.0
        %3616 = vmatpush1.msra.mxu0 0.0
        %3617 = vmatprep.subr.mxu0 0.0
        %3618 = vmatpush1.msra.mxu0 0.0
        %3619 = vmatprep.subr.mxu0 0.0
        %3620 = vmatpush1.msra.mxu0 0.0
        %3621 = vmatprep.subr.mxu0 0.0
        %3622 = vmatpush1.msra.mxu0 0.0
        %3623 = vmatprep.mubr.f32.mxu0 0.0
        %3624 = vmatmul.mubr.f32.gmra.mrb[0].mxu0 %v3557
        %v3625 = vpop.f32.mrb[0].mxu0
        %v3626 = vadd.f32 0.0, %v3625
        %v3627 = vpop.f32.mrb[0].mxu0
        %3628 = vdwg.mxu0
        %v3630 = vsel %vm457, %v3626, 0
        %3632 = vmatprep.subr.mxu0 0.0
        %3633 = vmatpush1.msra.mxu0 %v2981
        %3634 = vmatprep.subr.mxu0 0.0
        %3635 = vmatpush1.msra.mxu0 0.0
        %3636 = vmatprep.subr.mxu0 0.0
        %3637 = vmatpush1.msra.mxu0 0.0
        %3638 = vmatprep.subr.mxu0 0.0
        %3639 = vmatpush1.msra.mxu0 0.0
        %3640 = vmatprep.subr.mxu0 0.0
        %3641 = vmatpush1.msra.mxu0 0.0
        %3642 = vmatprep.subr.mxu0 0.0
        %3643 = vmatpush1.msra.mxu0 0.0
        %3644 = vmatprep.subr.mxu0 0.0
        %3645 = vmatpush1.msra.mxu0 0.0
        %3646 = vmatprep.subr.mxu0 0.0
        %3647 = vmatpush1.msra.mxu0 0.0
        %3648 = vmatprep.subr.mxu0 0.0
        %3649 = vmatpush1.msra.mxu0 0.0
        %3650 = vmatprep.subr.mxu0 0.0
        %3651 = vmatpush1.msra.mxu0 0.0
        %3652 = vmatprep.subr.mxu0 0.0
        %3653 = vmatpush1.msra.mxu0 0.0
        %3654 = vmatprep.subr.mxu0 0.0
        %3655 = vmatpush1.msra.mxu0 0.0
        %3656 = vmatprep.subr.mxu0 0.0
        %3657 = vmatpush1.msra.mxu0 0.0
        %3658 = vmatprep.subr.mxu0 0.0
        %3659 = vmatpush1.msra.mxu0 0.0
        %3660 = vmatprep.subr.mxu0 0.0
        %3661 = vmatpush1.msra.mxu0 0.0
        %3662 = vmatprep.subr.mxu0 0.0
        %3663 = vmatpush1.msra.mxu0 0.0
        %3664 = vmatprep.subr.mxu0 0.0
        %3665 = vmatpush1.msra.mxu0 0.0
        %3666 = vmatprep.subr.mxu0 0.0
        %3667 = vmatpush1.msra.mxu0 0.0
        %3668 = vmatprep.subr.mxu0 0.0
        %3669 = vmatpush1.msra.mxu0 0.0
        %3670 = vmatprep.subr.mxu0 0.0
        %3671 = vmatpush1.msra.mxu0 0.0
        %3672 = vmatprep.subr.mxu0 0.0
        %3673 = vmatpush1.msra.mxu0 0.0
        %3674 = vmatprep.subr.mxu0 0.0
        %3675 = vmatpush1.msra.mxu0 0.0
        %3676 = vmatprep.subr.mxu0 0.0
        %3677 = vmatpush1.msra.mxu0 0.0
        %3678 = vmatprep.subr.mxu0 0.0
        %3679 = vmatpush1.msra.mxu0 0.0
        %3680 = vmatprep.subr.mxu0 0.0
        %3681 = vmatpush1.msra.mxu0 0.0
        %3682 = vmatprep.subr.mxu0 0.0
        %3683 = vmatpush1.msra.mxu0 0.0
        %3684 = vmatprep.subr.mxu0 0.0
        %3685 = vmatpush1.msra.mxu0 0.0
        %3686 = vmatprep.subr.mxu0 0.0
        %3687 = vmatpush1.msra.mxu0 0.0
        %3688 = vmatprep.subr.mxu0 0.0
        %3689 = vmatpush1.msra.mxu0 0.0
        %3690 = vmatprep.subr.mxu0 0.0
        %3691 = vmatpush1.msra.mxu0 0.0
        %3692 = vmatprep.subr.mxu0 0.0
        %3693 = vmatpush1.msra.mxu0 0.0
        %3694 = vmatprep.subr.mxu0 0.0
        %3695 = vmatpush1.msra.mxu0 0.0
        %3696 = vmatprep.mubr.f32.mxu0 0.0
        %3697 = vmatmul.mubr.f32.gmra.mrb[0].mxu0 %v3630
        %v3698 = vpop.f32.mrb[0].mxu0
        %v3699 = vadd.f32 0.0, %v3698
        %v3700 = vpop.f32.mrb[0].mxu0
        %3701 = vdwg.mxu0
        %v3702 = vadd.f32 %v3459, %v3699
        %3703 = vrot.lane.b32.xlu0 %v2969, 104
        %v3704 = vpop.permute.xlu0 %3703
        %3705 = vrot.lane.b32.xlu0 %v2969, 72
        %v3706 = vpop.permute.xlu0 %3705
        %v3707 = vsel %vm457, %v3704, 0
        %v3709 = vsel %vm457, %v3706, 0
        %3711 = vmatprep.subr.mxu0 0.0
        %3712 = vmatpush1.xpose.msra.mxu0 %v3709
        %3713 = vmatprep.subr.mxu0 0.0
        %3714 = vmatpush1.xpose.msra.mxu0 0.0
        %3715 = vmatprep.subr.mxu0 0.0
        %3716 = vmatpush1.xpose.msra.mxu0 0.0
        %3717 = vmatprep.subr.mxu0 0.0
        %3718 = vmatpush1.xpose.msra.mxu0 0.0
        %3719 = vmatprep.subr.mxu0 0.0
        %3720 = vmatpush1.xpose.msra.mxu0 0.0
        %3721 = vmatprep.subr.mxu0 0.0
        %3722 = vmatpush1.xpose.msra.mxu0 0.0
        %3723 = vmatprep.subr.mxu0 0.0
        %3724 = vmatpush1.xpose.msra.mxu0 0.0
        %3725 = vmatprep.subr.mxu0 0.0
        %3726 = vmatpush1.xpose.msra.mxu0 0.0
        %3727 = vmatprep.subr.mxu0 0.0
        %3728 = vmatpush1.xpose.msra.mxu0 0.0
        %3729 = vmatprep.subr.mxu0 0.0
        %3730 = vmatpush1.xpose.msra.mxu0 0.0
        %3731 = vmatprep.subr.mxu0 0.0
        %3732 = vmatpush1.xpose.msra.mxu0 0.0
        %3733 = vmatprep.subr.mxu0 0.0
        %3734 = vmatpush1.xpose.msra.mxu0 0.0
        %3735 = vmatprep.subr.mxu0 0.0
        %3736 = vmatpush1.xpose.msra.mxu0 0.0
        %3737 = vmatprep.subr.mxu0 0.0
        %3738 = vmatpush1.xpose.msra.mxu0 0.0
        %3739 = vmatprep.subr.mxu0 0.0
        %3740 = vmatpush1.xpose.msra.mxu0 0.0
        %3741 = vmatprep.subr.mxu0 0.0
        %3742 = vmatpush1.xpose.msra.mxu0 0.0
        %3743 = vmatprep.subr.mxu0 0.0
        %3744 = vmatpush1.xpose.msra.mxu0 0.0
        %3745 = vmatprep.subr.mxu0 0.0
        %3746 = vmatpush1.xpose.msra.mxu0 0.0
        %3747 = vmatprep.subr.mxu0 0.0
        %3748 = vmatpush1.xpose.msra.mxu0 0.0
        %3749 = vmatprep.subr.mxu0 0.0
        %3750 = vmatpush1.xpose.msra.mxu0 0.0
        %3751 = vmatprep.subr.mxu0 0.0
        %3752 = vmatpush1.xpose.msra.mxu0 0.0
        %3753 = vmatprep.subr.mxu0 0.0
        %3754 = vmatpush1.xpose.msra.mxu0 0.0
        %3755 = vmatprep.subr.mxu0 0.0
        %3756 = vmatpush1.xpose.msra.mxu0 0.0
        %3757 = vmatprep.subr.mxu0 0.0
        %3758 = vmatpush1.xpose.msra.mxu0 0.0
        %3759 = vmatprep.subr.mxu0 0.0
        %3760 = vmatpush1.xpose.msra.mxu0 0.0
        %3761 = vmatprep.subr.mxu0 0.0
        %3762 = vmatpush1.xpose.msra.mxu0 0.0
        %3763 = vmatprep.subr.mxu0 0.0
        %3764 = vmatpush1.xpose.msra.mxu0 0.0
        %3765 = vmatprep.subr.mxu0 0.0
        %3766 = vmatpush1.xpose.msra.mxu0 0.0
        %3767 = vmatprep.subr.mxu0 0.0
        %3768 = vmatpush1.xpose.msra.mxu0 0.0
        %3769 = vmatprep.subr.mxu0 0.0
        %3770 = vmatpush1.xpose.msra.mxu0 0.0
        %3771 = vmatprep.subr.mxu0 0.0
        %3772 = vmatpush1.xpose.msra.mxu0 0.0
        %3773 = vmatprep.subr.mxu0 0.0
        %3774 = vmatpush1.xpose.msra.mxu0 0.0
        %3775 = vmatprep.mubr.f32.mxu0 0.0
        %3776 = vmatmul.mubr.f32.gmra.mrb[0].mxu0 %v3707
        %v3777 = vpop.f32.mrb[0].mxu0
        %v3778 = vadd.f32 0.0, %v3777
        %v3779 = vpop.f32.mrb[0].mxu0
        %3780 = vdwg.mxu0
        %v3781 = vmul.f32 %v3778, 0.35355338
        %v3782 = vadd.f32 %v3781, %v2881
        %v3783 = vsel %vm457, %v3782, -inf
        %3784 = vmax.xlane.f32.xlu0 %v3783
        %v3785 = vpop.xlane.xlu0 %3784
        %v3786 = vsub.f32 %v3782, %v3785
        %v3787 = vmul.f32 %v3786, 1.442695
        %v3788 = vpow.pop %v3787
        %v3789 = vsel %vm457, %v3788, 0.0
        %3790 = vadd.xlane.f32.xlu0 %v3789
        %v3791 = vpop.xlane.xlu0 %3790
        %v3792 = vrcp.pop %v3791
        %v3793 = vmul.f32 %v3788, %v3792
        %3794 = vrot.lane.b32.xlu0 %v2969, 40
        %v3795 = vpop.permute.xlu0 %3794
        %v3798 = vsel %vm457, %v3793, 0
        %3800 = vmatprep.subr.mxu0 0.0
        %3801 = vmatpush1.msra.mxu0 %v3795
        %3802 = vmatprep.subr.mxu0 0.0
        %3803 = vmatpush1.msra.mxu0 0.0
        %3804 = vmatprep.subr.mxu0 0.0
        %3805 = vmatpush1.msra.mxu0 0.0
        %3806 = vmatprep.subr.mxu0 0.0
        %3807 = vmatpush1.msra.mxu0 0.0
        %3808 = vmatprep.subr.mxu0 0.0
        %3809 = vmatpush1.msra.mxu0 0.0
        %3810 = vmatprep.subr.mxu0 0.0
        %3811 = vmatpush1.msra.mxu0 0.0
        %3812 = vmatprep.subr.mxu0 0.0
        %3813 = vmatpush1.msra.mxu0 0.0
        %3814 = vmatprep.subr.mxu0 0.0
        %3815 = vmatpush1.msra.mxu0 0.0
        %3816 = vmatprep.subr.mxu0 0.0
        %3817 = vmatpush1.msra.mxu0 0.0
        %3818 = vmatprep.subr.mxu0 0.0
        %3819 = vmatpush1.msra.mxu0 0.0
        %3820 = vmatprep.subr.mxu0 0.0
        %3821 = vmatpush1.msra.mxu0 0.0
        %3822 = vmatprep.subr.mxu0 0.0
        %3823 = vmatpush1.msra.mxu0 0.0
        %3824 = vmatprep.subr.mxu0 0.0
        %3825 = vmatpush1.msra.mxu0 0.0
        %3826 = vmatprep.subr.mxu0 0.0
        %3827 = vmatpush1.msra.mxu0 0.0
        %3828 = vmatprep.subr.mxu0 0.0
        %3829 = vmatpush1.msra.mxu0 0.0
        %3830 = vmatprep.subr.mxu0 0.0
        %3831 = vmatpush1.msra.mxu0 0.0
        %3832 = vmatprep.subr.mxu0 0.0
        %3833 = vmatpush1.msra.mxu0 0.0
        %3834 = vmatprep.subr.mxu0 0.0
        %3835 = vmatpush1.msra.mxu0 0.0
        %3836 = vmatprep.subr.mxu0 0.0
        %3837 = vmatpush1.msra.mxu0 0.0
        %3838 = vmatprep.subr.mxu0 0.0
        %3839 = vmatpush1.msra.mxu0 0.0
        %3840 = vmatprep.subr.mxu0 0.0
        %3841 = vmatpush1.msra.mxu0 0.0
        %3842 = vmatprep.subr.mxu0 0.0
        %3843 = vmatpush1.msra.mxu0 0.0
        %3844 = vmatprep.subr.mxu0 0.0
        %3845 = vmatpush1.msra.mxu0 0.0
        %3846 = vmatprep.subr.mxu0 0.0
        %3847 = vmatpush1.msra.mxu0 0.0
        %3848 = vmatprep.subr.mxu0 0.0
        %3849 = vmatpush1.msra.mxu0 0.0
        %3850 = vmatprep.subr.mxu0 0.0
        %3851 = vmatpush1.msra.mxu0 0.0
        %3852 = vmatprep.subr.mxu0 0.0
        %3853 = vmatpush1.msra.mxu0 0.0
        %3854 = vmatprep.subr.mxu0 0.0
        %3855 = vmatpush1.msra.mxu0 0.0
        %3856 = vmatprep.subr.mxu0 0.0
        %3857 = vmatpush1.msra.mxu0 0.0
        %3858 = vmatprep.subr.mxu0 0.0
        %3859 = vmatpush1.msra.mxu0 0.0
        %3860 = vmatprep.subr.mxu0 0.0
        %3861 = vmatpush1.msra.mxu0 0.0
        %3862 = vmatprep.subr.mxu0 0.0
        %3863 = vmatpush1.msra.mxu0 0.0
        %3864 = vmatprep.mubr.f32.mxu0 0.0
        %3865 = vmatmul.mubr.f32.gmra.mrb[0].mxu0 %v3798
        %v3866 = vpop.f32.mrb[0].mxu0
        %v3867 = vadd.f32 0.0, %v3866
        %v3868 = vpop.f32.mrb[0].mxu0
        %3869 = vdwg.mxu0
        %v3871 = vsel %vm457, %v3867, 0
        %3873 = vmatprep.subr.mxu0 0.0
        %3874 = vmatpush1.msra.mxu0 %v2982
        %3875 = vmatprep.subr.mxu0 0.0
        %3876 = vmatpush1.msra.mxu0 0.0
        %3877 = vmatprep.subr.mxu0 0.0
        %3878 = vmatpush1.msra.mxu0 0.0
        %3879 = vmatprep.subr.mxu0 0.0
        %3880 = vmatpush1.msra.mxu0 0.0
        %3881 = vmatprep.subr.mxu0 0.0
        %3882 = vmatpush1.msra.mxu0 0.0
        %3883 = vmatprep.subr.mxu0 0.0
        %3884 = vmatpush1.msra.mxu0 0.0
        %3885 = vmatprep.subr.mxu0 0.0
        %3886 = vmatpush1.msra.mxu0 0.0
        %3887 = vmatprep.subr.mxu0 0.0
        %3888 = vmatpush1.msra.mxu0 0.0
        %3889 = vmatprep.subr.mxu0 0.0
        %3890 = vmatpush1.msra.mxu0 0.0
        %3891 = vmatprep.subr.mxu0 0.0
        %3892 = vmatpush1.msra.mxu0 0.0
        %3893 = vmatprep.subr.mxu0 0.0
        %3894 = vmatpush1.msra.mxu0 0.0
        %3895 = vmatprep.subr.mxu0 0.0
        %3896 = vmatpush1.msra.mxu0 0.0
        %3897 = vmatprep.subr.mxu0 0.0
        %3898 = vmatpush1.msra.mxu0 0.0
        %3899 = vmatprep.subr.mxu0 0.0
        %3900 = vmatpush1.msra.mxu0 0.0
        %3901 = vmatprep.subr.mxu0 0.0
        %3902 = vmatpush1.msra.mxu0 0.0
        %3903 = vmatprep.subr.mxu0 0.0
        %3904 = vmatpush1.msra.mxu0 0.0
        %3905 = vmatprep.subr.mxu0 0.0
        %3906 = vmatpush1.msra.mxu0 0.0
        %3907 = vmatprep.subr.mxu0 0.0
        %3908 = vmatpush1.msra.mxu0 0.0
        %3909 = vmatprep.subr.mxu0 0.0
        %3910 = vmatpush1.msra.mxu0 0.0
        %3911 = vmatprep.subr.mxu0 0.0
        %3912 = vmatpush1.msra.mxu0 0.0
        %3913 = vmatprep.subr.mxu0 0.0
        %3914 = vmatpush1.msra.mxu0 0.0
        %3915 = vmatprep.subr.mxu0 0.0
        %3916 = vmatpush1.msra.mxu0 0.0
        %3917 = vmatprep.subr.mxu0 0.0
        %3918 = vmatpush1.msra.mxu0 0.0
        %3919 = vmatprep.subr.mxu0 0.0
        %3920 = vmatpush1.msra.mxu0 0.0
        %3921 = vmatprep.subr.mxu0 0.0
        %3922 = vmatpush1.msra.mxu0 0.0
        %3923 = vmatprep.subr.mxu0 0.0
        %3924 = vmatpush1.msra.mxu0 0.0
        %3925 = vmatprep.subr.mxu0 0.0
        %3926 = vmatpush1.msra.mxu0 0.0
        %3927 = vmatprep.subr.mxu0 0.0
        %3928 = vmatpush1.msra.mxu0 0.0
        %3929 = vmatprep.subr.mxu0 0.0
        %3930 = vmatpush1.msra.mxu0 0.0
        %3931 = vmatprep.subr.mxu0 0.0
        %3932 = vmatpush1.msra.mxu0 0.0
        %3933 = vmatprep.subr.mxu0 0.0
        %3934 = vmatpush1.msra.mxu0 0.0
        %3935 = vmatprep.subr.mxu0 0.0
        %3936 = vmatpush1.msra.mxu0 0.0
        %3937 = vmatprep.mubr.f32.mxu0 0.0
        %3938 = vmatmul.mubr.f32.gmra.mrb[0].mxu0 %v3871
        %v3939 = vpop.f32.mrb[0].mxu0
        %v3940 = vadd.f32 0.0, %v3939
        %v3941 = vpop.f32.mrb[0].mxu0
        %3942 = vdwg.mxu0
        %v3943 = vadd.f32 %v3702, %v3940
        %v3944 = vadd.f32 %v2882, %v3943
        %v3945 = vld [vmem:[%s5 + $0x15] sm:$0x1]
        %v3946 = vlaneseq
        %v3947 = vshrl.u32 %v3946, 7
        %v3948 = vsub.s32 0, %v3947
        %v3949 = vrot.slane %v3945, %v3948
        %v3950 = vadd.f32 %v3944, %v3949
        %v3951 = vld [vmem:[%s5 + $0x16] sm:$0x1]
        %v3952 = vld [vmem:[%s5 + $0x17] sm:$0x1]
        %v3953 = vsel %vm355, %v3950, 0.0
        %3954 = vadd.xlane.f32.xlu0 %v3953
        %v3955 = vpop.xlane.xlu0 %3954
        %v3956 = vmul.f32 %v3955, %v359
        %v3957 = vsub.f32 %v3950, %v3956
        %v3958 = vmul.f32 %v3957, %v3957
        %v3959 = vsel %vm355, %v3958, 0.0
        %3960 = vadd.xlane.f32.xlu0 %v3959
        %v3961 = vpop.xlane.xlu0 %3960
        %v3962 = vmul.f32 %v3961, %v359
        %v3963 = vadd.f32 %v3962, 1e-06
        %v3964 = vrsqrt.pop %v3963
        %v3965 = vmul.f32 %v3957, %v3964
        %v3966 = vlaneseq
        %v3967 = vshrl.u32 %v3966, 7
        %v3968 = vsub.s32 0, %v3967
        %v3969 = vrot.slane %v3951, %v3968
        %v3970 = vmul.f32 %v3965, %v3969
        %v3971 = vlaneseq
        %v3972 = vshrl.u32 %v3971, 7
        %v3973 = vsub.s32 0, %v3972
        %v3974 = vrot.slane %v3952, %v3973
        %v3975 = vadd.f32 %v3970, %v3974
        %v3976 = vpack.c.bf16 %v3975, %v3975
        %s3977 = scalar_lea.vmem [#allocation2], 320
        %v3978 = vld [vmem:[%s3977] sm:$0xf]
        %v3979 = vld [vmem:[%s3977 + $0x4] sm:$0xf]
        %v3980 = vld [vmem:[%s3977 + $0x8] sm:$0xf]
        %v3981 = vld [vmem:[%s3977 + $0xc] sm:$0xf]
        %v3982 = vld [vmem:[%s5 + $0x18] sm:$0x1]
        %v3983 = vlaneseq
        %v3984 = vshrl.u32 %v3983, 7
        %v3985 = vsub.s32 0, %v3984
        %v3986 = vrot.slane %v3982, %v3985
        %v3991 = vunpack.c.l.b16 %v3978
        %v3992 = vunpack.c.l.b16 %v3979
        %v3993 = vunpack.c.l.b16 %v3980
        %v3994 = vunpack.c.l.b16 %v3981
        %v3995 = vpack.c.b16 %v3992, %v3991
        %v3996 = vpack.c.b16 %v3994, %v3993
        %v4000 = vsel %vm355, %v3976, 0
        %4002 = vmatprep.subr.bf16.mxu0 0
        %4003 = vmatpush1.bf16.msra.mxu0 %v3995
        %4004 = vmatprep.subr.bf16.mxu0 0
        %4005 = vmatpush1.bf16.msra.mxu0 %v3996
        %4006 = vmatprep.subr.bf16.mxu0 0
        %4007 = vmatpush1.bf16.msra.mxu0 0
        %4008 = vmatprep.subr.bf16.mxu0 0
        %4009 = vmatpush1.bf16.msra.mxu0 0
        %4010 = vmatprep.subr.bf16.mxu0 0
        %4011 = vmatpush1.bf16.msra.mxu0 0
        %4012 = vmatprep.subr.bf16.mxu0 0
        %4013 = vmatpush1.bf16.msra.mxu0 0
        %4014 = vmatprep.subr.bf16.mxu0 0
        %4015 = vmatpush1.bf16.msra.mxu0 0
        %4016 = vmatprep.subr.bf16.mxu0 0
        %4017 = vmatpush1.bf16.msra.mxu0 0
        %4018 = vmatprep.subr.bf16.mxu0 0
        %4019 = vmatpush1.bf16.msra.mxu0 0
        %4020 = vmatprep.subr.bf16.mxu0 0
        %4021 = vmatpush1.bf16.msra.mxu0 0
        %4022 = vmatprep.subr.bf16.mxu0 0
        %4023 = vmatpush1.bf16.msra.mxu0 0
        %4024 = vmatprep.subr.bf16.mxu0 0
        %4025 = vmatpush1.bf16.msra.mxu0 0
        %4026 = vmatprep.subr.bf16.mxu0 0
        %4027 = vmatpush1.bf16.msra.mxu0 0
        %4028 = vmatprep.subr.bf16.mxu0 0
        %4029 = vmatpush1.bf16.msra.mxu0 0
        %4030 = vmatprep.subr.bf16.mxu0 0
        %4031 = vmatpush1.bf16.msra.mxu0 0
        %4032 = vmatprep.subr.bf16.mxu0 0
        %4033 = vmatpush1.bf16.msra.mxu0 0
        %4034 = vmatprep.mubr.bf16.mxu0 0
        %4035 = vmatmul.mubr.bf16.gmra.mrb[0].mxu0 %v4000
        %v4036 = vpop.f32.mrb[0].mxu0
        %v4037 = vadd.f32 %v3986, %v4036
        %v4038 = vpop.f32.mrb[0].mxu0
        %v4039 = vpop.f32.mrb[0].mxu0
        %v4040 = vpop.f32.mrb[0].mxu0
        %4041 = vdwg.mxu0
        %s4042 = scalar_lea.vmem [#allocation2], 352
        %v4043 = vld [vmem:[%s4042] sm:$0xf]
        %v4044 = vld [vmem:[%s4042 + $0x4] sm:$0xf]
        %v4045 = vld [vmem:[%s4042 + $0x8] sm:$0xf]
        %v4046 = vld [vmem:[%s4042 + $0xc] sm:$0xf]
        %v4047 = vld [vmem:[%s5 + $0x19] sm:$0x1]
        %v4048 = vlaneseq
        %v4049 = vshrl.u32 %v4048, 7
        %v4050 = vsub.s32 0, %v4049
        %v4051 = vrot.slane %v4047, %v4050
        %v4056 = vunpack.c.l.b16 %v4043
        %v4057 = vunpack.c.l.b16 %v4044
        %v4058 = vunpack.c.l.b16 %v4045
        %v4059 = vunpack.c.l.b16 %v4046
        %v4060 = vpack.c.b16 %v4057, %v4056
        %v4061 = vpack.c.b16 %v4059, %v4058
        %v4065 = vsel %vm355, %v2875, 0
        %4067 = vmatprep.subr.bf16.mxu0 0
        %4068 = vmatpush1.bf16.msra.mxu0 %v4060
        %4069 = vmatprep.subr.bf16.mxu0 0
        %4070 = vmatpush1.bf16.msra.mxu0 %v4061
        %4071 = vmatprep.subr.bf16.mxu0 0
        %4072 = vmatpush1.bf16.msra.mxu0 0
        %4073 = vmatprep.subr.bf16.mxu0 0
        %4074 = vmatpush1.bf16.msra.mxu0 0
        %4075 = vmatprep.subr.bf16.mxu0 0
        %4076 = vmatpush1.bf16.msra.mxu0 0
        %4077 = vmatprep.subr.bf16.mxu0 0
        %4078 = vmatpush1.bf16.msra.mxu0 0
        %4079 = vmatprep.subr.bf16.mxu0 0
        %4080 = vmatpush1.bf16.msra.mxu0 0
        %4081 = vmatprep.subr.bf16.mxu0 0
        %4082 = vmatpush1.bf16.msra.mxu0 0
        %4083 = vmatprep.subr.bf16.mxu0 0
        %4084 = vmatpush1.bf16.msra.mxu0 0
        %4085 = vmatprep.subr.bf16.mxu0 0
        %4086 = vmatpush1.bf16.msra.mxu0 0
        %4087 = vmatprep.subr.bf16.mxu0 0
        %4088 = vmatpush1.bf16.msra.mxu0 0
        %4089 = vmatprep.subr.bf16.mxu0 0
        %4090 = vmatpush1.bf16.msra.mxu0 0
        %4091 = vmatprep.subr.bf16.mxu0 0
        %4092 = vmatpush1.bf16.msra.mxu0 0
        %4093 = vmatprep.subr.bf16.mxu0 0
        %4094 = vmatpush1.bf16.msra.mxu0 0
        %4095 = vmatprep.subr.bf16.mxu0 0
        %4096 = vmatpush1.bf16.msra.mxu0 0
        %4097 = vmatprep.subr.bf16.mxu0 0
        %4098 = vmatpush1.bf16.msra.mxu0 0
        %4099 = vmatprep.mubr.bf16.mxu0 0
        %4100 = vmatmul.mubr.bf16.gmra.mrb[0].mxu0 %v4065
        %v4101 = vpop.f32.mrb[0].mxu0
        %v4102 = vadd.f32 %v4051, %v4101
        %v4103 = vpop.f32.mrb[0].mxu0
        %v4104 = vpop.f32.mrb[0].mxu0
        %v4105 = vpop.f32.mrb[0].mxu0
        %4106 = vdwg.mxu0
        %s4107 = scalar_lea.vmem [#allocation2], 384
        %v4108 = vld [vmem:[%s4107] sm:$0xf]
        %v4109 = vld [vmem:[%s4107 + $0x4] sm:$0xf]
        %v4110 = vld [vmem:[%s4107 + $0x8] sm:$0xf]
        %v4111 = vld [vmem:[%s4107 + $0xc] sm:$0xf]
        %v4112 = vunpack.c.l.bf16 %v4108
        %v4113 = vunpack.c.l.bf16 %v4109
        %v4114 = vunpack.c.l.bf16 %v4110
        %v4115 = vunpack.c.l.bf16 %v4111
        %v4117 = vsel %vm457, %v4037, 0
        %v4120 = vsel %vm457, %v4102, 0
        %4122 = vmatprep.subr.mxu0 0.0
        %4123 = vmatpush1.xpose.msra.mxu0 %v4120
        %4124 = vmatprep.subr.mxu0 0.0
        %4125 = vmatpush1.xpose.msra.mxu0 0.0
        %4126 = vmatprep.subr.mxu0 0.0
        %4127 = vmatpush1.xpose.msra.mxu0 0.0
        %4128 = vmatprep.subr.mxu0 0.0
        %4129 = vmatpush1.xpose.msra.mxu0 0.0
        %4130 = vmatprep.subr.mxu0 0.0
        %4131 = vmatpush1.xpose.msra.mxu0 0.0
        %4132 = vmatprep.subr.mxu0 0.0
        %4133 = vmatpush1.xpose.msra.mxu0 0.0
        %4134 = vmatprep.subr.mxu0 0.0
        %4135 = vmatpush1.xpose.msra.mxu0 0.0
        %4136 = vmatprep.subr.mxu0 0.0
        %4137 = vmatpush1.xpose.msra.mxu0 0.0
        %4138 = vmatprep.subr.mxu0 0.0
        %4139 = vmatpush1.xpose.msra.mxu0 0.0
        %4140 = vmatprep.subr.mxu0 0.0
        %4141 = vmatpush1.xpose.msra.mxu0 0.0
        %4142 = vmatprep.subr.mxu0 0.0
        %4143 = vmatpush1.xpose.msra.mxu0 0.0
        %4144 = vmatprep.subr.mxu0 0.0
        %4145 = vmatpush1.xpose.msra.mxu0 0.0
        %4146 = vmatprep.subr.mxu0 0.0
        %4147 = vmatpush1.xpose.msra.mxu0 0.0
        %4148 = vmatprep.subr.mxu0 0.0
        %4149 = vmatpush1.xpose.msra.mxu0 0.0
        %4150 = vmatprep.subr.mxu0 0.0
        %4151 = vmatpush1.xpose.msra.mxu0 0.0
        %4152 = vmatprep.subr.mxu0 0.0
        %4153 = vmatpush1.xpose.msra.mxu0 0.0
        %4154 = vmatprep.subr.mxu0 0.0
        %4155 = vmatpush1.xpose.msra.mxu0 0.0
        %4156 = vmatprep.subr.mxu0 0.0
        %4157 = vmatpush1.xpose.msra.mxu0 0.0
        %4158 = vmatprep.subr.mxu0 0.0
        %4159 = vmatpush1.xpose.msra.mxu0 0.0
        %4160 = vmatprep.subr.mxu0 0.0
        %4161 = vmatpush1.xpose.msra.mxu0 0.0
        %4162 = vmatprep.subr.mxu0 0.0
        %4163 = vmatpush1.xpose.msra.mxu0 0.0
        %4164 = vmatprep.subr.mxu0 0.0
        %4165 = vmatpush1.xpose.msra.mxu0 0.0
        %4166 = vmatprep.subr.mxu0 0.0
        %4167 = vmatpush1.xpose.msra.mxu0 0.0
        %4168 = vmatprep.subr.mxu0 0.0
        %4169 = vmatpush1.xpose.msra.mxu0 0.0
        %4170 = vmatprep.subr.mxu0 0.0
        %4171 = vmatpush1.xpose.msra.mxu0 0.0
        %4172 = vmatprep.subr.mxu0 0.0
        %4173 = vmatpush1.xpose.msra.mxu0 0.0
        %4174 = vmatprep.subr.mxu0 0.0
        %4175 = vmatpush1.xpose.msra.mxu0 0.0
        %4176 = vmatprep.subr.mxu0 0.0
        %4177 = vmatpush1.xpose.msra.mxu0 0.0
        %4178 = vmatprep.subr.mxu0 0.0
        %4179 = vmatpush1.xpose.msra.mxu0 0.0
        %4180 = vmatprep.subr.mxu0 0.0
        %4181 = vmatpush1.xpose.msra.mxu0 0.0
        %4182 = vmatprep.subr.mxu0 0.0
        %4183 = vmatpush1.xpose.msra.mxu0 0.0
        %4184 = vmatprep.subr.mxu0 0.0
        %4185 = vmatpush1.xpose.msra.mxu0 0.0
        %4186 = vmatprep.mubr.f32.mxu0 0.0
        %4187 = vmatmul.mubr.f32.gmra.mrb[0].mxu0 %v4117
        %v4188 = vpop.f32.mrb[0].mxu0
        %v4189 = vadd.f32 0.0, %v4188
        %v4190 = vpop.f32.mrb[0].mxu0
        %4191 = vdwg.mxu0
        %v4192 = vmul.f32 %v4189, 0.35355338
        %v4193 = vadd.f32 %v4192, %v537
        %v4194 = vsel %vm457, %v4193, -inf
        %4195 = vmax.xlane.f32.xlu0 %v4194
        %v4196 = vpop.xlane.xlu0 %4195
        %v4197 = vsub.f32 %v4193, %v4196
        %v4198 = vmul.f32 %v4197, 1.442695
        %v4199 = vpow.pop %v4198
        %v4200 = vsel %vm457, %v4199, 0.0
        %4201 = vadd.xlane.f32.xlu0 %v4200
        %v4202 = vpop.xlane.xlu0 %4201
        %v4203 = vrcp.pop %v4202
        %v4204 = vmul.f32 %v4199, %v4203
        %4205 = vrot.lane.b32.xlu0 %v4102, 96
        %v4206 = vpop.permute.xlu0 %4205
        %v4209 = vsel %vm457, %v4204, 0
        %4211 = vmatprep.subr.mxu0 0.0
        %4212 = vmatpush1.msra.mxu0 %v4206
        %4213 = vmatprep.subr.mxu0 0.0
        %4214 = vmatpush1.msra.mxu0 0.0
        %4215 = vmatprep.subr.mxu0 0.0
        %4216 = vmatpush1.msra.mxu0 0.0
        %4217 = vmatprep.subr.mxu0 0.0
        %4218 = vmatpush1.msra.mxu0 0.0
        %4219 = vmatprep.subr.mxu0 0.0
        %4220 = vmatpush1.msra.mxu0 0.0
        %4221 = vmatprep.subr.mxu0 0.0
        %4222 = vmatpush1.msra.mxu0 0.0
        %4223 = vmatprep.subr.mxu0 0.0
        %4224 = vmatpush1.msra.mxu0 0.0
        %4225 = vmatprep.subr.mxu0 0.0
        %4226 = vmatpush1.msra.mxu0 0.0
        %4227 = vmatprep.subr.mxu0 0.0
        %4228 = vmatpush1.msra.mxu0 0.0
        %4229 = vmatprep.subr.mxu0 0.0
        %4230 = vmatpush1.msra.mxu0 0.0
        %4231 = vmatprep.subr.mxu0 0.0
        %4232 = vmatpush1.msra.mxu0 0.0
        %4233 = vmatprep.subr.mxu0 0.0
        %4234 = vmatpush1.msra.mxu0 0.0
        %4235 = vmatprep.subr.mxu0 0.0
        %4236 = vmatpush1.msra.mxu0 0.0
        %4237 = vmatprep.subr.mxu0 0.0
        %4238 = vmatpush1.msra.mxu0 0.0
        %4239 = vmatprep.subr.mxu0 0.0
        %4240 = vmatpush1.msra.mxu0 0.0
        %4241 = vmatprep.subr.mxu0 0.0
        %4242 = vmatpush1.msra.mxu0 0.0
        %4243 = vmatprep.subr.mxu0 0.0
        %4244 = vmatpush1.msra.mxu0 0.0
        %4245 = vmatprep.subr.mxu0 0.0
        %4246 = vmatpush1.msra.mxu0 0.0
        %4247 = vmatprep.subr.mxu0 0.0
        %4248 = vmatpush1.msra.mxu0 0.0
        %4249 = vmatprep.subr.mxu0 0.0
        %4250 = vmatpush1.msra.mxu0 0.0
        %4251 = vmatprep.subr.mxu0 0.0
        %4252 = vmatpush1.msra.mxu0 0.0
        %4253 = vmatprep.subr.mxu0 0.0
        %4254 = vmatpush1.msra.mxu0 0.0
        %4255 = vmatprep.subr.mxu0 0.0
        %4256 = vmatpush1.msra.mxu0 0.0
        %4257 = vmatprep.subr.mxu0 0.0
        %4258 = vmatpush1.msra.mxu0 0.0
        %4259 = vmatprep.subr.mxu0 0.0
        %4260 = vmatpush1.msra.mxu0 0.0
        %4261 = vmatprep.subr.mxu0 0.0
        %4262 = vmatpush1.msra.mxu0 0.0
        %4263 = vmatprep.subr.mxu0 0.0
        %4264 = vmatpush1.msra.mxu0 0.0
        %4265 = vmatprep.subr.mxu0 0.0
        %4266 = vmatpush1.msra.mxu0 0.0
        %4267 = vmatprep.subr.mxu0 0.0
        %4268 = vmatpush1.msra.mxu0 0.0
        %4269 = vmatprep.subr.mxu0 0.0
        %4270 = vmatpush1.msra.mxu0 0.0
        %4271 = vmatprep.subr.mxu0 0.0
        %4272 = vmatpush1.msra.mxu0 0.0
        %4273 = vmatprep.subr.mxu0 0.0
        %4274 = vmatpush1.msra.mxu0 0.0
        %4275 = vmatprep.mubr.f32.mxu0 0.0
        %4276 = vmatmul.mubr.f32.gmra.mrb[0].mxu0 %v4209
        %v4277 = vpop.f32.mrb[0].mxu0
        %v4278 = vadd.f32 0.0, %v4277
        %v4279 = vpop.f32.mrb[0].mxu0
        %4280 = vdwg.mxu0
        %4281 = vrot.lane.b32.xlu0 %v4037, 120
        %v4282 = vpop.permute.xlu0 %4281
        %4283 = vrot.lane.b32.xlu0 %v4102, 120
        %v4284 = vpop.permute.xlu0 %4283
        %v4285 = vsel %vm457, %v4282, 0
        %v4287 = vsel %vm457, %v4284, 0
        %4289 = vmatprep.subr.mxu0 0.0
        %4290 = vmatpush1.xpose.msra.mxu0 %v4287
        %4291 = vmatprep.subr.mxu0 0.0
        %4292 = vmatpush1.xpose.msra.mxu0 0.0
        %4293 = vmatprep.subr.mxu0 0.0
        %4294 = vmatpush1.xpose.msra.mxu0 0.0
        %4295 = vmatprep.subr.mxu0 0.0
        %4296 = vmatpush1.xpose.msra.mxu0 0.0
        %4297 = vmatprep.subr.mxu0 0.0
        %4298 = vmatpush1.xpose.msra.mxu0 0.0
        %4299 = vmatprep.subr.mxu0 0.0
        %4300 = vmatpush1.xpose.msra.mxu0 0.0
        %4301 = vmatprep.subr.mxu0 0.0
        %4302 = vmatpush1.xpose.msra.mxu0 0.0
        %4303 = vmatprep.subr.mxu0 0.0
        %4304 = vmatpush1.xpose.msra.mxu0 0.0
        %4305 = vmatprep.subr.mxu0 0.0
        %4306 = vmatpush1.xpose.msra.mxu0 0.0
        %4307 = vmatprep.subr.mxu0 0.0
        %4308 = vmatpush1.xpose.msra.mxu0 0.0
        %4309 = vmatprep.subr.mxu0 0.0
        %4310 = vmatpush1.xpose.msra.mxu0 0.0
        %4311 = vmatprep.subr.mxu0 0.0
        %4312 = vmatpush1.xpose.msra.mxu0 0.0
        %4313 = vmatprep.subr.mxu0 0.0
        %4314 = vmatpush1.xpose.msra.mxu0 0.0
        %4315 = vmatprep.subr.mxu0 0.0
        %4316 = vmatpush1.xpose.msra.mxu0 0.0
        %4317 = vmatprep.subr.mxu0 0.0
        %4318 = vmatpush1.xpose.msra.mxu0 0.0
        %4319 = vmatprep.subr.mxu0 0.0
        %4320 = vmatpush1.xpose.msra.mxu0 0.0
        %4321 = vmatprep.subr.mxu0 0.0
        %4322 = vmatpush1.xpose.msra.mxu0 0.0
        %4323 = vmatprep.subr.mxu0 0.0
        %4324 = vmatpush1.xpose.msra.mxu0 0.0
        %4325 = vmatprep.subr.mxu0 0.0
        %4326 = vmatpush1.xpose.msra.mxu0 0.0
        %4327 = vmatprep.subr.mxu0 0.0
        %4328 = vmatpush1.xpose.msra.mxu0 0.0
        %4329 = vmatprep.subr.mxu0 0.0
        %4330 = vmatpush1.xpose.msra.mxu0 0.0
        %4331 = vmatprep.subr.mxu0 0.0
        %4332 = vmatpush1.xpose.msra.mxu0 0.0
        %4333 = vmatprep.subr.mxu0 0.0
        %4334 = vmatpush1.xpose.msra.mxu0 0.0
        %4335 = vmatprep.subr.mxu0 0.0
        %4336 = vmatpush1.xpose.msra.mxu0 0.0
        %4337 = vmatprep.subr.mxu0 0.0
        %4338 = vmatpush1.xpose.msra.mxu0 0.0
        %4339 = vmatprep.subr.mxu0 0.0
        %4340 = vmatpush1.xpose.msra.mxu0 0.0
        %4341 = vmatprep.subr.mxu0 0.0
        %4342 = vmatpush1.xpose.msra.mxu0 0.0
        %4343 = vmatprep.subr.mxu0 0.0
        %4344 = vmatpush1.xpose.msra.mxu0 0.0
        %4345 = vmatprep.subr.mxu0 0.0
        %4346 = vmatpush1.xpose.msra.mxu0 0.0
        %4347 = vmatprep.subr.mxu0 0.0
        %4348 = vmatpush1.xpose.msra.mxu0 0.0
        %4349 = vmatprep.subr.mxu0 0.0
        %4350 = vmatpush1.xpose.msra.mxu0 0.0
        %4351 = vmatprep.subr.mxu0 0.0
        %4352 = vmatpush1.xpose.msra.mxu0 0.0
        %4353 = vmatprep.mubr.f32.mxu0 0.0
        %4354 = vmatmul.mubr.f32.gmra.mrb[0].mxu0 %v4285
        %v4355 = vpop.f32.mrb[0].mxu0
        %v4356 = vadd.f32 0.0, %v4355
        %v4357 = vpop.f32.mrb[0].mxu0
        %4358 = vdwg.mxu0
        %v4359 = vmul.f32 %v4356, 0.35355338
        %v4360 = vadd.f32 %v4359, %v537
        %v4361 = vsel %vm457, %v4360, -inf
        %4362 = vmax.xlane.f32.xlu0 %v4361
        %v4363 = vpop.xlane.xlu0 %4362
        %v4364 = vsub.f32 %v4360, %v4363
        %v4365 = vmul.f32 %v4364, 1.442695
        %v4366 = vpow.pop %v4365
        %v4367 = vsel %vm457, %v4366, 0.0
        %4368 = vadd.xlane.f32.xlu0 %v4367
        %v4369 = vpop.xlane.xlu0 %4368
        %v4370 = vrcp.pop %v4369
        %v4371 = vmul.f32 %v4366, %v4370
        %4372 = vrot.lane.b32.xlu0 %v4102, 88
        %v4373 = vpop.permute.xlu0 %4372
        %v4376 = vsel %vm457, %v4371, 0
        %4378 = vmatprep.subr.mxu0 0.0
        %4379 = vmatpush1.msra.mxu0 %v4373
        %4380 = vmatprep.subr.mxu0 0.0
        %4381 = vmatpush1.msra.mxu0 0.0
        %4382 = vmatprep.subr.mxu0 0.0
        %4383 = vmatpush1.msra.mxu0 0.0
        %4384 = vmatprep.subr.mxu0 0.0
        %4385 = vmatpush1.msra.mxu0 0.0
        %4386 = vmatprep.subr.mxu0 0.0
        %4387 = vmatpush1.msra.mxu0 0.0
        %4388 = vmatprep.subr.mxu0 0.0
        %4389 = vmatpush1.msra.mxu0 0.0
        %4390 = vmatprep.subr.mxu0 0.0
        %4391 = vmatpush1.msra.mxu0 0.0
        %4392 = vmatprep.subr.mxu0 0.0
        %4393 = vmatpush1.msra.mxu0 0.0
        %4394 = vmatprep.subr.mxu0 0.0
        %4395 = vmatpush1.msra.mxu0 0.0
        %4396 = vmatprep.subr.mxu0 0.0
        %4397 = vmatpush1.msra.mxu0 0.0
        %4398 = vmatprep.subr.mxu0 0.0
        %4399 = vmatpush1.msra.mxu0 0.0
        %4400 = vmatprep.subr.mxu0 0.0
        %4401 = vmatpush1.msra.mxu0 0.0
        %4402 = vmatprep.subr.mxu0 0.0
        %4403 = vmatpush1.msra.mxu0 0.0
        %4404 = vmatprep.subr.mxu0 0.0
        %4405 = vmatpush1.msra.mxu0 0.0
        %4406 = vmatprep.subr.mxu0 0.0
        %4407 = vmatpush1.msra.mxu0 0.0
        %4408 = vmatprep.subr.mxu0 0.0
        %4409 = vmatpush1.msra.mxu0 0.0
        %4410 = vmatprep.subr.mxu0 0.0
        %4411 = vmatpush1.msra.mxu0 0.0
        %4412 = vmatprep.subr.mxu0 0.0
        %4413 = vmatpush1.msra.mxu0 0.0
        %4414 = vmatprep.subr.mxu0 0.0
        %4415 = vmatpush1.msra.mxu0 0.0
        %4416 = vmatprep.subr.mxu0 0.0
        %4417 = vmatpush1.msra.mxu0 0.0
        %4418 = vmatprep.subr.mxu0 0.0
        %4419 = vmatpush1.msra.mxu0 0.0
        %4420 = vmatprep.subr.mxu0 0.0
        %4421 = vmatpush1.msra.mxu0 0.0
        %4422 = vmatprep.subr.mxu0 0.0
        %4423 = vmatpush1.msra.mxu0 0.0
        %4424 = vmatprep.subr.mxu0 0.0
        %4425 = vmatpush1.msra.mxu0 0.0
        %4426 = vmatprep.subr.mxu0 0.0
        %4427 = vmatpush1.msra.mxu0 0.0
        %4428 = vmatprep.subr.mxu0 0.0
        %4429 = vmatpush1.msra.mxu0 0.0
        %4430 = vmatprep.subr.mxu0 0.0
        %4431 = vmatpush1.msra.mxu0 0.0
        %4432 = vmatprep.subr.mxu0 0.0
        %4433 = vmatpush1.msra.mxu0 0.0
        %4434 = vmatprep.subr.mxu0 0.0
        %4435 = vmatpush1.msra.mxu0 0.0
        %4436 = vmatprep.subr.mxu0 0.0
        %4437 = vmatpush1.msra.mxu0 0.0
        %4438 = vmatprep.subr.mxu0 0.0
        %4439 = vmatpush1.msra.mxu0 0.0
        %4440 = vmatprep.subr.mxu0 0.0
        %4441 = vmatpush1.msra.mxu0 0.0
        %4442 = vmatprep.mubr.f32.mxu0 0.0
        %4443 = vmatmul.mubr.f32.gmra.mrb[0].mxu0 %v4376
        %v4444 = vpop.f32.mrb[0].mxu0
        %v4445 = vadd.f32 0.0, %v4444
        %v4446 = vpop.f32.mrb[0].mxu0
        %4447 = vdwg.mxu0
        %v4449 = vsel %vm457, %v4445, 0
        %4451 = vmatprep.subr.mxu0 0.0
        %4452 = vmatpush1.msra.mxu0 %v4113
        %4453 = vmatprep.subr.mxu0 0.0
        %4454 = vmatpush1.msra.mxu0 0.0
        %4455 = vmatprep.subr.mxu0 0.0
        %4456 = vmatpush1.msra.mxu0 0.0
        %4457 = vmatprep.subr.mxu0 0.0
        %4458 = vmatpush1.msra.mxu0 0.0
        %4459 = vmatprep.subr.mxu0 0.0
        %4460 = vmatpush1.msra.mxu0 0.0
        %4461 = vmatprep.subr.mxu0 0.0
        %4462 = vmatpush1.msra.mxu0 0.0
        %4463 = vmatprep.subr.mxu0 0.0
        %4464 = vmatpush1.msra.mxu0 0.0
        %4465 = vmatprep.subr.mxu0 0.0
        %4466 = vmatpush1.msra.mxu0 0.0
        %4467 = vmatprep.subr.mxu0 0.0
        %4468 = vmatpush1.msra.mxu0 0.0
        %4469 = vmatprep.subr.mxu0 0.0
        %4470 = vmatpush1.msra.mxu0 0.0
        %4471 = vmatprep.subr.mxu0 0.0
        %4472 = vmatpush1.msra.mxu0 0.0
        %4473 = vmatprep.subr.mxu0 0.0
        %4474 = vmatpush1.msra.mxu0 0.0
        %4475 = vmatprep.subr.mxu0 0.0
        %4476 = vmatpush1.msra.mxu0 0.0
        %4477 = vmatprep.subr.mxu0 0.0
        %4478 = vmatpush1.msra.mxu0 0.0
        %4479 = vmatprep.subr.mxu0 0.0
        %4480 = vmatpush1.msra.mxu0 0.0
        %4481 = vmatprep.subr.mxu0 0.0
        %4482 = vmatpush1.msra.mxu0 0.0
        %4483 = vmatprep.subr.mxu0 0.0
        %4484 = vmatpush1.msra.mxu0 0.0
        %4485 = vmatprep.subr.mxu0 0.0
        %4486 = vmatpush1.msra.mxu0 0.0
        %4487 = vmatprep.subr.mxu0 0.0
        %4488 = vmatpush1.msra.mxu0 0.0
        %4489 = vmatprep.subr.mxu0 0.0
        %4490 = vmatpush1.msra.mxu0 0.0
        %4491 = vmatprep.subr.mxu0 0.0
        %4492 = vmatpush1.msra.mxu0 0.0
        %4493 = vmatprep.subr.mxu0 0.0
        %4494 = vmatpush1.msra.mxu0 0.0
        %4495 = vmatprep.subr.mxu0 0.0
        %4496 = vmatpush1.msra.mxu0 0.0
        %4497 = vmatprep.subr.mxu0 0.0
        %4498 = vmatpush1.msra.mxu0 0.0
        %4499 = vmatprep.subr.mxu0 0.0
        %4500 = vmatpush1.msra.mxu0 0.0
        %4501 = vmatprep.subr.mxu0 0.0
        %4502 = vmatpush1.msra.mxu0 0.0
        %4503 = vmatprep.subr.mxu0 0.0
        %4504 = vmatpush1.msra.mxu0 0.0
        %4505 = vmatprep.subr.mxu0 0.0
        %4506 = vmatpush1.msra.mxu0 0.0
        %4507 = vmatprep.subr.mxu0 0.0
        %4508 = vmatpush1.msra.mxu0 0.0
        %4509 = vmatprep.subr.mxu0 0.0
        %4510 = vmatpush1.msra.mxu0 0.0
        %4511 = vmatprep.subr.mxu0 0.0
        %4512 = vmatpush1.msra.mxu0 0.0
        %4513 = vmatprep.subr.mxu0 0.0
        %4514 = vmatpush1.msra.mxu0 0.0
        %4515 = vmatprep.mubr.f32.mxu0 0.0
        %4516 = vmatmul.mubr.f32.gmra.mrb[0].mxu0 %v4449
        %v4517 = vpop.f32.mrb[0].mxu0
        %v4518 = vadd.f32 0.0, %v4517
        %v4519 = vpop.f32.mrb[0].mxu0
        %4520 = vdwg.mxu0
        %v4522 = vsel %vm457, %v4278, 0
        %4524 = vmatprep.subr.mxu0 0.0
        %4525 = vmatpush1.msra.mxu0 %v4112
        %4526 = vmatprep.subr.mxu0 0.0
        %4527 = vmatpush1.msra.mxu0 0.0
        %4528 = vmatprep.subr.mxu0 0.0
        %4529 = vmatpush1.msra.mxu0 0.0
        %4530 = vmatprep.subr.mxu0 0.0
        %4531 = vmatpush1.msra.mxu0 0.0
        %4532 = vmatprep.subr.mxu0 0.0
        %4533 = vmatpush1.msra.mxu0 0.0
        %4534 = vmatprep.subr.mxu0 0.0
        %4535 = vmatpush1.msra.mxu0 0.0
        %4536 = vmatprep.subr.mxu0 0.0
        %4537 = vmatpush1.msra.mxu0 0.0
        %4538 = vmatprep.subr.mxu0 0.0
        %4539 = vmatpush1.msra.mxu0 0.0
        %4540 = vmatprep.subr.mxu0 0.0
        %4541 = vmatpush1.msra.mxu0 0.0
        %4542 = vmatprep.subr.mxu0 0.0
        %4543 = vmatpush1.msra.mxu0 0.0
        %4544 = vmatprep.subr.mxu0 0.0
        %4545 = vmatpush1.msra.mxu0 0.0
        %4546 = vmatprep.subr.mxu0 0.0
        %4547 = vmatpush1.msra.mxu0 0.0
        %4548 = vmatprep.subr.mxu0 0.0
        %4549 = vmatpush1.msra.mxu0 0.0
        %4550 = vmatprep.subr.mxu0 0.0
        %4551 = vmatpush1.msra.mxu0 0.0
        %4552 = vmatprep.subr.mxu0 0.0
        %4553 = vmatpush1.msra.mxu0 0.0
        %4554 = vmatprep.subr.mxu0 0.0
        %4555 = vmatpush1.msra.mxu0 0.0
        %4556 = vmatprep.subr.mxu0 0.0
        %4557 = vmatpush1.msra.mxu0 0.0
        %4558 = vmatprep.subr.mxu0 0.0
        %4559 = vmatpush1.msra.mxu0 0.0
        %4560 = vmatprep.subr.mxu0 0.0
        %4561 = vmatpush1.msra.mxu0 0.0
        %4562 = vmatprep.subr.mxu0 0.0
        %4563 = vmatpush1.msra.mxu0 0.0
        %4564 = vmatprep.subr.mxu0 0.0
        %4565 = vmatpush1.msra.mxu0 0.0
        %4566 = vmatprep.subr.mxu0 0.0
        %4567 = vmatpush1.msra.mxu0 0.0
        %4568 = vmatprep.subr.mxu0 0.0
        %4569 = vmatpush1.msra.mxu0 0.0
        %4570 = vmatprep.subr.mxu0 0.0
        %4571 = vmatpush1.msra.mxu0 0.0
        %4572 = vmatprep.subr.mxu0 0.0
        %4573 = vmatpush1.msra.mxu0 0.0
        %4574 = vmatprep.subr.mxu0 0.0
        %4575 = vmatpush1.msra.mxu0 0.0
        %4576 = vmatprep.subr.mxu0 0.0
        %4577 = vmatpush1.msra.mxu0 0.0
        %4578 = vmatprep.subr.mxu0 0.0
        %4579 = vmatpush1.msra.mxu0 0.0
        %4580 = vmatprep.subr.mxu0 0.0
        %4581 = vmatpush1.msra.mxu0 0.0
        %4582 = vmatprep.subr.mxu0 0.0
        %4583 = vmatpush1.msra.mxu0 0.0
        %4584 = vmatprep.subr.mxu0 0.0
        %4585 = vmatpush1.msra.mxu0 0.0
        %4586 = vmatprep.subr.mxu0 0.0
        %4587 = vmatpush1.msra.mxu0 0.0
        %4588 = vmatprep.mubr.f32.mxu0 0.0
        %4589 = vmatmul.mubr.f32.gmra.mrb[0].mxu0 %v4522
        %v4590 = vpop.f32.mrb[0].mxu0
        %v4591 = vadd.f32 %v4518, %v4590
        %v4592 = vpop.f32.mrb[0].mxu0
        %4593 = vdwg.mxu0
        %4594 = vrot.lane.b32.xlu0 %v4037, 112
        %v4595 = vpop.permute.xlu0 %4594
        %4596 = vrot.lane.b32.xlu0 %v4102, 112
        %v4597 = vpop.permute.xlu0 %4596
        %v4598 = vsel %vm457, %v4595, 0
        %v4600 = vsel %vm457, %v4597, 0
        %4602 = vmatprep.subr.mxu0 0.0
        %4603 = vmatpush1.xpose.msra.mxu0 %v4600
        %4604 = vmatprep.subr.mxu0 0.0
        %4605 = vmatpush1.xpose.msra.mxu0 0.0
        %4606 = vmatprep.subr.mxu0 0.0
        %4607 = vmatpush1.xpose.msra.mxu0 0.0
        %4608 = vmatprep.subr.mxu0 0.0
        %4609 = vmatpush1.xpose.msra.mxu0 0.0
        %4610 = vmatprep.subr.mxu0 0.0
        %4611 = vmatpush1.xpose.msra.mxu0 0.0
        %4612 = vmatprep.subr.mxu0 0.0
        %4613 = vmatpush1.xpose.msra.mxu0 0.0
        %4614 = vmatprep.subr.mxu0 0.0
        %4615 = vmatpush1.xpose.msra.mxu0 0.0
        %4616 = vmatprep.subr.mxu0 0.0
        %4617 = vmatpush1.xpose.msra.mxu0 0.0
        %4618 = vmatprep.subr.mxu0 0.0
        %4619 = vmatpush1.xpose.msra.mxu0 0.0
        %4620 = vmatprep.subr.mxu0 0.0
        %4621 = vmatpush1.xpose.msra.mxu0 0.0
        %4622 = vmatprep.subr.mxu0 0.0
        %4623 = vmatpush1.xpose.msra.mxu0 0.0
        %4624 = vmatprep.subr.mxu0 0.0
        %4625 = vmatpush1.xpose.msra.mxu0 0.0
        %4626 = vmatprep.subr.mxu0 0.0
        %4627 = vmatpush1.xpose.msra.mxu0 0.0
        %4628 = vmatprep.subr.mxu0 0.0
        %4629 = vmatpush1.xpose.msra.mxu0 0.0
        %4630 = vmatprep.subr.mxu0 0.0
        %4631 = vmatpush1.xpose.msra.mxu0 0.0
        %4632 = vmatprep.subr.mxu0 0.0
        %4633 = vmatpush1.xpose.msra.mxu0 0.0
        %4634 = vmatprep.subr.mxu0 0.0
        %4635 = vmatpush1.xpose.msra.mxu0 0.0
        %4636 = vmatprep.subr.mxu0 0.0
        %4637 = vmatpush1.xpose.msra.mxu0 0.0
        %4638 = vmatprep.subr.mxu0 0.0
        %4639 = vmatpush1.xpose.msra.mxu0 0.0
        %4640 = vmatprep.subr.mxu0 0.0
        %4641 = vmatpush1.xpose.msra.mxu0 0.0
        %4642 = vmatprep.subr.mxu0 0.0
        %4643 = vmatpush1.xpose.msra.mxu0 0.0
        %4644 = vmatprep.subr.mxu0 0.0
        %4645 = vmatpush1.xpose.msra.mxu0 0.0
        %4646 = vmatprep.subr.mxu0 0.0
        %4647 = vmatpush1.xpose.msra.mxu0 0.0
        %4648 = vmatprep.subr.mxu0 0.0
        %4649 = vmatpush1.xpose.msra.mxu0 0.0
        %4650 = vmatprep.subr.mxu0 0.0
        %4651 = vmatpush1.xpose.msra.mxu0 0.0
        %4652 = vmatprep.subr.mxu0 0.0
        %4653 = vmatpush1.xpose.msra.mxu0 0.0
        %4654 = vmatprep.subr.mxu0 0.0
        %4655 = vmatpush1.xpose.msra.mxu0 0.0
        %4656 = vmatprep.subr.mxu0 0.0
        %4657 = vmatpush1.xpose.msra.mxu0 0.0
        %4658 = vmatprep.subr.mxu0 0.0
        %4659 = vmatpush1.xpose.msra.mxu0 0.0
        %4660 = vmatprep.subr.mxu0 0.0
        %4661 = vmatpush1.xpose.msra.mxu0 0.0
        %4662 = vmatprep.subr.mxu0 0.0
        %4663 = vmatpush1.xpose.msra.mxu0 0.0
        %4664 = vmatprep.subr.mxu0 0.0
        %4665 = vmatpush1.xpose.msra.mxu0 0.0
        %4666 = vmatprep.mubr.f32.mxu0 0.0
        %4667 = vmatmul.mubr.f32.gmra.mrb[0].mxu0 %v4598
        %v4668 = vpop.f32.mrb[0].mxu0
        %v4669 = vadd.f32 0.0, %v4668
        %v4670 = vpop.f32.mrb[0].mxu0
        %4671 = vdwg.mxu0
        %v4672 = vmul.f32 %v4669, 0.35355338
        %v4673 = vadd.f32 %v4672, %v537
        %v4674 = vsel %vm457, %v4673, -inf
        %4675 = vmax.xlane.f32.xlu0 %v4674
        %v4676 = vpop.xlane.xlu0 %4675
        %v4677 = vsub.f32 %v4673, %v4676
        %v4678 = vmul.f32 %v4677, 1.442695
        %v4679 = vpow.pop %v4678
        %v4680 = vsel %vm457, %v4679, 0.0
        %4681 = vadd.xlane.f32.xlu0 %v4680
        %v4682 = vpop.xlane.xlu0 %4681
        %v4683 = vrcp.pop %v4682
        %v4684 = vmul.f32 %v4679, %v4683
        %4685 = vrot.lane.b32.xlu0 %v4102, 80
        %v4686 = vpop.permute.xlu0 %4685
        %v4689 = vsel %vm457, %v4684, 0
        %4691 = vmatprep.subr.mxu0 0.0
        %4692 = vmatpush1.msra.mxu0 %v4686
        %4693 = vmatprep.subr.mxu0 0.0
        %4694 = vmatpush1.msra.mxu0 0.0
        %4695 = vmatprep.subr.mxu0 0.0
        %4696 = vmatpush1.msra.mxu0 0.0
        %4697 = vmatprep.subr.mxu0 0.0
        %4698 = vmatpush1.msra.mxu0 0.0
        %4699 = vmatprep.subr.mxu0 0.0
        %4700 = vmatpush1.msra.mxu0 0.0
        %4701 = vmatprep.subr.mxu0 0.0
        %4702 = vmatpush1.msra.mxu0 0.0
        %4703 = vmatprep.subr.mxu0 0.0
        %4704 = vmatpush1.msra.mxu0 0.0
        %4705 = vmatprep.subr.mxu0 0.0
        %4706 = vmatpush1.msra.mxu0 0.0
        %4707 = vmatprep.subr.mxu0 0.0
        %4708 = vmatpush1.msra.mxu0 0.0
        %4709 = vmatprep.subr.mxu0 0.0
        %4710 = vmatpush1.msra.mxu0 0.0
        %4711 = vmatprep.subr.mxu0 0.0
        %4712 = vmatpush1.msra.mxu0 0.0
        %4713 = vmatprep.subr.mxu0 0.0
        %4714 = vmatpush1.msra.mxu0 0.0
        %4715 = vmatprep.subr.mxu0 0.0
        %4716 = vmatpush1.msra.mxu0 0.0
        %4717 = vmatprep.subr.mxu0 0.0
        %4718 = vmatpush1.msra.mxu0 0.0
        %4719 = vmatprep.subr.mxu0 0.0
        %4720 = vmatpush1.msra.mxu0 0.0
        %4721 = vmatprep.subr.mxu0 0.0
        %4722 = vmatpush1.msra.mxu0 0.0
        %4723 = vmatprep.subr.mxu0 0.0
        %4724 = vmatpush1.msra.mxu0 0.0
        %4725 = vmatprep.subr.mxu0 0.0
        %4726 = vmatpush1.msra.mxu0 0.0
        %4727 = vmatprep.subr.mxu0 0.0
        %4728 = vmatpush1.msra.mxu0 0.0
        %4729 = vmatprep.subr.mxu0 0.0
        %4730 = vmatpush1.msra.mxu0 0.0
        %4731 = vmatprep.subr.mxu0 0.0
        %4732 = vmatpush1.msra.mxu0 0.0
        %4733 = vmatprep.subr.mxu0 0.0
        %4734 = vmatpush1.msra.mxu0 0.0
        %4735 = vmatprep.subr.mxu0 0.0
        %4736 = vmatpush1.msra.mxu0 0.0
        %4737 = vmatprep.subr.mxu0 0.0
        %4738 = vmatpush1.msra.mxu0 0.0
        %4739 = vmatprep.subr.mxu0 0.0
        %4740 = vmatpush1.msra.mxu0 0.0
        %4741 = vmatprep.subr.mxu0 0.0
        %4742 = vmatpush1.msra.mxu0 0.0
        %4743 = vmatprep.subr.mxu0 0.0
        %4744 = vmatpush1.msra.mxu0 0.0
        %4745 = vmatprep.subr.mxu0 0.0
        %4746 = vmatpush1.msra.mxu0 0.0
        %4747 = vmatprep.subr.mxu0 0.0
        %4748 = vmatpush1.msra.mxu0 0.0
        %4749 = vmatprep.subr.mxu0 0.0
        %4750 = vmatpush1.msra.mxu0 0.0
        %4751 = vmatprep.subr.mxu0 0.0
        %4752 = vmatpush1.msra.mxu0 0.0
        %4753 = vmatprep.subr.mxu0 0.0
        %4754 = vmatpush1.msra.mxu0 0.0
        %4755 = vmatprep.mubr.f32.mxu0 0.0
        %4756 = vmatmul.mubr.f32.gmra.mrb[0].mxu0 %v4689
        %v4757 = vpop.f32.mrb[0].mxu0
        %v4758 = vadd.f32 0.0, %v4757
        %v4759 = vpop.f32.mrb[0].mxu0
        %4760 = vdwg.mxu0
        %v4762 = vsel %vm457, %v4758, 0
        %4764 = vmatprep.subr.mxu0 0.0
        %4765 = vmatpush1.msra.mxu0 %v4114
        %4766 = vmatprep.subr.mxu0 0.0
        %4767 = vmatpush1.msra.mxu0 0.0
        %4768 = vmatprep.subr.mxu0 0.0
        %4769 = vmatpush1.msra.mxu0 0.0
        %4770 = vmatprep.subr.mxu0 0.0
        %4771 = vmatpush1.msra.mxu0 0.0
        %4772 = vmatprep.subr.mxu0 0.0
        %4773 = vmatpush1.msra.mxu0 0.0
        %4774 = vmatprep.subr.mxu0 0.0
        %4775 = vmatpush1.msra.mxu0 0.0
        %4776 = vmatprep.subr.mxu0 0.0
        %4777 = vmatpush1.msra.mxu0 0.0
        %4778 = vmatprep.subr.mxu0 0.0
        %4779 = vmatpush1.msra.mxu0 0.0
        %4780 = vmatprep.subr.mxu0 0.0
        %4781 = vmatpush1.msra.mxu0 0.0
        %4782 = vmatprep.subr.mxu0 0.0
        %4783 = vmatpush1.msra.mxu0 0.0
        %4784 = vmatprep.subr.mxu0 0.0
        %4785 = vmatpush1.msra.mxu0 0.0
        %4786 = vmatprep.subr.mxu0 0.0
        %4787 = vmatpush1.msra.mxu0 0.0
        %4788 = vmatprep.subr.mxu0 0.0
        %4789 = vmatpush1.msra.mxu0 0.0
        %4790 = vmatprep.subr.mxu0 0.0
        %4791 = vmatpush1.msra.mxu0 0.0
        %4792 = vmatprep.subr.mxu0 0.0
        %4793 = vmatpush1.msra.mxu0 0.0
        %4794 = vmatprep.subr.mxu0 0.0
        %4795 = vmatpush1.msra.mxu0 0.0
        %4796 = vmatprep.subr.mxu0 0.0
        %4797 = vmatpush1.msra.mxu0 0.0
        %4798 = vmatprep.subr.mxu0 0.0
        %4799 = vmatpush1.msra.mxu0 0.0
        %4800 = vmatprep.subr.mxu0 0.0
        %4801 = vmatpush1.msra.mxu0 0.0
        %4802 = vmatprep.subr.mxu0 0.0
        %4803 = vmatpush1.msra.mxu0 0.0
        %4804 = vmatprep.subr.mxu0 0.0
        %4805 = vmatpush1.msra.mxu0 0.0
        %4806 = vmatprep.subr.mxu0 0.0
        %4807 = vmatpush1.msra.mxu0 0.0
        %4808 = vmatprep.subr.mxu0 0.0
        %4809 = vmatpush1.msra.mxu0 0.0
        %4810 = vmatprep.subr.mxu0 0.0
        %4811 = vmatpush1.msra.mxu0 0.0
        %4812 = vmatprep.subr.mxu0 0.0
        %4813 = vmatpush1.msra.mxu0 0.0
        %4814 = vmatprep.subr.mxu0 0.0
        %4815 = vmatpush1.msra.mxu0 0.0
        %4816 = vmatprep.subr.mxu0 0.0
        %4817 = vmatpush1.msra.mxu0 0.0
        %4818 = vmatprep.subr.mxu0 0.0
        %4819 = vmatpush1.msra.mxu0 0.0
        %4820 = vmatprep.subr.mxu0 0.0
        %4821 = vmatpush1.msra.mxu0 0.0
        %4822 = vmatprep.subr.mxu0 0.0
        %4823 = vmatpush1.msra.mxu0 0.0
        %4824 = vmatprep.subr.mxu0 0.0
        %4825 = vmatpush1.msra.mxu0 0.0
        %4826 = vmatprep.subr.mxu0 0.0
        %4827 = vmatpush1.msra.mxu0 0.0
        %4828 = vmatprep.mubr.f32.mxu0 0.0
        %4829 = vmatmul.mubr.f32.gmra.mrb[0].mxu0 %v4762
        %v4830 = vpop.f32.mrb[0].mxu0
        %v4831 = vadd.f32 0.0, %v4830
        %v4832 = vpop.f32.mrb[0].mxu0
        %4833 = vdwg.mxu0
        %v4834 = vadd.f32 %v4591, %v4831
        %4835 = vrot.lane.b32.xlu0 %v4037, 104
        %v4836 = vpop.permute.xlu0 %4835
        %4837 = vrot.lane.b32.xlu0 %v4102, 104
        %v4838 = vpop.permute.xlu0 %4837
        %v4839 = vsel %vm457, %v4836, 0
        %v4841 = vsel %vm457, %v4838, 0
        %4843 = vmatprep.subr.mxu0 0.0
        %4844 = vmatpush1.xpose.msra.mxu0 %v4841
        %4845 = vmatprep.subr.mxu0 0.0
        %4846 = vmatpush1.xpose.msra.mxu0 0.0
        %4847 = vmatprep.subr.mxu0 0.0
        %4848 = vmatpush1.xpose.msra.mxu0 0.0
        %4849 = vmatprep.subr.mxu0 0.0
        %4850 = vmatpush1.xpose.msra.mxu0 0.0
        %4851 = vmatprep.subr.mxu0 0.0
        %4852 = vmatpush1.xpose.msra.mxu0 0.0
        %4853 = vmatprep.subr.mxu0 0.0
        %4854 = vmatpush1.xpose.msra.mxu0 0.0
        %4855 = vmatprep.subr.mxu0 0.0
        %4856 = vmatpush1.xpose.msra.mxu0 0.0
        %4857 = vmatprep.subr.mxu0 0.0
        %4858 = vmatpush1.xpose.msra.mxu0 0.0
        %4859 = vmatprep.subr.mxu0 0.0
        %4860 = vmatpush1.xpose.msra.mxu0 0.0
        %4861 = vmatprep.subr.mxu0 0.0
        %4862 = vmatpush1.xpose.msra.mxu0 0.0
        %4863 = vmatprep.subr.mxu0 0.0
        %4864 = vmatpush1.xpose.msra.mxu0 0.0
        %4865 = vmatprep.subr.mxu0 0.0
        %4866 = vmatpush1.xpose.msra.mxu0 0.0
        %4867 = vmatprep.subr.mxu0 0.0
        %4868 = vmatpush1.xpose.msra.mxu0 0.0
        %4869 = vmatprep.subr.mxu0 0.0
        %4870 = vmatpush1.xpose.msra.mxu0 0.0
        %4871 = vmatprep.subr.mxu0 0.0
        %4872 = vmatpush1.xpose.msra.mxu0 0.0
        %4873 = vmatprep.subr.mxu0 0.0
        %4874 = vmatpush1.xpose.msra.mxu0 0.0
        %4875 = vmatprep.subr.mxu0 0.0
        %4876 = vmatpush1.xpose.msra.mxu0 0.0
        %4877 = vmatprep.subr.mxu0 0.0
        %4878 = vmatpush1.xpose.msra.mxu0 0.0
        %4879 = vmatprep.subr.mxu0 0.0
        %4880 = vmatpush1.xpose.msra.mxu0 0.0
        %4881 = vmatprep.subr.mxu0 0.0
        %4882 = vmatpush1.xpose.msra.mxu0 0.0
        %4883 = vmatprep.subr.mxu0 0.0
        %4884 = vmatpush1.xpose.msra.mxu0 0.0
        %4885 = vmatprep.subr.mxu0 0.0
        %4886 = vmatpush1.xpose.msra.mxu0 0.0
        %4887 = vmatprep.subr.mxu0 0.0
        %4888 = vmatpush1.xpose.msra.mxu0 0.0
        %4889 = vmatprep.subr.mxu0 0.0
        %4890 = vmatpush1.xpose.msra.mxu0 0.0
        %4891 = vmatprep.subr.mxu0 0.0
        %4892 = vmatpush1.xpose.msra.mxu0 0.0
        %4893 = vmatprep.subr.mxu0 0.0
        %4894 = vmatpush1.xpose.msra.mxu0 0.0
        %4895 = vmatprep.subr.mxu0 0.0
        %4896 = vmatpush1.xpose.msra.mxu0 0.0
        %4897 = vmatprep.subr.mxu0 0.0
        %4898 = vmatpush1.xpose.msra.mxu0 0.0
        %4899 = vmatprep.subr.mxu0 0.0
        %4900 = vmatpush1.xpose.msra.mxu0 0.0
        %4901 = vmatprep.subr.mxu0 0.0
        %4902 = vmatpush1.xpose.msra.mxu0 0.0
        %4903 = vmatprep.subr.mxu0 0.0
        %4904 = vmatpush1.xpose.msra.mxu0 0.0
        %4905 = vmatprep.subr.mxu0 0.0
        %4906 = vmatpush1.xpose.msra.mxu0 0.0
        %4907 = vmatprep.mubr.f32.mxu0 0.0
        %4908 = vmatmul.mubr.f32.gmra.mrb[0].mxu0 %v4839
        %v4909 = vpop.f32.mrb[0].mxu0
        %v4910 = vadd.f32 0.0, %v4909
        %v4911 = vpop.f32.mrb[0].mxu0
        %4912 = vdwg.mxu0
        %v4913 = vmul.f32 %v4910, 0.35355338
        %v4914 = vadd.f32 %v4913, %v537
        %v4915 = vsel %vm457, %v4914, -inf
        %4916 = vmax.xlane.f32.xlu0 %v4915
        %v4917 = vpop.xlane.xlu0 %4916
        %v4918 = vsub.f32 %v4914, %v4917
        %v4919 = vmul.f32 %v4918, 1.442695
        %v4920 = vpow.pop %v4919
        %v4921 = vsel %vm457, %v4920, 0.0
        %4922 = vadd.xlane.f32.xlu0 %v4921
        %v4923 = vpop.xlane.xlu0 %4922
        %v4924 = vrcp.pop %v4923
        %v4925 = vmul.f32 %v4920, %v4924
        %4926 = vrot.lane.b32.xlu0 %v4102, 72
        %v4927 = vpop.permute.xlu0 %4926
        %v4930 = vsel %vm457, %v4925, 0
        %4932 = vmatprep.subr.mxu0 0.0
        %4933 = vmatpush1.msra.mxu0 %v4927
        %4934 = vmatprep.subr.mxu0 0.0
        %4935 = vmatpush1.msra.mxu0 0.0
        %4936 = vmatprep.subr.mxu0 0.0
        %4937 = vmatpush1.msra.mxu0 0.0
        %4938 = vmatprep.subr.mxu0 0.0
        %4939 = vmatpush1.msra.mxu0 0.0
        %4940 = vmatprep.subr.mxu0 0.0
        %4941 = vmatpush1.msra.mxu0 0.0
        %4942 = vmatprep.subr.mxu0 0.0
        %4943 = vmatpush1.msra.mxu0 0.0
        %4944 = vmatprep.subr.mxu0 0.0
        %4945 = vmatpush1.msra.mxu0 0.0
        %4946 = vmatprep.subr.mxu0 0.0
        %4947 = vmatpush1.msra.mxu0 0.0
        %4948 = vmatprep.subr.mxu0 0.0
        %4949 = vmatpush1.msra.mxu0 0.0
        %4950 = vmatprep.subr.mxu0 0.0
        %4951 = vmatpush1.msra.mxu0 0.0
        %4952 = vmatprep.subr.mxu0 0.0
        %4953 = vmatpush1.msra.mxu0 0.0
        %4954 = vmatprep.subr.mxu0 0.0
        %4955 = vmatpush1.msra.mxu0 0.0
        %4956 = vmatprep.subr.mxu0 0.0
        %4957 = vmatpush1.msra.mxu0 0.0
        %4958 = vmatprep.subr.mxu0 0.0
        %4959 = vmatpush1.msra.mxu0 0.0
        %4960 = vmatprep.subr.mxu0 0.0
        %4961 = vmatpush1.msra.mxu0 0.0
        %4962 = vmatprep.subr.mxu0 0.0
        %4963 = vmatpush1.msra.mxu0 0.0
        %4964 = vmatprep.subr.mxu0 0.0
        %4965 = vmatpush1.msra.mxu0 0.0
        %4966 = vmatprep.subr.mxu0 0.0
        %4967 = vmatpush1.msra.mxu0 0.0
        %4968 = vmatprep.subr.mxu0 0.0
        %4969 = vmatpush1.msra.mxu0 0.0
        %4970 = vmatprep.subr.mxu0 0.0
        %4971 = vmatpush1.msra.mxu0 0.0
        %4972 = vmatprep.subr.mxu0 0.0
        %4973 = vmatpush1.msra.mxu0 0.0
        %4974 = vmatprep.subr.mxu0 0.0
        %4975 = vmatpush1.msra.mxu0 0.0
        %4976 = vmatprep.subr.mxu0 0.0
        %4977 = vmatpush1.msra.mxu0 0.0
        %4978 = vmatprep.subr.mxu0 0.0
        %4979 = vmatpush1.msra.mxu0 0.0
        %4980 = vmatprep.subr.mxu0 0.0
        %4981 = vmatpush1.msra.mxu0 0.0
        %4982 = vmatprep.subr.mxu0 0.0
        %4983 = vmatpush1.msra.mxu0 0.0
        %4984 = vmatprep.subr.mxu0 0.0
        %4985 = vmatpush1.msra.mxu0 0.0
        %4986 = vmatprep.subr.mxu0 0.0
        %4987 = vmatpush1.msra.mxu0 0.0
        %4988 = vmatprep.subr.mxu0 0.0
        %4989 = vmatpush1.msra.mxu0 0.0
        %4990 = vmatprep.subr.mxu0 0.0
        %4991 = vmatpush1.msra.mxu0 0.0
        %4992 = vmatprep.subr.mxu0 0.0
        %4993 = vmatpush1.msra.mxu0 0.0
        %4994 = vmatprep.subr.mxu0 0.0
        %4995 = vmatpush1.msra.mxu0 0.0
        %4996 = vmatprep.mubr.f32.mxu0 0.0
        %4997 = vmatmul.mubr.f32.gmra.mrb[0].mxu0 %v4930
        %v4998 = vpop.f32.mrb[0].mxu0
        %v4999 = vadd.f32 0.0, %v4998
        %v5000 = vpop.f32.mrb[0].mxu0
        %5001 = vdwg.mxu0
        %v5003 = vsel %vm457, %v4999, 0
        %5005 = vmatprep.subr.mxu0 0.0
        %5006 = vmatpush1.msra.mxu0 %v4115
        %5007 = vmatprep.subr.mxu0 0.0
        %5008 = vmatpush1.msra.mxu0 0.0
        %5009 = vmatprep.subr.mxu0 0.0
        %5010 = vmatpush1.msra.mxu0 0.0
        %5011 = vmatprep.subr.mxu0 0.0
        %5012 = vmatpush1.msra.mxu0 0.0
        %5013 = vmatprep.subr.mxu0 0.0
        %5014 = vmatpush1.msra.mxu0 0.0
        %5015 = vmatprep.subr.mxu0 0.0
        %5016 = vmatpush1.msra.mxu0 0.0
        %5017 = vmatprep.subr.mxu0 0.0
        %5018 = vmatpush1.msra.mxu0 0.0
        %5019 = vmatprep.subr.mxu0 0.0
        %5020 = vmatpush1.msra.mxu0 0.0
        %5021 = vmatprep.subr.mxu0 0.0
        %5022 = vmatpush1.msra.mxu0 0.0
        %5023 = vmatprep.subr.mxu0 0.0
        %5024 = vmatpush1.msra.mxu0 0.0
        %5025 = vmatprep.subr.mxu0 0.0
        %5026 = vmatpush1.msra.mxu0 0.0
        %5027 = vmatprep.subr.mxu0 0.0
        %5028 = vmatpush1.msra.mxu0 0.0
        %5029 = vmatprep.subr.mxu0 0.0
        %5030 = vmatpush1.msra.mxu0 0.0
        %5031 = vmatprep.subr.mxu0 0.0
        %5032 = vmatpush1.msra.mxu0 0.0
        %5033 = vmatprep.subr.mxu0 0.0
        %5034 = vmatpush1.msra.mxu0 0.0
        %5035 = vmatprep.subr.mxu0 0.0
        %5036 = vmatpush1.msra.mxu0 0.0
        %5037 = vmatprep.subr.mxu0 0.0
        %5038 = vmatpush1.msra.mxu0 0.0
        %5039 = vmatprep.subr.mxu0 0.0
        %5040 = vmatpush1.msra.mxu0 0.0
        %5041 = vmatprep.subr.mxu0 0.0
        %5042 = vmatpush1.msra.mxu0 0.0
        %5043 = vmatprep.subr.mxu0 0.0
        %5044 = vmatpush1.msra.mxu0 0.0
        %5045 = vmatprep.subr.mxu0 0.0
        %5046 = vmatpush1.msra.mxu0 0.0
        %5047 = vmatprep.subr.mxu0 0.0
        %5048 = vmatpush1.msra.mxu0 0.0
        %5049 = vmatprep.subr.mxu0 0.0
        %5050 = vmatpush1.msra.mxu0 0.0
        %5051 = vmatprep.subr.mxu0 0.0
        %5052 = vmatpush1.msra.mxu0 0.0
        %5053 = vmatprep.subr.mxu0 0.0
        %5054 = vmatpush1.msra.mxu0 0.0
        %5055 = vmatprep.subr.mxu0 0.0
        %5056 = vmatpush1.msra.mxu0 0.0
        %5057 = vmatprep.subr.mxu0 0.0
        %5058 = vmatpush1.msra.mxu0 0.0
        %5059 = vmatprep.subr.mxu0 0.0
        %5060 = vmatpush1.msra.mxu0 0.0
        %5061 = vmatprep.subr.mxu0 0.0
        %5062 = vmatpush1.msra.mxu0 0.0
        %5063 = vmatprep.subr.mxu0 0.0
        %5064 = vmatpush1.msra.mxu0 0.0
        %5065 = vmatprep.subr.mxu0 0.0
        %5066 = vmatpush1.msra.mxu0 0.0
        %5067 = vmatprep.subr.mxu0 0.0
        %5068 = vmatpush1.msra.mxu0 0.0
        %5069 = vmatprep.mubr.f32.mxu0 0.0
        %5070 = vmatmul.mubr.f32.gmra.mrb[0].mxu0 %v5003
        %v5071 = vpop.f32.mrb[0].mxu0
        %v5072 = vadd.f32 0.0, %v5071
        %v5073 = vpop.f32.mrb[0].mxu0
        %5074 = vdwg.mxu0
        %v5075 = vadd.f32 %v4834, %v5072
        %v5076 = vadd.f32 %v3950, %v5075
        %v5077 = vld [vmem:[%s5 + $0x1a] sm:$0x1]
        %v5078 = vlaneseq
        %v5079 = vshrl.u32 %v5078, 7
        %v5080 = vsub.s32 0, %v5079
        %v5081 = vrot.slane %v5077, %v5080
        %v5082 = vadd.f32 %v5076, %v5081
        %v5083 = vld [vmem:[%s5 + $0x1b] sm:$0x1]
        %v5084 = vld [vmem:[%s5 + $0x1c] sm:$0x1]
        %v5085 = vsel %vm355, %v5082, 0.0
        %5086 = vadd.xlane.f32.xlu0 %v5085
        %v5087 = vpop.xlane.xlu0 %5086
        %v5088 = vmul.f32 %v5087, %v359
        %v5089 = vsub.f32 %v5082, %v5088
        %v5090 = vmul.f32 %v5089, %v5089
        %v5091 = vsel %vm355, %v5090, 0.0
        %5092 = vadd.xlane.f32.xlu0 %v5091
        %v5093 = vpop.xlane.xlu0 %5092
        %v5094 = vmul.f32 %v5093, %v359
        %v5095 = vadd.f32 %v5094, 1e-06
        %v5096 = vrsqrt.pop %v5095
        %v5097 = vmul.f32 %v5089, %v5096
        %v5098 = vlaneseq
        %v5099 = vshrl.u32 %v5098, 7
        %v5100 = vsub.s32 0, %v5099
        %v5101 = vrot.slane %v5083, %v5100
        %v5102 = vmul.f32 %v5097, %v5101
        %v5103 = vlaneseq
        %v5104 = vshrl.u32 %v5103, 7
        %v5105 = vsub.s32 0, %v5104
        %v5106 = vrot.slane %v5084, %v5105
        %v5107 = vadd.f32 %v5102, %v5106
        %v5108 = vpack.c.bf16 %v5107, %v5107
        %s5109 = scalar_lea.vmem [#allocation2], 416
        %v5110 = vld [vmem:[%s5109] sm:$0xf]
        %v5111 = vld [vmem:[%s5109 + $0x4] sm:$0xf]
        %v5112 = vld [vmem:[%s5109 + $0x8] sm:$0xf]
        %v5113 = vld [vmem:[%s5109 + $0xc] sm:$0xf]
        %v5114 = vld [vmem:[%s5 + $0x1d] sm:$0x1]
        %v5115 = vlaneseq
        %v5116 = vshrl.u32 %v5115, 7
        %v5117 = vsub.s32 0, %v5116
        %v5118 = vrot.slane %v5114, %v5117
        %v5123 = vunpack.c.l.b16 %v5110
        %v5124 = vunpack.c.l.b16 %v5111
        %v5125 = vunpack.c.l.b16 %v5112
        %v5126 = vunpack.c.l.b16 %v5113
        %v5127 = vpack.c.b16 %v5124, %v5123
        %v5128 = vpack.c.b16 %v5126, %v5125
        %v5132 = vsel %vm355, %v5108, 0
        %5134 = vmatprep.subr.bf16.mxu0 0
        %5135 = vmatpush1.bf16.msra.mxu0 %v5127
        %5136 = vmatprep.subr.bf16.mxu0 0
        %5137 = vmatpush1.bf16.msra.mxu0 %v5128
        %5138 = vmatprep.subr.bf16.mxu0 0
        %5139 = vmatpush1.bf16.msra.mxu0 0
        %5140 = vmatprep.subr.bf16.mxu0 0
        %5141 = vmatpush1.bf16.msra.mxu0 0
        %5142 = vmatprep.subr.bf16.mxu0 0
        %5143 = vmatpush1.bf16.msra.mxu0 0
        %5144 = vmatprep.subr.bf16.mxu0 0
        %5145 = vmatpush1.bf16.msra.mxu0 0
        %5146 = vmatprep.subr.bf16.mxu0 0
        %5147 = vmatpush1.bf16.msra.mxu0 0
        %5148 = vmatprep.subr.bf16.mxu0 0
        %5149 = vmatpush1.bf16.msra.mxu0 0
        %5150 = vmatprep.subr.bf16.mxu0 0
        %5151 = vmatpush1.bf16.msra.mxu0 0
        %5152 = vmatprep.subr.bf16.mxu0 0
        %5153 = vmatpush1.bf16.msra.mxu0 0
        %5154 = vmatprep.subr.bf16.mxu0 0
        %5155 = vmatpush1.bf16.msra.mxu0 0
        %5156 = vmatprep.subr.bf16.mxu0 0
        %5157 = vmatpush1.bf16.msra.mxu0 0
        %5158 = vmatprep.subr.bf16.mxu0 0
        %5159 = vmatpush1.bf16.msra.mxu0 0
        %5160 = vmatprep.subr.bf16.mxu0 0
        %5161 = vmatpush1.bf16.msra.mxu0 0
        %5162 = vmatprep.subr.bf16.mxu0 0
        %5163 = vmatpush1.bf16.msra.mxu0 0
        %5164 = vmatprep.subr.bf16.mxu0 0
        %5165 = vmatpush1.bf16.msra.mxu0 0
        %5166 = vmatprep.mubr.bf16.mxu0 0
        %5167 = vmatmul.mubr.bf16.gmra.mrb[0].mxu0 %v5132
        %v5168 = vpop.f32.mrb[0].mxu0
        %v5169 = vadd.f32 %v5118, %v5168
        %v5170 = vpop.f32.mrb[0].mxu0
        %v5171 = vpop.f32.mrb[0].mxu0
        %v5172 = vpop.f32.mrb[0].mxu0
        %5173 = vdwg.mxu0
        %v5174 = vmax.f32 %v5169, 0.0
        %v5175 = vpack.c.bf16 %v5174, %v5174
        %s5176 = scalar_lea.vmem [#allocation2], 448
        %v5177 = vld [vmem:[%s5176] sm:$0xf]
        %v5178 = vld [vmem:[%s5176 + $0x4] sm:$0xf]
        %v5179 = vld [vmem:[%s5176 + $0x8] sm:$0xf]
        %v5180 = vld [vmem:[%s5176 + $0xc] sm:$0xf]
        %v5181 = vld [vmem:[%s5176 + $0x10] sm:$0xf]
        %v5182 = vld [vmem:[%s5176 + $0x14] sm:$0xf]
        %v5183 = vld [vmem:[%s5176 + $0x18] sm:$0xf]
        %v5184 = vld [vmem:[%s5176 + $0x1c] sm:$0xf]
        %v5193 = vunpack.c.l.b16 %v5177
        %v5194 = vunpack.c.l.b16 %v5178
        %v5195 = vunpack.c.l.b16 %v5179
        %v5196 = vunpack.c.l.b16 %v5180
        %v5197 = vunpack.c.l.b16 %v5181
        %v5198 = vunpack.c.l.b16 %v5182
        %v5199 = vunpack.c.l.b16 %v5183
        %v5200 = vunpack.c.l.b16 %v5184
        %v5201 = vpack.c.b16 %v5194, %v5193
        %v5202 = vpack.c.b16 %v5196, %v5195
        %v5203 = vpack.c.b16 %v5198, %v5197
        %v5204 = vpack.c.b16 %v5200, %v5199
        %v5210 = vsel %vm1555, %v5175, 0
        %5212 = vmatprep.subr.bf16.mxu0 0
        %5213 = vmatpush1.bf16.msra.mxu0 %v5201
        %5214 = vmatprep.subr.bf16.mxu0 0
        %5215 = vmatpush1.bf16.msra.mxu0 %v5202
        %5216 = vmatprep.subr.bf16.mxu0 0
        %5217 = vmatpush1.bf16.msra.mxu0 %v5203
        %5218 = vmatprep.subr.bf16.mxu0 0
        %5219 = vmatpush1.bf16.msra.mxu0 %v5204
        %5220 = vmatprep.subr.bf16.mxu0 0
        %5221 = vmatpush1.bf16.msra.mxu0 0
        %5222 = vmatprep.subr.bf16.mxu0 0
        %5223 = vmatpush1.bf16.msra.mxu0 0
        %5224 = vmatprep.subr.bf16.mxu0 0
        %5225 = vmatpush1.bf16.msra.mxu0 0
        %5226 = vmatprep.subr.bf16.mxu0 0
        %5227 = vmatpush1.bf16.msra.mxu0 0
        %5228 = vmatprep.subr.bf16.mxu0 0
        %5229 = vmatpush1.bf16.msra.mxu0 0
        %5230 = vmatprep.subr.bf16.mxu0 0
        %5231 = vmatpush1.bf16.msra.mxu0 0
        %5232 = vmatprep.subr.bf16.mxu0 0
        %5233 = vmatpush1.bf16.msra.mxu0 0
        %5234 = vmatprep.subr.bf16.mxu0 0
        %5235 = vmatpush1.bf16.msra.mxu0 0
        %5236 = vmatprep.subr.bf16.mxu0 0
        %5237 = vmatpush1.bf16.msra.mxu0 0
        %5238 = vmatprep.subr.bf16.mxu0 0
        %5239 = vmatpush1.bf16.msra.mxu0 0
        %5240 = vmatprep.subr.bf16.mxu0 0
        %5241 = vmatpush1.bf16.msra.mxu0 0
        %5242 = vmatprep.subr.bf16.mxu0 0
        %5243 = vmatpush1.bf16.msra.mxu0 0
        %5244 = vmatprep.mubr.bf16.mxu0 0
        %5245 = vmatmul.mubr.bf16.gmra.mrb[0].mxu0 %v5210
        %v5246 = vpop.f32.mrb[0].mxu0
        %v5247 = vadd.f32 0.0, %v5246
        %v5248 = vpop.f32.mrb[0].mxu0
        %v5249 = vpop.f32.mrb[0].mxu0
        %v5250 = vpop.f32.mrb[0].mxu0
        %5251 = vdwg.mxu0
        %v5252 = vadd.f32 %v5082, %v5247
        %v5253 = vld [vmem:[%s5 + $0x1e] sm:$0x1]
        %v5254 = vlaneseq
        %v5255 = vshrl.u32 %v5254, 7
        %v5256 = vsub.s32 0, %v5255
        %v5257 = vrot.slane %v5253, %v5256
        %v5258 = vadd.f32 %v5252, %v5257
        %v5259 = vld [vmem:[%s5 + $0x1f] sm:$0x1]
        %v5260 = vld [vmem:[%s5 + $0x20] sm:$0x1]
        %v5261 = vsel %vm355, %v5258, 0.0
        %5262 = vadd.xlane.f32.xlu0 %v5261
        %v5263 = vpop.xlane.xlu0 %5262
        %v5264 = vmul.f32 %v5263, %v359
        %v5265 = vsub.f32 %v5258, %v5264
        %v5266 = vmul.f32 %v5265, %v5265
        %v5267 = vsel %vm355, %v5266, 0.0
        %5268 = vadd.xlane.f32.xlu0 %v5267
        %v5269 = vpop.xlane.xlu0 %5268
        %v5270 = vmul.f32 %v5269, %v359
        %v5271 = vadd.f32 %v5270, 1e-06
        %v5272 = vrsqrt.pop %v5271
        %v5273 = vmul.f32 %v5265, %v5272
        %v5274 = vlaneseq
        %v5275 = vshrl.u32 %v5274, 7
        %v5276 = vsub.s32 0, %v5275
        %v5277 = vrot.slane %v5259, %v5276
        %v5278 = vmul.f32 %v5273, %v5277
        %v5279 = vlaneseq
        %v5280 = vshrl.u32 %v5279, 7
        %v5281 = vsub.s32 0, %v5280
        %v5282 = vrot.slane %v5260, %v5281
        %v5283 = vadd.f32 %v5278, %v5282
        %v5284 = vpack.c.bf16 %v5283, %v5283
        %s5285 = scalar_lea.vmem [#allocation2], 480
        %v5286 = vld [vmem:[%s5285] sm:$0xf]
        %v5287 = vld [vmem:[%s5285 + $0x4] sm:$0xf]
        %v5288 = vld [vmem:[%s5285 + $0x8] sm:$0xf]
        %v5289 = vld [vmem:[%s5285 + $0xc] sm:$0xf]
        %v5290 = vld [vmem:[%s5 + $0x21] sm:$0x1]
        %v5291 = vlaneseq
        %v5292 = vshrl.u32 %v5291, 7
        %v5293 = vsub.s32 0, %v5292
        %v5294 = vrot.slane %v5290, %v5293
        %v5299 = vunpack.c.l.b16 %v5286
        %v5300 = vunpack.c.l.b16 %v5287
        %v5301 = vunpack.c.l.b16 %v5288
        %v5302 = vunpack.c.l.b16 %v5289
        %v5303 = vpack.c.b16 %v5300, %v5299
        %v5304 = vpack.c.b16 %v5302, %v5301
        %v5308 = vsel %vm355, %v5284, 0
        %5310 = vmatprep.subr.bf16.mxu0 0
        %5311 = vmatpush1.bf16.msra.mxu0 %v5303
        %5312 = vmatprep.subr.bf16.mxu0 0
        %5313 = vmatpush1.bf16.msra.mxu0 %v5304
        %5314 = vmatprep.subr.bf16.mxu0 0
        %5315 = vmatpush1.bf16.msra.mxu0 0
        %5316 = vmatprep.subr.bf16.mxu0 0
        %5317 = vmatpush1.bf16.msra.mxu0 0
        %5318 = vmatprep.subr.bf16.mxu0 0
        %5319 = vmatpush1.bf16.msra.mxu0 0
        %5320 = vmatprep.subr.bf16.mxu0 0
        %5321 = vmatpush1.bf16.msra.mxu0 0
        %5322 = vmatprep.subr.bf16.mxu0 0
        %5323 = vmatpush1.bf16.msra.mxu0 0
        %5324 = vmatprep.subr.bf16.mxu0 0
        %5325 = vmatpush1.bf16.msra.mxu0 0
        %5326 = vmatprep.subr.bf16.mxu0 0
        %5327 = vmatpush1.bf16.msra.mxu0 0
        %5328 = vmatprep.subr.bf16.mxu0 0
        %5329 = vmatpush1.bf16.msra.mxu0 0
        %5330 = vmatprep.subr.bf16.mxu0 0
        %5331 = vmatpush1.bf16.msra.mxu0 0
        %5332 = vmatprep.subr.bf16.mxu0 0
        %5333 = vmatpush1.bf16.msra.mxu0 0
        %5334 = vmatprep.subr.bf16.mxu0 0
        %5335 = vmatpush1.bf16.msra.mxu0 0
        %5336 = vmatprep.subr.bf16.mxu0 0
        %5337 = vmatpush1.bf16.msra.mxu0 0
        %5338 = vmatprep.subr.bf16.mxu0 0
        %5339 = vmatpush1.bf16.msra.mxu0 0
        %5340 = vmatprep.subr.bf16.mxu0 0
        %5341 = vmatpush1.bf16.msra.mxu0 0
        %5342 = vmatprep.mubr.bf16.mxu0 0
        %5343 = vmatmul.mubr.bf16.gmra.mrb[0].mxu0 %v5308
        %v5344 = vpop.f32.mrb[0].mxu0
        %v5345 = vadd.f32 %v5294, %v5344
        %v5346 = vpop.f32.mrb[0].mxu0
        %v5347 = vpop.f32.mrb[0].mxu0
        %v5348 = vpop.f32.mrb[0].mxu0
        %5349 = vdwg.mxu0
        %s5350 = scalar_lea.vmem [#allocation2], 512
        %v5351 = vld [vmem:[%s5350] sm:$0xf]
        %v5352 = vld [vmem:[%s5350 + $0x4] sm:$0xf]
        %v5353 = vld [vmem:[%s5350 + $0x8] sm:$0xf]
        %v5354 = vld [vmem:[%s5350 + $0xc] sm:$0xf]
        %v5355 = vunpack.c.l.bf16 %v5351
        %v5356 = vunpack.c.l.bf16 %v5352
        %v5357 = vunpack.c.l.bf16 %v5353
        %v5358 = vunpack.c.l.bf16 %v5354
        %5360 = vrot.lane.b32.xlu0 %v5345, 96
        %v5361 = vpop.permute.xlu0 %5360
        %v5362 = vsel %vm457, %v5345, 0
        %v5364 = vsel %vm457, %v5361, 0
        %5366 = vmatprep.subr.mxu0 0.0
        %5367 = vmatpush1.xpose.msra.mxu0 %v5364
        %5368 = vmatprep.subr.mxu0 0.0
        %5369 = vmatpush1.xpose.msra.mxu0 0.0
        %5370 = vmatprep.subr.mxu0 0.0
        %5371 = vmatpush1.xpose.msra.mxu0 0.0
        %5372 = vmatprep.subr.mxu0 0.0
        %5373 = vmatpush1.xpose.msra.mxu0 0.0
        %5374 = vmatprep.subr.mxu0 0.0
        %5375 = vmatpush1.xpose.msra.mxu0 0.0
        %5376 = vmatprep.subr.mxu0 0.0
        %5377 = vmatpush1.xpose.msra.mxu0 0.0
        %5378 = vmatprep.subr.mxu0 0.0
        %5379 = vmatpush1.xpose.msra.mxu0 0.0
        %5380 = vmatprep.subr.mxu0 0.0
        %5381 = vmatpush1.xpose.msra.mxu0 0.0
        %5382 = vmatprep.subr.mxu0 0.0
        %5383 = vmatpush1.xpose.msra.mxu0 0.0
        %5384 = vmatprep.subr.mxu0 0.0
        %5385 = vmatpush1.xpose.msra.mxu0 0.0
        %5386 = vmatprep.subr.mxu0 0.0
        %5387 = vmatpush1.xpose.msra.mxu0 0.0
        %5388 = vmatprep.subr.mxu0 0.0
        %5389 = vmatpush1.xpose.msra.mxu0 0.0
        %5390 = vmatprep.subr.mxu0 0.0
        %5391 = vmatpush1.xpose.msra.mxu0 0.0
        %5392 = vmatprep.subr.mxu0 0.0
        %5393 = vmatpush1.xpose.msra.mxu0 0.0
        %5394 = vmatprep.subr.mxu0 0.0
        %5395 = vmatpush1.xpose.msra.mxu0 0.0
        %5396 = vmatprep.subr.mxu0 0.0
        %5397 = vmatpush1.xpose.msra.mxu0 0.0
        %5398 = vmatprep.subr.mxu0 0.0
        %5399 = vmatpush1.xpose.msra.mxu0 0.0
        %5400 = vmatprep.subr.mxu0 0.0
        %5401 = vmatpush1.xpose.msra.mxu0 0.0
        %5402 = vmatprep.subr.mxu0 0.0
        %5403 = vmatpush1.xpose.msra.mxu0 0.0
        %5404 = vmatprep.subr.mxu0 0.0
        %5405 = vmatpush1.xpose.msra.mxu0 0.0
        %5406 = vmatprep.subr.mxu0 0.0
        %5407 = vmatpush1.xpose.msra.mxu0 0.0
        %5408 = vmatprep.subr.mxu0 0.0
        %5409 = vmatpush1.xpose.msra.mxu0 0.0
        %5410 = vmatprep.subr.mxu0 0.0
        %5411 = vmatpush1.xpose.msra.mxu0 0.0
        %5412 = vmatprep.subr.mxu0 0.0
        %5413 = vmatpush1.xpose.msra.mxu0 0.0
        %5414 = vmatprep.subr.mxu0 0.0
        %5415 = vmatpush1.xpose.msra.mxu0 0.0
        %5416 = vmatprep.subr.mxu0 0.0
        %5417 = vmatpush1.xpose.msra.mxu0 0.0
        %5418 = vmatprep.subr.mxu0 0.0
        %5419 = vmatpush1.xpose.msra.mxu0 0.0
        %5420 = vmatprep.subr.mxu0 0.0
        %5421 = vmatpush1.xpose.msra.mxu0 0.0
        %5422 = vmatprep.subr.mxu0 0.0
        %5423 = vmatpush1.xpose.msra.mxu0 0.0
        %5424 = vmatprep.subr.mxu0 0.0
        %5425 = vmatpush1.xpose.msra.mxu0 0.0
        %5426 = vmatprep.subr.mxu0 0.0
        %5427 = vmatpush1.xpose.msra.mxu0 0.0
        %5428 = vmatprep.subr.mxu0 0.0
        %5429 = vmatpush1.xpose.msra.mxu0 0.0
        %5430 = vmatprep.mubr.f32.mxu0 0.0
        %5431 = vmatmul.mubr.f32.gmra.mrb[0].mxu0 %v5362
        %v5432 = vpop.f32.mrb[0].mxu0
        %v5433 = vadd.f32 0.0, %v5432
        %v5434 = vpop.f32.mrb[0].mxu0
        %5435 = vdwg.mxu0
        %v5436 = vmul.f32 %v5433, 0.35355338
        %v5437 = vadd.f32 %v5436, %v2881
        %v5438 = vsel %vm457, %v5437, -inf
        %5439 = vmax.xlane.f32.xlu0 %v5438
        %v5440 = vpop.xlane.xlu0 %5439
        %v5441 = vsub.f32 %v5437, %v5440
        %v5442 = vmul.f32 %v5441, 1.442695
        %v5443 = vpow.pop %v5442
        %v5444 = vsel %vm457, %v5443, 0.0
        %5445 = vadd.xlane.f32.xlu0 %v5444
        %v5446 = vpop.xlane.xlu0 %5445
        %v5447 = vrcp.pop %v5446
        %v5448 = vmul.f32 %v5443, %v5447
        %5449 = vrot.lane.b32.xlu0 %v5345, 64
        %v5450 = vpop.permute.xlu0 %5449
        %v5453 = vsel %vm457, %v5448, 0
        %5455 = vmatprep.subr.mxu0 0.0
        %5456 = vmatpush1.msra.mxu0 %v5450
        %5457 = vmatprep.subr.mxu0 0.0
        %5458 = vmatpush1.msra.mxu0 0.0
        %5459 = vmatprep.subr.mxu0 0.0
        %5460 = vmatpush1.msra.mxu0 0.0
        %5461 = vmatprep.subr.mxu0 0.0
        %5462 = vmatpush1.msra.mxu0 0.0
        %5463 = vmatprep.subr.mxu0 0.0
        %5464 = vmatpush1.msra.mxu0 0.0
        %5465 = vmatprep.subr.mxu0 0.0
        %5466 = vmatpush1.msra.mxu0 0.0
        %5467 = vmatprep.subr.mxu0 0.0
        %5468 = vmatpush1.msra.mxu0 0.0
        %5469 = vmatprep.subr.mxu0 0.0
        %5470 = vmatpush1.msra.mxu0 0.0
        %5471 = vmatprep.subr.mxu0 0.0
        %5472 = vmatpush1.msra.mxu0 0.0
        %5473 = vmatprep.subr.mxu0 0.0
        %5474 = vmatpush1.msra.mxu0 0.0
        %5475 = vmatprep.subr.mxu0 0.0
        %5476 = vmatpush1.msra.mxu0 0.0
        %5477 = vmatprep.subr.mxu0 0.0
        %5478 = vmatpush1.msra.mxu0 0.0
        %5479 = vmatprep.subr.mxu0 0.0
        %5480 = vmatpush1.msra.mxu0 0.0
        %5481 = vmatprep.subr.mxu0 0.0
        %5482 = vmatpush1.msra.mxu0 0.0
        %5483 = vmatprep.subr.mxu0 0.0
        %5484 = vmatpush1.msra.mxu0 0.0
        %5485 = vmatprep.subr.mxu0 0.0
        %5486 = vmatpush1.msra.mxu0 0.0
        %5487 = vmatprep.subr.mxu0 0.0
        %5488 = vmatpush1.msra.mxu0 0.0
        %5489 = vmatprep.subr.mxu0 0.0
        %5490 = vmatpush1.msra.mxu0 0.0
        %5491 = vmatprep.subr.mxu0 0.0
        %5492 = vmatpush1.msra.mxu0 0.0
        %5493 = vmatprep.subr.mxu0 0.0
        %5494 = vmatpush1.msra.mxu0 0.0
        %5495 = vmatprep.subr.mxu0 0.0
        %5496 = vmatpush1.msra.mxu0 0.0
        %5497 = vmatprep.subr.mxu0 0.0
        %5498 = vmatpush1.msra.mxu0 0.0
        %5499 = vmatprep.subr.mxu0 0.0
        %5500 = vmatpush1.msra.mxu0 0.0
        %5501 = vmatprep.subr.mxu0 0.0
        %5502 = vmatpush1.msra.mxu0 0.0
        %5503 = vmatprep.subr.mxu0 0.0
        %5504 = vmatpush1.msra.mxu0 0.0
        %5505 = vmatprep.subr.mxu0 0.0
        %5506 = vmatpush1.msra.mxu0 0.0
        %5507 = vmatprep.subr.mxu0 0.0
        %5508 = vmatpush1.msra.mxu0 0.0
        %5509 = vmatprep.subr.mxu0 0.0
        %5510 = vmatpush1.msra.mxu0 0.0
        %5511 = vmatprep.subr.mxu0 0.0
        %5512 = vmatpush1.msra.mxu0 0.0
        %5513 = vmatprep.subr.mxu0 0.0
        %5514 = vmatpush1.msra.mxu0 0.0
        %5515 = vmatprep.subr.mxu0 0.0
        %5516 = vmatpush1.msra.mxu0 0.0
        %5517 = vmatprep.subr.mxu0 0.0
        %5518 = vmatpush1.msra.mxu0 0.0
        %5519 = vmatprep.mubr.f32.mxu0 0.0
        %5520 = vmatmul.mubr.f32.gmra.mrb[0].mxu0 %v5453
        %v5521 = vpop.f32.mrb[0].mxu0
        %v5522 = vadd.f32 0.0, %v5521
        %v5523 = vpop.f32.mrb[0].mxu0
        %5524 = vdwg.mxu0
        %5525 = vrot.lane.b32.xlu0 %v5345, 120
        %v5526 = vpop.permute.xlu0 %5525
        %5527 = vrot.lane.b32.xlu0 %v5345, 88
        %v5528 = vpop.permute.xlu0 %5527
        %v5529 = vsel %vm457, %v5526, 0
        %v5531 = vsel %vm457, %v5528, 0
        %5533 = vmatprep.subr.mxu0 0.0
        %5534 = vmatpush1.xpose.msra.mxu0 %v5531
        %5535 = vmatprep.subr.mxu0 0.0
        %5536 = vmatpush1.xpose.msra.mxu0 0.0
        %5537 = vmatprep.subr.mxu0 0.0
        %5538 = vmatpush1.xpose.msra.mxu0 0.0
        %5539 = vmatprep.subr.mxu0 0.0
        %5540 = vmatpush1.xpose.msra.mxu0 0.0
        %5541 = vmatprep.subr.mxu0 0.0
        %5542 = vmatpush1.xpose.msra.mxu0 0.0
        %5543 = vmatprep.subr.mxu0 0.0
        %5544 = vmatpush1.xpose.msra.mxu0 0.0
        %5545 = vmatprep.subr.mxu0 0.0
        %5546 = vmatpush1.xpose.msra.mxu0 0.0
        %5547 = vmatprep.subr.mxu0 0.0
        %5548 = vmatpush1.xpose.msra.mxu0 0.0
        %5549 = vmatprep.subr.mxu0 0.0
        %5550 = vmatpush1.xpose.msra.mxu0 0.0
        %5551 = vmatprep.subr.mxu0 0.0
        %5552 = vmatpush1.xpose.msra.mxu0 0.0
        %5553 = vmatprep.subr.mxu0 0.0
        %5554 = vmatpush1.xpose.msra.mxu0 0.0
        %5555 = vmatprep.subr.mxu0 0.0
        %5556 = vmatpush1.xpose.msra.mxu0 0.0
        %5557 = vmatprep.subr.mxu0 0.0
        %5558 = vmatpush1.xpose.msra.mxu0 0.0
        %5559 = vmatprep.subr.mxu0 0.0
        %5560 = vmatpush1.xpose.msra.mxu0 0.0
        %5561 = vmatprep.subr.mxu0 0.0
        %5562 = vmatpush1.xpose.msra.mxu0 0.0
        %5563 = vmatprep.subr.mxu0 0.0
        %5564 = vmatpush1.xpose.msra.mxu0 0.0
        %5565 = vmatprep.subr.mxu0 0.0
        %5566 = vmatpush1.xpose.msra.mxu0 0.0
        %5567 = vmatprep.subr.mxu0 0.0
        %5568 = vmatpush1.xpose.msra.mxu0 0.0
        %5569 = vmatprep.subr.mxu0 0.0
        %5570 = vmatpush1.xpose.msra.mxu0 0.0
        %5571 = vmatprep.subr.mxu0 0.0
        %5572 = vmatpush1.xpose.msra.mxu0 0.0
        %5573 = vmatprep.subr.mxu0 0.0
        %5574 = vmatpush1.xpose.msra.mxu0 0.0
        %5575 = vmatprep.subr.mxu0 0.0
        %5576 = vmatpush1.xpose.msra.mxu0 0.0
        %5577 = vmatprep.subr.mxu0 0.0
        %5578 = vmatpush1.xpose.msra.mxu0 0.0
        %5579 = vmatprep.subr.mxu0 0.0
        %5580 = vmatpush1.xpose.msra.mxu0 0.0
        %5581 = vmatprep.subr.mxu0 0.0
        %5582 = vmatpush1.xpose.msra.mxu0 0.0
        %5583 = vmatprep.subr.mxu0 0.0
        %5584 = vmatpush1.xpose.msra.mxu0 0.0
        %5585 = vmatprep.subr.mxu0 0.0
        %5586 = vmatpush1.xpose.msra.mxu0 0.0
        %5587 = vmatprep.subr.mxu0 0.0
        %5588 = vmatpush1.xpose.msra.mxu0 0.0
        %5589 = vmatprep.subr.mxu0 0.0
        %5590 = vmatpush1.xpose.msra.mxu0 0.0
        %5591 = vmatprep.subr.mxu0 0.0
        %5592 = vmatpush1.xpose.msra.mxu0 0.0
        %5593 = vmatprep.subr.mxu0 0.0
        %5594 = vmatpush1.xpose.msra.mxu0 0.0
        %5595 = vmatprep.subr.mxu0 0.0
        %5596 = vmatpush1.xpose.msra.mxu0 0.0
        %5597 = vmatprep.mubr.f32.mxu0 0.0
        %5598 = vmatmul.mubr.f32.gmra.mrb[0].mxu0 %v5529
        %v5599 = vpop.f32.mrb[0].mxu0
        %v5600 = vadd.f32 0.0, %v5599
        %v5601 = vpop.f32.mrb[0].mxu0
        %5602 = vdwg.mxu0
        %v5603 = vmul.f32 %v5600, 0.35355338
        %v5604 = vadd.f32 %v5603, %v2881
        %v5605 = vsel %vm457, %v5604, -inf
        %5606 = vmax.xlane.f32.xlu0 %v5605
        %v5607 = vpop.xlane.xlu0 %5606
        %v5608 = vsub.f32 %v5604, %v5607
        %v5609 = vmul.f32 %v5608, 1.442695
        %v5610 = vpow.pop %v5609
        %v5611 = vsel %vm457, %v5610, 0.0
        %5612 = vadd.xlane.f32.xlu0 %v5611
        %v5613 = vpop.xlane.xlu0 %5612
        %v5614 = vrcp.pop %v5613
        %v5615 = vmul.f32 %v5610, %v5614
        %5616 = vrot.lane.b32.xlu0 %v5345, 56
        %v5617 = vpop.permute.xlu0 %5616
        %v5620 = vsel %vm457, %v5615, 0
        %5622 = vmatprep.subr.mxu0 0.0
        %5623 = vmatpush1.msra.mxu0 %v5617
        %5624 = vmatprep.subr.mxu0 0.0
        %5625 = vmatpush1.msra.mxu0 0.0
        %5626 = vmatprep.subr.mxu0 0.0
        %5627 = vmatpush1.msra.mxu0 0.0
        %5628 = vmatprep.subr.mxu0 0.0
        %5629 = vmatpush1.msra.mxu0 0.0
        %5630 = vmatprep.subr.mxu0 0.0
        %5631 = vmatpush1.msra.mxu0 0.0
        %5632 = vmatprep.subr.mxu0 0.0
        %5633 = vmatpush1.msra.mxu0 0.0
        %5634 = vmatprep.subr.mxu0 0.0
        %5635 = vmatpush1.msra.mxu0 0.0
        %5636 = vmatprep.subr.mxu0 0.0
        %5637 = vmatpush1.msra.mxu0 0.0
        %5638 = vmatprep.subr.mxu0 0.0
        %5639 = vmatpush1.msra.mxu0 0.0
        %5640 = vmatprep.subr.mxu0 0.0
        %5641 = vmatpush1.msra.mxu0 0.0
        %5642 = vmatprep.subr.mxu0 0.0
        %5643 = vmatpush1.msra.mxu0 0.0
        %5644 = vmatprep.subr.mxu0 0.0
        %5645 = vmatpush1.msra.mxu0 0.0
        %5646 = vmatprep.subr.mxu0 0.0
        %5647 = vmatpush1.msra.mxu0 0.0
        %5648 = vmatprep.subr.mxu0 0.0
        %5649 = vmatpush1.msra.mxu0 0.0
        %5650 = vmatprep.subr.mxu0 0.0
        %5651 = vmatpush1.msra.mxu0 0.0
        %5652 = vmatprep.subr.mxu0 0.0
        %5653 = vmatpush1.msra.mxu0 0.0
        %5654 = vmatprep.subr.mxu0 0.0
        %5655 = vmatpush1.msra.mxu0 0.0
        %5656 = vmatprep.subr.mxu0 0.0
        %5657 = vmatpush1.msra.mxu0 0.0
        %5658 = vmatprep.subr.mxu0 0.0
        %5659 = vmatpush1.msra.mxu0 0.0
        %5660 = vmatprep.subr.mxu0 0.0
        %5661 = vmatpush1.msra.mxu0 0.0
        %5662 = vmatprep.subr.mxu0 0.0
        %5663 = vmatpush1.msra.mxu0 0.0
        %5664 = vmatprep.subr.mxu0 0.0
        %5665 = vmatpush1.msra.mxu0 0.0
        %5666 = vmatprep.subr.mxu0 0.0
        %5667 = vmatpush1.msra.mxu0 0.0
        %5668 = vmatprep.subr.mxu0 0.0
        %5669 = vmatpush1.msra.mxu0 0.0
        %5670 = vmatprep.subr.mxu0 0.0
        %5671 = vmatpush1.msra.mxu0 0.0
        %5672 = vmatprep.subr.mxu0 0.0
        %5673 = vmatpush1.msra.mxu0 0.0
        %5674 = vmatprep.subr.mxu0 0.0
        %5675 = vmatpush1.msra.mxu0 0.0
        %5676 = vmatprep.subr.mxu0 0.0
        %5677 = vmatpush1.msra.mxu0 0.0
        %5678 = vmatprep.subr.mxu0 0.0
        %5679 = vmatpush1.msra.mxu0 0.0
        %5680 = vmatprep.subr.mxu0 0.0
        %5681 = vmatpush1.msra.mxu0 0.0
        %5682 = vmatprep.subr.mxu0 0.0
        %5683 = vmatpush1.msra.mxu0 0.0
        %5684 = vmatprep.subr.mxu0 0.0
        %5685 = vmatpush1.msra.mxu0 0.0
        %5686 = vmatprep.mubr.f32.mxu0 0.0
        %5687 = vmatmul.mubr.f32.gmra.mrb[0].mxu0 %v5620
        %v5688 = vpop.f32.mrb[0].mxu0
        %v5689 = vadd.f32 0.0, %v5688
        %v5690 = vpop.f32.mrb[0].mxu0
        %5691 = vdwg.mxu0
        %v5693 = vsel %vm457, %v5689, 0
        %5695 = vmatprep.subr.mxu0 0.0
        %5696 = vmatpush1.msra.mxu0 %v5356
        %5697 = vmatprep.subr.mxu0 0.0
        %5698 = vmatpush1.msra.mxu0 0.0
        %5699 = vmatprep.subr.mxu0 0.0
        %5700 = vmatpush1.msra.mxu0 0.0
        %5701 = vmatprep.subr.mxu0 0.0
        %5702 = vmatpush1.msra.mxu0 0.0
        %5703 = vmatprep.subr.mxu0 0.0
        %5704 = vmatpush1.msra.mxu0 0.0
        %5705 = vmatprep.subr.mxu0 0.0
        %5706 = vmatpush1.msra.mxu0 0.0
        %5707 = vmatprep.subr.mxu0 0.0
        %5708 = vmatpush1.msra.mxu0 0.0
        %5709 = vmatprep.subr.mxu0 0.0
        %5710 = vmatpush1.msra.mxu0 0.0
        %5711 = vmatprep.subr.mxu0 0.0
        %5712 = vmatpush1.msra.mxu0 0.0
        %5713 = vmatprep.subr.mxu0 0.0
        %5714 = vmatpush1.msra.mxu0 0.0
        %5715 = vmatprep.subr.mxu0 0.0
        %5716 = vmatpush1.msra.mxu0 0.0
        %5717 = vmatprep.subr.mxu0 0.0
        %5718 = vmatpush1.msra.mxu0 0.0
        %5719 = vmatprep.subr.mxu0 0.0
        %5720 = vmatpush1.msra.mxu0 0.0
        %5721 = vmatprep.subr.mxu0 0.0
        %5722 = vmatpush1.msra.mxu0 0.0
        %5723 = vmatprep.subr.mxu0 0.0
        %5724 = vmatpush1.msra.mxu0 0.0
        %5725 = vmatprep.subr.mxu0 0.0
        %5726 = vmatpush1.msra.mxu0 0.0
        %5727 = vmatprep.subr.mxu0 0.0
        %5728 = vmatpush1.msra.mxu0 0.0
        %5729 = vmatprep.subr.mxu0 0.0
        %5730 = vmatpush1.msra.mxu0 0.0
        %5731 = vmatprep.subr.mxu0 0.0
        %5732 = vmatpush1.msra.mxu0 0.0
        %5733 = vmatprep.subr.mxu0 0.0
        %5734 = vmatpush1.msra.mxu0 0.0
        %5735 = vmatprep.subr.mxu0 0.0
        %5736 = vmatpush1.msra.mxu0 0.0
        %5737 = vmatprep.subr.mxu0 0.0
        %5738 = vmatpush1.msra.mxu0 0.0
        %5739 = vmatprep.subr.mxu0 0.0
        %5740 = vmatpush1.msra.mxu0 0.0
        %5741 = vmatprep.subr.mxu0 0.0
        %5742 = vmatpush1.msra.mxu0 0.0
        %5743 = vmatprep.subr.mxu0 0.0
        %5744 = vmatpush1.msra.mxu0 0.0
        %5745 = vmatprep.subr.mxu0 0.0
        %5746 = vmatpush1.msra.mxu0 0.0
        %5747 = vmatprep.subr.mxu0 0.0
        %5748 = vmatpush1.msra.mxu0 0.0
        %5749 = vmatprep.subr.mxu0 0.0
        %5750 = vmatpush1.msra.mxu0 0.0
        %5751 = vmatprep.subr.mxu0 0.0
        %5752 = vmatpush1.msra.mxu0 0.0
        %5753 = vmatprep.subr.mxu0 0.0
        %5754 = vmatpush1.msra.mxu0 0.0
        %5755 = vmatprep.subr.mxu0 0.0
        %5756 = vmatpush1.msra.mxu0 0.0
        %5757 = vmatprep.subr.mxu0 0.0
        %5758 = vmatpush1.msra.mxu0 0.0
        %5759 = vmatprep.mubr.f32.mxu0 0.0
        %5760 = vmatmul.mubr.f32.gmra.mrb[0].mxu0 %v5693
        %v5761 = vpop.f32.mrb[0].mxu0
        %v5762 = vadd.f32 0.0, %v5761
        %v5763 = vpop.f32.mrb[0].mxu0
        %5764 = vdwg.mxu0
        %v5766 = vsel %vm457, %v5522, 0
        %5768 = vmatprep.subr.mxu0 0.0
        %5769 = vmatpush1.msra.mxu0 %v5355
        %5770 = vmatprep.subr.mxu0 0.0
        %5771 = vmatpush1.msra.mxu0 0.0
        %5772 = vmatprep.subr.mxu0 0.0
        %5773 = vmatpush1.msra.mxu0 0.0
        %5774 = vmatprep.subr.mxu0 0.0
        %5775 = vmatpush1.msra.mxu0 0.0
        %5776 = vmatprep.subr.mxu0 0.0
        %5777 = vmatpush1.msra.mxu0 0.0
        %5778 = vmatprep.subr.mxu0 0.0
        %5779 = vmatpush1.msra.mxu0 0.0
        %5780 = vmatprep.subr.mxu0 0.0
        %5781 = vmatpush1.msra.mxu0 0.0
        %5782 = vmatprep.subr.mxu0 0.0
        %5783 = vmatpush1.msra.mxu0 0.0
        %5784 = vmatprep.subr.mxu0 0.0
        %5785 = vmatpush1.msra.mxu0 0.0
        %5786 = vmatprep.subr.mxu0 0.0
        %5787 = vmatpush1.msra.mxu0 0.0
        %5788 = vmatprep.subr.mxu0 0.0
        %5789 = vmatpush1.msra.mxu0 0.0
        %5790 = vmatprep.subr.mxu0 0.0
        %5791 = vmatpush1.msra.mxu0 0.0
        %5792 = vmatprep.subr.mxu0 0.0
        %5793 = vmatpush1.msra.mxu0 0.0
        %5794 = vmatprep.subr.mxu0 0.0
        %5795 = vmatpush1.msra.mxu0 0.0
        %5796 = vmatprep.subr.mxu0 0.0
        %5797 = vmatpush1.msra.mxu0 0.0
        %5798 = vmatprep.subr.mxu0 0.0
        %5799 = vmatpush1.msra.mxu0 0.0
        %5800 = vmatprep.subr.mxu0 0.0
        %5801 = vmatpush1.msra.mxu0 0.0
        %5802 = vmatprep.subr.mxu0 0.0
        %5803 = vmatpush1.msra.mxu0 0.0
        %5804 = vmatprep.subr.mxu0 0.0
        %5805 = vmatpush1.msra.mxu0 0.0
        %5806 = vmatprep.subr.mxu0 0.0
        %5807 = vmatpush1.msra.mxu0 0.0
        %5808 = vmatprep.subr.mxu0 0.0
        %5809 = vmatpush1.msra.mxu0 0.0
        %5810 = vmatprep.subr.mxu0 0.0
        %5811 = vmatpush1.msra.mxu0 0.0
        %5812 = vmatprep.subr.mxu0 0.0
        %5813 = vmatpush1.msra.mxu0 0.0
        %5814 = vmatprep.subr.mxu0 0.0
        %5815 = vmatpush1.msra.mxu0 0.0
        %5816 = vmatprep.subr.mxu0 0.0
        %5817 = vmatpush1.msra.mxu0 0.0
        %5818 = vmatprep.subr.mxu0 0.0
        %5819 = vmatpush1.msra.mxu0 0.0
        %5820 = vmatprep.subr.mxu0 0.0
        %5821 = vmatpush1.msra.mxu0 0.0
        %5822 = vmatprep.subr.mxu0 0.0
        %5823 = vmatpush1.msra.mxu0 0.0
        %5824 = vmatprep.subr.mxu0 0.0
        %5825 = vmatpush1.msra.mxu0 0.0
        %5826 = vmatprep.subr.mxu0 0.0
        %5827 = vmatpush1.msra.mxu0 0.0
        %5828 = vmatprep.subr.mxu0 0.0
        %5829 = vmatpush1.msra.mxu0 0.0
        %5830 = vmatprep.subr.mxu0 0.0
        %5831 = vmatpush1.msra.mxu0 0.0
        %5832 = vmatprep.mubr.f32.mxu0 0.0
        %5833 = vmatmul.mubr.f32.gmra.mrb[0].mxu0 %v5766
        %v5834 = vpop.f32.mrb[0].mxu0
        %v5835 = vadd.f32 %v5762, %v5834
        %v5836 = vpop.f32.mrb[0].mxu0
        %5837 = vdwg.mxu0
        %5838 = vrot.lane.b32.xlu0 %v5345, 112
        %v5839 = vpop.permute.xlu0 %5838
        %5840 = vrot.lane.b32.xlu0 %v5345, 80
        %v5841 = vpop.permute.xlu0 %5840
        %v5842 = vsel %vm457, %v5839, 0
        %v5844 = vsel %vm457, %v5841, 0
        %5846 = vmatprep.subr.mxu0 0.0
        %5847 = vmatpush1.xpose.msra.mxu0 %v5844
        %5848 = vmatprep.subr.mxu0 0.0
        %5849 = vmatpush1.xpose.msra.mxu0 0.0
        %5850 = vmatprep.subr.mxu0 0.0
        %5851 = vmatpush1.xpose.msra.mxu0 0.0
        %5852 = vmatprep.subr.mxu0 0.0
        %5853 = vmatpush1.xpose.msra.mxu0 0.0
        %5854 = vmatprep.subr.mxu0 0.0
        %5855 = vmatpush1.xpose.msra.mxu0 0.0
        %5856 = vmatprep.subr.mxu0 0.0
        %5857 = vmatpush1.xpose.msra.mxu0 0.0
        %5858 = vmatprep.subr.mxu0 0.0
        %5859 = vmatpush1.xpose.msra.mxu0 0.0
        %5860 = vmatprep.subr.mxu0 0.0
        %5861 = vmatpush1.xpose.msra.mxu0 0.0
        %5862 = vmatprep.subr.mxu0 0.0
        %5863 = vmatpush1.xpose.msra.mxu0 0.0
        %5864 = vmatprep.subr.mxu0 0.0
        %5865 = vmatpush1.xpose.msra.mxu0 0.0
        %5866 = vmatprep.subr.mxu0 0.0
        %5867 = vmatpush1.xpose.msra.mxu0 0.0
        %5868 = vmatprep.subr.mxu0 0.0
        %5869 = vmatpush1.xpose.msra.mxu0 0.0
        %5870 = vmatprep.subr.mxu0 0.0
        %5871 = vmatpush1.xpose.msra.mxu0 0.0
        %5872 = vmatprep.subr.mxu0 0.0
        %5873 = vmatpush1.xpose.msra.mxu0 0.0
        %5874 = vmatprep.subr.mxu0 0.0
        %5875 = vmatpush1.xpose.msra.mxu0 0.0
        %5876 = vmatprep.subr.mxu0 0.0
        %5877 = vmatpush1.xpose.msra.mxu0 0.0
        %5878 = vmatprep.subr.mxu0 0.0
        %5879 = vmatpush1.xpose.msra.mxu0 0.0
        %5880 = vmatprep.subr.mxu0 0.0
        %5881 = vmatpush1.xpose.msra.mxu0 0.0
        %5882 = vmatprep.subr.mxu0 0.0
        %5883 = vmatpush1.xpose.msra.mxu0 0.0
        %5884 = vmatprep.subr.mxu0 0.0
        %5885 = vmatpush1.xpose.msra.mxu0 0.0
        %5886 = vmatprep.subr.mxu0 0.0
        %5887 = vmatpush1.xpose.msra.mxu0 0.0
        %5888 = vmatprep.subr.mxu0 0.0
        %5889 = vmatpush1.xpose.msra.mxu0 0.0
        %5890 = vmatprep.subr.mxu0 0.0
        %5891 = vmatpush1.xpose.msra.mxu0 0.0
        %5892 = vmatprep.subr.mxu0 0.0
        %5893 = vmatpush1.xpose.msra.mxu0 0.0
        %5894 = vmatprep.subr.mxu0 0.0
        %5895 = vmatpush1.xpose.msra.mxu0 0.0
        %5896 = vmatprep.subr.mxu0 0.0
        %5897 = vmatpush1.xpose.msra.mxu0 0.0
        %5898 = vmatprep.subr.mxu0 0.0
        %5899 = vmatpush1.xpose.msra.mxu0 0.0
        %5900 = vmatprep.subr.mxu0 0.0
        %5901 = vmatpush1.xpose.msra.mxu0 0.0
        %5902 = vmatprep.subr.mxu0 0.0
        %5903 = vmatpush1.xpose.msra.mxu0 0.0
        %5904 = vmatprep.subr.mxu0 0.0
        %5905 = vmatpush1.xpose.msra.mxu0 0.0
        %5906 = vmatprep.subr.mxu0 0.0
        %5907 = vmatpush1.xpose.msra.mxu0 0.0
        %5908 = vmatprep.subr.mxu0 0.0
        %5909 = vmatpush1.xpose.msra.mxu0 0.0
        %5910 = vmatprep.mubr.f32.mxu0 0.0
        %5911 = vmatmul.mubr.f32.gmra.mrb[0].mxu0 %v5842
        %v5912 = vpop.f32.mrb[0].mxu0
        %v5913 = vadd.f32 0.0, %v5912
        %v5914 = vpop.f32.mrb[0].mxu0
        %5915 = vdwg.mxu0
        %v5916 = vmul.f32 %v5913, 0.35355338
        %v5917 = vadd.f32 %v5916, %v2881
        %v5918 = vsel %vm457, %v5917, -inf
        %5919 = vmax.xlane.f32.xlu0 %v5918
        %v5920 = vpop.xlane.xlu0 %5919
        %v5921 = vsub.f32 %v5917, %v5920
        %v5922 = vmul.f32 %v5921, 1.442695
        %v5923 = vpow.pop %v5922
        %v5924 = vsel %vm457, %v5923, 0.0
        %5925 = vadd.xlane.f32.xlu0 %v5924
        %v5926 = vpop.xlane.xlu0 %5925
        %v5927 = vrcp.pop %v5926
        %v5928 = vmul.f32 %v5923, %v5927
        %5929 = vrot.lane.b32.xlu0 %v5345, 48
        %v5930 = vpop.permute.xlu0 %5929
        %v5933 = vsel %vm457, %v5928, 0
        %5935 = vmatprep.subr.mxu0 0.0
        %5936 = vmatpush1.msra.mxu0 %v5930
        %5937 = vmatprep.subr.mxu0 0.0
        %5938 = vmatpush1.msra.mxu0 0.0
        %5939 = vmatprep.subr.mxu0 0.0
        %5940 = vmatpush1.msra.mxu0 0.0
        %5941 = vmatprep.subr.mxu0 0.0
        %5942 = vmatpush1.msra.mxu0 0.0
        %5943 = vmatprep.subr.mxu0 0.0
        %5944 = vmatpush1.msra.mxu0 0.0
        %5945 = vmatprep.subr.mxu0 0.0
        %5946 = vmatpush1.msra.mxu0 0.0
        %5947 = vmatprep.subr.mxu0 0.0
        %5948 = vmatpush1.msra.mxu0 0.0
        %5949 = vmatprep.subr.mxu0 0.0
        %5950 = vmatpush1.msra.mxu0 0.0
        %5951 = vmatprep.subr.mxu0 0.0
        %5952 = vmatpush1.msra.mxu0 0.0
        %5953 = vmatprep.subr.mxu0 0.0
        %5954 = vmatpush1.msra.mxu0 0.0
        %5955 = vmatprep.subr.mxu0 0.0
        %5956 = vmatpush1.msra.mxu0 0.0
        %5957 = vmatprep.subr.mxu0 0.0
        %5958 = vmatpush1.msra.mxu0 0.0
        %5959 = vmatprep.subr.mxu0 0.0
        %5960 = vmatpush1.msra.mxu0 0.0
        %5961 = vmatprep.subr.mxu0 0.0
        %5962 = vmatpush1.msra.mxu0 0.0
        %5963 = vmatprep.subr.mxu0 0.0
        %5964 = vmatpush1.msra.mxu0 0.0
        %5965 = vmatprep.subr.mxu0 0.0
        %5966 = vmatpush1.msra.mxu0 0.0
        %5967 = vmatprep.subr.mxu0 0.0
        %5968 = vmatpush1.msra.mxu0 0.0
        %5969 = vmatprep.subr.mxu0 0.0
        %5970 = vmatpush1.msra.mxu0 0.0
        %5971 = vmatprep.subr.mxu0 0.0
        %5972 = vmatpush1.msra.mxu0 0.0
        %5973 = vmatprep.subr.mxu0 0.0
        %5974 = vmatpush1.msra.mxu0 0.0
        %5975 = vmatprep.subr.mxu0 0.0
        %5976 = vmatpush1.msra.mxu0 0.0
        %5977 = vmatprep.subr.mxu0 0.0
        %5978 = vmatpush1.msra.mxu0 0.0
        %5979 = vmatprep.subr.mxu0 0.0
        %5980 = vmatpush1.msra.mxu0 0.0
        %5981 = vmatprep.subr.mxu0 0.0
        %5982 = vmatpush1.msra.mxu0 0.0
        %5983 = vmatprep.subr.mxu0 0.0
        %5984 = vmatpush1.msra.mxu0 0.0
        %5985 = vmatprep.subr.mxu0 0.0
        %5986 = vmatpush1.msra.mxu0 0.0
        %5987 = vmatprep.subr.mxu0 0.0
        %5988 = vmatpush1.msra.mxu0 0.0
        %5989 = vmatprep.subr.mxu0 0.0
        %5990 = vmatpush1.msra.mxu0 0.0
        %5991 = vmatprep.subr.mxu0 0.0
        %5992 = vmatpush1.msra.mxu0 0.0
        %5993 = vmatprep.subr.mxu0 0.0
        %5994 = vmatpush1.msra.mxu0 0.0
        %5995 = vmatprep.subr.mxu0 0.0
        %5996 = vmatpush1.msra.mxu0 0.0
        %5997 = vmatprep.subr.mxu0 0.0
        %5998 = vmatpush1.msra.mxu0 0.0
        %5999 = vmatprep.mubr.f32.mxu0 0.0
        %6000 = vmatmul.mubr.f32.gmra.mrb[0].mxu0 %v5933
        %v6001 = vpop.f32.mrb[0].mxu0
        %v6002 = vadd.f32 0.0, %v6001
        %v6003 = vpop.f32.mrb[0].mxu0
        %6004 = vdwg.mxu0
        %v6006 = vsel %vm457, %v6002, 0
        %6008 = vmatprep.subr.mxu0 0.0
        %6009 = vmatpush1.msra.mxu0 %v5357
        %6010 = vmatprep.subr.mxu0 0.0
        %6011 = vmatpush1.msra.mxu0 0.0
        %6012 = vmatprep.subr.mxu0 0.0
        %6013 = vmatpush1.msra.mxu0 0.0
        %6014 = vmatprep.subr.mxu0 0.0
        %6015 = vmatpush1.msra.mxu0 0.0
        %6016 = vmatprep.subr.mxu0 0.0
        %6017 = vmatpush1.msra.mxu0 0.0
        %6018 = vmatprep.subr.mxu0 0.0
        %6019 = vmatpush1.msra.mxu0 0.0
        %6020 = vmatprep.subr.mxu0 0.0
        %6021 = vmatpush1.msra.mxu0 0.0
        %6022 = vmatprep.subr.mxu0 0.0
        %6023 = vmatpush1.msra.mxu0 0.0
        %6024 = vmatprep.subr.mxu0 0.0
        %6025 = vmatpush1.msra.mxu0 0.0
        %6026 = vmatprep.subr.mxu0 0.0
        %6027 = vmatpush1.msra.mxu0 0.0
        %6028 = vmatprep.subr.mxu0 0.0
        %6029 = vmatpush1.msra.mxu0 0.0
        %6030 = vmatprep.subr.mxu0 0.0
        %6031 = vmatpush1.msra.mxu0 0.0
        %6032 = vmatprep.subr.mxu0 0.0
        %6033 = vmatpush1.msra.mxu0 0.0
        %6034 = vmatprep.subr.mxu0 0.0
        %6035 = vmatpush1.msra.mxu0 0.0
        %6036 = vmatprep.subr.mxu0 0.0
        %6037 = vmatpush1.msra.mxu0 0.0
        %6038 = vmatprep.subr.mxu0 0.0
        %6039 = vmatpush1.msra.mxu0 0.0
        %6040 = vmatprep.subr.mxu0 0.0
        %6041 = vmatpush1.msra.mxu0 0.0
        %6042 = vmatprep.subr.mxu0 0.0
        %6043 = vmatpush1.msra.mxu0 0.0
        %6044 = vmatprep.subr.mxu0 0.0
        %6045 = vmatpush1.msra.mxu0 0.0
        %6046 = vmatprep.subr.mxu0 0.0
        %6047 = vmatpush1.msra.mxu0 0.0
        %6048 = vmatprep.subr.mxu0 0.0
        %6049 = vmatpush1.msra.mxu0 0.0
        %6050 = vmatprep.subr.mxu0 0.0
        %6051 = vmatpush1.msra.mxu0 0.0
        %6052 = vmatprep.subr.mxu0 0.0
        %6053 = vmatpush1.msra.mxu0 0.0
        %6054 = vmatprep.subr.mxu0 0.0
        %6055 = vmatpush1.msra.mxu0 0.0
        %6056 = vmatprep.subr.mxu0 0.0
        %6057 = vmatpush1.msra.mxu0 0.0
        %6058 = vmatprep.subr.mxu0 0.0
        %6059 = vmatpush1.msra.mxu0 0.0
        %6060 = vmatprep.subr.mxu0 0.0
        %6061 = vmatpush1.msra.mxu0 0.0
        %6062 = vmatprep.subr.mxu0 0.0
        %6063 = vmatpush1.msra.mxu0 0.0
        %6064 = vmatprep.subr.mxu0 0.0
        %6065 = vmatpush1.msra.mxu0 0.0
        %6066 = vmatprep.subr.mxu0 0.0
        %6067 = vmatpush1.msra.mxu0 0.0
        %6068 = vmatprep.subr.mxu0 0.0
        %6069 = vmatpush1.msra.mxu0 0.0
        %6070 = vmatprep.subr.mxu0 0.0
        %6071 = vmatpush1.msra.mxu0 0.0
        %6072 = vmatprep.mubr.f32.mxu0 0.0
        %6073 = vmatmul.mubr.f32.gmra.mrb[0].mxu0 %v6006
        %v6074 = vpop.f32.mrb[0].mxu0
        %v6075 = vadd.f32 0.0, %v6074
        %v6076 = vpop.f32.mrb[0].mxu0
        %6077 = vdwg.mxu0
        %v6078 = vadd.f32 %v5835, %v6075
        %6079 = vrot.lane.b32.xlu0 %v5345, 104
        %v6080 = vpop.permute.xlu0 %6079
        %6081 = vrot.lane.b32.xlu0 %v5345, 72
        %v6082 = vpop.permute.xlu0 %6081
        %v6083 = vsel %vm457, %v6080, 0
        %v6085 = vsel %vm457, %v6082, 0
        %6087 = vmatprep.subr.mxu0 0.0
        %6088 = vmatpush1.xpose.msra.mxu0 %v6085
        %6089 = vmatprep.subr.mxu0 0.0
        %6090 = vmatpush1.xpose.msra.mxu0 0.0
        %6091 = vmatprep.subr.mxu0 0.0
        %6092 = vmatpush1.xpose.msra.mxu0 0.0
        %6093 = vmatprep.subr.mxu0 0.0
        %6094 = vmatpush1.xpose.msra.mxu0 0.0
        %6095 = vmatprep.subr.mxu0 0.0
        %6096 = vmatpush1.xpose.msra.mxu0 0.0
        %6097 = vmatprep.subr.mxu0 0.0
        %6098 = vmatpush1.xpose.msra.mxu0 0.0
        %6099 = vmatprep.subr.mxu0 0.0
        %6100 = vmatpush1.xpose.msra.mxu0 0.0
        %6101 = vmatprep.subr.mxu0 0.0
        %6102 = vmatpush1.xpose.msra.mxu0 0.0
        %6103 = vmatprep.subr.mxu0 0.0
        %6104 = vmatpush1.xpose.msra.mxu0 0.0
        %6105 = vmatprep.subr.mxu0 0.0
        %6106 = vmatpush1.xpose.msra.mxu0 0.0
        %6107 = vmatprep.subr.mxu0 0.0
        %6108 = vmatpush1.xpose.msra.mxu0 0.0
        %6109 = vmatprep.subr.mxu0 0.0
        %6110 = vmatpush1.xpose.msra.mxu0 0.0
        %6111 = vmatprep.subr.mxu0 0.0
        %6112 = vmatpush1.xpose.msra.mxu0 0.0
        %6113 = vmatprep.subr.mxu0 0.0
        %6114 = vmatpush1.xpose.msra.mxu0 0.0
        %6115 = vmatprep.subr.mxu0 0.0
        %6116 = vmatpush1.xpose.msra.mxu0 0.0
        %6117 = vmatprep.subr.mxu0 0.0
        %6118 = vmatpush1.xpose.msra.mxu0 0.0
        %6119 = vmatprep.subr.mxu0 0.0
        %6120 = vmatpush1.xpose.msra.mxu0 0.0
        %6121 = vmatprep.subr.mxu0 0.0
        %6122 = vmatpush1.xpose.msra.mxu0 0.0
        %6123 = vmatprep.subr.mxu0 0.0
        %6124 = vmatpush1.xpose.msra.mxu0 0.0
        %6125 = vmatprep.subr.mxu0 0.0
        %6126 = vmatpush1.xpose.msra.mxu0 0.0
        %6127 = vmatprep.subr.mxu0 0.0
        %6128 = vmatpush1.xpose.msra.mxu0 0.0
        %6129 = vmatprep.subr.mxu0 0.0
        %6130 = vmatpush1.xpose.msra.mxu0 0.0
        %6131 = vmatprep.subr.mxu0 0.0
        %6132 = vmatpush1.xpose.msra.mxu0 0.0
        %6133 = vmatprep.subr.mxu0 0.0
        %6134 = vmatpush1.xpose.msra.mxu0 0.0
        %6135 = vmatprep.subr.mxu0 0.0
        %6136 = vmatpush1.xpose.msra.mxu0 0.0
        %6137 = vmatprep.subr.mxu0 0.0
        %6138 = vmatpush1.xpose.msra.mxu0 0.0
        %6139 = vmatprep.subr.mxu0 0.0
        %6140 = vmatpush1.xpose.msra.mxu0 0.0
        %6141 = vmatprep.subr.mxu0 0.0
        %6142 = vmatpush1.xpose.msra.mxu0 0.0
        %6143 = vmatprep.subr.mxu0 0.0
        %6144 = vmatpush1.xpose.msra.mxu0 0.0
        %6145 = vmatprep.subr.mxu0 0.0
        %6146 = vmatpush1.xpose.msra.mxu0 0.0
        %6147 = vmatprep.subr.mxu0 0.0
        %6148 = vmatpush1.xpose.msra.mxu0 0.0
        %6149 = vmatprep.subr.mxu0 0.0
        %6150 = vmatpush1.xpose.msra.mxu0 0.0
        %6151 = vmatprep.mubr.f32.mxu0 0.0
        %6152 = vmatmul.mubr.f32.gmra.mrb[0].mxu0 %v6083
        %v6153 = vpop.f32.mrb[0].mxu0
        %v6154 = vadd.f32 0.0, %v6153
        %v6155 = vpop.f32.mrb[0].mxu0
        %6156 = vdwg.mxu0
        %v6157 = vmul.f32 %v6154, 0.35355338
        %v6158 = vadd.f32 %v6157, %v2881
        %v6159 = vsel %vm457, %v6158, -inf
        %6160 = vmax.xlane.f32.xlu0 %v6159
        %v6161 = vpop.xlane.xlu0 %6160
        %v6162 = vsub.f32 %v6158, %v6161
        %v6163 = vmul.f32 %v6162, 1.442695
        %v6164 = vpow.pop %v6163
        %v6165 = vsel %vm457, %v6164, 0.0
        %6166 = vadd.xlane.f32.xlu0 %v6165
        %v6167 = vpop.xlane.xlu0 %6166
        %v6168 = vrcp.pop %v6167
        %v6169 = vmul.f32 %v6164, %v6168
        %6170 = vrot.lane.b32.xlu0 %v5345, 40
        %v6171 = vpop.permute.xlu0 %6170
        %v6174 = vsel %vm457, %v6169, 0
        %6176 = vmatprep.subr.mxu0 0.0
        %6177 = vmatpush1.msra.mxu0 %v6171
        %6178 = vmatprep.subr.mxu0 0.0
        %6179 = vmatpush1.msra.mxu0 0.0
        %6180 = vmatprep.subr.mxu0 0.0
        %6181 = vmatpush1.msra.mxu0 0.0
        %6182 = vmatprep.subr.mxu0 0.0
        %6183 = vmatpush1.msra.mxu0 0.0
        %6184 = vmatprep.subr.mxu0 0.0
        %6185 = vmatpush1.msra.mxu0 0.0
        %6186 = vmatprep.subr.mxu0 0.0
        %6187 = vmatpush1.msra.mxu0 0.0
        %6188 = vmatprep.subr.mxu0 0.0
        %6189 = vmatpush1.msra.mxu0 0.0
        %6190 = vmatprep.subr.mxu0 0.0
        %6191 = vmatpush1.msra.mxu0 0.0
        %6192 = vmatprep.subr.mxu0 0.0
        %6193 = vmatpush1.msra.mxu0 0.0
        %6194 = vmatprep.subr.mxu0 0.0
        %6195 = vmatpush1.msra.mxu0 0.0
        %6196 = vmatprep.subr.mxu0 0.0
        %6197 = vmatpush1.msra.mxu0 0.0
        %6198 = vmatprep.subr.mxu0 0.0
        %6199 = vmatpush1.msra.mxu0 0.0
        %6200 = vmatprep.subr.mxu0 0.0
        %6201 = vmatpush1.msra.mxu0 0.0
        %6202 = vmatprep.subr.mxu0 0.0
        %6203 = vmatpush1.msra.mxu0 0.0
        %6204 = vmatprep.subr.mxu0 0.0
        %6205 = vmatpush1.msra.mxu0 0.0
        %6206 = vmatprep.subr.mxu0 0.0
        %6207 = vmatpush1.msra.mxu0 0.0
        %6208 = vmatprep.subr.mxu0 0.0
        %6209 = vmatpush1.msra.mxu0 0.0
        %6210 = vmatprep.subr.mxu0 0.0
        %6211 = vmatpush1.msra.mxu0 0.0
        %6212 = vmatprep.subr.mxu0 0.0
        %6213 = vmatpush1.msra.mxu0 0.0
        %6214 = vmatprep.subr.mxu0 0.0
        %6215 = vmatpush1.msra.mxu0 0.0
        %6216 = vmatprep.subr.mxu0 0.0
        %6217 = vmatpush1.msra.mxu0 0.0
        %6218 = vmatprep.subr.mxu0 0.0
        %6219 = vmatpush1.msra.mxu0 0.0
        %6220 = vmatprep.subr.mxu0 0.0
        %6221 = vmatpush1.msra.mxu0 0.0
        %6222 = vmatprep.subr.mxu0 0.0
        %6223 = vmatpush1.msra.mxu0 0.0
        %6224 = vmatprep.subr.mxu0 0.0
        %6225 = vmatpush1.msra.mxu0 0.0
        %6226 = vmatprep.subr.mxu0 0.0
        %6227 = vmatpush1.msra.mxu0 0.0
        %6228 = vmatprep.subr.mxu0 0.0
        %6229 = vmatpush1.msra.mxu0 0.0
        %6230 = vmatprep.subr.mxu0 0.0
        %6231 = vmatpush1.msra.mxu0 0.0
        %6232 = vmatprep.subr.mxu0 0.0
        %6233 = vmatpush1.msra.mxu0 0.0
        %6234 = vmatprep.subr.mxu0 0.0
        %6235 = vmatpush1.msra.mxu0 0.0
        %6236 = vmatprep.subr.mxu0 0.0
        %6237 = vmatpush1.msra.mxu0 0.0
        %6238 = vmatprep.subr.mxu0 0.0
        %6239 = vmatpush1.msra.mxu0 0.0
        %6240 = vmatprep.mubr.f32.mxu0 0.0
        %6241 = vmatmul.mubr.f32.gmra.mrb[0].mxu0 %v6174
        %v6242 = vpop.f32.mrb[0].mxu0
        %v6243 = vadd.f32 0.0, %v6242
        %v6244 = vpop.f32.mrb[0].mxu0
        %6245 = vdwg.mxu0
        %v6247 = vsel %vm457, %v6243, 0
        %6249 = vmatprep.subr.mxu0 0.0
        %6250 = vmatpush1.msra.mxu0 %v5358
        %6251 = vmatprep.subr.mxu0 0.0
        %6252 = vmatpush1.msra.mxu0 0.0
        %6253 = vmatprep.subr.mxu0 0.0
        %6254 = vmatpush1.msra.mxu0 0.0
        %6255 = vmatprep.subr.mxu0 0.0
        %6256 = vmatpush1.msra.mxu0 0.0
        %6257 = vmatprep.subr.mxu0 0.0
        %6258 = vmatpush1.msra.mxu0 0.0
        %6259 = vmatprep.subr.mxu0 0.0
        %6260 = vmatpush1.msra.mxu0 0.0
        %6261 = vmatprep.subr.mxu0 0.0
        %6262 = vmatpush1.msra.mxu0 0.0
        %6263 = vmatprep.subr.mxu0 0.0
        %6264 = vmatpush1.msra.mxu0 0.0
        %6265 = vmatprep.subr.mxu0 0.0
        %6266 = vmatpush1.msra.mxu0 0.0
        %6267 = vmatprep.subr.mxu0 0.0
        %6268 = vmatpush1.msra.mxu0 0.0
        %6269 = vmatprep.subr.mxu0 0.0
        %6270 = vmatpush1.msra.mxu0 0.0
        %6271 = vmatprep.subr.mxu0 0.0
        %6272 = vmatpush1.msra.mxu0 0.0
        %6273 = vmatprep.subr.mxu0 0.0
        %6274 = vmatpush1.msra.mxu0 0.0
        %6275 = vmatprep.subr.mxu0 0.0
        %6276 = vmatpush1.msra.mxu0 0.0
        %6277 = vmatprep.subr.mxu0 0.0
        %6278 = vmatpush1.msra.mxu0 0.0
        %6279 = vmatprep.subr.mxu0 0.0
        %6280 = vmatpush1.msra.mxu0 0.0
        %6281 = vmatprep.subr.mxu0 0.0
        %6282 = vmatpush1.msra.mxu0 0.0
        %6283 = vmatprep.subr.mxu0 0.0
        %6284 = vmatpush1.msra.mxu0 0.0
        %6285 = vmatprep.subr.mxu0 0.0
        %6286 = vmatpush1.msra.mxu0 0.0
        %6287 = vmatprep.subr.mxu0 0.0
        %6288 = vmatpush1.msra.mxu0 0.0
        %6289 = vmatprep.subr.mxu0 0.0
        %6290 = vmatpush1.msra.mxu0 0.0
        %6291 = vmatprep.subr.mxu0 0.0
        %6292 = vmatpush1.msra.mxu0 0.0
        %6293 = vmatprep.subr.mxu0 0.0
        %6294 = vmatpush1.msra.mxu0 0.0
        %6295 = vmatprep.subr.mxu0 0.0
        %6296 = vmatpush1.msra.mxu0 0.0
        %6297 = vmatprep.subr.mxu0 0.0
        %6298 = vmatpush1.msra.mxu0 0.0
        %6299 = vmatprep.subr.mxu0 0.0
        %6300 = vmatpush1.msra.mxu0 0.0
        %6301 = vmatprep.subr.mxu0 0.0
        %6302 = vmatpush1.msra.mxu0 0.0
        %6303 = vmatprep.subr.mxu0 0.0
        %6304 = vmatpush1.msra.mxu0 0.0
        %6305 = vmatprep.subr.mxu0 0.0
        %6306 = vmatpush1.msra.mxu0 0.0
        %6307 = vmatprep.subr.mxu0 0.0
        %6308 = vmatpush1.msra.mxu0 0.0
        %6309 = vmatprep.subr.mxu0 0.0
        %6310 = vmatpush1.msra.mxu0 0.0
        %6311 = vmatprep.subr.mxu0 0.0
        %6312 = vmatpush1.msra.mxu0 0.0
        %6313 = vmatprep.mubr.f32.mxu0 0.0
        %6314 = vmatmul.mubr.f32.gmra.mrb[0].mxu0 %v6247
        %v6315 = vpop.f32.mrb[0].mxu0
        %v6316 = vadd.f32 0.0, %v6315
        %v6317 = vpop.f32.mrb[0].mxu0
        %6318 = vdwg.mxu0
        %v6319 = vadd.f32 %v6078, %v6316
        %v6320 = vadd.f32 %v5258, %v6319
        %v6321 = vld [vmem:[%s5 + $0x22] sm:$0x1]
        %v6322 = vlaneseq
        %v6323 = vshrl.u32 %v6322, 7
        %v6324 = vsub.s32 0, %v6323
        %v6325 = vrot.slane %v6321, %v6324
        %v6326 = vadd.f32 %v6320, %v6325
        %v6327 = vld [vmem:[%s5 + $0x23] sm:$0x1]
        %v6328 = vld [vmem:[%s5 + $0x24] sm:$0x1]
        %v6329 = vsel %vm355, %v6326, 0.0
        %6330 = vadd.xlane.f32.xlu0 %v6329
        %v6331 = vpop.xlane.xlu0 %6330
        %v6332 = vmul.f32 %v6331, %v359
        %v6333 = vsub.f32 %v6326, %v6332
        %v6334 = vmul.f32 %v6333, %v6333
        %v6335 = vsel %vm355, %v6334, 0.0
        %6336 = vadd.xlane.f32.xlu0 %v6335
        %v6337 = vpop.xlane.xlu0 %6336
        %v6338 = vmul.f32 %v6337, %v359
        %v6339 = vadd.f32 %v6338, 1e-06
        %v6340 = vrsqrt.pop %v6339
        %v6341 = vmul.f32 %v6333, %v6340
        %v6342 = vlaneseq
        %v6343 = vshrl.u32 %v6342, 7
        %v6344 = vsub.s32 0, %v6343
        %v6345 = vrot.slane %v6327, %v6344
        %v6346 = vmul.f32 %v6341, %v6345
        %v6347 = vlaneseq
        %v6348 = vshrl.u32 %v6347, 7
        %v6349 = vsub.s32 0, %v6348
        %v6350 = vrot.slane %v6328, %v6349
        %v6351 = vadd.f32 %v6346, %v6350
        %v6352 = vpack.c.bf16 %v6351, %v6351
        %s6353 = scalar_lea.vmem [#allocation2], 544
        %v6354 = vld [vmem:[%s6353] sm:$0xf]
        %v6355 = vld [vmem:[%s6353 + $0x4] sm:$0xf]
        %v6356 = vld [vmem:[%s6353 + $0x8] sm:$0xf]
        %v6357 = vld [vmem:[%s6353 + $0xc] sm:$0xf]
        %v6358 = vld [vmem:[%s5 + $0x25] sm:$0x1]
        %v6359 = vlaneseq
        %v6360 = vshrl.u32 %v6359, 7
        %v6361 = vsub.s32 0, %v6360
        %v6362 = vrot.slane %v6358, %v6361
        %v6367 = vunpack.c.l.b16 %v6354
        %v6368 = vunpack.c.l.b16 %v6355
        %v6369 = vunpack.c.l.b16 %v6356
        %v6370 = vunpack.c.l.b16 %v6357
        %v6371 = vpack.c.b16 %v6368, %v6367
        %v6372 = vpack.c.b16 %v6370, %v6369
        %v6376 = vsel %vm355, %v6352, 0
        %6378 = vmatprep.subr.bf16.mxu0 0
        %6379 = vmatpush1.bf16.msra.mxu0 %v6371
        %6380 = vmatprep.subr.bf16.mxu0 0
        %6381 = vmatpush1.bf16.msra.mxu0 %v6372
        %6382 = vmatprep.subr.bf16.mxu0 0
        %6383 = vmatpush1.bf16.msra.mxu0 0
        %6384 = vmatprep.subr.bf16.mxu0 0
        %6385 = vmatpush1.bf16.msra.mxu0 0
        %6386 = vmatprep.subr.bf16.mxu0 0
        %6387 = vmatpush1.bf16.msra.mxu0 0
        %6388 = vmatprep.subr.bf16.mxu0 0
        %6389 = vmatpush1.bf16.msra.mxu0 0
        %6390 = vmatprep.subr.bf16.mxu0 0
        %6391 = vmatpush1.bf16.msra.mxu0 0
        %6392 = vmatprep.subr.bf16.mxu0 0
        %6393 = vmatpush1.bf16.msra.mxu0 0
        %6394 = vmatprep.subr.bf16.mxu0 0
        %6395 = vmatpush1.bf16.msra.mxu0 0
        %6396 = vmatprep.subr.bf16.mxu0 0
        %6397 = vmatpush1.bf16.msra.mxu0 0
        %6398 = vmatprep.subr.bf16.mxu0 0
        %6399 = vmatpush1.bf16.msra.mxu0 0
        %6400 = vmatprep.subr.bf16.mxu0 0
        %6401 = vmatpush1.bf16.msra.mxu0 0
        %6402 = vmatprep.subr.bf16.mxu0 0
        %6403 = vmatpush1.bf16.msra.mxu0 0
        %6404 = vmatprep.subr.bf16.mxu0 0
        %6405 = vmatpush1.bf16.msra.mxu0 0
        %6406 = vmatprep.subr.bf16.mxu0 0
        %6407 = vmatpush1.bf16.msra.mxu0 0
        %6408 = vmatprep.subr.bf16.mxu0 0
        %6409 = vmatpush1.bf16.msra.mxu0 0
        %6410 = vmatprep.mubr.bf16.mxu0 0
        %6411 = vmatmul.mubr.bf16.gmra.mrb[0].mxu0 %v6376
        %v6412 = vpop.f32.mrb[0].mxu0
        %v6413 = vadd.f32 %v6362, %v6412
        %v6414 = vpop.f32.mrb[0].mxu0
        %v6415 = vpop.f32.mrb[0].mxu0
        %v6416 = vpop.f32.mrb[0].mxu0
        %6417 = vdwg.mxu0
        %s6418 = scalar_lea.vmem [#allocation2], 576
        %v6419 = vld [vmem:[%s6418] sm:$0xf]
        %v6420 = vld [vmem:[%s6418 + $0x4] sm:$0xf]
        %v6421 = vld [vmem:[%s6418 + $0x8] sm:$0xf]
        %v6422 = vld [vmem:[%s6418 + $0xc] sm:$0xf]
        %v6423 = vld [vmem:[%s5 + $0x26] sm:$0x1]
        %v6424 = vlaneseq
        %v6425 = vshrl.u32 %v6424, 7
        %v6426 = vsub.s32 0, %v6425
        %v6427 = vrot.slane %v6423, %v6426
        %v6432 = vunpack.c.l.b16 %v6419
        %v6433 = vunpack.c.l.b16 %v6420
        %v6434 = vunpack.c.l.b16 %v6421
        %v6435 = vunpack.c.l.b16 %v6422
        %v6436 = vpack.c.b16 %v6433, %v6432
        %v6437 = vpack.c.b16 %v6435, %v6434
        %6440 = vmatprep.subr.bf16.mxu0 0
        %6441 = vmatpush1.bf16.msra.mxu0 %v6436
        %6442 = vmatprep.subr.bf16.mxu0 0
        %6443 = vmatpush1.bf16.msra.mxu0 %v6437
        %6444 = vmatprep.subr.bf16.mxu0 0
        %6445 = vmatpush1.bf16.msra.mxu0 0
        %6446 = vmatprep.subr.bf16.mxu0 0
        %6447 = vmatpush1.bf16.msra.mxu0 0
        %6448 = vmatprep.subr.bf16.mxu0 0
        %6449 = vmatpush1.bf16.msra.mxu0 0
        %6450 = vmatprep.subr.bf16.mxu0 0
        %6451 = vmatpush1.bf16.msra.mxu0 0
        %6452 = vmatprep.subr.bf16.mxu0 0
        %6453 = vmatpush1.bf16.msra.mxu0 0
        %6454 = vmatprep.subr.bf16.mxu0 0
        %6455 = vmatpush1.bf16.msra.mxu0 0
        %6456 = vmatprep.subr.bf16.mxu0 0
        %6457 = vmatpush1.bf16.msra.mxu0 0
        %6458 = vmatprep.subr.bf16.mxu0 0
        %6459 = vmatpush1.bf16.msra.mxu0 0
        %6460 = vmatprep.subr.bf16.mxu0 0
        %6461 = vmatpush1.bf16.msra.mxu0 0
        %6462 = vmatprep.subr.bf16.mxu0 0
        %6463 = vmatpush1.bf16.msra.mxu0 0
        %6464 = vmatprep.subr.bf16.mxu0 0
        %6465 = vmatpush1.bf16.msra.mxu0 0
        %6466 = vmatprep.subr.bf16.mxu0 0
        %6467 = vmatpush1.bf16.msra.mxu0 0
        %6468 = vmatprep.subr.bf16.mxu0 0
        %6469 = vmatpush1.bf16.msra.mxu0 0
        %6470 = vmatprep.subr.bf16.mxu0 0
        %6471 = vmatpush1.bf16.msra.mxu0 0
        %6472 = vmatprep.mubr.bf16.mxu0 0
        %6473 = vmatmul.mubr.bf16.gmra.mrb[0].mxu0 %v4065
        %v6474 = vpop.f32.mrb[0].mxu0
        %v6475 = vadd.f32 %v6427, %v6474
        %v6476 = vpop.f32.mrb[0].mxu0
        %v6477 = vpop.f32.mrb[0].mxu0
        %v6478 = vpop.f32.mrb[0].mxu0
        %6479 = vdwg.mxu0
        %s6480 = scalar_lea.vmem [#allocation2], 608
        %v6481 = vld [vmem:[%s6480] sm:$0xf]
        %v6482 = vld [vmem:[%s6480 + $0x4] sm:$0xf]
        %v6483 = vld [vmem:[%s6480 + $0x8] sm:$0xf]
        %v6484 = vld [vmem:[%s6480 + $0xc] sm:$0xf]
        %v6485 = vunpack.c.l.bf16 %v6481
        %v6486 = vunpack.c.l.bf16 %v6482
        %v6487 = vunpack.c.l.bf16 %v6483
        %v6488 = vunpack.c.l.bf16 %v6484
        %v6490 = vsel %vm457, %v6413, 0
        %v6493 = vsel %vm457, %v6475, 0
        %6495 = vmatprep.subr.mxu0 0.0
        %6496 = vmatpush1.xpose.msra.mxu0 %v6493
        %6497 = vmatprep.subr.mxu0 0.0
        %6498 = vmatpush1.xpose.msra.mxu0 0.0
        %6499 = vmatprep.subr.mxu0 0.0
        %6500 = vmatpush1.xpose.msra.mxu0 0.0
        %6501 = vmatprep.subr.mxu0 0.0
        %6502 = vmatpush1.xpose.msra.mxu0 0.0
        %6503 = vmatprep.subr.mxu0 0.0
        %6504 = vmatpush1.xpose.msra.mxu0 0.0
        %6505 = vmatprep.subr.mxu0 0.0
        %6506 = vmatpush1.xpose.msra.mxu0 0.0
        %6507 = vmatprep.subr.mxu0 0.0
        %6508 = vmatpush1.xpose.msra.mxu0 0.0
        %6509 = vmatprep.subr.mxu0 0.0
        %6510 = vmatpush1.xpose.msra.mxu0 0.0
        %6511 = vmatprep.subr.mxu0 0.0
        %6512 = vmatpush1.xpose.msra.mxu0 0.0
        %6513 = vmatprep.subr.mxu0 0.0
        %6514 = vmatpush1.xpose.msra.mxu0 0.0
        %6515 = vmatprep.subr.mxu0 0.0
        %6516 = vmatpush1.xpose.msra.mxu0 0.0
        %6517 = vmatprep.subr.mxu0 0.0
        %6518 = vmatpush1.xpose.msra.mxu0 0.0
        %6519 = vmatprep.subr.mxu0 0.0
        %6520 = vmatpush1.xpose.msra.mxu0 0.0
        %6521 = vmatprep.subr.mxu0 0.0
        %6522 = vmatpush1.xpose.msra.mxu0 0.0
        %6523 = vmatprep.subr.mxu0 0.0
        %6524 = vmatpush1.xpose.msra.mxu0 0.0
        %6525 = vmatprep.subr.mxu0 0.0
        %6526 = vmatpush1.xpose.msra.mxu0 0.0
        %6527 = vmatprep.subr.mxu0 0.0
        %6528 = vmatpush1.xpose.msra.mxu0 0.0
        %6529 = vmatprep.subr.mxu0 0.0
        %6530 = vmatpush1.xpose.msra.mxu0 0.0
        %6531 = vmatprep.subr.mxu0 0.0
        %6532 = vmatpush1.xpose.msra.mxu0 0.0
        %6533 = vmatprep.subr.mxu0 0.0
        %6534 = vmatpush1.xpose.msra.mxu0 0.0
        %6535 = vmatprep.subr.mxu0 0.0
        %6536 = vmatpush1.xpose.msra.mxu0 0.0
        %6537 = vmatprep.subr.mxu0 0.0
        %6538 = vmatpush1.xpose.msra.mxu0 0.0
        %6539 = vmatprep.subr.mxu0 0.0
        %6540 = vmatpush1.xpose.msra.mxu0 0.0
        %6541 = vmatprep.subr.mxu0 0.0
        %6542 = vmatpush1.xpose.msra.mxu0 0.0
        %6543 = vmatprep.subr.mxu0 0.0
        %6544 = vmatpush1.xpose.msra.mxu0 0.0
        %6545 = vmatprep.subr.mxu0 0.0
        %6546 = vmatpush1.xpose.msra.mxu0 0.0
        %6547 = vmatprep.subr.mxu0 0.0
        %6548 = vmatpush1.xpose.msra.mxu0 0.0
        %6549 = vmatprep.subr.mxu0 0.0
        %6550 = vmatpush1.xpose.msra.mxu0 0.0
        %6551 = vmatprep.subr.mxu0 0.0
        %6552 = vmatpush1.xpose.msra.mxu0 0.0
        %6553 = vmatprep.subr.mxu0 0.0
        %6554 = vmatpush1.xpose.msra.mxu0 0.0
        %6555 = vmatprep.subr.mxu0 0.0
        %6556 = vmatpush1.xpose.msra.mxu0 0.0
        %6557 = vmatprep.subr.mxu0 0.0
        %6558 = vmatpush1.xpose.msra.mxu0 0.0
        %6559 = vmatprep.mubr.f32.mxu0 0.0
        %6560 = vmatmul.mubr.f32.gmra.mrb[0].mxu0 %v6490
        %v6561 = vpop.f32.mrb[0].mxu0
        %v6562 = vadd.f32 0.0, %v6561
        %v6563 = vpop.f32.mrb[0].mxu0
        %6564 = vdwg.mxu0
        %v6565 = vmul.f32 %v6562, 0.35355338
        %v6566 = vadd.f32 %v6565, %v537
        %v6567 = vsel %vm457, %v6566, -inf
        %6568 = vmax.xlane.f32.xlu0 %v6567
        %v6569 = vpop.xlane.xlu0 %6568
        %v6570 = vsub.f32 %v6566, %v6569
        %v6571 = vmul.f32 %v6570, 1.442695
        %v6572 = vpow.pop %v6571
        %v6573 = vsel %vm457, %v6572, 0.0
        %6574 = vadd.xlane.f32.xlu0 %v6573
        %v6575 = vpop.xlane.xlu0 %6574
        %v6576 = vrcp.pop %v6575
        %v6577 = vmul.f32 %v6572, %v6576
        %6578 = vrot.lane.b32.xlu0 %v6475, 96
        %v6579 = vpop.permute.xlu0 %6578
        %v6582 = vsel %vm457, %v6577, 0
        %6584 = vmatprep.subr.mxu0 0.0
        %6585 = vmatpush1.msra.mxu0 %v6579
        %6586 = vmatprep.subr.mxu0 0.0
        %6587 = vmatpush1.msra.mxu0 0.0
        %6588 = vmatprep.subr.mxu0 0.0
        %6589 = vmatpush1.msra.mxu0 0.0
        %6590 = vmatprep.subr.mxu0 0.0
        %6591 = vmatpush1.msra.mxu0 0.0
        %6592 = vmatprep.subr.mxu0 0.0
        %6593 = vmatpush1.msra.mxu0 0.0
        %6594 = vmatprep.subr.mxu0 0.0
        %6595 = vmatpush1.msra.mxu0 0.0
        %6596 = vmatprep.subr.mxu0 0.0
        %6597 = vmatpush1.msra.mxu0 0.0
        %6598 = vmatprep.subr.mxu0 0.0
        %6599 = vmatpush1.msra.mxu0 0.0
        %6600 = vmatprep.subr.mxu0 0.0
        %6601 = vmatpush1.msra.mxu0 0.0
        %6602 = vmatprep.subr.mxu0 0.0
        %6603 = vmatpush1.msra.mxu0 0.0
        %6604 = vmatprep.subr.mxu0 0.0
        %6605 = vmatpush1.msra.mxu0 0.0
        %6606 = vmatprep.subr.mxu0 0.0
        %6607 = vmatpush1.msra.mxu0 0.0
        %6608 = vmatprep.subr.mxu0 0.0
        %6609 = vmatpush1.msra.mxu0 0.0
        %6610 = vmatprep.subr.mxu0 0.0
        %6611 = vmatpush1.msra.mxu0 0.0
        %6612 = vmatprep.subr.mxu0 0.0
        %6613 = vmatpush1.msra.mxu0 0.0
        %6614 = vmatprep.subr.mxu0 0.0
        %6615 = vmatpush1.msra.mxu0 0.0
        %6616 = vmatprep.subr.mxu0 0.0
        %6617 = vmatpush1.msra.mxu0 0.0
        %6618 = vmatprep.subr.mxu0 0.0
        %6619 = vmatpush1.msra.mxu0 0.0
        %6620 = vmatprep.subr.mxu0 0.0
        %6621 = vmatpush1.msra.mxu0 0.0
        %6622 = vmatprep.subr.mxu0 0.0
        %6623 = vmatpush1.msra.mxu0 0.0
        %6624 = vmatprep.subr.mxu0 0.0
        %6625 = vmatpush1.msra.mxu0 0.0
        %6626 = vmatprep.subr.mxu0 0.0
        %6627 = vmatpush1.msra.mxu0 0.0
        %6628 = vmatprep.subr.mxu0 0.0
        %6629 = vmatpush1.msra.mxu0 0.0
        %6630 = vmatprep.subr.mxu0 0.0
        %6631 = vmatpush1.msra.mxu0 0.0
        %6632 = vmatprep.subr.mxu0 0.0
        %6633 = vmatpush1.msra.mxu0 0.0
        %6634 = vmatprep.subr.mxu0 0.0
        %6635 = vmatpush1.msra.mxu0 0.0
        %6636 = vmatprep.subr.mxu0 0.0
        %6637 = vmatpush1.msra.mxu0 0.0
        %6638 = vmatprep.subr.mxu0 0.0
        %6639 = vmatpush1.msra.mxu0 0.0
        %6640 = vmatprep.subr.mxu0 0.0
        %6641 = vmatpush1.msra.mxu0 0.0
        %6642 = vmatprep.subr.mxu0 0.0
        %6643 = vmatpush1.msra.mxu0 0.0
        %6644 = vmatprep.subr.mxu0 0.0
        %6645 = vmatpush1.msra.mxu0 0.0
        %6646 = vmatprep.subr.mxu0 0.0
        %6647 = vmatpush1.msra.mxu0 0.0
        %6648 = vmatprep.mubr.f32.mxu0 0.0
        %6649 = vmatmul.mubr.f32.gmra.mrb[0].mxu0 %v6582
        %v6650 = vpop.f32.mrb[0].mxu0
        %v6651 = vadd.f32 0.0, %v6650
        %v6652 = vpop.f32.mrb[0].mxu0
        %6653 = vdwg.mxu0
        %6654 = vrot.lane.b32.xlu0 %v6413, 120
        %v6655 = vpop.permute.xlu0 %6654
        %6656 = vrot.lane.b32.xlu0 %v6475, 120
        %v6657 = vpop.permute.xlu0 %6656
        %v6658 = vsel %vm457, %v6655, 0
        %v6660 = vsel %vm457, %v6657, 0
        %6662 = vmatprep.subr.mxu0 0.0
        %6663 = vmatpush1.xpose.msra.mxu0 %v6660
        %6664 = vmatprep.subr.mxu0 0.0
        %6665 = vmatpush1.xpose.msra.mxu0 0.0
        %6666 = vmatprep.subr.mxu0 0.0
        %6667 = vmatpush1.xpose.msra.mxu0 0.0
        %6668 = vmatprep.subr.mxu0 0.0
        %6669 = vmatpush1.xpose.msra.mxu0 0.0
        %6670 = vmatprep.subr.mxu0 0.0
        %6671 = vmatpush1.xpose.msra.mxu0 0.0
        %6672 = vmatprep.subr.mxu0 0.0
        %6673 = vmatpush1.xpose.msra.mxu0 0.0
        %6674 = vmatprep.subr.mxu0 0.0
        %6675 = vmatpush1.xpose.msra.mxu0 0.0
        %6676 = vmatprep.subr.mxu0 0.0
        %6677 = vmatpush1.xpose.msra.mxu0 0.0
        %6678 = vmatprep.subr.mxu0 0.0
        %6679 = vmatpush1.xpose.msra.mxu0 0.0
        %6680 = vmatprep.subr.mxu0 0.0
        %6681 = vmatpush1.xpose.msra.mxu0 0.0
        %6682 = vmatprep.subr.mxu0 0.0
        %6683 = vmatpush1.xpose.msra.mxu0 0.0
        %6684 = vmatprep.subr.mxu0 0.0
        %6685 = vmatpush1.xpose.msra.mxu0 0.0
        %6686 = vmatprep.subr.mxu0 0.0
        %6687 = vmatpush1.xpose.msra.mxu0 0.0
        %6688 = vmatprep.subr.mxu0 0.0
        %6689 = vmatpush1.xpose.msra.mxu0 0.0
        %6690 = vmatprep.subr.mxu0 0.0
        %6691 = vmatpush1.xpose.msra.mxu0 0.0
        %6692 = vmatprep.subr.mxu0 0.0
        %6693 = vmatpush1.xpose.msra.mxu0 0.0
        %6694 = vmatprep.subr.mxu0 0.0
        %6695 = vmatpush1.xpose.msra.mxu0 0.0
        %6696 = vmatprep.subr.mxu0 0.0
        %6697 = vmatpush1.xpose.msra.mxu0 0.0
        %6698 = vmatprep.subr.mxu0 0.0
        %6699 = vmatpush1.xpose.msra.mxu0 0.0
        %6700 = vmatprep.subr.mxu0 0.0
        %6701 = vmatpush1.xpose.msra.mxu0 0.0
        %6702 = vmatprep.subr.mxu0 0.0
        %6703 = vmatpush1.xpose.msra.mxu0 0.0
        %6704 = vmatprep.subr.mxu0 0.0
        %6705 = vmatpush1.xpose.msra.mxu0 0.0
        %6706 = vmatprep.subr.mxu0 0.0
        %6707 = vmatpush1.xpose.msra.mxu0 0.0
        %6708 = vmatprep.subr.mxu0 0.0
        %6709 = vmatpush1.xpose.msra.mxu0 0.0
        %6710 = vmatprep.subr.mxu0 0.0
        %6711 = vmatpush1.xpose.msra.mxu0 0.0
        %6712 = vmatprep.subr.mxu0 0.0
        %6713 = vmatpush1.xpose.msra.mxu0 0.0
        %6714 = vmatprep.subr.mxu0 0.0
        %6715 = vmatpush1.xpose.msra.mxu0 0.0
        %6716 = vmatprep.subr.mxu0 0.0
        %6717 = vmatpush1.xpose.msra.mxu0 0.0
        %6718 = vmatprep.subr.mxu0 0.0
        %6719 = vmatpush1.xpose.msra.mxu0 0.0
        %6720 = vmatprep.subr.mxu0 0.0
        %6721 = vmatpush1.xpose.msra.mxu0 0.0
        %6722 = vmatprep.subr.mxu0 0.0
        %6723 = vmatpush1.xpose.msra.mxu0 0.0
        %6724 = vmatprep.subr.mxu0 0.0
        %6725 = vmatpush1.xpose.msra.mxu0 0.0
        %6726 = vmatprep.mubr.f32.mxu0 0.0
        %6727 = vmatmul.mubr.f32.gmra.mrb[0].mxu0 %v6658
        %v6728 = vpop.f32.mrb[0].mxu0
        %v6729 = vadd.f32 0.0, %v6728
        %v6730 = vpop.f32.mrb[0].mxu0
        %6731 = vdwg.mxu0
        %v6732 = vmul.f32 %v6729, 0.35355338
        %v6733 = vadd.f32 %v6732, %v537
        %v6734 = vsel %vm457, %v6733, -inf
        %6735 = vmax.xlane.f32.xlu0 %v6734
        %v6736 = vpop.xlane.xlu0 %6735
        %v6737 = vsub.f32 %v6733, %v6736
        %v6738 = vmul.f32 %v6737, 1.442695
        %v6739 = vpow.pop %v6738
        %v6740 = vsel %vm457, %v6739, 0.0
        %6741 = vadd.xlane.f32.xlu0 %v6740
        %v6742 = vpop.xlane.xlu0 %6741
        %v6743 = vrcp.pop %v6742
        %v6744 = vmul.f32 %v6739, %v6743
        %6745 = vrot.lane.b32.xlu0 %v6475, 88
        %v6746 = vpop.permute.xlu0 %6745
        %v6749 = vsel %vm457, %v6744, 0
        %6751 = vmatprep.subr.mxu0 0.0
        %6752 = vmatpush1.msra.mxu0 %v6746
        %6753 = vmatprep.subr.mxu0 0.0
        %6754 = vmatpush1.msra.mxu0 0.0
        %6755 = vmatprep.subr.mxu0 0.0
        %6756 = vmatpush1.msra.mxu0 0.0
        %6757 = vmatprep.subr.mxu0 0.0
        %6758 = vmatpush1.msra.mxu0 0.0
        %6759 = vmatprep.subr.mxu0 0.0
        %6760 = vmatpush1.msra.mxu0 0.0
        %6761 = vmatprep.subr.mxu0 0.0
        %6762 = vmatpush1.msra.mxu0 0.0
        %6763 = vmatprep.subr.mxu0 0.0
        %6764 = vmatpush1.msra.mxu0 0.0
        %6765 = vmatprep.subr.mxu0 0.0
        %6766 = vmatpush1.msra.mxu0 0.0
        %6767 = vmatprep.subr.mxu0 0.0
        %6768 = vmatpush1.msra.mxu0 0.0
        %6769 = vmatprep.subr.mxu0 0.0
        %6770 = vmatpush1.msra.mxu0 0.0
        %6771 = vmatprep.subr.mxu0 0.0
        %6772 = vmatpush1.msra.mxu0 0.0
        %6773 = vmatprep.subr.mxu0 0.0
        %6774 = vmatpush1.msra.mxu0 0.0
        %6775 = vmatprep.subr.mxu0 0.0
        %6776 = vmatpush1.msra.mxu0 0.0
        %6777 = vmatprep.subr.mxu0 0.0
        %6778 = vmatpush1.msra.mxu0 0.0
        %6779 = vmatprep.subr.mxu0 0.0
        %6780 = vmatpush1.msra.mxu0 0.0
        %6781 = vmatprep.subr.mxu0 0.0
        %6782 = vmatpush1.msra.mxu0 0.0
        %6783 = vmatprep.subr.mxu0 0.0
        %6784 = vmatpush1.msra.mxu0 0.0
        %6785 = vmatprep.subr.mxu0 0.0
        %6786 = vmatpush1.msra.mxu0 0.0
        %6787 = vmatprep.subr.mxu0 0.0
        %6788 = vmatpush1.msra.mxu0 0.0
        %6789 = vmatprep.subr.mxu0 0.0
        %6790 = vmatpush1.msra.mxu0 0.0
        %6791 = vmatprep.subr.mxu0 0.0
        %6792 = vmatpush1.msra.mxu0 0.0
        %6793 = vmatprep.subr.mxu0 0.0
        %6794 = vmatpush1.msra.mxu0 0.0
        %6795 = vmatprep.subr.mxu0 0.0
        %6796 = vmatpush1.msra.mxu0 0.0
        %6797 = vmatprep.subr.mxu0 0.0
        %6798 = vmatpush1.msra.mxu0 0.0
        %6799 = vmatprep.subr.mxu0 0.0
        %6800 = vmatpush1.msra.mxu0 0.0
        %6801 = vmatprep.subr.mxu0 0.0
        %6802 = vmatpush1.msra.mxu0 0.0
        %6803 = vmatprep.subr.mxu0 0.0
        %6804 = vmatpush1.msra.mxu0 0.0
        %6805 = vmatprep.subr.mxu0 0.0
        %6806 = vmatpush1.msra.mxu0 0.0
        %6807 = vmatprep.subr.mxu0 0.0
        %6808 = vmatpush1.msra.mxu0 0.0
        %6809 = vmatprep.subr.mxu0 0.0
        %6810 = vmatpush1.msra.mxu0 0.0
        %6811 = vmatprep.subr.mxu0 0.0
        %6812 = vmatpush1.msra.mxu0 0.0
        %6813 = vmatprep.subr.mxu0 0.0
        %6814 = vmatpush1.msra.mxu0 0.0
        %6815 = vmatprep.mubr.f32.mxu0 0.0
        %6816 = vmatmul.mubr.f32.gmra.mrb[0].mxu0 %v6749
        %v6817 = vpop.f32.mrb[0].mxu0
        %v6818 = vadd.f32 0.0, %v6817
        %v6819 = vpop.f32.mrb[0].mxu0
        %6820 = vdwg.mxu0
        %v6822 = vsel %vm457, %v6818, 0
        %6824 = vmatprep.subr.mxu0 0.0
        %6825 = vmatpush1.msra.mxu0 %v6486
        %6826 = vmatprep.subr.mxu0 0.0
        %6827 = vmatpush1.msra.mxu0 0.0
        %6828 = vmatprep.subr.mxu0 0.0
        %6829 = vmatpush1.msra.mxu0 0.0
        %6830 = vmatprep.subr.mxu0 0.0
        %6831 = vmatpush1.msra.mxu0 0.0
        %6832 = vmatprep.subr.mxu0 0.0
        %6833 = vmatpush1.msra.mxu0 0.0
        %6834 = vmatprep.subr.mxu0 0.0
        %6835 = vmatpush1.msra.mxu0 0.0
        %6836 = vmatprep.subr.mxu0 0.0
        %6837 = vmatpush1.msra.mxu0 0.0
        %6838 = vmatprep.subr.mxu0 0.0
        %6839 = vmatpush1.msra.mxu0 0.0
        %6840 = vmatprep.subr.mxu0 0.0
        %6841 = vmatpush1.msra.mxu0 0.0
        %6842 = vmatprep.subr.mxu0 0.0
        %6843 = vmatpush1.msra.mxu0 0.0
        %6844 = vmatprep.subr.mxu0 0.0
        %6845 = vmatpush1.msra.mxu0 0.0
        %6846 = vmatprep.subr.mxu0 0.0
        %6847 = vmatpush1.msra.mxu0 0.0
        %6848 = vmatprep.subr.mxu0 0.0
        %6849 = vmatpush1.msra.mxu0 0.0
        %6850 = vmatprep.subr.mxu0 0.0
        %6851 = vmatpush1.msra.mxu0 0.0
        %6852 = vmatprep.subr.mxu0 0.0
        %6853 = vmatpush1.msra.mxu0 0.0
        %6854 = vmatprep.subr.mxu0 0.0
        %6855 = vmatpush1.msra.mxu0 0.0
        %6856 = vmatprep.subr.mxu0 0.0
        %6857 = vmatpush1.msra.mxu0 0.0
        %6858 = vmatprep.subr.mxu0 0.0
        %6859 = vmatpush1.msra.mxu0 0.0
        %6860 = vmatprep.subr.mxu0 0.0
        %6861 = vmatpush1.msra.mxu0 0.0
        %6862 = vmatprep.subr.mxu0 0.0
        %6863 = vmatpush1.msra.mxu0 0.0
        %6864 = vmatprep.subr.mxu0 0.0
        %6865 = vmatpush1.msra.mxu0 0.0
        %6866 = vmatprep.subr.mxu0 0.0
        %6867 = vmatpush1.msra.mxu0 0.0
        %6868 = vmatprep.subr.mxu0 0.0
        %6869 = vmatpush1.msra.mxu0 0.0
        %6870 = vmatprep.subr.mxu0 0.0
        %6871 = vmatpush1.msra.mxu0 0.0
        %6872 = vmatprep.subr.mxu0 0.0
        %6873 = vmatpush1.msra.mxu0 0.0
        %6874 = vmatprep.subr.mxu0 0.0
        %6875 = vmatpush1.msra.mxu0 0.0
        %6876 = vmatprep.subr.mxu0 0.0
        %6877 = vmatpush1.msra.mxu0 0.0
        %6878 = vmatprep.subr.mxu0 0.0
        %6879 = vmatpush1.msra.mxu0 0.0
        %6880 = vmatprep.subr.mxu0 0.0
        %6881 = vmatpush1.msra.mxu0 0.0
        %6882 = vmatprep.subr.mxu0 0.0
        %6883 = vmatpush1.msra.mxu0 0.0
        %6884 = vmatprep.subr.mxu0 0.0
        %6885 = vmatpush1.msra.mxu0 0.0
        %6886 = vmatprep.subr.mxu0 0.0
        %6887 = vmatpush1.msra.mxu0 0.0
        %6888 = vmatprep.mubr.f32.mxu0 0.0
        %6889 = vmatmul.mubr.f32.gmra.mrb[0].mxu0 %v6822
        %v6890 = vpop.f32.mrb[0].mxu0
        %v6891 = vadd.f32 0.0, %v6890
        %v6892 = vpop.f32.mrb[0].mxu0
        %6893 = vdwg.mxu0
        %v6895 = vsel %vm457, %v6651, 0
        %6897 = vmatprep.subr.mxu0 0.0
        %6898 = vmatpush1.msra.mxu0 %v6485
        %6899 = vmatprep.subr.mxu0 0.0
        %6900 = vmatpush1.msra.mxu0 0.0
        %6901 = vmatprep.subr.mxu0 0.0
        %6902 = vmatpush1.msra.mxu0 0.0
        %6903 = vmatprep.subr.mxu0 0.0
        %6904 = vmatpush1.msra.mxu0 0.0
        %6905 = vmatprep.subr.mxu0 0.0
        %6906 = vmatpush1.msra.mxu0 0.0
        %6907 = vmatprep.subr.mxu0 0.0
        %6908 = vmatpush1.msra.mxu0 0.0
        %6909 = vmatprep.subr.mxu0 0.0
        %6910 = vmatpush1.msra.mxu0 0.0
        %6911 = vmatprep.subr.mxu0 0.0
        %6912 = vmatpush1.msra.mxu0 0.0
        %6913 = vmatprep.subr.mxu0 0.0
        %6914 = vmatpush1.msra.mxu0 0.0
        %6915 = vmatprep.subr.mxu0 0.0
        %6916 = vmatpush1.msra.mxu0 0.0
        %6917 = vmatprep.subr.mxu0 0.0
        %6918 = vmatpush1.msra.mxu0 0.0
        %6919 = vmatprep.subr.mxu0 0.0
        %6920 = vmatpush1.msra.mxu0 0.0
        %6921 = vmatprep.subr.mxu0 0.0
        %6922 = vmatpush1.msra.mxu0 0.0
        %6923 = vmatprep.subr.mxu0 0.0
        %6924 = vmatpush1.msra.mxu0 0.0
        %6925 = vmatprep.subr.mxu0 0.0
        %6926 = vmatpush1.msra.mxu0 0.0
        %6927 = vmatprep.subr.mxu0 0.0
        %6928 = vmatpush1.msra.mxu0 0.0
        %6929 = vmatprep.subr.mxu0 0.0
        %6930 = vmatpush1.msra.mxu0 0.0
        %6931 = vmatprep.subr.mxu0 0.0
        %6932 = vmatpush1.msra.mxu0 0.0
        %6933 = vmatprep.subr.mxu0 0.0
        %6934 = vmatpush1.msra.mxu0 0.0
        %6935 = vmatprep.subr.mxu0 0.0
        %6936 = vmatpush1.msra.mxu0 0.0
        %6937 = vmatprep.subr.mxu0 0.0
        %6938 = vmatpush1.msra.mxu0 0.0
        %6939 = vmatprep.subr.mxu0 0.0
        %6940 = vmatpush1.msra.mxu0 0.0
        %6941 = vmatprep.subr.mxu0 0.0
        %6942 = vmatpush1.msra.mxu0 0.0
        %6943 = vmatprep.subr.mxu0 0.0
        %6944 = vmatpush1.msra.mxu0 0.0
        %6945 = vmatprep.subr.mxu0 0.0
        %6946 = vmatpush1.msra.mxu0 0.0
        %6947 = vmatprep.subr.mxu0 0.0
        %6948 = vmatpush1.msra.mxu0 0.0
        %6949 = vmatprep.subr.mxu0 0.0
        %6950 = vmatpush1.msra.mxu0 0.0
        %6951 = vmatprep.subr.mxu0 0.0
        %6952 = vmatpush1.msra.mxu0 0.0
        %6953 = vmatprep.subr.mxu0 0.0
        %6954 = vmatpush1.msra.mxu0 0.0
        %6955 = vmatprep.subr.mxu0 0.0
        %6956 = vmatpush1.msra.mxu0 0.0
        %6957 = vmatprep.subr.mxu0 0.0
        %6958 = vmatpush1.msra.mxu0 0.0
        %6959 = vmatprep.subr.mxu0 0.0
        %6960 = vmatpush1.msra.mxu0 0.0
        %6961 = vmatprep.mubr.f32.mxu0 0.0
        %6962 = vmatmul.mubr.f32.gmra.mrb[0].mxu0 %v6895
        %v6963 = vpop.f32.mrb[0].mxu0
        %v6964 = vadd.f32 %v6891, %v6963
        %v6965 = vpop.f32.mrb[0].mxu0
        %6966 = vdwg.mxu0
        %v6967 = vadd.f32 %v6577, %v6744
        %6968 = vrot.lane.b32.xlu0 %v6413, 112
        %v6969 = vpop.permute.xlu0 %6968
        %6970 = vrot.lane.b32.xlu0 %v6475, 112
        %v6971 = vpop.permute.xlu0 %6970
        %v6972 = vsel %vm457, %v6969, 0
        %v6974 = vsel %vm457, %v6971, 0
        %6976 = vmatprep.subr.mxu0 0.0
        %6977 = vmatpush1.xpose.msra.mxu0 %v6974
        %6978 = vmatprep.subr.mxu0 0.0
        %6979 = vmatpush1.xpose.msra.mxu0 0.0
        %6980 = vmatprep.subr.mxu0 0.0
        %6981 = vmatpush1.xpose.msra.mxu0 0.0
        %6982 = vmatprep.subr.mxu0 0.0
        %6983 = vmatpush1.xpose.msra.mxu0 0.0
        %6984 = vmatprep.subr.mxu0 0.0
        %6985 = vmatpush1.xpose.msra.mxu0 0.0
        %6986 = vmatprep.subr.mxu0 0.0
        %6987 = vmatpush1.xpose.msra.mxu0 0.0
        %6988 = vmatprep.subr.mxu0 0.0
        %6989 = vmatpush1.xpose.msra.mxu0 0.0
        %6990 = vmatprep.subr.mxu0 0.0
        %6991 = vmatpush1.xpose.msra.mxu0 0.0
        %6992 = vmatprep.subr.mxu0 0.0
        %6993 = vmatpush1.xpose.msra.mxu0 0.0
        %6994 = vmatprep.subr.mxu0 0.0
        %6995 = vmatpush1.xpose.msra.mxu0 0.0
        %6996 = vmatprep.subr.mxu0 0.0
        %6997 = vmatpush1.xpose.msra.mxu0 0.0
        %6998 = vmatprep.subr.mxu0 0.0
        %6999 = vmatpush1.xpose.msra.mxu0 0.0
        %7000 = vmatprep.subr.mxu0 0.0
        %7001 = vmatpush1.xpose.msra.mxu0 0.0
        %7002 = vmatprep.subr.mxu0 0.0
        %7003 = vmatpush1.xpose.msra.mxu0 0.0
        %7004 = vmatprep.subr.mxu0 0.0
        %7005 = vmatpush1.xpose.msra.mxu0 0.0
        %7006 = vmatprep.subr.mxu0 0.0
        %7007 = vmatpush1.xpose.msra.mxu0 0.0
        %7008 = vmatprep.subr.mxu0 0.0
        %7009 = vmatpush1.xpose.msra.mxu0 0.0
        %7010 = vmatprep.subr.mxu0 0.0
        %7011 = vmatpush1.xpose.msra.mxu0 0.0
        %7012 = vmatprep.subr.mxu0 0.0
        %7013 = vmatpush1.xpose.msra.mxu0 0.0
        %7014 = vmatprep.subr.mxu0 0.0
        %7015 = vmatpush1.xpose.msra.mxu0 0.0
        %7016 = vmatprep.subr.mxu0 0.0
        %7017 = vmatpush1.xpose.msra.mxu0 0.0
        %7018 = vmatprep.subr.mxu0 0.0
        %7019 = vmatpush1.xpose.msra.mxu0 0.0
        %7020 = vmatprep.subr.mxu0 0.0
        %7021 = vmatpush1.xpose.msra.mxu0 0.0
        %7022 = vmatprep.subr.mxu0 0.0
        %7023 = vmatpush1.xpose.msra.mxu0 0.0
        %7024 = vmatprep.subr.mxu0 0.0
        %7025 = vmatpush1.xpose.msra.mxu0 0.0
        %7026 = vmatprep.subr.mxu0 0.0
        %7027 = vmatpush1.xpose.msra.mxu0 0.0
        %7028 = vmatprep.subr.mxu0 0.0
        %7029 = vmatpush1.xpose.msra.mxu0 0.0
        %7030 = vmatprep.subr.mxu0 0.0
        %7031 = vmatpush1.xpose.msra.mxu0 0.0
        %7032 = vmatprep.subr.mxu0 0.0
        %7033 = vmatpush1.xpose.msra.mxu0 0.0
        %7034 = vmatprep.subr.mxu0 0.0
        %7035 = vmatpush1.xpose.msra.mxu0 0.0
        %7036 = vmatprep.subr.mxu0 0.0
        %7037 = vmatpush1.xpose.msra.mxu0 0.0
        %7038 = vmatprep.subr.mxu0 0.0
        %7039 = vmatpush1.xpose.msra.mxu0 0.0
        %7040 = vmatprep.mubr.f32.mxu0 0.0
        %7041 = vmatmul.mubr.f32.gmra.mrb[0].mxu0 %v6972
        %v7042 = vpop.f32.mrb[0].mxu0
        %v7043 = vadd.f32 0.0, %v7042
        %v7044 = vpop.f32.mrb[0].mxu0
        %7045 = vdwg.mxu0
        %v7046 = vmul.f32 %v7043, 0.35355338
        %v7047 = vadd.f32 %v7046, %v537
        %v7048 = vsel %vm457, %v7047, -inf
        %7049 = vmax.xlane.f32.xlu0 %v7048
        %v7050 = vpop.xlane.xlu0 %7049
        %v7051 = vsub.f32 %v7047, %v7050
        %v7052 = vmul.f32 %v7051, 1.442695
        %v7053 = vpow.pop %v7052
        %v7054 = vsel %vm457, %v7053, 0.0
        %7055 = vadd.xlane.f32.xlu0 %v7054
        %v7056 = vpop.xlane.xlu0 %7055
        %v7057 = vrcp.pop %v7056
        %v7058 = vmul.f32 %v7053, %v7057
        %7059 = vrot.lane.b32.xlu0 %v6475, 80
        %v7060 = vpop.permute.xlu0 %7059
        %v7063 = vsel %vm457, %v7058, 0
        %7065 = vmatprep.subr.mxu0 0.0
        %7066 = vmatpush1.msra.mxu0 %v7060
        %7067 = vmatprep.subr.mxu0 0.0
        %7068 = vmatpush1.msra.mxu0 0.0
        %7069 = vmatprep.subr.mxu0 0.0
        %7070 = vmatpush1.msra.mxu0 0.0
        %7071 = vmatprep.subr.mxu0 0.0
        %7072 = vmatpush1.msra.mxu0 0.0
        %7073 = vmatprep.subr.mxu0 0.0
        %7074 = vmatpush1.msra.mxu0 0.0
        %7075 = vmatprep.subr.mxu0 0.0
        %7076 = vmatpush1.msra.mxu0 0.0
        %7077 = vmatprep.subr.mxu0 0.0
        %7078 = vmatpush1.msra.mxu0 0.0
        %7079 = vmatprep.subr.mxu0 0.0
        %7080 = vmatpush1.msra.mxu0 0.0
        %7081 = vmatprep.subr.mxu0 0.0
        %7082 = vmatpush1.msra.mxu0 0.0
        %7083 = vmatprep.subr.mxu0 0.0
        %7084 = vmatpush1.msra.mxu0 0.0
        %7085 = vmatprep.subr.mxu0 0.0
        %7086 = vmatpush1.msra.mxu0 0.0
        %7087 = vmatprep.subr.mxu0 0.0
        %7088 = vmatpush1.msra.mxu0 0.0
        %7089 = vmatprep.subr.mxu0 0.0
        %7090 = vmatpush1.msra.mxu0 0.0
        %7091 = vmatprep.subr.mxu0 0.0
        %7092 = vmatpush1.msra.mxu0 0.0
        %7093 = vmatprep.subr.mxu0 0.0
        %7094 = vmatpush1.msra.mxu0 0.0
        %7095 = vmatprep.subr.mxu0 0.0
        %7096 = vmatpush1.msra.mxu0 0.0
        %7097 = vmatprep.subr.mxu0 0.0
        %7098 = vmatpush1.msra.mxu0 0.0
        %7099 = vmatprep.subr.mxu0 0.0
        %7100 = vmatpush1.msra.mxu0 0.0
        %7101 = vmatprep.subr.mxu0 0.0
        %7102 = vmatpush1.msra.mxu0 0.0
        %7103 = vmatprep.subr.mxu0 0.0
        %7104 = vmatpush1.msra.mxu0 0.0
        %7105 = vmatprep.subr.mxu0 0.0
        %7106 = vmatpush1.msra.mxu0 0.0
        %7107 = vmatprep.subr.mxu0 0.0
        %7108 = vmatpush1.msra.mxu0 0.0
        %7109 = vmatprep.subr.mxu0 0.0
        %7110 = vmatpush1.msra.mxu0 0.0
        %7111 = vmatprep.subr.mxu0 0.0
        %7112 = vmatpush1.msra.mxu0 0.0
        %7113 = vmatprep.subr.mxu0 0.0
        %7114 = vmatpush1.msra.mxu0 0.0
        %7115 = vmatprep.subr.mxu0 0.0
        %7116 = vmatpush1.msra.mxu0 0.0
        %7117 = vmatprep.subr.mxu0 0.0
        %7118 = vmatpush1.msra.mxu0 0.0
        %7119 = vmatprep.subr.mxu0 0.0
        %7120 = vmatpush1.msra.mxu0 0.0
        %7121 = vmatprep.subr.mxu0 0.0
        %7122 = vmatpush1.msra.mxu0 0.0
        %7123 = vmatprep.subr.mxu0 0.0
        %7124 = vmatpush1.msra.mxu0 0.0
        %7125 = vmatprep.subr.mxu0 0.0
        %7126 = vmatpush1.msra.mxu0 0.0
        %7127 = vmatprep.subr.mxu0 0.0
        %7128 = vmatpush1.msra.mxu0 0.0
        %7129 = vmatprep.mubr.f32.mxu0 0.0
        %7130 = vmatmul.mubr.f32.gmra.mrb[0].mxu0 %v7063
        %v7131 = vpop.f32.mrb[0].mxu0
        %v7132 = vadd.f32 0.0, %v7131
        %v7133 = vpop.f32.mrb[0].mxu0
        %7134 = vdwg.mxu0
        %v7136 = vsel %vm457, %v7132, 0
        %7138 = vmatprep.subr.mxu0 0.0
        %7139 = vmatpush1.msra.mxu0 %v6487
        %7140 = vmatprep.subr.mxu0 0.0
        %7141 = vmatpush1.msra.mxu0 0.0
        %7142 = vmatprep.subr.mxu0 0.0
        %7143 = vmatpush1.msra.mxu0 0.0
        %7144 = vmatprep.subr.mxu0 0.0
        %7145 = vmatpush1.msra.mxu0 0.0
        %7146 = vmatprep.subr.mxu0 0.0
        %7147 = vmatpush1.msra.mxu0 0.0
        %7148 = vmatprep.subr.mxu0 0.0
        %7149 = vmatpush1.msra.mxu0 0.0
        %7150 = vmatprep.subr.mxu0 0.0
        %7151 = vmatpush1.msra.mxu0 0.0
        %7152 = vmatprep.subr.mxu0 0.0
        %7153 = vmatpush1.msra.mxu0 0.0
        %7154 = vmatprep.subr.mxu0 0.0
        %7155 = vmatpush1.msra.mxu0 0.0
        %7156 = vmatprep.subr.mxu0 0.0
        %7157 = vmatpush1.msra.mxu0 0.0
        %7158 = vmatprep.subr.mxu0 0.0
        %7159 = vmatpush1.msra.mxu0 0.0
        %7160 = vmatprep.subr.mxu0 0.0
        %7161 = vmatpush1.msra.mxu0 0.0
        %7162 = vmatprep.subr.mxu0 0.0
        %7163 = vmatpush1.msra.mxu0 0.0
        %7164 = vmatprep.subr.mxu0 0.0
        %7165 = vmatpush1.msra.mxu0 0.0
        %7166 = vmatprep.subr.mxu0 0.0
        %7167 = vmatpush1.msra.mxu0 0.0
        %7168 = vmatprep.subr.mxu0 0.0
        %7169 = vmatpush1.msra.mxu0 0.0
        %7170 = vmatprep.subr.mxu0 0.0
        %7171 = vmatpush1.msra.mxu0 0.0
        %7172 = vmatprep.subr.mxu0 0.0
        %7173 = vmatpush1.msra.mxu0 0.0
        %7174 = vmatprep.subr.mxu0 0.0
        %7175 = vmatpush1.msra.mxu0 0.0
        %7176 = vmatprep.subr.mxu0 0.0
        %7177 = vmatpush1.msra.mxu0 0.0
        %7178 = vmatprep.subr.mxu0 0.0
        %7179 = vmatpush1.msra.mxu0 0.0
        %7180 = vmatprep.subr.mxu0 0.0
        %7181 = vmatpush1.msra.mxu0 0.0
        %7182 = vmatprep.subr.mxu0 0.0
        %7183 = vmatpush1.msra.mxu0 0.0
        %7184 = vmatprep.subr.mxu0 0.0
        %7185 = vmatpush1.msra.mxu0 0.0
        %7186 = vmatprep.subr.mxu0 0.0
        %7187 = vmatpush1.msra.mxu0 0.0
        %7188 = vmatprep.subr.mxu0 0.0
        %7189 = vmatpush1.msra.mxu0 0.0
        %7190 = vmatprep.subr.mxu0 0.0
        %7191 = vmatpush1.msra.mxu0 0.0
        %7192 = vmatprep.subr.mxu0 0.0
        %7193 = vmatpush1.msra.mxu0 0.0
        %7194 = vmatprep.subr.mxu0 0.0
        %7195 = vmatpush1.msra.mxu0 0.0
        %7196 = vmatprep.subr.mxu0 0.0
        %7197 = vmatpush1.msra.mxu0 0.0
        %7198 = vmatprep.subr.mxu0 0.0
        %7199 = vmatpush1.msra.mxu0 0.0
        %7200 = vmatprep.subr.mxu0 0.0
        %7201 = vmatpush1.msra.mxu0 0.0
        %7202 = vmatprep.mubr.f32.mxu0 0.0
        %7203 = vmatmul.mubr.f32.gmra.mrb[0].mxu0 %v7136
        %v7204 = vpop.f32.mrb[0].mxu0
        %v7205 = vadd.f32 0.0, %v7204
        %v7206 = vpop.f32.mrb[0].mxu0
        %7207 = vdwg.mxu0
        %v7208 = vadd.f32 %v6964, %v7205
        %v7209 = vadd.f32 %v6967, %v7058
        %7210 = vrot.lane.b32.xlu0 %v6413, 104
        %v7211 = vpop.permute.xlu0 %7210
        %7212 = vrot.lane.b32.xlu0 %v6475, 104
        %v7213 = vpop.permute.xlu0 %7212
        %v7214 = vsel %vm457, %v7211, 0
        %v7216 = vsel %vm457, %v7213, 0
        %7218 = vmatprep.subr.mxu0 0.0
        %7219 = vmatpush1.xpose.msra.mxu0 %v7216
        %7220 = vmatprep.subr.mxu0 0.0
        %7221 = vmatpush1.xpose.msra.mxu0 0.0
        %7222 = vmatprep.subr.mxu0 0.0
        %7223 = vmatpush1.xpose.msra.mxu0 0.0
        %7224 = vmatprep.subr.mxu0 0.0
        %7225 = vmatpush1.xpose.msra.mxu0 0.0
        %7226 = vmatprep.subr.mxu0 0.0
        %7227 = vmatpush1.xpose.msra.mxu0 0.0
        %7228 = vmatprep.subr.mxu0 0.0
        %7229 = vmatpush1.xpose.msra.mxu0 0.0
        %7230 = vmatprep.subr.mxu0 0.0
        %7231 = vmatpush1.xpose.msra.mxu0 0.0
        %7232 = vmatprep.subr.mxu0 0.0
        %7233 = vmatpush1.xpose.msra.mxu0 0.0
        %7234 = vmatprep.subr.mxu0 0.0
        %7235 = vmatpush1.xpose.msra.mxu0 0.0
        %7236 = vmatprep.subr.mxu0 0.0
        %7237 = vmatpush1.xpose.msra.mxu0 0.0
        %7238 = vmatprep.subr.mxu0 0.0
        %7239 = vmatpush1.xpose.msra.mxu0 0.0
        %7240 = vmatprep.subr.mxu0 0.0
        %7241 = vmatpush1.xpose.msra.mxu0 0.0
        %7242 = vmatprep.subr.mxu0 0.0
        %7243 = vmatpush1.xpose.msra.mxu0 0.0
        %7244 = vmatprep.subr.mxu0 0.0
        %7245 = vmatpush1.xpose.msra.mxu0 0.0
        %7246 = vmatprep.subr.mxu0 0.0
        %7247 = vmatpush1.xpose.msra.mxu0 0.0
        %7248 = vmatprep.subr.mxu0 0.0
        %7249 = vmatpush1.xpose.msra.mxu0 0.0
        %7250 = vmatprep.subr.mxu0 0.0
        %7251 = vmatpush1.xpose.msra.mxu0 0.0
        %7252 = vmatprep.subr.mxu0 0.0
        %7253 = vmatpush1.xpose.msra.mxu0 0.0
        %7254 = vmatprep.subr.mxu0 0.0
        %7255 = vmatpush1.xpose.msra.mxu0 0.0
        %7256 = vmatprep.subr.mxu0 0.0
        %7257 = vmatpush1.xpose.msra.mxu0 0.0
        %7258 = vmatprep.subr.mxu0 0.0
        %7259 = vmatpush1.xpose.msra.mxu0 0.0
        %7260 = vmatprep.subr.mxu0 0.0
        %7261 = vmatpush1.xpose.msra.mxu0 0.0
        %7262 = vmatprep.subr.mxu0 0.0
        %7263 = vmatpush1.xpose.msra.mxu0 0.0
        %7264 = vmatprep.subr.mxu0 0.0
        %7265 = vmatpush1.xpose.msra.mxu0 0.0
        %7266 = vmatprep.subr.mxu0 0.0
        %7267 = vmatpush1.xpose.msra.mxu0 0.0
        %7268 = vmatprep.subr.mxu0 0.0
        %7269 = vmatpush1.xpose.msra.mxu0 0.0
        %7270 = vmatprep.subr.mxu0 0.0
        %7271 = vmatpush1.xpose.msra.mxu0 0.0
        %7272 = vmatprep.subr.mxu0 0.0
        %7273 = vmatpush1.xpose.msra.mxu0 0.0
        %7274 = vmatprep.subr.mxu0 0.0
        %7275 = vmatpush1.xpose.msra.mxu0 0.0
        %7276 = vmatprep.subr.mxu0 0.0
        %7277 = vmatpush1.xpose.msra.mxu0 0.0
        %7278 = vmatprep.subr.mxu0 0.0
        %7279 = vmatpush1.xpose.msra.mxu0 0.0
        %7280 = vmatprep.subr.mxu0 0.0
        %7281 = vmatpush1.xpose.msra.mxu0 0.0
        %7282 = vmatprep.mubr.f32.mxu0 0.0
        %7283 = vmatmul.mubr.f32.gmra.mrb[0].mxu0 %v7214
        %v7284 = vpop.f32.mrb[0].mxu0
        %v7285 = vadd.f32 0.0, %v7284
        %v7286 = vpop.f32.mrb[0].mxu0
        %7287 = vdwg.mxu0
        %v7288 = vmul.f32 %v7285, 0.35355338
        %v7289 = vadd.f32 %v7288, %v537
        %v7290 = vsel %vm457, %v7289, -inf
        %7291 = vmax.xlane.f32.xlu0 %v7290
        %v7292 = vpop.xlane.xlu0 %7291
        %v7293 = vsub.f32 %v7289, %v7292
        %v7294 = vmul.f32 %v7293, 1.442695
        %v7295 = vpow.pop %v7294
        %v7296 = vsel %vm457, %v7295, 0.0
        %7297 = vadd.xlane.f32.xlu0 %v7296
        %v7298 = vpop.xlane.xlu0 %7297
        %v7299 = vrcp.pop %v7298
        %v7300 = vmul.f32 %v7295, %v7299
        %7301 = vrot.lane.b32.xlu0 %v6475, 72
        %v7302 = vpop.permute.xlu0 %7301
        %v7305 = vsel %vm457, %v7300, 0
        %7307 = vmatprep.subr.mxu0 0.0
        %7308 = vmatpush1.msra.mxu0 %v7302
        %7309 = vmatprep.subr.mxu0 0.0
        %7310 = vmatpush1.msra.mxu0 0.0
        %7311 = vmatprep.subr.mxu0 0.0
        %7312 = vmatpush1.msra.mxu0 0.0
        %7313 = vmatprep.subr.mxu0 0.0
        %7314 = vmatpush1.msra.mxu0 0.0
        %7315 = vmatprep.subr.mxu0 0.0
        %7316 = vmatpush1.msra.mxu0 0.0
        %7317 = vmatprep.subr.mxu0 0.0
        %7318 = vmatpush1.msra.mxu0 0.0
        %7319 = vmatprep.subr.mxu0 0.0
        %7320 = vmatpush1.msra.mxu0 0.0
        %7321 = vmatprep.subr.mxu0 0.0
        %7322 = vmatpush1.msra.mxu0 0.0
        %7323 = vmatprep.subr.mxu0 0.0
        %7324 = vmatpush1.msra.mxu0 0.0
        %7325 = vmatprep.subr.mxu0 0.0
        %7326 = vmatpush1.msra.mxu0 0.0
        %7327 = vmatprep.subr.mxu0 0.0
        %7328 = vmatpush1.msra.mxu0 0.0
        %7329 = vmatprep.subr.mxu0 0.0
        %7330 = vmatpush1.msra.mxu0 0.0
        %7331 = vmatprep.subr.mxu0 0.0
        %7332 = vmatpush1.msra.mxu0 0.0
        %7333 = vmatprep.subr.mxu0 0.0
        %7334 = vmatpush1.msra.mxu0 0.0
        %7335 = vmatprep.subr.mxu0 0.0
        %7336 = vmatpush1.msra.mxu0 0.0
        %7337 = vmatprep.subr.mxu0 0.0
        %7338 = vmatpush1.msra.mxu0 0.0
        %7339 = vmatprep.subr.mxu0 0.0
        %7340 = vmatpush1.msra.mxu0 0.0
        %7341 = vmatprep.subr.mxu0 0.0
        %7342 = vmatpush1.msra.mxu0 0.0
        %7343 = vmatprep.subr.mxu0 0.0
        %7344 = vmatpush1.msra.mxu0 0.0
        %7345 = vmatprep.subr.mxu0 0.0
        %7346 = vmatpush1.msra.mxu0 0.0
        %7347 = vmatprep.subr.mxu0 0.0
        %7348 = vmatpush1.msra.mxu0 0.0
        %7349 = vmatprep.subr.mxu0 0.0
        %7350 = vmatpush1.msra.mxu0 0.0
        %7351 = vmatprep.subr.mxu0 0.0
        %7352 = vmatpush1.msra.mxu0 0.0
        %7353 = vmatprep.subr.mxu0 0.0
        %7354 = vmatpush1.msra.mxu0 0.0
        %7355 = vmatprep.subr.mxu0 0.0
        %7356 = vmatpush1.msra.mxu0 0.0
        %7357 = vmatprep.subr.mxu0 0.0
        %7358 = vmatpush1.msra.mxu0 0.0
        %7359 = vmatprep.subr.mxu0 0.0
        %7360 = vmatpush1.msra.mxu0 0.0
        %7361 = vmatprep.subr.mxu0 0.0
        %7362 = vmatpush1.msra.mxu0 0.0
        %7363 = vmatprep.subr.mxu0 0.0
        %7364 = vmatpush1.msra.mxu0 0.0
        %7365 = vmatprep.subr.mxu0 0.0
        %7366 = vmatpush1.msra.mxu0 0.0
        %7367 = vmatprep.subr.mxu0 0.0
        %7368 = vmatpush1.msra.mxu0 0.0
        %7369 = vmatprep.subr.mxu0 0.0
        %7370 = vmatpush1.msra.mxu0 0.0
        %7371 = vmatprep.mubr.f32.mxu0 0.0
        %7372 = vmatmul.mubr.f32.gmra.mrb[0].mxu0 %v7305
        %v7373 = vpop.f32.mrb[0].mxu0
        %v7374 = vadd.f32 0.0, %v7373
        %v7375 = vpop.f32.mrb[0].mxu0
        %7376 = vdwg.mxu0
        %v7378 = vsel %vm457, %v7374, 0
        %7380 = vmatprep.subr.mxu0 0.0
        %7381 = vmatpush1.msra.mxu0 %v6488
        %7382 = vmatprep.subr.mxu0 0.0
        %7383 = vmatpush1.msra.mxu0 0.0
        %7384 = vmatprep.subr.mxu0 0.0
        %7385 = vmatpush1.msra.mxu0 0.0
        %7386 = vmatprep.subr.mxu0 0.0
        %7387 = vmatpush1.msra.mxu0 0.0
        %7388 = vmatprep.subr.mxu0 0.0
        %7389 = vmatpush1.msra.mxu0 0.0
        %7390 = vmatprep.subr.mxu0 0.0
        %7391 = vmatpush1.msra.mxu0 0.0
        %7392 = vmatprep.subr.mxu0 0.0
        %7393 = vmatpush1.msra.mxu0 0.0
        %7394 = vmatprep.subr.mxu0 0.0
        %7395 = vmatpush1.msra.mxu0 0.0
        %7396 = vmatprep.subr.mxu0 0.0
        %7397 = vmatpush1.msra.mxu0 0.0
        %7398 = vmatprep.subr.mxu0 0.0
        %7399 = vmatpush1.msra.mxu0 0.0
        %7400 = vmatprep.subr.mxu0 0.0
        %7401 = vmatpush1.msra.mxu0 0.0
        %7402 = vmatprep.subr.mxu0 0.0
        %7403 = vmatpush1.msra.mxu0 0.0
        %7404 = vmatprep.subr.mxu0 0.0
        %7405 = vmatpush1.msra.mxu0 0.0
        %7406 = vmatprep.subr.mxu0 0.0
        %7407 = vmatpush1.msra.mxu0 0.0
        %7408 = vmatprep.subr.mxu0 0.0
        %7409 = vmatpush1.msra.mxu0 0.0
        %7410 = vmatprep.subr.mxu0 0.0
        %7411 = vmatpush1.msra.mxu0 0.0
        %7412 = vmatprep.subr.mxu0 0.0
        %7413 = vmatpush1.msra.mxu0 0.0
        %7414 = vmatprep.subr.mxu0 0.0
        %7415 = vmatpush1.msra.mxu0 0.0
        %7416 = vmatprep.subr.mxu0 0.0
        %7417 = vmatpush1.msra.mxu0 0.0
        %7418 = vmatprep.subr.mxu0 0.0
        %7419 = vmatpush1.msra.mxu0 0.0
        %7420 = vmatprep.subr.mxu0 0.0
        %7421 = vmatpush1.msra.mxu0 0.0
        %7422 = vmatprep.subr.mxu0 0.0
        %7423 = vmatpush1.msra.mxu0 0.0
        %7424 = vmatprep.subr.mxu0 0.0
        %7425 = vmatpush1.msra.mxu0 0.0
        %7426 = vmatprep.subr.mxu0 0.0
        %7427 = vmatpush1.msra.mxu0 0.0
        %7428 = vmatprep.subr.mxu0 0.0
        %7429 = vmatpush1.msra.mxu0 0.0
        %7430 = vmatprep.subr.mxu0 0.0
        %7431 = vmatpush1.msra.mxu0 0.0
        %7432 = vmatprep.subr.mxu0 0.0
        %7433 = vmatpush1.msra.mxu0 0.0
        %7434 = vmatprep.subr.mxu0 0.0
        %7435 = vmatpush1.msra.mxu0 0.0
        %7436 = vmatprep.subr.mxu0 0.0
        %7437 = vmatpush1.msra.mxu0 0.0
        %7438 = vmatprep.subr.mxu0 0.0
        %7439 = vmatpush1.msra.mxu0 0.0
        %7440 = vmatprep.subr.mxu0 0.0
        %7441 = vmatpush1.msra.mxu0 0.0
        %7442 = vmatprep.subr.mxu0 0.0
        %7443 = vmatpush1.msra.mxu0 0.0
        %7444 = vmatprep.mubr.f32.mxu0 0.0
        %7445 = vmatmul.mubr.f32.gmra.mrb[0].mxu0 %v7378
        %v7446 = vpop.f32.mrb[0].mxu0
        %v7447 = vadd.f32 0.0, %v7446
        %v7448 = vpop.f32.mrb[0].mxu0
        %7449 = vdwg.mxu0
        %v7450 = vadd.f32 %v7208, %v7447
        %v7451 = vadd.f32 %v7209, %v7300
        %v7452 = vmul.f32 %v7451, 0.25
        %v7453 = vadd.f32 %v6326, %v7450
        %v7454 = vld [vmem:[%s5 + $0x27] sm:$0x1]
        %v7455 = vlaneseq
        %v7456 = vshrl.u32 %v7455, 7
        %v7457 = vsub.s32 0, %v7456
        %v7458 = vrot.slane %v7454, %v7457
        %v7459 = vadd.f32 %v7453, %v7458
        %v7460 = vld [vmem:[%s5 + $0x28] sm:$0x1]
        %v7461 = vld [vmem:[%s5 + $0x29] sm:$0x1]
        %v7462 = vsel %vm355, %v7459, 0.0
        %7463 = vadd.xlane.f32.xlu0 %v7462
        %v7464 = vpop.xlane.xlu0 %7463
        %v7465 = vmul.f32 %v7464, %v359
        %v7466 = vsub.f32 %v7459, %v7465
        %v7467 = vmul.f32 %v7466, %v7466
        %v7468 = vsel %vm355, %v7467, 0.0
        %7469 = vadd.xlane.f32.xlu0 %v7468
        %v7470 = vpop.xlane.xlu0 %7469
        %v7471 = vmul.f32 %v7470, %v359
        %v7472 = vadd.f32 %v7471, 1e-06
        %v7473 = vrsqrt.pop %v7472
        %v7474 = vmul.f32 %v7466, %v7473
        %v7475 = vlaneseq
        %v7476 = vshrl.u32 %v7475, 7
        %v7477 = vsub.s32 0, %v7476
        %v7478 = vrot.slane %v7460, %v7477
        %v7479 = vmul.f32 %v7474, %v7478
        %v7480 = vlaneseq
        %v7481 = vshrl.u32 %v7480, 7
        %v7482 = vsub.s32 0, %v7481
        %v7483 = vrot.slane %v7461, %v7482
        %v7484 = vadd.f32 %v7479, %v7483
        %v7485 = vpack.c.bf16 %v7484, %v7484
        %s7486 = scalar_lea.vmem [#allocation2], 640
        %v7487 = vld [vmem:[%s7486] sm:$0xf]
        %v7488 = vld [vmem:[%s7486 + $0x4] sm:$0xf]
        %v7489 = vld [vmem:[%s7486 + $0x8] sm:$0xf]
        %v7490 = vld [vmem:[%s7486 + $0xc] sm:$0xf]
        %v7491 = vld [vmem:[%s5 + $0x2a] sm:$0x1]
        %v7492 = vlaneseq
        %v7493 = vshrl.u32 %v7492, 7
        %v7494 = vsub.s32 0, %v7493
        %v7495 = vrot.slane %v7491, %v7494
        %v7500 = vunpack.c.l.b16 %v7487
        %v7501 = vunpack.c.l.b16 %v7488
        %v7502 = vunpack.c.l.b16 %v7489
        %v7503 = vunpack.c.l.b16 %v7490
        %v7504 = vpack.c.b16 %v7501, %v7500
        %v7505 = vpack.c.b16 %v7503, %v7502
        %v7509 = vsel %vm355, %v7485, 0
        %7511 = vmatprep.subr.bf16.mxu0 0
        %7512 = vmatpush1.bf16.msra.mxu0 %v7504
        %7513 = vmatprep.subr.bf16.mxu0 0
        %7514 = vmatpush1.bf16.msra.mxu0 %v7505
        %7515 = vmatprep.subr.bf16.mxu0 0
        %7516 = vmatpush1.bf16.msra.mxu0 0
        %7517 = vmatprep.subr.bf16.mxu0 0
        %7518 = vmatpush1.bf16.msra.mxu0 0
        %7519 = vmatprep.subr.bf16.mxu0 0
        %7520 = vmatpush1.bf16.msra.mxu0 0
        %7521 = vmatprep.subr.bf16.mxu0 0
        %7522 = vmatpush1.bf16.msra.mxu0 0
        %7523 = vmatprep.subr.bf16.mxu0 0
        %7524 = vmatpush1.bf16.msra.mxu0 0
        %7525 = vmatprep.subr.bf16.mxu0 0
        %7526 = vmatpush1.bf16.msra.mxu0 0
        %7527 = vmatprep.subr.bf16.mxu0 0
        %7528 = vmatpush1.bf16.msra.mxu0 0
        %7529 = vmatprep.subr.bf16.mxu0 0
        %7530 = vmatpush1.bf16.msra.mxu0 0
        %7531 = vmatprep.subr.bf16.mxu0 0
        %7532 = vmatpush1.bf16.msra.mxu0 0
        %7533 = vmatprep.subr.bf16.mxu0 0
        %7534 = vmatpush1.bf16.msra.mxu0 0
        %7535 = vmatprep.subr.bf16.mxu0 0
        %7536 = vmatpush1.bf16.msra.mxu0 0
        %7537 = vmatprep.subr.bf16.mxu0 0
        %7538 = vmatpush1.bf16.msra.mxu0 0
        %7539 = vmatprep.subr.bf16.mxu0 0
        %7540 = vmatpush1.bf16.msra.mxu0 0
        %7541 = vmatprep.subr.bf16.mxu0 0
        %7542 = vmatpush1.bf16.msra.mxu0 0
        %7543 = vmatprep.mubr.bf16.mxu0 0
        %7544 = vmatmul.mubr.bf16.gmra.mrb[0].mxu0 %v7509
        %v7545 = vpop.f32.mrb[0].mxu0
        %v7546 = vadd.f32 %v7495, %v7545
        %v7547 = vpop.f32.mrb[0].mxu0
        %v7548 = vpop.f32.mrb[0].mxu0
        %v7549 = vpop.f32.mrb[0].mxu0
        %7550 = vdwg.mxu0
        %v7551 = vmax.f32 %v7546, 0.0
        %v7552 = vpack.c.bf16 %v7551, %v7551
        %s7553 = scalar_lea.vmem [#allocation2], 672
        %v7554 = vld [vmem:[%s7553] sm:$0xf]
        %v7555 = vld [vmem:[%s7553 + $0x4] sm:$0xf]
        %v7556 = vld [vmem:[%s7553 + $0x8] sm:$0xf]
        %v7557 = vld [vmem:[%s7553 + $0xc] sm:$0xf]
        %v7558 = vld [vmem:[%s7553 + $0x10] sm:$0xf]
        %v7559 = vld [vmem:[%s7553 + $0x14] sm:$0xf]
        %v7560 = vld [vmem:[%s7553 + $0x18] sm:$0xf]
        %v7561 = vld [vmem:[%s7553 + $0x1c] sm:$0xf]
        %v7570 = vunpack.c.l.b16 %v7554
        %v7571 = vunpack.c.l.b16 %v7555
        %v7572 = vunpack.c.l.b16 %v7556
        %v7573 = vunpack.c.l.b16 %v7557
        %v7574 = vunpack.c.l.b16 %v7558
        %v7575 = vunpack.c.l.b16 %v7559
        %v7576 = vunpack.c.l.b16 %v7560
        %v7577 = vunpack.c.l.b16 %v7561
        %v7578 = vpack.c.b16 %v7571, %v7570
        %v7579 = vpack.c.b16 %v7573, %v7572
        %v7580 = vpack.c.b16 %v7575, %v7574
        %v7581 = vpack.c.b16 %v7577, %v7576
        %v7587 = vsel %vm1555, %v7552, 0
        %7589 = vmatprep.subr.bf16.mxu0 0
        %7590 = vmatpush1.bf16.msra.mxu0 %v7578
        %7591 = vmatprep.subr.bf16.mxu0 0
        %7592 = vmatpush1.bf16.msra.mxu0 %v7579
        %7593 = vmatprep.subr.bf16.mxu0 0
        %7594 = vmatpush1.bf16.msra.mxu0 %v7580
        %7595 = vmatprep.subr.bf16.mxu0 0
        %7596 = vmatpush1.bf16.msra.mxu0 %v7581
        %7597 = vmatprep.subr.bf16.mxu0 0
        %7598 = vmatpush1.bf16.msra.mxu0 0
        %7599 = vmatprep.subr.bf16.mxu0 0
        %7600 = vmatpush1.bf16.msra.mxu0 0
        %7601 = vmatprep.subr.bf16.mxu0 0
        %7602 = vmatpush1.bf16.msra.mxu0 0
        %7603 = vmatprep.subr.bf16.mxu0 0
        %7604 = vmatpush1.bf16.msra.mxu0 0
        %7605 = vmatprep.subr.bf16.mxu0 0
        %7606 = vmatpush1.bf16.msra.mxu0 0
        %7607 = vmatprep.subr.bf16.mxu0 0
        %7608 = vmatpush1.bf16.msra.mxu0 0
        %7609 = vmatprep.subr.bf16.mxu0 0
        %7610 = vmatpush1.bf16.msra.mxu0 0
        %7611 = vmatprep.subr.bf16.mxu0 0
        %7612 = vmatpush1.bf16.msra.mxu0 0
        %7613 = vmatprep.subr.bf16.mxu0 0
        %7614 = vmatpush1.bf16.msra.mxu0 0
        %7615 = vmatprep.subr.bf16.mxu0 0
        %7616 = vmatpush1.bf16.msra.mxu0 0
        %7617 = vmatprep.subr.bf16.mxu0 0
        %7618 = vmatpush1.bf16.msra.mxu0 0
        %7619 = vmatprep.subr.bf16.mxu0 0
        %7620 = vmatpush1.bf16.msra.mxu0 0
        %7621 = vmatprep.mubr.bf16.mxu0 0
        %7622 = vmatmul.mubr.bf16.gmra.mrb[0].mxu0 %v7587
        %v7623 = vpop.f32.mrb[0].mxu0
        %v7624 = vadd.f32 0.0, %v7623
        %v7625 = vpop.f32.mrb[0].mxu0
        %v7626 = vpop.f32.mrb[0].mxu0
        %v7627 = vpop.f32.mrb[0].mxu0
        %7628 = vdwg.mxu0
        %v7629 = vadd.f32 %v7459, %v7624
        %v7630 = vld [vmem:[%s5 + $0x2b] sm:$0x1]
        %v7631 = vlaneseq
        %v7632 = vshrl.u32 %v7631, 7
        %v7633 = vsub.s32 0, %v7632
        %v7634 = vrot.slane %v7630, %v7633
        %v7635 = vadd.f32 %v7629, %v7634
        %v7636 = vld [vmem:[%s5 + $0x2c] sm:$0x1]
        %v7637 = vld [vmem:[%s5 + $0x2d] sm:$0x1]
        %v7638 = vsel %vm355, %v7635, 0.0
        %7639 = vadd.xlane.f32.xlu0 %v7638
        %v7640 = vpop.xlane.xlu0 %7639
        %v7641 = vmul.f32 %v7640, %v359
        %v7642 = vsub.f32 %v7635, %v7641
        %v7643 = vmul.f32 %v7642, %v7642
        %v7644 = vsel %vm355, %v7643, 0.0
        %7645 = vadd.xlane.f32.xlu0 %v7644
        %v7646 = vpop.xlane.xlu0 %7645
        %v7647 = vmul.f32 %v7646, %v359
        %v7648 = vadd.f32 %v7647, 1e-06
        %v7649 = vrsqrt.pop %v7648
        %v7650 = vmul.f32 %v7642, %v7649
        %v7651 = vlaneseq
        %v7652 = vshrl.u32 %v7651, 7
        %v7653 = vsub.s32 0, %v7652
        %v7654 = vrot.slane %v7636, %v7653
        %v7655 = vmul.f32 %v7650, %v7654
        %v7656 = vlaneseq
        %v7657 = vshrl.u32 %v7656, 7
        %v7658 = vsub.s32 0, %v7657
        %v7659 = vrot.slane %v7637, %v7658
        %v7660 = vadd.f32 %v7655, %v7659
        %v7661 = vpack.c.bf16 %v7660, %v7660
        %s7662 = scalar_lea.vmem [#allocation2], 704
        %v7663 = vld [vmem:[%s7662] sm:$0xf]
        %v7664 = vld [vmem:[%s7662 + $0x4] sm:$0xf]
        %v7665 = vld [vmem:[%s7662 + $0x8] sm:$0xf]
        %v7666 = vld [vmem:[%s7662 + $0xc] sm:$0xf]
        %vm7667 = vcmp.lt.s32.totalorder %v2879, 50
        %v7668 = vsel %vm7667, 0.0, -1e+09
        %v7673 = vunpack.c.l.b16 %v7663
        %v7674 = vunpack.c.l.b16 %v7664
        %v7675 = vunpack.c.l.b16 %v7665
        %v7676 = vunpack.c.l.b16 %v7666
        %v7677 = vpack.c.b16 %v7674, %v7673
        %v7678 = vpack.c.b16 %v7676, %v7675
        %v7682 = vsel %vm355, %v7661, 0
        %7684 = vmatprep.subr.bf16.mxu0 0
        %7685 = vmatpush1.bf16.msra.mxu0 %v7677
        %7686 = vmatprep.subr.bf16.mxu0 0
        %7687 = vmatpush1.bf16.msra.mxu0 %v7678
        %7688 = vmatprep.subr.bf16.mxu0 0
        %7689 = vmatpush1.bf16.msra.mxu0 0
        %7690 = vmatprep.subr.bf16.mxu0 0
        %7691 = vmatpush1.bf16.msra.mxu0 0
        %7692 = vmatprep.subr.bf16.mxu0 0
        %7693 = vmatpush1.bf16.msra.mxu0 0
        %7694 = vmatprep.subr.bf16.mxu0 0
        %7695 = vmatpush1.bf16.msra.mxu0 0
        %7696 = vmatprep.subr.bf16.mxu0 0
        %7697 = vmatpush1.bf16.msra.mxu0 0
        %7698 = vmatprep.subr.bf16.mxu0 0
        %7699 = vmatpush1.bf16.msra.mxu0 0
        %7700 = vmatprep.subr.bf16.mxu0 0
        %7701 = vmatpush1.bf16.msra.mxu0 0
        %7702 = vmatprep.subr.bf16.mxu0 0
        %7703 = vmatpush1.bf16.msra.mxu0 0
        %7704 = vmatprep.subr.bf16.mxu0 0
        %7705 = vmatpush1.bf16.msra.mxu0 0
        %7706 = vmatprep.subr.bf16.mxu0 0
        %7707 = vmatpush1.bf16.msra.mxu0 0
        %7708 = vmatprep.subr.bf16.mxu0 0
        %7709 = vmatpush1.bf16.msra.mxu0 0
        %7710 = vmatprep.subr.bf16.mxu0 0
        %7711 = vmatpush1.bf16.msra.mxu0 0
        %7712 = vmatprep.subr.bf16.mxu0 0
        %7713 = vmatpush1.bf16.msra.mxu0 0
        %7714 = vmatprep.subr.bf16.mxu0 0
        %7715 = vmatpush1.bf16.msra.mxu0 0
        %7716 = vmatprep.mubr.bf16.mxu0 0
        %7717 = vmatmul.mubr.bf16.gmra.mrb[0].mxu0 %v7682
        %v7718 = vpop.f32.mrb[0].mxu0
        %v7719 = vadd.f32 %v7668, %v7718
        %v7720 = vpop.f32.mrb[0].mxu0
        %v7721 = vpop.f32.mrb[0].mxu0
        %v7722 = vpop.f32.mrb[0].mxu0
        %7723 = vdwg.mxu0
        %7724 = vmax.xlane.f32.xlu0 %v7719
        %v7725 = vpop.xlane.xlu0 %7724
        %v7726 = vsub.f32 %v7719, %v7725
        %v7727 = vmul.f32 %v7726, 1.442695
        %v7728 = vpow.pop %v7727
        %7729 = vadd.xlane.f32.xlu0 %v7728
        %v7730 = vpop.xlane.xlu0 %7729
        %v7731 = vrcp.pop %v7730
        %v7732 = vmul.f32 %v7728, %v7731
        %v7734 = vsel %vm457, %v7452, 0
        %7736 = vmatprep.subr.mxu0 0.0
        %7737 = vmatpush1.msra.mxu0 %v2874
        %7738 = vmatprep.subr.mxu0 0.0
        %7739 = vmatpush1.msra.mxu0 0.0
        %7740 = vmatprep.subr.mxu0 0.0
        %7741 = vmatpush1.msra.mxu0 0.0
        %7742 = vmatprep.subr.mxu0 0.0
        %7743 = vmatpush1.msra.mxu0 0.0
        %7744 = vmatprep.subr.mxu0 0.0
        %7745 = vmatpush1.msra.mxu0 0.0
        %7746 = vmatprep.subr.mxu0 0.0
        %7747 = vmatpush1.msra.mxu0 0.0
        %7748 = vmatprep.subr.mxu0 0.0
        %7749 = vmatpush1.msra.mxu0 0.0
        %7750 = vmatprep.subr.mxu0 0.0
        %7751 = vmatpush1.msra.mxu0 0.0
        %7752 = vmatprep.subr.mxu0 0.0
        %7753 = vmatpush1.msra.mxu0 0.0
        %7754 = vmatprep.subr.mxu0 0.0
        %7755 = vmatpush1.msra.mxu0 0.0
        %7756 = vmatprep.subr.mxu0 0.0
        %7757 = vmatpush1.msra.mxu0 0.0
        %7758 = vmatprep.subr.mxu0 0.0
        %7759 = vmatpush1.msra.mxu0 0.0
        %7760 = vmatprep.subr.mxu0 0.0
        %7761 = vmatpush1.msra.mxu0 0.0
        %7762 = vmatprep.subr.mxu0 0.0
        %7763 = vmatpush1.msra.mxu0 0.0
        %7764 = vmatprep.subr.mxu0 0.0
        %7765 = vmatpush1.msra.mxu0 0.0
        %7766 = vmatprep.subr.mxu0 0.0
        %7767 = vmatpush1.msra.mxu0 0.0
        %7768 = vmatprep.subr.mxu0 0.0
        %7769 = vmatpush1.msra.mxu0 0.0
        %7770 = vmatprep.subr.mxu0 0.0
        %7771 = vmatpush1.msra.mxu0 0.0
        %7772 = vmatprep.subr.mxu0 0.0
        %7773 = vmatpush1.msra.mxu0 0.0
        %7774 = vmatprep.subr.mxu0 0.0
        %7775 = vmatpush1.msra.mxu0 0.0
        %7776 = vmatprep.subr.mxu0 0.0
        %7777 = vmatpush1.msra.mxu0 0.0
        %7778 = vmatprep.subr.mxu0 0.0
        %7779 = vmatpush1.msra.mxu0 0.0
        %7780 = vmatprep.subr.mxu0 0.0
        %7781 = vmatpush1.msra.mxu0 0.0
        %7782 = vmatprep.subr.mxu0 0.0
        %7783 = vmatpush1.msra.mxu0 0.0
        %7784 = vmatprep.subr.mxu0 0.0
        %7785 = vmatpush1.msra.mxu0 0.0
        %7786 = vmatprep.subr.mxu0 0.0
        %7787 = vmatpush1.msra.mxu0 0.0
        %7788 = vmatprep.subr.mxu0 0.0
        %7789 = vmatpush1.msra.mxu0 0.0
        %7790 = vmatprep.subr.mxu0 0.0
        %7791 = vmatpush1.msra.mxu0 0.0
        %7792 = vmatprep.subr.mxu0 0.0
        %7793 = vmatpush1.msra.mxu0 0.0
        %7794 = vmatprep.subr.mxu0 0.0
        %7795 = vmatpush1.msra.mxu0 0.0
        %7796 = vmatprep.subr.mxu0 0.0
        %7797 = vmatpush1.msra.mxu0 0.0
        %7798 = vmatprep.subr.mxu0 0.0
        %7799 = vmatpush1.msra.mxu0 0.0
        %7800 = vmatprep.mubr.f32.mxu0 0.0
        %7801 = vmatmul.mubr.f32.gmra.mrb[0].mxu0 %v7734
        %v7802 = vpop.f32.mrb[0].mxu0
        %v7803 = vadd.f32 0.0, %v7802
        %v7804 = vpop.f32.mrb[0].mxu0
        %7805 = vdwg.mxu0
        %v7806 = vld [vmem:[%s5 + $0x2e] sm:$0x1]
        %v7807 = vlaneseq
        %v7808 = vshrl.u32 %v7807, 7
        %v7809 = vsub.s32 0, %v7808
        %v7810 = vrot.slane %v7806, %v7809
        %v7811 = vmul.f32 %v7660, %v7810
        %v7812 = vsel %vm355, %v7811, 0.0
        %7813 = vadd.xlane.f32.xlu0 %v7812
        %v7814 = vpop.xlane.xlu0 %7813
        %v7815 = vld [vmem:[%s5 + $0x2f] sm:$0x1]
        %v7816 = vlaneseq
        %v7817 = vshrl.u32 %v7816, 7
        %v7818 = vsub.s32 0, %v7817
        %v7819 = vrot.slane %v7815, %v7818
        %v7820 = vmul.f32 %v7803, %v7819
        %v7821 = vsel %vm355, %v7820, 0.0
        %7822 = vadd.xlane.f32.xlu0 %v7821
        %v7823 = vpop.xlane.xlu0 %7822
        %v7824 = vadd.f32 %v7814, %v7823
        %v7825 = vld [vmem:[%s5 + $0x30] sm:$0x1]
        %v7826 = vlaneseq
        %v7827 = vshrl.u32 %v7826, 7
        %v7828 = vsub.s32 0, %v7827
        %v7829 = vrot.slane %v7825, %v7828
        %v7830 = vadd.f32 %v7824, %v7829
        %v7831 = vxor.u32 %v7830, 2147483648
        %v7832 = vmul.f32 %v7831, 1.442695
        %v7833 = vpow.pop %v7832
        %v7834 = vadd.f32 %v7833, 1.0
        %v7835 = vrcp.pop %v7834
        %v7836 = vmul.f32 1.0, %v7835
        %v7837 = vld [vmem:[%s347] sm:$0xff]
        %7838 = vset.pattern.permute.xlu0 0
        %7839 = vperm.xlu0 %7838, %v7837
        %v7840 = vpop.permute.xlu0 %7839
        %vm7841 = vcmp.eq.s32.totalorder %v7840, %v2879
        %v7842 = vsel %vm7841, 1, 0
        %v7843 = vcvt.s32.f32 %v7842
        %7844 = vmatprep.subr.mxu0 0.0
        %7845 = vmatpush1.msra.mxu0 %v7843
        %7846 = vmatprep.subr.mxu0 0.0
        %7847 = vmatpush1.msra.mxu0 0.0
        %7848 = vmatprep.subr.mxu0 0.0
        %7849 = vmatpush1.msra.mxu0 0.0
        %7850 = vmatprep.subr.mxu0 0.0
        %7851 = vmatpush1.msra.mxu0 0.0
        %7852 = vmatprep.subr.mxu0 0.0
        %7853 = vmatpush1.msra.mxu0 0.0
        %7854 = vmatprep.subr.mxu0 0.0
        %7855 = vmatpush1.msra.mxu0 0.0
        %7856 = vmatprep.subr.mxu0 0.0
        %7857 = vmatpush1.msra.mxu0 0.0
        %7858 = vmatprep.subr.mxu0 0.0
        %7859 = vmatpush1.msra.mxu0 0.0
        %7860 = vmatprep.subr.mxu0 0.0
        %7861 = vmatpush1.msra.mxu0 0.0
        %7862 = vmatprep.subr.mxu0 0.0
        %7863 = vmatpush1.msra.mxu0 0.0
        %7864 = vmatprep.subr.mxu0 0.0
        %7865 = vmatpush1.msra.mxu0 0.0
        %7866 = vmatprep.subr.mxu0 0.0
        %7867 = vmatpush1.msra.mxu0 0.0
        %7868 = vmatprep.subr.mxu0 0.0
        %7869 = vmatpush1.msra.mxu0 0.0
        %7870 = vmatprep.subr.mxu0 0.0
        %7871 = vmatpush1.msra.mxu0 0.0
        %7872 = vmatprep.subr.mxu0 0.0
        %7873 = vmatpush1.msra.mxu0 0.0
        %7874 = vmatprep.subr.mxu0 0.0
        %7875 = vmatpush1.msra.mxu0 0.0
        %7876 = vmatprep.subr.mxu0 0.0
        %7877 = vmatpush1.msra.mxu0 0.0
        %7878 = vmatprep.subr.mxu0 0.0
        %7879 = vmatpush1.msra.mxu0 0.0
        %7880 = vmatprep.subr.mxu0 0.0
        %7881 = vmatpush1.msra.mxu0 0.0
        %7882 = vmatprep.subr.mxu0 0.0
        %7883 = vmatpush1.msra.mxu0 0.0
        %7884 = vmatprep.subr.mxu0 0.0
        %7885 = vmatpush1.msra.mxu0 0.0
        %7886 = vmatprep.subr.mxu0 0.0
        %7887 = vmatpush1.msra.mxu0 0.0
        %7888 = vmatprep.subr.mxu0 0.0
        %7889 = vmatpush1.msra.mxu0 0.0
        %7890 = vmatprep.subr.mxu0 0.0
        %7891 = vmatpush1.msra.mxu0 0.0
        %7892 = vmatprep.subr.mxu0 0.0
        %7893 = vmatpush1.msra.mxu0 0.0
        %7894 = vmatprep.subr.mxu0 0.0
        %7895 = vmatpush1.msra.mxu0 0.0
        %7896 = vmatprep.subr.mxu0 0.0
        %7897 = vmatpush1.msra.mxu0 0.0
        %7898 = vmatprep.subr.mxu0 0.0
        %7899 = vmatpush1.msra.mxu0 0.0
        %7900 = vmatprep.subr.mxu0 0.0
        %7901 = vmatpush1.msra.mxu0 0.0
        %7902 = vmatprep.subr.mxu0 0.0
        %7903 = vmatpush1.msra.mxu0 0.0
        %7904 = vmatprep.subr.mxu0 0.0
        %7905 = vmatpush1.msra.mxu0 0.0
        %7906 = vmatprep.subr.mxu0 0.0
        %7907 = vmatpush1.msra.mxu0 0.0
        %7908 = vmatprep.mubr.f32.mxu0 0.0
        %7909 = vmatmul.mubr.f32.gmra.mrb[0].mxu0 %v7734
        %v7910 = vpop.f32.mrb[0].mxu0
        %v7911 = vadd.f32 0.0, %v7910
        %v7912 = vpop.f32.mrb[0].mxu0
        %7913 = vdwg.mxu0
        %7915 = vset.pattern.permute.xlu0 0
        %7916 = vperm.xlu0 %7915, %v7836
        %v7917 = vpop.permute.xlu0 %7916
        %v7919 = vmul.f32 %v7917, %v7732
        %v7920 = vsub.f32 1.0, %v7836
        %7922 = vset.pattern.permute.xlu0 0
        %7923 = vperm.xlu0 %7922, %v7920
        %v7924 = vpop.permute.xlu0 %7923
        %v7926 = vmul.f32 %v7924, %v7911
        %v7927 = vadd.f32 %v7919, %v7926
        %7928 = vst [vmem:[%s325] sm:$0xff] %v7927
        %v7929 = vsel %vm457, %v7452, 0.0
        %7930 = vst [vmem:[%s332] sm:$0xff] %v7929
        %s7931 = sand.u32 %s180, 1
        %s7932 = scalar_lea.sflag [#allocation4], %s7931
        %s7933 = sand.u32 %s180, 1
        %s7934 = smul.addr %s7933, 8
        %s7935 = scalar_lea.vmem [#allocation5], %s7934
        %s7936 = sand.u32 %s206, 1
        %s7937 = scalar_lea.sflag [#allocation7], %s7936
        %s7938 = sand.u32 %s206, 1
        %s7939 = smul.addr %s7938, 8
        %s7940 = scalar_lea.vmem [#allocation6], %s7939
        // Predicated region
        $region49: #{seq2seq_forward.1} parent=43 // pred_check
          %p7941 = pneg %p190
        $region50: #{seq2seq_forward.1} parent=43 // pred_check_branch
          %7943 = sbr.rel (%p7941) target = $region52
        $region51: #{seq2seq_forward.1} parent=43 // pred_region
          %s7945 = ssub.s32 128, 128
          %7946 = vsyncadd %s7932, %s7945
          %s7947 = smul.addr %s26, 128
          %s7948 = scalar_lea.hbm %s6, %s7947
          %s7950 = sshll.u32 %s7935, 4
          %s7951 = int_to_ptr.vmem [resolvable:$true] %s7950
          %7953 = dma.vmem_to_hbm [thread:$0]  %s7951, 128, %s7948, %s7932
        $region52: #{seq2seq_forward.1} parent=43 // pred_fallthru
          _
        // Predicated region
        $region53: #{seq2seq_forward.1} parent=43 // pred_check
          %p7954 = pneg %p216
        $region54: #{seq2seq_forward.1} parent=43 // pred_check_branch
          %7956 = sbr.rel (%p7954) target = $region56
        $region55: #{seq2seq_forward.1} parent=43 // pred_region
          %s7958 = ssub.s32 128, 128
          %7959 = vsyncadd %s7937, %s7958
          %s7960 = smul.addr %s26, 128
          %s7961 = scalar_lea.hbm %s7, %s7960
          %s7963 = sshll.u32 %s7940, 4
          %s7964 = int_to_ptr.vmem [resolvable:$true] %s7963
          %7966 = dma.vmem_to_hbm [thread:$0]  %s7964, 128, %s7961, %s7937
        $region56: #{seq2seq_forward.1} parent=43 // pred_fallthru
          _
      $region44: #{seq2seq_forward.1} parent=5 // pred_fallthru
        _
      %p7967 = scmp.le.s32.totalorder 2, %s21
      // Predicated region
      $region57: #{seq2seq_forward.1} parent=5 // pred_check
        %p7968 = pneg %p7967
      $region58: #{seq2seq_forward.1} parent=5 // pred_check_branch
        %7970 = sbr.rel (%p7968) target = $region60
      $region59: #{seq2seq_forward.1} parent=5 // pred_region
        %s7971 = ssub.s32 %s21, 2
        // Predicated region
        $region61: #{seq2seq_forward.1} parent=59 // pred_check
          %p7972 = pneg %p196
        $region62: #{seq2seq_forward.1} parent=59 // pred_check_branch
          %7974 = sbr.rel (%p7972) target = $region64
        $region63: #{seq2seq_forward.1} parent=59 // pred_region
          %s7975 = sand.u32 %s181, 1
          %s7976 = scalar_lea.sflag [#allocation4], %s7975
          %s7977 = sand.u32 %s181, 1
          %s7978 = smul.addr %s7977, 8
          %s7979 = scalar_lea.vmem [#allocation5], %s7978
          %7980 = dma.done %s7976, 128
        $region64: #{seq2seq_forward.1} parent=59 // pred_fallthru
          _
        // Predicated region
        $region65: #{seq2seq_forward.1} parent=59 // pred_check
          %p7981 = pneg %p222
        $region66: #{seq2seq_forward.1} parent=59 // pred_check_branch
          %7983 = sbr.rel (%p7981) target = $region68
        $region67: #{seq2seq_forward.1} parent=59 // pred_region
          %s7984 = sand.u32 %s207, 1
          %s7985 = scalar_lea.sflag [#allocation7], %s7984
          %s7986 = sand.u32 %s207, 1
          %s7987 = smul.addr %s7986, 8
          %s7988 = scalar_lea.vmem [#allocation6], %s7987
          %7989 = dma.done %s7985, 128
        $region68: #{seq2seq_forward.1} parent=59 // pred_fallthru
          _
      $region60: #{seq2seq_forward.1} parent=5 // pred_fallthru
        _
    $region6: #{seq2seq_forward.1} parent=1 // loop_footer
      %s25 = sadd.s32 1, %s21
    $region7: #{seq2seq_forward.1} parent=1 // loop_footer_branch
      %20 = sbr.rel target = $region3
    $region8: #{seq2seq_forward.1} parent=1 // loop_exit
      _
    %7990 = vsyncpa [#allocation3], 1
    %s7991 = scalar_lea.sflag [#allocation3], 1
    %7992 = vsyncpa %s7991, 1
    %7993 = vsyncpa [#allocation4], 1
    %s7994 = scalar_lea.sflag [#allocation4], 1
    %7995 = vsyncpa %s7994, 1
    %7996 = vsyncpa [#allocation7], 1
    %s7997 = scalar_lea.sflag [#allocation7], 1
    %7998 = vsyncpa %s7997, 1

</llo_original>
